<compile_context>
chip_gen: v7x
topology: tpu7x:2x2x1
jax: 0.10.0
libtpu: 0.0.40
codegen_flags: <defaults>
</compile_context>

<pallas_src>
import math

import jax
import jax.numpy as jnp
from jax import lax
from jax.experimental import pallas as pl
from jax.experimental.pallas import tpu as pltpu

EPS = 1e-5  # torch GroupNorm default eps


# ------------------------------------------------------------------------
# GroupNorm helper: group statistics are computed lane-friendly via a (C, C)
# block-diagonal averaging matrix A (A[c, c'] = 1/Cg if same group), so no
# lane-dim reshapes are needed inside the kernel.
# ------------------------------------------------------------------------
def _group_avg_matrix(C, G):
    Cg = C // G
    return jnp.kron(jnp.eye(G, dtype=jnp.float32),
                    jnp.full((Cg, Cg), 1.0 / Cg, dtype=jnp.float32))


# ------------------------------------------------------------------------
# Fully fused ASPP kernel (one grid step == nb samples).
# ------------------------------------------------------------------------
def _make_fused_kernel(nb, H, W, Cin, Cout, dilations, maxpad):
    HW = H * W
    M = nb * HW
    dil3 = tuple(dilations[1:])   # dilations of the three 3x3 branches
    inv_hw = 1.0 / HW

    def kernel(xp_ref, pool_ref, w1_ref, w2_ref, w3_ref, w4_ref, w5_ref,
               wc_ref, g_ref, b_ref, A_ref, o_ref):
        A = A_ref[...]                                          # (Cout, Cout) f32

        def gn_relu(y3, idx):
            # y3: (nb, rows, Cout) f32. Per-sample GroupNorm over (rows, Cg),
            # single-pass stats: mean & mean-of-squares share ONE small matmul
            # against A, then affine + ReLU.
            gamma = g_ref[idx]                                  # (1, Cout)
            beta = b_ref[idx]                                   # (1, Cout)
            mean_c = jnp.mean(y3, axis=1)                       # (nb, Cout)
            msq_c = jnp.mean(y3 * y3, axis=1)                   # (nb, Cout)
            stats = jnp.concatenate([mean_c, msq_c], axis=0)    # (2*nb, Cout)
            stats_g = jnp.dot(stats, A, preferred_element_type=jnp.float32)
            mean_g = stats_g[:nb]                               # (nb, Cout)
            var_g = stats_g[nb:] - mean_g * mean_g
            scale = lax.rsqrt(var_g + EPS) * gamma              # gamma folded in
            out = ((y3 - mean_g.reshape(nb, 1, Cout))
                   * scale.reshape(nb, 1, Cout) + beta)
            return jnp.maximum(out, 0.0)

        xp = xp_ref[...]                                        # (nb, Hp, Wpad, Cin) bf16

        def tap(y0, x0):
            return xp[:, y0:y0 + H, x0:x0 + W, :].reshape(M, Cin)

        # Interior (un-padded) pixels; also the centre tap of every dilated
        # branch, so it is materialized exactly once.
        xi = tap(maxpad, maxpad)                                # (M, Cin) bf16

        # ---- branch 1: 1x1 conv -> GN -> ReLU, folded straight into the
        # post-concat 1x1 conv (wc1 split per branch -> no concat tensor).
        y1 = jnp.dot(xi, w1_ref[...], preferred_element_type=jnp.float32)
        z1 = gn_relu(y1.reshape(nb, HW, Cout), 0).reshape(M, Cout)
        acc = jnp.dot(z1.astype(jnp.bfloat16), wc_ref[0],
                      preferred_element_type=jnp.float32)       # (M, Cout) f32

        # ---- branches 2..4: dilated 3x3 conv via ONE K=9*Cin im2col matmul
        # each, -> GN -> ReLU -> folded into the final-conv accumulator.
        for bi, (w_ref, dil) in enumerate(
                ((w2_ref, dil3[0]), (w3_ref, dil3[1]), (w4_ref, dil3[2])),
                start=1):
            off = maxpad - dil                                  # shared-pad offset
            taps = [xi if (ky == 1 and kx == 1)
                    else tap(off + ky * dil, off + kx * dil)
                    for ky in range(3) for kx in range(3)]
            slab = jnp.concatenate(taps, axis=-1)               # (M, 9*Cin) bf16
            yb = jnp.dot(slab, w_ref[...], preferred_element_type=jnp.float32)
            zb = gn_relu(yb.reshape(nb, HW, Cout), bi).reshape(M, Cout)
            acc = acc + jnp.dot(zb.astype(jnp.bfloat16), wc_ref[bi],
                                preferred_element_type=jnp.float32)

        # ---- branch 5: global avg pool -> 1x1 conv -> GN -> ReLU, folded in
        # as a per-sample rank-1 row add (its broadcast map never touches HBM).
        # Pool mean via an MXU ones-matmul: f32 accumulation, no f32 slab copy.
        m = jnp.dot(pool_ref[...], xi,
                    preferred_element_type=jnp.float32) * inv_hw  # (nb, Cin) f32
        y5 = jnp.dot(m.astype(jnp.bfloat16), w5_ref[...],
                     preferred_element_type=jnp.float32)          # (nb, Cout)
        z5 = gn_relu(y5.reshape(nb, 1, Cout), 4).reshape(nb, Cout)
        r5 = jnp.dot(z5.astype(jnp.bfloat16), wc_ref[4],
                     preferred_element_type=jnp.float32)          # (nb, Cout)

        acc3 = acc.reshape(nb, HW, Cout) + r5.reshape(nb, 1, Cout)

        # ---- conv1 (already accumulated) -> bn1 (GN) -> ReLU. Dropout(0.5)
        # with dec=True is inference-mode identity.
        # TODO(synk): training-mode RNG dropout not reproduced.
        o_ref[...] = gn_relu(acc3, 5).astype(o_ref.dtype)

    return kernel


# ------------------------------------------------------------------------
# Parameter init (deterministic, matches __init__: kaiming_normal conv weights,
# GroupNorm affine defaults gamma=1, beta=0). All reference convs are bias=False.
# ------------------------------------------------------------------------
def _kaiming_conv(key, cout, cin, k):
    fan_in = cin * k * k
    std = math.sqrt(2.0 / fan_in)
    return std * jax.random.normal(key, (cout, cin, k, k), dtype=jnp.float32)


def make_params(key, cin, cout):
    ks = jax.random.split(key, 6)
    w1 = _kaiming_conv(ks[0], cout, cin, 1)                 # aspp1 1x1
    w2 = _kaiming_conv(ks[1], cout, cin, 3)                 # aspp2 3x3
    w3 = _kaiming_conv(ks[2], cout, cin, 3)                 # aspp3 3x3
    w4 = _kaiming_conv(ks[3], cout, cin, 3)                 # aspp4 3x3
    w5 = _kaiming_conv(ks[4], cout, cin, 1)                 # global pool 1x1
    wc1 = _kaiming_conv(ks[5], cout, 5 * cout, 1)           # conv1 after concat

    def to_io_1x1(w):      # (Cout,Cin,1,1) -> (Cin,Cout)
        return jnp.transpose(w.reshape(w.shape[0], w.shape[1]), (1, 0))

    def to_im2col(w):      # (Cout,Cin,3,3) -> (9*Cin,Cout); row = (ky*3+kx)*Cin+cin
        return jnp.transpose(w, (2, 3, 1, 0)).reshape(9 * w.shape[1], w.shape[0])

    ones = jnp.ones((1, cout), jnp.float32)
    zeros = jnp.zeros((1, cout), jnp.float32)
    return dict(
        w1=to_io_1x1(w1), w2=to_im2col(w2), w3=to_im2col(w3), w4=to_im2col(w4),
        w5=to_io_1x1(w5),
        wc1=to_io_1x1(wc1).reshape(5, cout, cout),          # split per branch
        g1=ones, b1=zeros, g2=ones, b2=zeros, g3=ones, b3=zeros,
        g4=ones, b4=zeros, g5=ones, b5=zeros, gc1=ones, bc1=zeros,
    )


# ------------------------------------------------------------------------
# Full ASPP forward (abn=False, dec=True). Input NCHW; output NHWC bf16 by
# default (set output_layout="NCHW" for exact PyTorch layout parity).
# ------------------------------------------------------------------------
def aspp_forward(x_nchw, params, dilations, groups, *,
                 samples_per_step=2, output_layout="NHWC"):
    N, Cin, H, W = x_nchw.shape
    Cout = params["w1"].shape[1]
    HW = H * W
    maxpad = max(dilations[1:])
    Hp = H + 2 * maxpad
    Wp = W + 2 * maxpad
    Wpad = ((Wp + 31) // 32) * 32       # align second-minor dim for bf16 tiling

    nb = max(1, min(samples_per_step, N))
    while N % nb:                        # fall back to a divisor of N
        nb -= 1

    # NCHW -> NHWC (glue), bf16 activations, ONE shared max-dilation pad with
    # right-side alignment padding on W.
    x_nhwc = jnp.transpose(x_nchw, (0, 2, 3, 1)).astype(jnp.bfloat16)
    xp = jnp.pad(x_nhwc, ((0, 0), (maxpad, maxpad),
                          (maxpad, maxpad + (Wpad - Wp)), (0, 0)))

    bf = lambda a: a.astype(jnp.bfloat16)
    w1, w2, w3, w4, w5 = (bf(params["w1"]), bf(params["w2"]), bf(params["w3"]),
                          bf(params["w4"]), bf(params["w5"]))
    wc = bf(params["wc1"])                                   # (5, Cout, Cout)
    gamma = jnp.stack([params[k] for k in ("g1", "g2", "g3", "g4", "g5", "gc1")], 0)
    beta = jnp.stack([params[k] for k in ("b1", "b2", "b3", "b4", "b5", "bc1")], 0)
    A = _group_avg_matrix(Cout, groups)
    # Per-sample block of ones: pool @ xi gives per-sample channel sums (f32 acc).
    pool = jnp.kron(jnp.eye(nb, dtype=jnp.float32),
                    jnp.ones((1, HW), jnp.float32)).astype(jnp.bfloat16)

    kernel = _make_fused_kernel(nb, H, W, Cin, Cout, dilations, maxpad)

    # NOTE: GN statistics need the full H*W per sample; for production-scale
    # ASPP inputs (large H,W,Cin on v7x's 64 MiB VMEM) the spatial axis should
    # be tiled with a streaming two-pass GN (accumulate per-group sum/sumsq
    # across spatial tiles) — at demo size nb whole images per step fit VMEM
    # on all TPU generations.  Constant-index weight slabs could additionally
    # be single-buffered (pipeline_mode) to reclaim VMEM headroom on v7x.
    out = pl.pallas_call(
        kernel,
        out_shape=jax.ShapeDtypeStruct((N, HW, Cout), jnp.bfloat16),
        grid=(N // nb,),
        in_specs=[
            pl.BlockSpec((nb, Hp, Wpad, Cin), lambda n: (n, 0, 0, 0)),
            pl.BlockSpec((nb, nb * HW), lambda n: (0, 0)),
            pl.BlockSpec((Cin, Cout), lambda n: (0, 0)),
            pl.BlockSpec((9 * Cin, Cout), lambda n: (0, 0)),
            pl.BlockSpec((9 * Cin, Cout), lambda n: (0, 0)),
            pl.BlockSpec((9 * Cin, Cout), lambda n: (0, 0)),
            pl.BlockSpec((Cin, Cout), lambda n: (0, 0)),
            pl.BlockSpec((5, Cout, Cout), lambda n: (0, 0, 0)),
            pl.BlockSpec((6, 1, Cout), lambda n: (0, 0, 0)),
            pl.BlockSpec((6, 1, Cout), lambda n: (0, 0, 0)),
            pl.BlockSpec((Cout, Cout), lambda n: (0, 0)),
        ],
        out_specs=pl.BlockSpec((nb, HW, Cout), lambda n: (n, 0, 0)),
        compiler_params=pltpu.CompilerParams(
            dimension_semantics=("parallel",),
            vmem_limit_bytes=64 * 1024 * 1024),
    )(xp, pool, w1, w2, w3, w4, w5, wc, gamma, beta, A)

    out_nhwc = out.reshape(N, H, W, Cout)
    if output_layout == "NCHW":
        return jnp.transpose(out_nhwc, (0, 3, 1, 2))
    return out_nhwc


if __name__ == "__main__":
    # Small, structure-preserving config:
    #   inplanes -> 128, planes (256 in the module) -> 128 (lane-dense, /32 ok),
    #   GroupNorm groups = 32, output_stride=32 -> dilations [1, 3, 6, 9].
    #   N=4 with 2 samples per grid step -> grid=(2,), keeps both v7x TCs busy.
    N, Cin, H, W = 4, 128, 8, 8
    Cout = 128
    GROUPS = 32
    dilations = [1, 3, 6, 9]

    key = jax.random.PRNGKey(0)
    kx, kp = jax.random.split(key)
    x = jax.random.normal(kx, (N, Cin, H, W), dtype=jnp.float32)   # NCHW like PyTorch
    params = make_params(kp, Cin, Cout)

    out = aspp_forward(x, params, dilations, GROUPS,
                       samples_per_step=2, output_layout="NHWC")
    jax.block_until_ready(out)
    assert out.shape == (N, H, W, Cout), out.shape
    assert out.dtype == jnp.bfloat16, out.dtype
    print("KERNEL_OK")
</pallas_src>

<mosaic_0001>
module attributes {stable_mosaic.version = 11 : i64} {
  func.func @kernel(%arg0: i32, %arg1: memref<2x26x32x128xbf16, #tpu.memory_space<vmem>>, %arg2: memref<2x128xbf16, #tpu.memory_space<vmem>>, %arg3: memref<128x128xbf16, #tpu.memory_space<vmem>>, %arg4: memref<1152x128xbf16, #tpu.memory_space<vmem>>, %arg5: memref<1152x128xbf16, #tpu.memory_space<vmem>>, %arg6: memref<1152x128xbf16, #tpu.memory_space<vmem>>, %arg7: memref<128x128xbf16, #tpu.memory_space<vmem>>, %arg8: memref<5x128x128xbf16, #tpu.memory_space<vmem>>, %arg9: memref<6x1x128xf32, #tpu.memory_space<vmem>>, %arg10: memref<6x1x128xf32, #tpu.memory_space<vmem>>, %arg11: memref<128x128xf32, #tpu.memory_space<vmem>>, %arg12: memref<2x64x128xbf16, #tpu.memory_space<vmem>>) attributes {dimension_semantics = [#tpu.dimension_semantics<parallel>], iteration_bounds = array<i64: 2>, scalar_prefetch = 0 : i64, scratch_operands = 0 : i64, tpu.core_type = #tpu.core_type<tc>, window_params = [{transform_indices = @transform_0, window_bounds = array<i64: 2, 26, 32, 128>}, {pipeline_mode = #tpu.pipeline_mode<synchronous>, transform_indices = @transform_1, window_bounds = array<i64: 2, 128>}, {pipeline_mode = #tpu.pipeline_mode<synchronous>, transform_indices = @transform_2, window_bounds = array<i64: 128, 128>}, {pipeline_mode = #tpu.pipeline_mode<synchronous>, transform_indices = @transform_3, window_bounds = array<i64: 1152, 128>}, {pipeline_mode = #tpu.pipeline_mode<synchronous>, transform_indices = @transform_4, window_bounds = array<i64: 1152, 128>}, {pipeline_mode = #tpu.pipeline_mode<synchronous>, transform_indices = @transform_5, window_bounds = array<i64: 1152, 128>}, {pipeline_mode = #tpu.pipeline_mode<synchronous>, transform_indices = @transform_6, window_bounds = array<i64: 128, 128>}, {pipeline_mode = #tpu.pipeline_mode<synchronous>, transform_indices = @transform_7, window_bounds = array<i64: 5, 128, 128>}, {pipeline_mode = #tpu.pipeline_mode<synchronous>, transform_indices = @transform_8, window_bounds = array<i64: 6, 1, 128>}, {pipeline_mode = #tpu.pipeline_mode<synchronous>, transform_indices = @transform_9, window_bounds = array<i64: 6, 1, 128>}, {pipeline_mode = #tpu.pipeline_mode<synchronous>, transform_indices = @transform_10, window_bounds = array<i64: 128, 128>}, {transform_indices = @transform_11, window_bounds = array<i64: 2, 64, 128>}]} {
    %c0 = arith.constant 0 : index
    %c0_0 = arith.constant 0 : index
    %0 = vector.load %arg11[%c0, %c0_0] : memref<128x128xf32, #tpu.memory_space<vmem>>, vector<128x128xf32>
    %c0_1 = arith.constant 0 : index
    %c0_2 = arith.constant 0 : index
    %c0_3 = arith.constant 0 : index
    %c0_4 = arith.constant 0 : index
    %1 = vector.load %arg1[%c0_1, %c0_2, %c0_3, %c0_4] : memref<2x26x32x128xbf16, #tpu.memory_space<vmem>>, vector<2x26x32x128xbf16>
    %2 = vector.extract_strided_slice %1 {offsets = [0, 9, 9, 0], sizes = [2, 8, 8, 128], strides = [1, 1, 1, 1]} : vector<2x26x32x128xbf16> to vector<2x8x8x128xbf16>
    %3 = vector.shape_cast %2 : vector<2x8x8x128xbf16> to vector<128x128xbf16>
    %c0_5 = arith.constant 0 : index
    %c0_6 = arith.constant 0 : index
    %4 = vector.load %arg3[%c0_5, %c0_6] : memref<128x128xbf16, #tpu.memory_space<vmem>>, vector<128x128xbf16>
    %cst = arith.constant dense<0.000000e+00> : vector<128x128xf32>
    %5 = tpu.matmul %3, %4, %cst {dimension_numbers = #tpu.dot_dimension_numbers<[1], [0], [0], [1], [0, 0, 1, 1], [], []>} : vector<128x128xbf16>, vector<128x128xbf16>, vector<128x128xf32> -> vector<128x128xf32>
    %6 = vector.shape_cast %5 : vector<128x128xf32> to vector<2x64x128xf32>
    %c0_7 = arith.constant 0 : index
    %c0_8 = arith.constant 0 : index
    %c0_9 = arith.constant 0 : index
    %7 = vector.load %arg9[%c0_7, %c0_8, %c0_9] : memref<6x1x128xf32, #tpu.memory_space<vmem>>, vector<1x1x128xf32>
    %8 = vector.shape_cast %7 : vector<1x1x128xf32> to vector<1x128xf32>
    %c0_10 = arith.constant 0 : index
    %c0_11 = arith.constant 0 : index
    %c0_12 = arith.constant 0 : index
    %9 = vector.load %arg10[%c0_10, %c0_11, %c0_12] : memref<6x1x128xf32, #tpu.memory_space<vmem>>, vector<1x1x128xf32>
    %10 = vector.shape_cast %9 : vector<1x1x128xf32> to vector<1x128xf32>
    %cst_13 = arith.constant dense<0.000000e+00> : vector<2x128xf32>
    %11 = vector.multi_reduction <add>, %6, %cst_13 [1] : vector<2x64x128xf32> to vector<2x128xf32>
    %cst_14 = arith.constant 6.400000e+01 : f32
    %12 = vector.broadcast %cst_14 : f32 to vector<2x128xf32>
    %13 = arith.divf %11, %12 : vector<2x128xf32>
    %14 = arith.mulf %6, %6 : vector<2x64x128xf32>
    %cst_15 = arith.constant dense<0.000000e+00> : vector<2x128xf32>
    %15 = vector.multi_reduction <add>, %14, %cst_15 [1] : vector<2x64x128xf32> to vector<2x128xf32>
    %cst_16 = arith.constant 6.400000e+01 : f32
    %16 = vector.broadcast %cst_16 : f32 to vector<2x128xf32>
    %17 = arith.divf %15, %16 : vector<2x128xf32>
    %18 = tpu.concatenate %13, %17 in 0 : vector<2x128xf32>, vector<2x128xf32> -> vector<4x128xf32>
    %cst_17 = arith.constant dense<0.000000e+00> : vector<4x128xf32>
    %19 = tpu.matmul %18, %0, %cst_17 {dimension_numbers = #tpu.dot_dimension_numbers<[1], [0], [0], [1], [0, 0, 1, 1], [], []>} : vector<4x128xf32>, vector<128x128xf32>, vector<4x128xf32> -> vector<4x128xf32>
    %20 = vector.extract_strided_slice %19 {offsets = [0, 0], sizes = [2, 128], strides = [1, 1]} : vector<4x128xf32> to vector<2x128xf32>
    %21 = vector.extract_strided_slice %19 {offsets = [2, 0], sizes = [2, 128], strides = [1, 1]} : vector<4x128xf32> to vector<2x128xf32>
    %22 = arith.mulf %20, %20 : vector<2x128xf32>
    %23 = arith.subf %21, %22 : vector<2x128xf32>
    %cst_18 = arith.constant 9.99999974E-6 : f32
    %24 = vector.broadcast %cst_18 : f32 to vector<2x128xf32>
    %25 = arith.addf %23, %24 : vector<2x128xf32>
    %26 = math.rsqrt %25 : vector<2x128xf32>
    %27 = vector.broadcast %8 : vector<1x128xf32> to vector<2x128xf32>
    %28 = arith.mulf %26, %27 : vector<2x128xf32>
    %29 = vector.shape_cast %20 : vector<2x128xf32> to vector<2x1x128xf32>
    %30 = vector.broadcast %29 : vector<2x1x128xf32> to vector<2x64x128xf32>
    %31 = arith.subf %6, %30 : vector<2x64x128xf32>
    %32 = vector.shape_cast %28 : vector<2x128xf32> to vector<2x1x128xf32>
    %33 = vector.broadcast %32 : vector<2x1x128xf32> to vector<2x64x128xf32>
    %34 = arith.mulf %31, %33 : vector<2x64x128xf32>
    %35 = vector.shape_cast %10 : vector<1x128xf32> to vector<1x1x128xf32>
    %36 = vector.broadcast %35 : vector<1x1x128xf32> to vector<2x64x128xf32>
    %37 = arith.addf %34, %36 : vector<2x64x128xf32>
    %cst_19 = arith.constant 0.000000e+00 : f32
    %38 = vector.broadcast %cst_19 : f32 to vector<2x64x128xf32>
    %39 = arith.maximumf %37, %38 : vector<2x64x128xf32>
    %40 = vector.shape_cast %39 : vector<2x64x128xf32> to vector<128x128xf32>
    %41 = arith.truncf %40 : vector<128x128xf32> to vector<128x128xbf16>
    %c0_20 = arith.constant 0 : index
    %c0_21 = arith.constant 0 : index
    %c0_22 = arith.constant 0 : index
    %42 = vector.load %arg8[%c0_20, %c0_21, %c0_22] : memref<5x128x128xbf16, #tpu.memory_space<vmem>>, vector<1x128x128xbf16>
    %43 = vector.shape_cast %42 : vector<1x128x128xbf16> to vector<128x128xbf16>
    %cst_23 = arith.constant dense<0.000000e+00> : vector<128x128xf32>
    %44 = tpu.matmul %41, %43, %cst_23 {dimension_numbers = #tpu.dot_dimension_numbers<[1], [0], [0], [1], [0, 0, 1, 1], [], []>} : vector<128x128xbf16>, vector<128x128xbf16>, vector<128x128xf32> -> vector<128x128xf32>
    %45 = vector.extract_strided_slice %1 {offsets = [0, 6, 6, 0], sizes = [2, 8, 8, 128], strides = [1, 1, 1, 1]} : vector<2x26x32x128xbf16> to vector<2x8x8x128xbf16>
    %46 = vector.shape_cast %45 : vector<2x8x8x128xbf16> to vector<128x128xbf16>
    %47 = vector.extract_strided_slice %1 {offsets = [0, 6, 9, 0], sizes = [2, 8, 8, 128], strides = [1, 1, 1, 1]} : vector<2x26x32x128xbf16> to vector<2x8x8x128xbf16>
    %48 = vector.shape_cast %47 : vector<2x8x8x128xbf16> to vector<128x128xbf16>
    %49 = vector.extract_strided_slice %1 {offsets = [0, 6, 12, 0], sizes = [2, 8, 8, 128], strides = [1, 1, 1, 1]} : vector<2x26x32x128xbf16> to vector<2x8x8x128xbf16>
    %50 = vector.shape_cast %49 : vector<2x8x8x128xbf16> to vector<128x128xbf16>
    %51 = vector.extract_strided_slice %1 {offsets = [0, 9, 6, 0], sizes = [2, 8, 8, 128], strides = [1, 1, 1, 1]} : vector<2x26x32x128xbf16> to vector<2x8x8x128xbf16>
    %52 = vector.shape_cast %51 : vector<2x8x8x128xbf16> to vector<128x128xbf16>
    %53 = vector.extract_strided_slice %1 {offsets = [0, 9, 12, 0], sizes = [2, 8, 8, 128], strides = [1, 1, 1, 1]} : vector<2x26x32x128xbf16> to vector<2x8x8x128xbf16>
    %54 = vector.shape_cast %53 : vector<2x8x8x128xbf16> to vector<128x128xbf16>
    %55 = vector.extract_strided_slice %1 {offsets = [0, 12, 6, 0], sizes = [2, 8, 8, 128], strides = [1, 1, 1, 1]} : vector<2x26x32x128xbf16> to vector<2x8x8x128xbf16>
    %56 = vector.shape_cast %55 : vector<2x8x8x128xbf16> to vector<128x128xbf16>
    %57 = vector.extract_strided_slice %1 {offsets = [0, 12, 9, 0], sizes = [2, 8, 8, 128], strides = [1, 1, 1, 1]} : vector<2x26x32x128xbf16> to vector<2x8x8x128xbf16>
    %58 = vector.shape_cast %57 : vector<2x8x8x128xbf16> to vector<128x128xbf16>
    %59 = vector.extract_strided_slice %1 {offsets = [0, 12, 12, 0], sizes = [2, 8, 8, 128], strides = [1, 1, 1, 1]} : vector<2x26x32x128xbf16> to vector<2x8x8x128xbf16>
    %60 = vector.shape_cast %59 : vector<2x8x8x128xbf16> to vector<128x128xbf16>
    %61 = tpu.concatenate %46, %48, %50, %52, %3, %54, %56, %58, %60 in 1 : vector<128x128xbf16>, vector<128x128xbf16>, vector<128x128xbf16>, vector<128x128xbf16>, vector<128x128xbf16>, vector<128x128xbf16>, vector<128x128xbf16>, vector<128x128xbf16>, vector<128x128xbf16> -> vector<128x1152xbf16>
    %c0_24 = arith.constant 0 : index
    %c0_25 = arith.constant 0 : index
    %62 = vector.load %arg4[%c0_24, %c0_25] : memref<1152x128xbf16, #tpu.memory_space<vmem>>, vector<1152x128xbf16>
    %cst_26 = arith.constant dense<0.000000e+00> : vector<128x128xf32>
    %63 = tpu.matmul %61, %62, %cst_26 {dimension_numbers = #tpu.dot_dimension_numbers<[1], [0], [0], [1], [0, 0, 1, 1], [], []>} : vector<128x1152xbf16>, vector<1152x128xbf16>, vector<128x128xf32> -> vector<128x128xf32>
    %64 = vector.shape_cast %63 : vector<128x128xf32> to vector<2x64x128xf32>
    %c1 = arith.constant 1 : index
    %c0_27 = arith.constant 0 : index
    %c0_28 = arith.constant 0 : index
    %65 = vector.load %arg9[%c1, %c0_27, %c0_28] : memref<6x1x128xf32, #tpu.memory_space<vmem>>, vector<1x1x128xf32>
    %66 = vector.shape_cast %65 : vector<1x1x128xf32> to vector<1x128xf32>
    %c1_29 = arith.constant 1 : index
    %c0_30 = arith.constant 0 : index
    %c0_31 = arith.constant 0 : index
    %67 = vector.load %arg10[%c1_29, %c0_30, %c0_31] : memref<6x1x128xf32, #tpu.memory_space<vmem>>, vector<1x1x128xf32>
    %68 = vector.shape_cast %67 : vector<1x1x128xf32> to vector<1x128xf32>
    %cst_32 = arith.constant dense<0.000000e+00> : vector<2x128xf32>
    %69 = vector.multi_reduction <add>, %64, %cst_32 [1] : vector<2x64x128xf32> to vector<2x128xf32>
    %cst_33 = arith.constant 6.400000e+01 : f32
    %70 = vector.broadcast %cst_33 : f32 to vector<2x128xf32>
    %71 = arith.divf %69, %70 : vector<2x128xf32>
    %72 = arith.mulf %64, %64 : vector<2x64x128xf32>
    %cst_34 = arith.constant dense<0.000000e+00> : vector<2x128xf32>
    %73 = vector.multi_reduction <add>, %72, %cst_34 [1] : vector<2x64x128xf32> to vector<2x128xf32>
    %cst_35 = arith.constant 6.400000e+01 : f32
    %74 = vector.broadcast %cst_35 : f32 to vector<2x128xf32>
    %75 = arith.divf %73, %74 : vector<2x128xf32>
    %76 = tpu.concatenate %71, %75 in 0 : vector<2x128xf32>, vector<2x128xf32> -> vector<4x128xf32>
    %cst_36 = arith.constant dense<0.000000e+00> : vector<4x128xf32>
    %77 = tpu.matmul %76, %0, %cst_36 {dimension_numbers = #tpu.dot_dimension_numbers<[1], [0], [0], [1], [0, 0, 1, 1], [], []>} : vector<4x128xf32>, vector<128x128xf32>, vector<4x128xf32> -> vector<4x128xf32>
    %78 = vector.extract_strided_slice %77 {offsets = [0, 0], sizes = [2, 128], strides = [1, 1]} : vector<4x128xf32> to vector<2x128xf32>
    %79 = vector.extract_strided_slice %77 {offsets = [2, 0], sizes = [2, 128], strides = [1, 1]} : vector<4x128xf32> to vector<2x128xf32>
    %80 = arith.mulf %78, %78 : vector<2x128xf32>
    %81 = arith.subf %79, %80 : vector<2x128xf32>
    %cst_37 = arith.constant 9.99999974E-6 : f32
    %82 = vector.broadcast %cst_37 : f32 to vector<2x128xf32>
    %83 = arith.addf %81, %82 : vector<2x128xf32>
    %84 = math.rsqrt %83 : vector<2x128xf32>
    %85 = vector.broadcast %66 : vector<1x128xf32> to vector<2x128xf32>
    %86 = arith.mulf %84, %85 : vector<2x128xf32>
    %87 = vector.shape_cast %78 : vector<2x128xf32> to vector<2x1x128xf32>
    %88 = vector.broadcast %87 : vector<2x1x128xf32> to vector<2x64x128xf32>
    %89 = arith.subf %64, %88 : vector<2x64x128xf32>
    %90 = vector.shape_cast %86 : vector<2x128xf32> to vector<2x1x128xf32>
    %91 = vector.broadcast %90 : vector<2x1x128xf32> to vector<2x64x128xf32>
    %92 = arith.mulf %89, %91 : vector<2x64x128xf32>
    %93 = vector.shape_cast %68 : vector<1x128xf32> to vector<1x1x128xf32>
    %94 = vector.broadcast %93 : vector<1x1x128xf32> to vector<2x64x128xf32>
    %95 = arith.addf %92, %94 : vector<2x64x128xf32>
    %cst_38 = arith.constant 0.000000e+00 : f32
    %96 = vector.broadcast %cst_38 : f32 to vector<2x64x128xf32>
    %97 = arith.maximumf %95, %96 : vector<2x64x128xf32>
    %98 = vector.shape_cast %97 : vector<2x64x128xf32> to vector<128x128xf32>
    %99 = arith.truncf %98 : vector<128x128xf32> to vector<128x128xbf16>
    %c1_39 = arith.constant 1 : index
    %c0_40 = arith.constant 0 : index
    %c0_41 = arith.constant 0 : index
    %100 = vector.load %arg8[%c1_39, %c0_40, %c0_41] : memref<5x128x128xbf16, #tpu.memory_space<vmem>>, vector<1x128x128xbf16>
    %101 = vector.shape_cast %100 : vector<1x128x128xbf16> to vector<128x128xbf16>
    %cst_42 = arith.constant dense<0.000000e+00> : vector<128x128xf32>
    %102 = tpu.matmul %99, %101, %cst_42 {dimension_numbers = #tpu.dot_dimension_numbers<[1], [0], [0], [1], [0, 0, 1, 1], [], []>} : vector<128x128xbf16>, vector<128x128xbf16>, vector<128x128xf32> -> vector<128x128xf32>
    %103 = arith.addf %44, %102 : vector<128x128xf32>
    %104 = vector.extract_strided_slice %1 {offsets = [0, 3, 3, 0], sizes = [2, 8, 8, 128], strides = [1, 1, 1, 1]} : vector<2x26x32x128xbf16> to vector<2x8x8x128xbf16>
    %105 = vector.shape_cast %104 : vector<2x8x8x128xbf16> to vector<128x128xbf16>
    %106 = vector.extract_strided_slice %1 {offsets = [0, 3, 9, 0], sizes = [2, 8, 8, 128], strides = [1, 1, 1, 1]} : vector<2x26x32x128xbf16> to vector<2x8x8x128xbf16>
    %107 = vector.shape_cast %106 : vector<2x8x8x128xbf16> to vector<128x128xbf16>
    %108 = vector.extract_strided_slice %1 {offsets = [0, 3, 15, 0], sizes = [2, 8, 8, 128], strides = [1, 1, 1, 1]} : vector<2x26x32x128xbf16> to vector<2x8x8x128xbf16>
    %109 = vector.shape_cast %108 : vector<2x8x8x128xbf16> to vector<128x128xbf16>
    %110 = vector.extract_strided_slice %1 {offsets = [0, 9, 3, 0], sizes = [2, 8, 8, 128], strides = [1, 1, 1, 1]} : vector<2x26x32x128xbf16> to vector<2x8x8x128xbf16>
    %111 = vector.shape_cast %110 : vector<2x8x8x128xbf16> to vector<128x128xbf16>
    %112 = vector.extract_strided_slice %1 {offsets = [0, 9, 15, 0], sizes = [2, 8, 8, 128], strides = [1, 1, 1, 1]} : vector<2x26x32x128xbf16> to vector<2x8x8x128xbf16>
    %113 = vector.shape_cast %112 : vector<2x8x8x128xbf16> to vector<128x128xbf16>
    %114 = vector.extract_strided_slice %1 {offsets = [0, 15, 3, 0], sizes = [2, 8, 8, 128], strides = [1, 1, 1, 1]} : vector<2x26x32x128xbf16> to vector<2x8x8x128xbf16>
    %115 = vector.shape_cast %114 : vector<2x8x8x128xbf16> to vector<128x128xbf16>
    %116 = vector.extract_strided_slice %1 {offsets = [0, 15, 9, 0], sizes = [2, 8, 8, 128], strides = [1, 1, 1, 1]} : vector<2x26x32x128xbf16> to vector<2x8x8x128xbf16>
    %117 = vector.shape_cast %116 : vector<2x8x8x128xbf16> to vector<128x128xbf16>
    %118 = vector.extract_strided_slice %1 {offsets = [0, 15, 15, 0], sizes = [2, 8, 8, 128], strides = [1, 1, 1, 1]} : vector<2x26x32x128xbf16> to vector<2x8x8x128xbf16>
    %119 = vector.shape_cast %118 : vector<2x8x8x128xbf16> to vector<128x128xbf16>
    %120 = tpu.concatenate %105, %107, %109, %111, %3, %113, %115, %117, %119 in 1 : vector<128x128xbf16>, vector<128x128xbf16>, vector<128x128xbf16>, vector<128x128xbf16>, vector<128x128xbf16>, vector<128x128xbf16>, vector<128x128xbf16>, vector<128x128xbf16>, vector<128x128xbf16> -> vector<128x1152xbf16>
    %c0_43 = arith.constant 0 : index
    %c0_44 = arith.constant 0 : index
    %121 = vector.load %arg5[%c0_43, %c0_44] : memref<1152x128xbf16, #tpu.memory_space<vmem>>, vector<1152x128xbf16>
    %cst_45 = arith.constant dense<0.000000e+00> : vector<128x128xf32>
    %122 = tpu.matmul %120, %121, %cst_45 {dimension_numbers = #tpu.dot_dimension_numbers<[1], [0], [0], [1], [0, 0, 1, 1], [], []>} : vector<128x1152xbf16>, vector<1152x128xbf16>, vector<128x128xf32> -> vector<128x128xf32>
    %123 = vector.shape_cast %122 : vector<128x128xf32> to vector<2x64x128xf32>
    %c2 = arith.constant 2 : index
    %c0_46 = arith.constant 0 : index
    %c0_47 = arith.constant 0 : index
    %124 = vector.load %arg9[%c2, %c0_46, %c0_47] : memref<6x1x128xf32, #tpu.memory_space<vmem>>, vector<1x1x128xf32>
    %125 = vector.shape_cast %124 : vector<1x1x128xf32> to vector<1x128xf32>
    %c2_48 = arith.constant 2 : index
    %c0_49 = arith.constant 0 : index
    %c0_50 = arith.constant 0 : index
    %126 = vector.load %arg10[%c2_48, %c0_49, %c0_50] : memref<6x1x128xf32, #tpu.memory_space<vmem>>, vector<1x1x128xf32>
    %127 = vector.shape_cast %126 : vector<1x1x128xf32> to vector<1x128xf32>
    %cst_51 = arith.constant dense<0.000000e+00> : vector<2x128xf32>
    %128 = vector.multi_reduction <add>, %123, %cst_51 [1] : vector<2x64x128xf32> to vector<2x128xf32>
    %cst_52 = arith.constant 6.400000e+01 : f32
    %129 = vector.broadcast %cst_52 : f32 to vector<2x128xf32>
    %130 = arith.divf %128, %129 : vector<2x128xf32>
    %131 = arith.mulf %123, %123 : vector<2x64x128xf32>
    %cst_53 = arith.constant dense<0.000000e+00> : vector<2x128xf32>
    %132 = vector.multi_reduction <add>, %131, %cst_53 [1] : vector<2x64x128xf32> to vector<2x128xf32>
    %cst_54 = arith.constant 6.400000e+01 : f32
    %133 = vector.broadcast %cst_54 : f32 to vector<2x128xf32>
    %134 = arith.divf %132, %133 : vector<2x128xf32>
    %135 = tpu.concatenate %130, %134 in 0 : vector<2x128xf32>, vector<2x128xf32> -> vector<4x128xf32>
    %cst_55 = arith.constant dense<0.000000e+00> : vector<4x128xf32>
    %136 = tpu.matmul %135, %0, %cst_55 {dimension_numbers = #tpu.dot_dimension_numbers<[1], [0], [0], [1], [0, 0, 1, 1], [], []>} : vector<4x128xf32>, vector<128x128xf32>, vector<4x128xf32> -> vector<4x128xf32>
    %137 = vector.extract_strided_slice %136 {offsets = [0, 0], sizes = [2, 128], strides = [1, 1]} : vector<4x128xf32> to vector<2x128xf32>
    %138 = vector.extract_strided_slice %136 {offsets = [2, 0], sizes = [2, 128], strides = [1, 1]} : vector<4x128xf32> to vector<2x128xf32>
    %139 = arith.mulf %137, %137 : vector<2x128xf32>
    %140 = arith.subf %138, %139 : vector<2x128xf32>
    %cst_56 = arith.constant 9.99999974E-6 : f32
    %141 = vector.broadcast %cst_56 : f32 to vector<2x128xf32>
    %142 = arith.addf %140, %141 : vector<2x128xf32>
    %143 = math.rsqrt %142 : vector<2x128xf32>
    %144 = vector.broadcast %125 : vector<1x128xf32> to vector<2x128xf32>
    %145 = arith.mulf %143, %144 : vector<2x128xf32>
    %146 = vector.shape_cast %137 : vector<2x128xf32> to vector<2x1x128xf32>
    %147 = vector.broadcast %146 : vector<2x1x128xf32> to vector<2x64x128xf32>
    %148 = arith.subf %123, %147 : vector<2x64x128xf32>
    %149 = vector.shape_cast %145 : vector<2x128xf32> to vector<2x1x128xf32>
    %150 = vector.broadcast %149 : vector<2x1x128xf32> to vector<2x64x128xf32>
    %151 = arith.mulf %148, %150 : vector<2x64x128xf32>
    %152 = vector.shape_cast %127 : vector<1x128xf32> to vector<1x1x128xf32>
    %153 = vector.broadcast %152 : vector<1x1x128xf32> to vector<2x64x128xf32>
    %154 = arith.addf %151, %153 : vector<2x64x128xf32>
    %cst_57 = arith.constant 0.000000e+00 : f32
    %155 = vector.broadcast %cst_57 : f32 to vector<2x64x128xf32>
    %156 = arith.maximumf %154, %155 : vector<2x64x128xf32>
    %157 = vector.shape_cast %156 : vector<2x64x128xf32> to vector<128x128xf32>
    %158 = arith.truncf %157 : vector<128x128xf32> to vector<128x128xbf16>
    %c2_58 = arith.constant 2 : index
    %c0_59 = arith.constant 0 : index
    %c0_60 = arith.constant 0 : index
    %159 = vector.load %arg8[%c2_58, %c0_59, %c0_60] : memref<5x128x128xbf16, #tpu.memory_space<vmem>>, vector<1x128x128xbf16>
    %160 = vector.shape_cast %159 : vector<1x128x128xbf16> to vector<128x128xbf16>
    %cst_61 = arith.constant dense<0.000000e+00> : vector<128x128xf32>
    %161 = tpu.matmul %158, %160, %cst_61 {dimension_numbers = #tpu.dot_dimension_numbers<[1], [0], [0], [1], [0, 0, 1, 1], [], []>} : vector<128x128xbf16>, vector<128x128xbf16>, vector<128x128xf32> -> vector<128x128xf32>
    %162 = arith.addf %103, %161 : vector<128x128xf32>
    %163 = vector.extract_strided_slice %1 {offsets = [0, 0, 0, 0], sizes = [2, 8, 8, 128], strides = [1, 1, 1, 1]} : vector<2x26x32x128xbf16> to vector<2x8x8x128xbf16>
    %164 = vector.shape_cast %163 : vector<2x8x8x128xbf16> to vector<128x128xbf16>
    %165 = vector.extract_strided_slice %1 {offsets = [0, 0, 9, 0], sizes = [2, 8, 8, 128], strides = [1, 1, 1, 1]} : vector<2x26x32x128xbf16> to vector<2x8x8x128xbf16>
    %166 = vector.shape_cast %165 : vector<2x8x8x128xbf16> to vector<128x128xbf16>
    %167 = vector.extract_strided_slice %1 {offsets = [0, 0, 18, 0], sizes = [2, 8, 8, 128], strides = [1, 1, 1, 1]} : vector<2x26x32x128xbf16> to vector<2x8x8x128xbf16>
    %168 = vector.shape_cast %167 : vector<2x8x8x128xbf16> to vector<128x128xbf16>
    %169 = vector.extract_strided_slice %1 {offsets = [0, 9, 0, 0], sizes = [2, 8, 8, 128], strides = [1, 1, 1, 1]} : vector<2x26x32x128xbf16> to vector<2x8x8x128xbf16>
    %170 = vector.shape_cast %169 : vector<2x8x8x128xbf16> to vector<128x128xbf16>
    %171 = vector.extract_strided_slice %1 {offsets = [0, 9, 18, 0], sizes = [2, 8, 8, 128], strides = [1, 1, 1, 1]} : vector<2x26x32x128xbf16> to vector<2x8x8x128xbf16>
    %172 = vector.shape_cast %171 : vector<2x8x8x128xbf16> to vector<128x128xbf16>
    %173 = vector.extract_strided_slice %1 {offsets = [0, 18, 0, 0], sizes = [2, 8, 8, 128], strides = [1, 1, 1, 1]} : vector<2x26x32x128xbf16> to vector<2x8x8x128xbf16>
    %174 = vector.shape_cast %173 : vector<2x8x8x128xbf16> to vector<128x128xbf16>
    %175 = vector.extract_strided_slice %1 {offsets = [0, 18, 9, 0], sizes = [2, 8, 8, 128], strides = [1, 1, 1, 1]} : vector<2x26x32x128xbf16> to vector<2x8x8x128xbf16>
    %176 = vector.shape_cast %175 : vector<2x8x8x128xbf16> to vector<128x128xbf16>
    %177 = vector.extract_strided_slice %1 {offsets = [0, 18, 18, 0], sizes = [2, 8, 8, 128], strides = [1, 1, 1, 1]} : vector<2x26x32x128xbf16> to vector<2x8x8x128xbf16>
    %178 = vector.shape_cast %177 : vector<2x8x8x128xbf16> to vector<128x128xbf16>
    %179 = tpu.concatenate %164, %166, %168, %170, %3, %172, %174, %176, %178 in 1 : vector<128x128xbf16>, vector<128x128xbf16>, vector<128x128xbf16>, vector<128x128xbf16>, vector<128x128xbf16>, vector<128x128xbf16>, vector<128x128xbf16>, vector<128x128xbf16>, vector<128x128xbf16> -> vector<128x1152xbf16>
    %c0_62 = arith.constant 0 : index
    %c0_63 = arith.constant 0 : index
    %180 = vector.load %arg6[%c0_62, %c0_63] : memref<1152x128xbf16, #tpu.memory_space<vmem>>, vector<1152x128xbf16>
    %cst_64 = arith.constant dense<0.000000e+00> : vector<128x128xf32>
    %181 = tpu.matmul %179, %180, %cst_64 {dimension_numbers = #tpu.dot_dimension_numbers<[1], [0], [0], [1], [0, 0, 1, 1], [], []>} : vector<128x1152xbf16>, vector<1152x128xbf16>, vector<128x128xf32> -> vector<128x128xf32>
    %182 = vector.shape_cast %181 : vector<128x128xf32> to vector<2x64x128xf32>
    %c3 = arith.constant 3 : index
    %c0_65 = arith.constant 0 : index
    %c0_66 = arith.constant 0 : index
    %183 = vector.load %arg9[%c3, %c0_65, %c0_66] : memref<6x1x128xf32, #tpu.memory_space<vmem>>, vector<1x1x128xf32>
    %184 = vector.shape_cast %183 : vector<1x1x128xf32> to vector<1x128xf32>
    %c3_67 = arith.constant 3 : index
    %c0_68 = arith.constant 0 : index
    %c0_69 = arith.constant 0 : index
    %185 = vector.load %arg10[%c3_67, %c0_68, %c0_69] : memref<6x1x128xf32, #tpu.memory_space<vmem>>, vector<1x1x128xf32>
    %186 = vector.shape_cast %185 : vector<1x1x128xf32> to vector<1x128xf32>
    %cst_70 = arith.constant dense<0.000000e+00> : vector<2x128xf32>
    %187 = vector.multi_reduction <add>, %182, %cst_70 [1] : vector<2x64x128xf32> to vector<2x128xf32>
    %cst_71 = arith.constant 6.400000e+01 : f32
    %188 = vector.broadcast %cst_71 : f32 to vector<2x128xf32>
    %189 = arith.divf %187, %188 : vector<2x128xf32>
    %190 = arith.mulf %182, %182 : vector<2x64x128xf32>
    %cst_72 = arith.constant dense<0.000000e+00> : vector<2x128xf32>
    %191 = vector.multi_reduction <add>, %190, %cst_72 [1] : vector<2x64x128xf32> to vector<2x128xf32>
    %cst_73 = arith.constant 6.400000e+01 : f32
    %192 = vector.broadcast %cst_73 : f32 to vector<2x128xf32>
    %193 = arith.divf %191, %192 : vector<2x128xf32>
    %194 = tpu.concatenate %189, %193 in 0 : vector<2x128xf32>, vector<2x128xf32> -> vector<4x128xf32>
    %cst_74 = arith.constant dense<0.000000e+00> : vector<4x128xf32>
    %195 = tpu.matmul %194, %0, %cst_74 {dimension_numbers = #tpu.dot_dimension_numbers<[1], [0], [0], [1], [0, 0, 1, 1], [], []>} : vector<4x128xf32>, vector<128x128xf32>, vector<4x128xf32> -> vector<4x128xf32>
    %196 = vector.extract_strided_slice %195 {offsets = [0, 0], sizes = [2, 128], strides = [1, 1]} : vector<4x128xf32> to vector<2x128xf32>
    %197 = vector.extract_strided_slice %195 {offsets = [2, 0], sizes = [2, 128], strides = [1, 1]} : vector<4x128xf32> to vector<2x128xf32>
    %198 = arith.mulf %196, %196 : vector<2x128xf32>
    %199 = arith.subf %197, %198 : vector<2x128xf32>
    %cst_75 = arith.constant 9.99999974E-6 : f32
    %200 = vector.broadcast %cst_75 : f32 to vector<2x128xf32>
    %201 = arith.addf %199, %200 : vector<2x128xf32>
    %202 = math.rsqrt %201 : vector<2x128xf32>
    %203 = vector.broadcast %184 : vector<1x128xf32> to vector<2x128xf32>
    %204 = arith.mulf %202, %203 : vector<2x128xf32>
    %205 = vector.shape_cast %196 : vector<2x128xf32> to vector<2x1x128xf32>
    %206 = vector.broadcast %205 : vector<2x1x128xf32> to vector<2x64x128xf32>
    %207 = arith.subf %182, %206 : vector<2x64x128xf32>
    %208 = vector.shape_cast %204 : vector<2x128xf32> to vector<2x1x128xf32>
    %209 = vector.broadcast %208 : vector<2x1x128xf32> to vector<2x64x128xf32>
    %210 = arith.mulf %207, %209 : vector<2x64x128xf32>
    %211 = vector.shape_cast %186 : vector<1x128xf32> to vector<1x1x128xf32>
    %212 = vector.broadcast %211 : vector<1x1x128xf32> to vector<2x64x128xf32>
    %213 = arith.addf %210, %212 : vector<2x64x128xf32>
    %cst_76 = arith.constant 0.000000e+00 : f32
    %214 = vector.broadcast %cst_76 : f32 to vector<2x64x128xf32>
    %215 = arith.maximumf %213, %214 : vector<2x64x128xf32>
    %216 = vector.shape_cast %215 : vector<2x64x128xf32> to vector<128x128xf32>
    %217 = arith.truncf %216 : vector<128x128xf32> to vector<128x128xbf16>
    %c3_77 = arith.constant 3 : index
    %c0_78 = arith.constant 0 : index
    %c0_79 = arith.constant 0 : index
    %218 = vector.load %arg8[%c3_77, %c0_78, %c0_79] : memref<5x128x128xbf16, #tpu.memory_space<vmem>>, vector<1x128x128xbf16>
    %219 = vector.shape_cast %218 : vector<1x128x128xbf16> to vector<128x128xbf16>
    %cst_80 = arith.constant dense<0.000000e+00> : vector<128x128xf32>
    %220 = tpu.matmul %217, %219, %cst_80 {dimension_numbers = #tpu.dot_dimension_numbers<[1], [0], [0], [1], [0, 0, 1, 1], [], []>} : vector<128x128xbf16>, vector<128x128xbf16>, vector<128x128xf32> -> vector<128x128xf32>
    %221 = arith.addf %162, %220 : vector<128x128xf32>
    %c0_81 = arith.constant 0 : index
    %c0_82 = arith.constant 0 : index
    %222 = vector.load %arg2[%c0_81, %c0_82] : memref<2x128xbf16, #tpu.memory_space<vmem>>, vector<2x128xbf16>
    %cst_83 = arith.constant dense<0.000000e+00> : vector<2x128xf32>
    %223 = tpu.matmul %222, %3, %cst_83 {dimension_numbers = #tpu.dot_dimension_numbers<[1], [0], [0], [1], [0, 0, 1, 1], [], []>} : vector<2x128xbf16>, vector<128x128xbf16>, vector<2x128xf32> -> vector<2x128xf32>
    %cst_84 = arith.constant 1.562500e-02 : f32
    %224 = vector.broadcast %cst_84 : f32 to vector<2x128xf32>
    %225 = arith.mulf %223, %224 : vector<2x128xf32>
    %226 = arith.truncf %225 : vector<2x128xf32> to vector<2x128xbf16>
    %c0_85 = arith.constant 0 : index
    %c0_86 = arith.constant 0 : index
    %227 = vector.load %arg7[%c0_85, %c0_86] : memref<128x128xbf16, #tpu.memory_space<vmem>>, vector<128x128xbf16>
    %cst_87 = arith.constant dense<0.000000e+00> : vector<2x128xf32>
    %228 = tpu.matmul %226, %227, %cst_87 {dimension_numbers = #tpu.dot_dimension_numbers<[1], [0], [0], [1], [0, 0, 1, 1], [], []>} : vector<2x128xbf16>, vector<128x128xbf16>, vector<2x128xf32> -> vector<2x128xf32>
    %229 = vector.shape_cast %228 : vector<2x128xf32> to vector<2x1x128xf32>
    %c4 = arith.constant 4 : index
    %c0_88 = arith.constant 0 : index
    %c0_89 = arith.constant 0 : index
    %230 = vector.load %arg9[%c4, %c0_88, %c0_89] : memref<6x1x128xf32, #tpu.memory_space<vmem>>, vector<1x1x128xf32>
    %231 = vector.shape_cast %230 : vector<1x1x128xf32> to vector<1x128xf32>
    %c4_90 = arith.constant 4 : index
    %c0_91 = arith.constant 0 : index
    %c0_92 = arith.constant 0 : index
    %232 = vector.load %arg10[%c4_90, %c0_91, %c0_92] : memref<6x1x128xf32, #tpu.memory_space<vmem>>, vector<1x1x128xf32>
    %233 = vector.shape_cast %232 : vector<1x1x128xf32> to vector<1x128xf32>
    %cst_93 = arith.constant dense<0.000000e+00> : vector<2x128xf32>
    %234 = vector.multi_reduction <add>, %229, %cst_93 [1] : vector<2x1x128xf32> to vector<2x128xf32>
    %cst_94 = arith.constant 1.000000e+00 : f32
    %235 = vector.broadcast %cst_94 : f32 to vector<2x128xf32>
    %236 = arith.divf %234, %235 : vector<2x128xf32>
    %237 = arith.mulf %229, %229 : vector<2x1x128xf32>
    %cst_95 = arith.constant dense<0.000000e+00> : vector<2x128xf32>
    %238 = vector.multi_reduction <add>, %237, %cst_95 [1] : vector<2x1x128xf32> to vector<2x128xf32>
    %cst_96 = arith.constant 1.000000e+00 : f32
    %239 = vector.broadcast %cst_96 : f32 to vector<2x128xf32>
    %240 = arith.divf %238, %239 : vector<2x128xf32>
    %241 = tpu.concatenate %236, %240 in 0 : vector<2x128xf32>, vector<2x128xf32> -> vector<4x128xf32>
    %cst_97 = arith.constant dense<0.000000e+00> : vector<4x128xf32>
    %242 = tpu.matmul %241, %0, %cst_97 {dimension_numbers = #tpu.dot_dimension_numbers<[1], [0], [0], [1], [0, 0, 1, 1], [], []>} : vector<4x128xf32>, vector<128x128xf32>, vector<4x128xf32> -> vector<4x128xf32>
    %243 = vector.extract_strided_slice %242 {offsets = [0, 0], sizes = [2, 128], strides = [1, 1]} : vector<4x128xf32> to vector<2x128xf32>
    %244 = vector.extract_strided_slice %242 {offsets = [2, 0], sizes = [2, 128], strides = [1, 1]} : vector<4x128xf32> to vector<2x128xf32>
    %245 = arith.mulf %243, %243 : vector<2x128xf32>
    %246 = arith.subf %244, %245 : vector<2x128xf32>
    %cst_98 = arith.constant 9.99999974E-6 : f32
    %247 = vector.broadcast %cst_98 : f32 to vector<2x128xf32>
    %248 = arith.addf %246, %247 : vector<2x128xf32>
    %249 = math.rsqrt %248 : vector<2x128xf32>
    %250 = vector.broadcast %231 : vector<1x128xf32> to vector<2x128xf32>
    %251 = arith.mulf %249, %250 : vector<2x128xf32>
    %252 = vector.shape_cast %243 : vector<2x128xf32> to vector<2x1x128xf32>
    %253 = arith.subf %229, %252 : vector<2x1x128xf32>
    %254 = vector.shape_cast %251 : vector<2x128xf32> to vector<2x1x128xf32>
    %255 = arith.mulf %253, %254 : vector<2x1x128xf32>
    %256 = vector.shape_cast %233 : vector<1x128xf32> to vector<1x1x128xf32>
    %257 = vector.broadcast %256 : vector<1x1x128xf32> to vector<2x1x128xf32>
    %258 = arith.addf %255, %257 : vector<2x1x128xf32>
    %cst_99 = arith.constant 0.000000e+00 : f32
    %259 = vector.broadcast %cst_99 : f32 to vector<2x1x128xf32>
    %260 = arith.maximumf %258, %259 : vector<2x1x128xf32>
    %261 = vector.shape_cast %260 : vector<2x1x128xf32> to vector<2x128xf32>
    %262 = arith.truncf %261 : vector<2x128xf32> to vector<2x128xbf16>
    %c4_100 = arith.constant 4 : index
    %c0_101 = arith.constant 0 : index
    %c0_102 = arith.constant 0 : index
    %263 = vector.load %arg8[%c4_100, %c0_101, %c0_102] : memref<5x128x128xbf16, #tpu.memory_space<vmem>>, vector<1x128x128xbf16>
    %264 = vector.shape_cast %263 : vector<1x128x128xbf16> to vector<128x128xbf16>
    %cst_103 = arith.constant dense<0.000000e+00> : vector<2x128xf32>
    %265 = tpu.matmul %262, %264, %cst_103 {dimension_numbers = #tpu.dot_dimension_numbers<[1], [0], [0], [1], [0, 0, 1, 1], [], []>} : vector<2x128xbf16>, vector<128x128xbf16>, vector<2x128xf32> -> vector<2x128xf32>
    %266 = vector.shape_cast %221 : vector<128x128xf32> to vector<2x64x128xf32>
    %267 = vector.shape_cast %265 : vector<2x128xf32> to vector<2x1x128xf32>
    %268 = vector.broadcast %267 : vector<2x1x128xf32> to vector<2x64x128xf32>
    %269 = arith.addf %266, %268 : vector<2x64x128xf32>
    %c5 = arith.constant 5 : index
    %c0_104 = arith.constant 0 : index
    %c0_105 = arith.constant 0 : index
    %270 = vector.load %arg9[%c5, %c0_104, %c0_105] : memref<6x1x128xf32, #tpu.memory_space<vmem>>, vector<1x1x128xf32>
    %271 = vector.shape_cast %270 : vector<1x1x128xf32> to vector<1x128xf32>
    %c5_106 = arith.constant 5 : index
    %c0_107 = arith.constant 0 : index
    %c0_108 = arith.constant 0 : index
    %272 = vector.load %arg10[%c5_106, %c0_107, %c0_108] : memref<6x1x128xf32, #tpu.memory_space<vmem>>, vector<1x1x128xf32>
    %273 = vector.shape_cast %272 : vector<1x1x128xf32> to vector<1x128xf32>
    %cst_109 = arith.constant dense<0.000000e+00> : vector<2x128xf32>
    %274 = vector.multi_reduction <add>, %269, %cst_109 [1] : vector<2x64x128xf32> to vector<2x128xf32>
    %cst_110 = arith.constant 6.400000e+01 : f32
    %275 = vector.broadcast %cst_110 : f32 to vector<2x128xf32>
    %276 = arith.divf %274, %275 : vector<2x128xf32>
    %277 = arith.mulf %269, %269 : vector<2x64x128xf32>
    %cst_111 = arith.constant dense<0.000000e+00> : vector<2x128xf32>
    %278 = vector.multi_reduction <add>, %277, %cst_111 [1] : vector<2x64x128xf32> to vector<2x128xf32>
    %cst_112 = arith.constant 6.400000e+01 : f32
    %279 = vector.broadcast %cst_112 : f32 to vector<2x128xf32>
    %280 = arith.divf %278, %279 : vector<2x128xf32>
    %281 = tpu.concatenate %276, %280 in 0 : vector<2x128xf32>, vector<2x128xf32> -> vector<4x128xf32>
    %cst_113 = arith.constant dense<0.000000e+00> : vector<4x128xf32>
    %282 = tpu.matmul %281, %0, %cst_113 {dimension_numbers = #tpu.dot_dimension_numbers<[1], [0], [0], [1], [0, 0, 1, 1], [], []>} : vector<4x128xf32>, vector<128x128xf32>, vector<4x128xf32> -> vector<4x128xf32>
    %283 = vector.extract_strided_slice %282 {offsets = [0, 0], sizes = [2, 128], strides = [1, 1]} : vector<4x128xf32> to vector<2x128xf32>
    %284 = vector.extract_strided_slice %282 {offsets = [2, 0], sizes = [2, 128], strides = [1, 1]} : vector<4x128xf32> to vector<2x128xf32>
    %285 = arith.mulf %283, %283 : vector<2x128xf32>
    %286 = arith.subf %284, %285 : vector<2x128xf32>
    %cst_114 = arith.constant 9.99999974E-6 : f32
    %287 = vector.broadcast %cst_114 : f32 to vector<2x128xf32>
    %288 = arith.addf %286, %287 : vector<2x128xf32>
    %289 = math.rsqrt %288 : vector<2x128xf32>
    %290 = vector.broadcast %271 : vector<1x128xf32> to vector<2x128xf32>
    %291 = arith.mulf %289, %290 : vector<2x128xf32>
    %292 = vector.shape_cast %283 : vector<2x128xf32> to vector<2x1x128xf32>
    %293 = vector.broadcast %292 : vector<2x1x128xf32> to vector<2x64x128xf32>
    %294 = arith.subf %269, %293 : vector<2x64x128xf32>
    %295 = vector.shape_cast %291 : vector<2x128xf32> to vector<2x1x128xf32>
    %296 = vector.broadcast %295 : vector<2x1x128xf32> to vector<2x64x128xf32>
    %297 = arith.mulf %294, %296 : vector<2x64x128xf32>
    %298 = vector.shape_cast %273 : vector<1x128xf32> to vector<1x1x128xf32>
    %299 = vector.broadcast %298 : vector<1x1x128xf32> to vector<2x64x128xf32>
    %300 = arith.addf %297, %299 : vector<2x64x128xf32>
    %cst_115 = arith.constant 0.000000e+00 : f32
    %301 = vector.broadcast %cst_115 : f32 to vector<2x64x128xf32>
    %302 = arith.maximumf %300, %301 : vector<2x64x128xf32>
    %303 = arith.truncf %302 : vector<2x64x128xf32> to vector<2x64x128xbf16>
    %c0_116 = arith.constant 0 : index
    %c0_117 = arith.constant 0 : index
    %c0_118 = arith.constant 0 : index
    %304 = vector.load %arg12[%c0_116, %c0_117, %c0_118] : memref<2x64x128xbf16, #tpu.memory_space<vmem>>, vector<2x64x128xbf16>
    tpu.vector_store %arg12[%c0_116, %c0_117, %c0_118], %303 {strides = array<i32>} : memref<2x64x128xbf16, #tpu.memory_space<vmem>>, vector<2x64x128xbf16>,
    return
  }
  func.func @transform_0(%arg0: i32) -> (i32, i32, i32, i32) {
    %c0_i32 = arith.constant 0 : i32
    %c0_i32_0 = arith.constant 0 : i32
    %c0_i32_1 = arith.constant 0 : i32
    %c0_i32_2 = arith.constant 0 : i32
    return %arg0, %c0_i32, %c0_i32_0, %c0_i32_1 : i32, i32, i32, i32
  }
  func.func @transform_1(%arg0: i32) -> (i32, i32) {
    %c0_i32 = arith.constant 0 : i32
    %c0_i32_0 = arith.constant 0 : i32
    %c0_i32_1 = arith.constant 0 : i32
    return %c0_i32, %c0_i32_0 : i32, i32
  }
  func.func @transform_2(%arg0: i32) -> (i32, i32) {
    %c0_i32 = arith.constant 0 : i32
    %c0_i32_0 = arith.constant 0 : i32
    %c0_i32_1 = arith.constant 0 : i32
    return %c0_i32, %c0_i32_0 : i32, i32
  }
  func.func @transform_3(%arg0: i32) -> (i32, i32) {
    %c0_i32 = arith.constant 0 : i32
    %c0_i32_0 = arith.constant 0 : i32
    %c0_i32_1 = arith.constant 0 : i32
    return %c0_i32, %c0_i32_0 : i32, i32
  }
  func.func @transform_4(%arg0: i32) -> (i32, i32) {
    %c0_i32 = arith.constant 0 : i32
    %c0_i32_0 = arith.constant 0 : i32
    %c0_i32_1 = arith.constant 0 : i32
    return %c0_i32, %c0_i32_0 : i32, i32
  }
  func.func @transform_5(%arg0: i32) -> (i32, i32) {
    %c0_i32 = arith.constant 0 : i32
    %c0_i32_0 = arith.constant 0 : i32
    %c0_i32_1 = arith.constant 0 : i32
    return %c0_i32, %c0_i32_0 : i32, i32
  }
  func.func @transform_6(%arg0: i32) -> (i32, i32) {
    %c0_i32 = arith.constant 0 : i32
    %c0_i32_0 = arith.constant 0 : i32
    %c0_i32_1 = arith.constant 0 : i32
    return %c0_i32, %c0_i32_0 : i32, i32
  }
  func.func @transform_7(%arg0: i32) -> (i32, i32, i32) {
    %c0_i32 = arith.constant 0 : i32
    %c0_i32_0 = arith.constant 0 : i32
    %c0_i32_1 = arith.constant 0 : i32
    %c0_i32_2 = arith.constant 0 : i32
    return %c0_i32, %c0_i32_0, %c0_i32_1 : i32, i32, i32
  }
  func.func @transform_8(%arg0: i32) -> (i32, i32, i32) {
    %c0_i32 = arith.constant 0 : i32
    %c0_i32_0 = arith.constant 0 : i32
    %c0_i32_1 = arith.constant 0 : i32
    %c0_i32_2 = arith.constant 0 : i32
    return %c0_i32, %c0_i32_0, %c0_i32_1 : i32, i32, i32
  }
  func.func @transform_9(%arg0: i32) -> (i32, i32, i32) {
    %c0_i32 = arith.constant 0 : i32
    %c0_i32_0 = arith.constant 0 : i32
    %c0_i32_1 = arith.constant 0 : i32
    %c0_i32_2 = arith.constant 0 : i32
    return %c0_i32, %c0_i32_0, %c0_i32_1 : i32, i32, i32
  }
  func.func @transform_10(%arg0: i32) -> (i32, i32) {
    %c0_i32 = arith.constant 0 : i32
    %c0_i32_0 = arith.constant 0 : i32
    %c0_i32_1 = arith.constant 0 : i32
    return %c0_i32, %c0_i32_0 : i32, i32
  }
  func.func @transform_11(%arg0: i32) -> (i32, i32, i32) {
    %c0_i32 = arith.constant 0 : i32
    %c0_i32_0 = arith.constant 0 : i32
    %c0_i32_1 = arith.constant 0 : i32
    return %arg0, %c0_i32, %c0_i32_0 : i32, i32, i32
  }
}

</mosaic_0001>

<llo_original>
// kernel: tpu_custom_call.1
$region0: #{tpu_custom_call.1}
  #allocation0 [shape = 'u32[]', space=smem, size = 0x4, offset = 0x4, fixed_abs, tag = 'smem constant byte address 0x4 - core index']
  #allocation1 [shape = 'u32[144,128]{1,0:T(1,128)}', space=vmem, size = 0x12000, scoped, tag = 'internal scratch']
  %s0 = inlined_call_operand.hbm [shape: bf16[4,26,32,128], index: 0, kind: input, shape index: {}]
  %s1 = inlined_call_operand.hbm [shape: bf16[2,128], index: 1, kind: input, shape index: {}]
  %s2 = inlined_call_operand.hbm [shape: bf16[128,128], index: 2, kind: input, shape index: {}]
  %s3 = inlined_call_operand.hbm [shape: bf16[1152,128], index: 3, kind: input, shape index: {}]
  %s4 = inlined_call_operand.hbm [shape: bf16[1152,128], index: 4, kind: input, shape index: {}]
  %s5 = inlined_call_operand.hbm [shape: bf16[1152,128], index: 5, kind: input, shape index: {}]
  %s6 = inlined_call_operand.hbm [shape: bf16[128,128], index: 6, kind: input, shape index: {}]
  %s7 = inlined_call_operand.hbm [shape: bf16[5,128,128], index: 7, kind: input, shape index: {}]
  %s8 = inlined_call_operand.hbm [shape: f32[6,1,128], index: 8, kind: input, shape index: {}]
  %s9 = inlined_call_operand.hbm [shape: f32[6,1,128], index: 9, kind: input, shape index: {}]
  %s10 = inlined_call_operand.hbm [shape: f32[128,128], index: 10, kind: input, shape index: {}]
  %s11 = inlined_call_operand.hbm [shape: bf16[4,64,128], index: 11, kind: output, shape index: {}]
  %s12 = sld [smem:[#allocation0]]
  $region121: #{tpu_custom_call.1} parent=0
    _
  %s14 = ssub.s32 1, %s12
  %s15 = scalar_select 0, %s14, %s12
  $region1: #{tpu_custom_call.1} parent=0
    #allocation2 [shape = 'u8[851968]{0}', space=vmem, size = 0xd0000, scoped, tag = 'input window, operand 0']
    #allocation3 [shape = 's32[2]{0}', space=sflag, size = 0x8, scoped, tag = 'scoped memory for tpu_custom_call.1']
    #allocation4 [shape = 's32[2]{0}', space=sflag, size = 0x8, scoped, tag = 'scoped memory for tpu_custom_call.1']
    #allocation5 [shape = 'u8[512]{0}', space=vmem, size = 0x400, scoped, tag = 'input window, operand 1, single buffered']
    #allocation6 [shape = 's32[1]{0}', space=sflag, size = 0x4, scoped, tag = 'scoped memory for tpu_custom_call.1']
    #allocation7 [shape = 'u8[32768]{0}', space=vmem, size = 0x8000, scoped, tag = 'input window, operand 2, single buffered']
    #allocation8 [shape = 'u8[294912]{0}', space=vmem, size = 0x48000, scoped, tag = 'input window, operand 3, single buffered']
    #allocation9 [shape = 's32[1]{0}', space=sflag, size = 0x4, scoped, tag = 'scoped memory for tpu_custom_call.1']
    #allocation10 [shape = 'u8[294912]{0}', space=vmem, size = 0x48000, scoped, tag = 'input window, operand 4, single buffered']
    #allocation11 [shape = 'u8[294912]{0}', space=vmem, size = 0x48000, scoped, tag = 'input window, operand 5, single buffered']
    #allocation12 [shape = 's32[1]{0}', space=sflag, size = 0x4, scoped, tag = 'scoped memory for tpu_custom_call.1']
    #allocation13 [shape = 'u8[32768]{0}', space=vmem, size = 0x8000, scoped, tag = 'input window, operand 6, single buffered']
    #allocation14 [shape = 'u8[163840]{0}', space=vmem, size = 0x28000, scoped, tag = 'input window, operand 7, single buffered']
    #allocation15 [shape = 's32[1]{0}', space=sflag, size = 0x4, scoped, tag = 'scoped memory for tpu_custom_call.1']
    #allocation16 [shape = 'u8[3072]{0}', space=vmem, size = 0xc00, scoped, tag = 'input window, operand 8, single buffered']
    #allocation17 [shape = 'u8[3072]{0}', space=vmem, size = 0xc00, scoped, tag = 'input window, operand 9, single buffered']
    #allocation18 [shape = 's32[1]{0}', space=sflag, size = 0x4, scoped, tag = 'scoped memory for tpu_custom_call.1']
    #allocation19 [shape = 'u8[65536]{0}', space=vmem, size = 0x10000, scoped, tag = 'input window, operand 10, single buffered']
    #allocation20 [shape = 'u8[65536]{0}', space=vmem, size = 0x10000, scoped, tag = 'output window, operand 0']
    %16 = vsyncpa [#allocation3], 0
    %s17 = scalar_lea.sflag [#allocation3], 1
    %18 = vsyncpa %s17, 0
    %19 = vsyncpa [#allocation6], 0
    %20 = vsyncpa [#allocation9], 0
    %21 = vsyncpa [#allocation12], 0
    %22 = vsyncpa [#allocation15], 0
    %23 = vsyncpa [#allocation18], 0
    %24 = vsyncpa [#allocation4], 0
    %s25 = scalar_lea.sflag [#allocation4], 1
    %26 = vsyncpa %s25, 0
    loop: start=0, step=1, limit=4
    $region2: #{tpu_custom_call.1} parent=1 // loop_pre_header
      _
    $region3: #{tpu_custom_call.1} parent=1 // loop_header
      %s28 = sphi 0, %s32
      %p29 = scmp.ge.s32.totalorder %s28, 4
      %s38 = sphi 0, %s40
      %s41 = sphi 0, %s38
      %s42 = sphi 0, %s41
      %s58 = sphi 0, %s42
      %s62 = sphi 0, %s62
      %s64 = sphi 0, %s62
      %s65 = sphi 0, %s64
      %s79 = sphi 0, %s65
      %s83 = sphi 0, %s83
      %s85 = sphi 0, %s83
      %s86 = sphi 0, %s85
      %s100 = sphi 0, %s86
      %s104 = sphi 0, %s104
      %s106 = sphi 0, %s104
      %s107 = sphi 0, %s106
      %s121 = sphi 0, %s107
      %s125 = sphi 0, %s125
      %s127 = sphi 0, %s125
      %s128 = sphi 0, %s127
      %s142 = sphi 0, %s128
      %s146 = sphi 0, %s146
      %s148 = sphi 0, %s146
      %s149 = sphi 0, %s148
      %s163 = sphi 0, %s149
      %s167 = sphi 0, %s167
      %s169 = sphi 0, %s167
      %s170 = sphi 0, %s169
      %s184 = sphi 0, %s170
      %s188 = sphi 0, %s188
      %s190 = sphi 0, %s188
      %s191 = sphi 0, %s190
      %s205 = sphi 0, %s191
      %s209 = sphi 0, %s209
      %s211 = sphi 0, %s209
      %s212 = sphi 0, %s211
      %s226 = sphi 0, %s212
      %s230 = sphi 0, %s230
      %s232 = sphi 0, %s230
      %s233 = sphi 0, %s232
      %s247 = sphi 0, %s233
      %s251 = sphi 0, %s251
      %s253 = sphi 0, %s251
      %s254 = sphi 0, %s253
      %s268 = sphi 0, %s254
      %s274 = sphi 0, %s276
      %s277 = sphi 0, %s274
      %s278 = sphi 0, %s277
      %s294 = sphi 0, %s278
    $region4: #{tpu_custom_call.1} parent=1 // loop_header_branch
      %31 = sbr.rel (%p29) target = $region8
    $region5: #{tpu_custom_call.1} parent=1 // loop_body
      %s33 = ssub.s32 %s28, 1
      %s34 = ssub.s32 %s28, 2
      %s35 = sadd.s32 %s28, 1
      %s36 = ssub.s32 %s28, %s35
      %p37 = scmp.eq.s32.totalorder %s36, 0
      %s39 = sadd.s32 %s38, 1
      %s40 = scalar_select %p37, %s38, %s39
      %p43 = pneg %p37
      %p44 = scmp.eq.s32.totalorder %s28, 1
      %p45 = por %p43, %p44
      %p46 = scmp.ne.s32.totalorder %s38, %s41
      %p47 = scmp.eq.s32.totalorder %s28, 0
      %p48 = por %p46, %p47
      %p49 = scmp.ne.s32.totalorder %s38, %s41
      %p50 = scmp.eq.s32.totalorder %s33, 1
      %p51 = por %p49, %p50
      %p52 = scmp.ne.s32.totalorder %s41, %s42
      %p53 = scmp.eq.s32.totalorder %s33, 0
      %p54 = por %p52, %p53
      %p55 = scmp.ne.s32.totalorder %s41, %s42
      %p56 = scmp.eq.s32.totalorder %s34, 1
      %p57 = por %p55, %p56
      %p59 = scmp.ne.s32.totalorder %s42, %s58
      %p60 = scmp.eq.s32.totalorder %s34, 0
      %p61 = por %p59, %p60
      %s63 = sadd.s32 %s62, 1
      %p66 = scmp.eq.s32.totalorder %s28, 1
      %p67 = scmp.ne.s32.totalorder %s62, %s64
      %p68 = scmp.eq.s32.totalorder %s28, 0
      %p69 = por %p67, %p68
      %p70 = scmp.ne.s32.totalorder %s62, %s64
      %p71 = scmp.eq.s32.totalorder %s33, 1
      %p72 = por %p70, %p71
      %p73 = scmp.ne.s32.totalorder %s64, %s65
      %p74 = scmp.eq.s32.totalorder %s33, 0
      %p75 = por %p73, %p74
      %p76 = scmp.ne.s32.totalorder %s64, %s65
      %p77 = scmp.eq.s32.totalorder %s34, 1
      %p78 = por %p76, %p77
      %p80 = scmp.ne.s32.totalorder %s65, %s79
      %p81 = scmp.eq.s32.totalorder %s34, 0
      %p82 = por %p80, %p81
      %s84 = sadd.s32 %s83, 1
      %p87 = scmp.eq.s32.totalorder %s28, 1
      %p88 = scmp.ne.s32.totalorder %s83, %s85
      %p89 = scmp.eq.s32.totalorder %s28, 0
      %p90 = por %p88, %p89
      %p91 = scmp.ne.s32.totalorder %s83, %s85
      %p92 = scmp.eq.s32.totalorder %s33, 1
      %p93 = por %p91, %p92
      %p94 = scmp.ne.s32.totalorder %s85, %s86
      %p95 = scmp.eq.s32.totalorder %s33, 0
      %p96 = por %p94, %p95
      %p97 = scmp.ne.s32.totalorder %s85, %s86
      %p98 = scmp.eq.s32.totalorder %s34, 1
      %p99 = por %p97, %p98
      %p101 = scmp.ne.s32.totalorder %s86, %s100
      %p102 = scmp.eq.s32.totalorder %s34, 0
      %p103 = por %p101, %p102
      %s105 = sadd.s32 %s104, 1
      %p108 = scmp.eq.s32.totalorder %s28, 1
      %p109 = scmp.ne.s32.totalorder %s104, %s106
      %p110 = scmp.eq.s32.totalorder %s28, 0
      %p111 = por %p109, %p110
      %p112 = scmp.ne.s32.totalorder %s104, %s106
      %p113 = scmp.eq.s32.totalorder %s33, 1
      %p114 = por %p112, %p113
      %p115 = scmp.ne.s32.totalorder %s106, %s107
      %p116 = scmp.eq.s32.totalorder %s33, 0
      %p117 = por %p115, %p116
      %p118 = scmp.ne.s32.totalorder %s106, %s107
      %p119 = scmp.eq.s32.totalorder %s34, 1
      %p120 = por %p118, %p119
      %p122 = scmp.ne.s32.totalorder %s107, %s121
      %p123 = scmp.eq.s32.totalorder %s34, 0
      %p124 = por %p122, %p123
      %s126 = sadd.s32 %s125, 1
      %p129 = scmp.eq.s32.totalorder %s28, 1
      %p130 = scmp.ne.s32.totalorder %s125, %s127
      %p131 = scmp.eq.s32.totalorder %s28, 0
      %p132 = por %p130, %p131
      %p133 = scmp.ne.s32.totalorder %s125, %s127
      %p134 = scmp.eq.s32.totalorder %s33, 1
      %p135 = por %p133, %p134
      %p136 = scmp.ne.s32.totalorder %s127, %s128
      %p137 = scmp.eq.s32.totalorder %s33, 0
      %p138 = por %p136, %p137
      %p139 = scmp.ne.s32.totalorder %s127, %s128
      %p140 = scmp.eq.s32.totalorder %s34, 1
      %p141 = por %p139, %p140
      %p143 = scmp.ne.s32.totalorder %s128, %s142
      %p144 = scmp.eq.s32.totalorder %s34, 0
      %p145 = por %p143, %p144
      %s147 = sadd.s32 %s146, 1
      %p150 = scmp.eq.s32.totalorder %s28, 1
      %p151 = scmp.ne.s32.totalorder %s146, %s148
      %p152 = scmp.eq.s32.totalorder %s28, 0
      %p153 = por %p151, %p152
      %p154 = scmp.ne.s32.totalorder %s146, %s148
      %p155 = scmp.eq.s32.totalorder %s33, 1
      %p156 = por %p154, %p155
      %p157 = scmp.ne.s32.totalorder %s148, %s149
      %p158 = scmp.eq.s32.totalorder %s33, 0
      %p159 = por %p157, %p158
      %p160 = scmp.ne.s32.totalorder %s148, %s149
      %p161 = scmp.eq.s32.totalorder %s34, 1
      %p162 = por %p160, %p161
      %p164 = scmp.ne.s32.totalorder %s149, %s163
      %p165 = scmp.eq.s32.totalorder %s34, 0
      %p166 = por %p164, %p165
      %s168 = sadd.s32 %s167, 1
      %p171 = scmp.eq.s32.totalorder %s28, 1
      %p172 = scmp.ne.s32.totalorder %s167, %s169
      %p173 = scmp.eq.s32.totalorder %s28, 0
      %p174 = por %p172, %p173
      %p175 = scmp.ne.s32.totalorder %s167, %s169
      %p176 = scmp.eq.s32.totalorder %s33, 1
      %p177 = por %p175, %p176
      %p178 = scmp.ne.s32.totalorder %s169, %s170
      %p179 = scmp.eq.s32.totalorder %s33, 0
      %p180 = por %p178, %p179
      %p181 = scmp.ne.s32.totalorder %s169, %s170
      %p182 = scmp.eq.s32.totalorder %s34, 1
      %p183 = por %p181, %p182
      %p185 = scmp.ne.s32.totalorder %s170, %s184
      %p186 = scmp.eq.s32.totalorder %s34, 0
      %p187 = por %p185, %p186
      %s189 = sadd.s32 %s188, 1
      %p192 = scmp.eq.s32.totalorder %s28, 1
      %p193 = scmp.ne.s32.totalorder %s188, %s190
      %p194 = scmp.eq.s32.totalorder %s28, 0
      %p195 = por %p193, %p194
      %p196 = scmp.ne.s32.totalorder %s188, %s190
      %p197 = scmp.eq.s32.totalorder %s33, 1
      %p198 = por %p196, %p197
      %p199 = scmp.ne.s32.totalorder %s190, %s191
      %p200 = scmp.eq.s32.totalorder %s33, 0
      %p201 = por %p199, %p200
      %p202 = scmp.ne.s32.totalorder %s190, %s191
      %p203 = scmp.eq.s32.totalorder %s34, 1
      %p204 = por %p202, %p203
      %p206 = scmp.ne.s32.totalorder %s191, %s205
      %p207 = scmp.eq.s32.totalorder %s34, 0
      %p208 = por %p206, %p207
      %s210 = sadd.s32 %s209, 1
      %p213 = scmp.eq.s32.totalorder %s28, 1
      %p214 = scmp.ne.s32.totalorder %s209, %s211
      %p215 = scmp.eq.s32.totalorder %s28, 0
      %p216 = por %p214, %p215
      %p217 = scmp.ne.s32.totalorder %s209, %s211
      %p218 = scmp.eq.s32.totalorder %s33, 1
      %p219 = por %p217, %p218
      %p220 = scmp.ne.s32.totalorder %s211, %s212
      %p221 = scmp.eq.s32.totalorder %s33, 0
      %p222 = por %p220, %p221
      %p223 = scmp.ne.s32.totalorder %s211, %s212
      %p224 = scmp.eq.s32.totalorder %s34, 1
      %p225 = por %p223, %p224
      %p227 = scmp.ne.s32.totalorder %s212, %s226
      %p228 = scmp.eq.s32.totalorder %s34, 0
      %p229 = por %p227, %p228
      %s231 = sadd.s32 %s230, 1
      %p234 = scmp.eq.s32.totalorder %s28, 1
      %p235 = scmp.ne.s32.totalorder %s230, %s232
      %p236 = scmp.eq.s32.totalorder %s28, 0
      %p237 = por %p235, %p236
      %p238 = scmp.ne.s32.totalorder %s230, %s232
      %p239 = scmp.eq.s32.totalorder %s33, 1
      %p240 = por %p238, %p239
      %p241 = scmp.ne.s32.totalorder %s232, %s233
      %p242 = scmp.eq.s32.totalorder %s33, 0
      %p243 = por %p241, %p242
      %p244 = scmp.ne.s32.totalorder %s232, %s233
      %p245 = scmp.eq.s32.totalorder %s34, 1
      %p246 = por %p244, %p245
      %p248 = scmp.ne.s32.totalorder %s233, %s247
      %p249 = scmp.eq.s32.totalorder %s34, 0
      %p250 = por %p248, %p249
      %s252 = sadd.s32 %s251, 1
      %p255 = scmp.eq.s32.totalorder %s28, 1
      %p256 = scmp.ne.s32.totalorder %s251, %s253
      %p257 = scmp.eq.s32.totalorder %s28, 0
      %p258 = por %p256, %p257
      %p259 = scmp.ne.s32.totalorder %s251, %s253
      %p260 = scmp.eq.s32.totalorder %s33, 1
      %p261 = por %p259, %p260
      %p262 = scmp.ne.s32.totalorder %s253, %s254
      %p263 = scmp.eq.s32.totalorder %s33, 0
      %p264 = por %p262, %p263
      %p265 = scmp.ne.s32.totalorder %s253, %s254
      %p266 = scmp.eq.s32.totalorder %s34, 1
      %p267 = por %p265, %p266
      %p269 = scmp.ne.s32.totalorder %s254, %s268
      %p270 = scmp.eq.s32.totalorder %s34, 0
      %p271 = por %p269, %p270
      %s272 = ssub.s32 %s28, %s35
      %p273 = scmp.eq.s32.totalorder %s272, 0
      %s275 = sadd.s32 %s274, 1
      %s276 = scalar_select %p273, %s274, %s275
      %p279 = pneg %p273
      %p280 = scmp.eq.s32.totalorder %s28, 1
      %p281 = por %p279, %p280
      %p282 = scmp.ne.s32.totalorder %s274, %s277
      %p283 = scmp.eq.s32.totalorder %s28, 0
      %p284 = por %p282, %p283
      %p285 = scmp.ne.s32.totalorder %s274, %s277
      %p286 = scmp.eq.s32.totalorder %s33, 1
      %p287 = por %p285, %p286
      %p288 = scmp.ne.s32.totalorder %s277, %s278
      %p289 = scmp.eq.s32.totalorder %s33, 0
      %p290 = por %p288, %p289
      %p291 = scmp.ne.s32.totalorder %s277, %s278
      %p292 = scmp.eq.s32.totalorder %s34, 1
      %p293 = por %p291, %p292
      %p295 = scmp.ne.s32.totalorder %s278, %s294
      %p296 = scmp.eq.s32.totalorder %s34, 0
      %p297 = por %p295, %p296
      %p298 = scmp.le.s32.totalorder 1, %s28
      %p299 = scmp.lt.s32.totalorder %s28, 3
      %p300 = pnand %p298, %p299
      %p301 = pneg %p300
      // Predicated region
      $region9: #{tpu_custom_call.1} parent=5 // pred_check
        _
      $region10: #{tpu_custom_call.1} parent=5 // pred_check_branch
        %303 = sbr.rel (%p300) target = $region12
      $region11: #{tpu_custom_call.1} parent=5 // pred_region
        %s304 = ssub.s32 %s28, 1
        // Predicated region
        $region13: #{tpu_custom_call.1} parent=11 // pred_check
          %p305 = pneg %p75
        $region14: #{tpu_custom_call.1} parent=11 // pred_check_branch
          %307 = sbr.rel (%p305) target = $region16
        $region15: #{tpu_custom_call.1} parent=11 // pred_region
          %s309 = ssub.s32 16, 16
          %310 = vsyncadd [#allocation6], %s309
          %s312 = sshll.u32 [#allocation5], 4
          %s313 = int_to_ptr.vmem [resolvable:$true] %s312
          %315 = dma.hbm_to_vmem [thread:$0]  %s1, 16, %s313, [#allocation6]
        $region16: #{tpu_custom_call.1} parent=11 // pred_fallthru
          _
        // Predicated region
        $region17: #{tpu_custom_call.1} parent=11 // pred_check
          %p316 = pneg %p96
        $region18: #{tpu_custom_call.1} parent=11 // pred_check_branch
          %318 = sbr.rel (%p316) target = $region20
        $region19: #{tpu_custom_call.1} parent=11 // pred_region
          %s320 = ssub.s32 1024, 1024
          %321 = vsyncadd [#allocation6], %s320
          %s322 = sshll.u32 [#allocation7], 4
          %s323 = int_to_ptr.vmem [resolvable:$true] %s322
          %328 = dma.hbm_to_vmem [thread:$0]  %s2, 1024, %s323, [#allocation6], 64, 64, 4
        $region20: #{tpu_custom_call.1} parent=11 // pred_fallthru
          _
        // Predicated region
        $region21: #{tpu_custom_call.1} parent=11 // pred_check
          %p329 = pneg %p117
        $region22: #{tpu_custom_call.1} parent=11 // pred_check_branch
          %331 = sbr.rel (%p329) target = $region24
        $region23: #{tpu_custom_call.1} parent=11 // pred_region
          %s333 = ssub.s32 9216, 9216
          %334 = vsyncadd [#allocation9], %s333
          %s335 = sshll.u32 [#allocation8], 4
          %s336 = int_to_ptr.vmem [resolvable:$true] %s335
          %341 = dma.hbm_to_vmem [thread:$0]  %s3, 9216, %s336, [#allocation9], 64, 64, 4
        $region24: #{tpu_custom_call.1} parent=11 // pred_fallthru
          _
        // Predicated region
        $region25: #{tpu_custom_call.1} parent=11 // pred_check
          %p342 = pneg %p138
        $region26: #{tpu_custom_call.1} parent=11 // pred_check_branch
          %344 = sbr.rel (%p342) target = $region28
        $region27: #{tpu_custom_call.1} parent=11 // pred_region
          %s346 = ssub.s32 9216, 9216
          %347 = vsyncadd [#allocation9], %s346
          %s348 = sshll.u32 [#allocation10], 4
          %s349 = int_to_ptr.vmem [resolvable:$true] %s348
          %354 = dma.hbm_to_vmem [thread:$0]  %s4, 9216, %s349, [#allocation9], 64, 64, 4
        $region28: #{tpu_custom_call.1} parent=11 // pred_fallthru
          _
        // Predicated region
        $region29: #{tpu_custom_call.1} parent=11 // pred_check
          %p355 = pneg %p159
        $region30: #{tpu_custom_call.1} parent=11 // pred_check_branch
          %357 = sbr.rel (%p355) target = $region32
        $region31: #{tpu_custom_call.1} parent=11 // pred_region
          %s359 = ssub.s32 9216, 9216
          %360 = vsyncadd [#allocation12], %s359
          %s361 = sshll.u32 [#allocation11], 4
          %s362 = int_to_ptr.vmem [resolvable:$true] %s361
          %367 = dma.hbm_to_vmem [thread:$0]  %s5, 9216, %s362, [#allocation12], 64, 64, 4
        $region32: #{tpu_custom_call.1} parent=11 // pred_fallthru
          _
        // Predicated region
        $region33: #{tpu_custom_call.1} parent=11 // pred_check
          %p368 = pneg %p180
        $region34: #{tpu_custom_call.1} parent=11 // pred_check_branch
          %370 = sbr.rel (%p368) target = $region36
        $region35: #{tpu_custom_call.1} parent=11 // pred_region
          %s372 = ssub.s32 1024, 1024
          %373 = vsyncadd [#allocation12], %s372
          %s374 = sshll.u32 [#allocation13], 4
          %s375 = int_to_ptr.vmem [resolvable:$true] %s374
          %380 = dma.hbm_to_vmem [thread:$0]  %s6, 1024, %s375, [#allocation12], 64, 64, 4
        $region36: #{tpu_custom_call.1} parent=11 // pred_fallthru
          _
        // Predicated region
        $region37: #{tpu_custom_call.1} parent=11 // pred_check
          %p381 = pneg %p201
        $region38: #{tpu_custom_call.1} parent=11 // pred_check_branch
          %383 = sbr.rel (%p381) target = $region40
        $region39: #{tpu_custom_call.1} parent=11 // pred_region
          %s385 = ssub.s32 5120, 5120
          %386 = vsyncadd [#allocation15], %s385
          %s387 = sshll.u32 [#allocation14], 4
          %s388 = int_to_ptr.vmem [resolvable:$true] %s387
          %393 = dma.hbm_to_vmem [thread:$0]  %s7, 5120, %s388, [#allocation15], 64, 64, 4
        $region40: #{tpu_custom_call.1} parent=11 // pred_fallthru
          _
        // Predicated region
        $region41: #{tpu_custom_call.1} parent=11 // pred_check
          %p394 = pneg %p222
        $region42: #{tpu_custom_call.1} parent=11 // pred_check_branch
          %396 = sbr.rel (%p394) target = $region44
        $region43: #{tpu_custom_call.1} parent=11 // pred_region
          %s398 = ssub.s32 96, 96
          %399 = vsyncadd [#allocation15], %s398
          %s400 = sshll.u32 [#allocation16], 4
          %s401 = int_to_ptr.vmem [resolvable:$true] %s400
          %406 = dma.hbm_to_vmem [thread:$0]  %s8, 96, %s401, [#allocation15], 16, 16, 1
        $region44: #{tpu_custom_call.1} parent=11 // pred_fallthru
          _
        // Predicated region
        $region45: #{tpu_custom_call.1} parent=11 // pred_check
          %p407 = pneg %p243
        $region46: #{tpu_custom_call.1} parent=11 // pred_check_branch
          %409 = sbr.rel (%p407) target = $region48
        $region47: #{tpu_custom_call.1} parent=11 // pred_region
          %s411 = ssub.s32 96, 96
          %412 = vsyncadd [#allocation18], %s411
          %s413 = sshll.u32 [#allocation17], 4
          %s414 = int_to_ptr.vmem [resolvable:$true] %s413
          %419 = dma.hbm_to_vmem [thread:$0]  %s9, 96, %s414, [#allocation18], 16, 16, 1
        $region48: #{tpu_custom_call.1} parent=11 // pred_fallthru
          _
        // Predicated region
        $region49: #{tpu_custom_call.1} parent=11 // pred_check
          %p420 = pneg %p264
        $region50: #{tpu_custom_call.1} parent=11 // pred_check_branch
          %422 = sbr.rel (%p420) target = $region52
        $region51: #{tpu_custom_call.1} parent=11 // pred_region
          %s424 = ssub.s32 2048, 2048
          %425 = vsyncadd [#allocation18], %s424
          %s426 = sshll.u32 [#allocation19], 4
          %s427 = int_to_ptr.vmem [resolvable:$true] %s426
          %432 = dma.hbm_to_vmem [thread:$0]  %s10, 2048, %s427, [#allocation18], 128, 128, 8
        $region52: #{tpu_custom_call.1} parent=11 // pred_fallthru
          _
      $region12: #{tpu_custom_call.1} parent=5 // pred_fallthru
        _
      %p433 = scmp.lt.s32.totalorder %s28, 2
      // Predicated region
      $region53: #{tpu_custom_call.1} parent=5 // pred_check
        %p434 = pneg %p433
      $region54: #{tpu_custom_call.1} parent=5 // pred_check_branch
        %436 = sbr.rel (%p434) target = $region56
      $region55: #{tpu_custom_call.1} parent=5 // pred_region
        // Predicated region
        $region57: #{tpu_custom_call.1} parent=55 // pred_check
          %p437 = pneg %p48
        $region58: #{tpu_custom_call.1} parent=55 // pred_check_branch
          %439 = sbr.rel (%p437) target = $region60
        $region59: #{tpu_custom_call.1} parent=55 // pred_region
          %s440 = sand.u32 %s38, 1
          %s441 = scalar_lea.sflag [#allocation3], %s440
          %s442 = sand.u32 %s38, 1
          %s443 = smul.addr %s442, 832
          %s444 = scalar_lea.vmem [#allocation2], %s443
          %s445 = smul.u32 2, %s28
          %s447 = ssub.s32 13312, 13312
          %448 = vsyncadd %s441, %s447
          %s449 = smul.addr %s445, 104
          %s450 = smul.addr %s449, 64
          %s451 = scalar_lea.hbm %s0, %s450
          %s452 = sshll.u32 %s444, 4
          %s453 = int_to_ptr.vmem [resolvable:$true] %s452
          %458 = dma.hbm_to_vmem [thread:$0]  %s451, 13312, %s453, %s441, 64, 64, 4
        $region60: #{tpu_custom_call.1} parent=55 // pred_fallthru
          _
      $region56: #{tpu_custom_call.1} parent=5 // pred_fallthru
        _
      %p459 = scmp.le.s32.totalorder 1, %s28
      %p460 = scmp.lt.s32.totalorder %s28, 3
      %p461 = pnand %p459, %p460
      %p462 = pneg %p461
      // Predicated region
      $region61: #{tpu_custom_call.1} parent=5 // pred_check
        _
      $region62: #{tpu_custom_call.1} parent=5 // pred_check_branch
        %464 = sbr.rel (%p461) target = $region64
      $region63: #{tpu_custom_call.1} parent=5 // pred_region
        %s465 = ssub.s32 %s28, 1
        %s466 = sand.u32 %s41, 1
        %s467 = scalar_lea.sflag [#allocation3], %s466
        %s468 = sand.u32 %s41, 1
        %s469 = smul.addr %s468, 832
        %s470 = scalar_lea.vmem [#allocation2], %s469
        // Predicated region
        $region65: #{tpu_custom_call.1} parent=63 // pred_check
          %p471 = pneg %p54
        $region66: #{tpu_custom_call.1} parent=63 // pred_check_branch
          %473 = sbr.rel (%p471) target = $region68
        $region67: #{tpu_custom_call.1} parent=63 // pred_region
          %474 = dma.done %s467, 13312
        $region68: #{tpu_custom_call.1} parent=63 // pred_fallthru
          _
        // Predicated region
        $region69: #{tpu_custom_call.1} parent=63 // pred_check
          %p475 = pneg %p75
        $region70: #{tpu_custom_call.1} parent=63 // pred_check_branch
          %477 = sbr.rel (%p475) target = $region72
        $region71: #{tpu_custom_call.1} parent=63 // pred_region
          %478 = dma.done [#allocation6], 16
        $region72: #{tpu_custom_call.1} parent=63 // pred_fallthru
          _
        // Predicated region
        $region73: #{tpu_custom_call.1} parent=63 // pred_check
          %p479 = pneg %p96
        $region74: #{tpu_custom_call.1} parent=63 // pred_check_branch
          %481 = sbr.rel (%p479) target = $region76
        $region75: #{tpu_custom_call.1} parent=63 // pred_region
          %482 = dma.done [#allocation6], 1024
        $region76: #{tpu_custom_call.1} parent=63 // pred_fallthru
          _
        // Predicated region
        $region77: #{tpu_custom_call.1} parent=63 // pred_check
          %p483 = pneg %p117
        $region78: #{tpu_custom_call.1} parent=63 // pred_check_branch
          %485 = sbr.rel (%p483) target = $region80
        $region79: #{tpu_custom_call.1} parent=63 // pred_region
          %486 = dma.done [#allocation9], 9216
        $region80: #{tpu_custom_call.1} parent=63 // pred_fallthru
          _
        // Predicated region
        $region81: #{tpu_custom_call.1} parent=63 // pred_check
          %p487 = pneg %p138
        $region82: #{tpu_custom_call.1} parent=63 // pred_check_branch
          %489 = sbr.rel (%p487) target = $region84
        $region83: #{tpu_custom_call.1} parent=63 // pred_region
          %490 = dma.done [#allocation9], 9216
        $region84: #{tpu_custom_call.1} parent=63 // pred_fallthru
          _
        // Predicated region
        $region85: #{tpu_custom_call.1} parent=63 // pred_check
          %p491 = pneg %p159
        $region86: #{tpu_custom_call.1} parent=63 // pred_check_branch
          %493 = sbr.rel (%p491) target = $region88
        $region87: #{tpu_custom_call.1} parent=63 // pred_region
          %494 = dma.done [#allocation12], 9216
        $region88: #{tpu_custom_call.1} parent=63 // pred_fallthru
          _
        // Predicated region
        $region89: #{tpu_custom_call.1} parent=63 // pred_check
          %p495 = pneg %p180
        $region90: #{tpu_custom_call.1} parent=63 // pred_check_branch
          %497 = sbr.rel (%p495) target = $region92
        $region91: #{tpu_custom_call.1} parent=63 // pred_region
          %498 = dma.done [#allocation12], 1024
        $region92: #{tpu_custom_call.1} parent=63 // pred_fallthru
          _
        // Predicated region
        $region93: #{tpu_custom_call.1} parent=63 // pred_check
          %p499 = pneg %p201
        $region94: #{tpu_custom_call.1} parent=63 // pred_check_branch
          %501 = sbr.rel (%p499) target = $region96
        $region95: #{tpu_custom_call.1} parent=63 // pred_region
          %502 = dma.done [#allocation15], 5120
        $region96: #{tpu_custom_call.1} parent=63 // pred_fallthru
          _
        // Predicated region
        $region97: #{tpu_custom_call.1} parent=63 // pred_check
          %p503 = pneg %p222
        $region98: #{tpu_custom_call.1} parent=63 // pred_check_branch
          %505 = sbr.rel (%p503) target = $region100
        $region99: #{tpu_custom_call.1} parent=63 // pred_region
          %506 = dma.done [#allocation15], 96
        $region100: #{tpu_custom_call.1} parent=63 // pred_fallthru
          _
        // Predicated region
        $region101: #{tpu_custom_call.1} parent=63 // pred_check
          %p507 = pneg %p243
        $region102: #{tpu_custom_call.1} parent=63 // pred_check_branch
          %509 = sbr.rel (%p507) target = $region104
        $region103: #{tpu_custom_call.1} parent=63 // pred_region
          %510 = dma.done [#allocation18], 96
        $region104: #{tpu_custom_call.1} parent=63 // pred_fallthru
          _
        // Predicated region
        $region105: #{tpu_custom_call.1} parent=63 // pred_check
          %p511 = pneg %p264
        $region106: #{tpu_custom_call.1} parent=63 // pred_check_branch
          %513 = sbr.rel (%p511) target = $region108
        $region107: #{tpu_custom_call.1} parent=63 // pred_region
          %514 = dma.done [#allocation18], 2048
        $region108: #{tpu_custom_call.1} parent=63 // pred_fallthru
          _
        %s515 = sand.u32 %s41, 1
        %s516 = scalar_lea.sflag [#allocation3], %s515
        %s517 = sand.u32 %s41, 1
        %s518 = smul.addr %s517, 832
        %s519 = scalar_lea.vmem [#allocation2], %s518
        %p520 = pneg %p54
        %p521 = pneg %p51
        %p522 = pneg %p75
        %p523 = pneg %p72
        %p524 = pneg %p96
        %p525 = pneg %p93
        %p526 = pneg %p117
        %p527 = pneg %p114
        %p528 = pneg %p138
        %p529 = pneg %p135
        %p530 = pneg %p159
        %p531 = pneg %p156
        %p532 = pneg %p180
        %p533 = pneg %p177
        %p534 = pneg %p201
        %p535 = pneg %p198
        %p536 = pneg %p222
        %p537 = pneg %p219
        %p538 = pneg %p243
        %p539 = pneg %p240
        %p540 = pneg %p264
        %p541 = pneg %p261
        %p542 = pneg %p290
        %p543 = pneg %p287
        %s544 = sand.u32 %s277, 1
        %s545 = scalar_lea.sflag [#allocation4], %s544
        %s546 = sand.u32 %s277, 1
        %s547 = smul.addr %s546, 64
        %s548 = scalar_lea.vmem [#allocation20], %s547
        %s549 = smul.u32 2, %s33
        %s550 = smul.u32 2, %s33
        %v552 = vld [vmem:[#allocation19] sm:$0xff]
        %v553 = vld [vmem:[#allocation19 + $0x8] sm:$0xff]
        %v554 = vld [vmem:[#allocation19 + $0x10] sm:$0xff]
        %v555 = vld [vmem:[#allocation19 + $0x18] sm:$0xff]
        %v556 = vld [vmem:[#allocation19 + $0x20] sm:$0xff]
        %v557 = vld [vmem:[#allocation19 + $0x28] sm:$0xff]
        %v558 = vld [vmem:[#allocation19 + $0x30] sm:$0xff]
        %v559 = vld [vmem:[#allocation19 + $0x38] sm:$0xff]
        %v560 = vld [vmem:[#allocation19 + $0x40] sm:$0xff]
        %v561 = vld [vmem:[#allocation19 + $0x48] sm:$0xff]
        %v562 = vld [vmem:[#allocation19 + $0x50] sm:$0xff]
        %v563 = vld [vmem:[#allocation19 + $0x58] sm:$0xff]
        %v564 = vld [vmem:[#allocation19 + $0x60] sm:$0xff]
        %v565 = vld [vmem:[#allocation19 + $0x68] sm:$0xff]
        %v566 = vld [vmem:[#allocation19 + $0x70] sm:$0xff]
        %v567 = vld [vmem:[#allocation19 + $0x78] sm:$0xff]
        %v568 = vld [vmem:[%s470] sm:$0xf]
        %v569 = vld [vmem:[%s470 + $0x4] sm:$0xf]
        %v570 = vld [vmem:[%s470 + $0x8] sm:$0xf]
        %v571 = vld [vmem:[%s470 + $0xc] sm:$0xf]
        %v572 = vld [vmem:[%s470 + $0x10] sm:$0xf]
        %v573 = vld [vmem:[%s470 + $0x14] sm:$0xf]
        %v574 = vld [vmem:[%s470 + $0x18] sm:$0xf]
        %v575 = vld [vmem:[%s470 + $0x1c] sm:$0xf]
        %v576 = vld [vmem:[%s470 + $0x20] sm:$0xf]
        %v577 = vld [vmem:[%s470 + $0x24] sm:$0xf]
        %v578 = vld [vmem:[%s470 + $0x28] sm:$0xf]
        %v579 = vld [vmem:[%s470 + $0x2c] sm:$0xf]
        %v580 = vld [vmem:[%s470 + $0x30] sm:$0xf]
        %v581 = vld [vmem:[%s470 + $0x34] sm:$0xf]
        %v582 = vld [vmem:[%s470 + $0x38] sm:$0xf]
        %v583 = vld [vmem:[%s470 + $0x3c] sm:$0xf]
        %v584 = vld [vmem:[%s470 + $0x40] sm:$0xf]
        %v585 = vld [vmem:[%s470 + $0x44] sm:$0xf]
        %v586 = vld [vmem:[%s470 + $0x48] sm:$0xf]
        %v587 = vld [vmem:[%s470 + $0x4c] sm:$0xf]
        %v588 = vld [vmem:[%s470 + $0x50] sm:$0xf]
        %v589 = vld [vmem:[%s470 + $0x54] sm:$0xf]
        %v590 = vld [vmem:[%s470 + $0x58] sm:$0xf]
        %v591 = vld [vmem:[%s470 + $0x5c] sm:$0xf]
        %v592 = vld [vmem:[%s470 + $0x60] sm:$0xf]
        %v593 = vld [vmem:[%s470 + $0x64] sm:$0xf]
        %v594 = vld [vmem:[%s470 + $0x68] sm:$0xf]
        %v595 = vld [vmem:[%s470 + $0x6c] sm:$0xf]
        %v596 = vld [vmem:[%s470 + $0x70] sm:$0xf]
        %v597 = vld [vmem:[%s470 + $0x74] sm:$0xf]
        %v598 = vld [vmem:[%s470 + $0x78] sm:$0xf]
        %v599 = vld [vmem:[%s470 + $0x7c] sm:$0xf]
        %v600 = vld [vmem:[%s470 + $0x80] sm:$0xf]
        %v601 = vld [vmem:[%s470 + $0x84] sm:$0xf]
        %v602 = vld [vmem:[%s470 + $0x88] sm:$0xf]
        %v603 = vld [vmem:[%s470 + $0x90] sm:$0xf]
        %v604 = vld [vmem:[%s470 + $0x94] sm:$0xf]
        %v605 = vld [vmem:[%s470 + $0x98] sm:$0xf]
        %v606 = vld [vmem:[%s470 + $0x9c] sm:$0xf]
        %v607 = vld [vmem:[%s470 + $0xa0] sm:$0xf]
        %v608 = vld [vmem:[%s470 + $0xa4] sm:$0xf]
        %v609 = vld [vmem:[%s470 + $0xa8] sm:$0xf]
        %v610 = vld [vmem:[%s470 + $0xac] sm:$0xf]
        %v611 = vld [vmem:[%s470 + $0xb0] sm:$0xf]
        %v612 = vld [vmem:[%s470 + $0xb4] sm:$0xf]
        %v613 = vld [vmem:[%s470 + $0xb8] sm:$0xf]
        %v614 = vld [vmem:[%s470 + $0xbc] sm:$0xf]
        %v615 = vld [vmem:[%s470 + $0xc0] sm:$0xf]
        %v616 = vld [vmem:[%s470 + $0xc4] sm:$0xf]
        %v617 = vld [vmem:[%s470 + $0xc8] sm:$0xf]
        %v618 = vld [vmem:[%s470 + $0xcc] sm:$0xf]
        %v619 = vld [vmem:[%s470 + $0xd0] sm:$0xf]
        %v620 = vld [vmem:[%s470 + $0xd4] sm:$0xf]
        %v621 = vld [vmem:[%s470 + $0xd8] sm:$0xf]
        %v622 = vld [vmem:[%s470 + $0xdc] sm:$0xf]
        %v623 = vld [vmem:[%s470 + $0xe0] sm:$0xf]
        %v624 = vld [vmem:[%s470 + $0xe4] sm:$0xf]
        %v625 = vld [vmem:[%s470 + $0xe8] sm:$0xf]
        %v626 = vld [vmem:[%s470 + $0xec] sm:$0xf]
        %v627 = vld [vmem:[%s470 + $0xf0] sm:$0xf]
        %v628 = vld [vmem:[%s470 + $0xf4] sm:$0xf]
        %v629 = vld [vmem:[%s470 + $0xf8] sm:$0xf]
        %v630 = vld [vmem:[%s470 + $0xfc] sm:$0xf]
        %v631 = vld [vmem:[%s470 + $0x100] sm:$0xf]
        %v632 = vld [vmem:[%s470 + $0x104] sm:$0xf]
        %v633 = vld [vmem:[%s470 + $0x108] sm:$0xf]
        %v634 = vld [vmem:[%s470 + $0x10c] sm:$0xf]
        %v635 = vld [vmem:[%s470 + $0x110] sm:$0xf]
        %v636 = vld [vmem:[%s470 + $0x114] sm:$0xf]
        %v637 = vld [vmem:[%s470 + $0x118] sm:$0xf]
        %v638 = vld [vmem:[%s470 + $0x120] sm:$0xf]
        %v639 = vld [vmem:[%s470 + $0x124] sm:$0xf]
        %v640 = vld [vmem:[%s470 + $0x128] sm:$0xf]
        %v641 = vld [vmem:[%s470 + $0x12c] sm:$0xf]
        %v642 = vld [vmem:[%s470 + $0x130] sm:$0xf]
        %v643 = vld [vmem:[%s470 + $0x134] sm:$0xf]
        %v644 = vld [vmem:[%s470 + $0x138] sm:$0xf]
        %v645 = vld [vmem:[%s470 + $0x13c] sm:$0xf]
        %v646 = vld [vmem:[%s470 + $0x140] sm:$0xf]
        %v647 = vld [vmem:[%s470 + $0x144] sm:$0xf]
        %v648 = vld [vmem:[%s470 + $0x148] sm:$0xf]
        %v649 = vld [vmem:[%s470 + $0x14c] sm:$0xf]
        %v650 = vld [vmem:[%s470 + $0x150] sm:$0xf]
        %v651 = vld [vmem:[%s470 + $0x154] sm:$0xf]
        %v652 = vld [vmem:[%s470 + $0x158] sm:$0xf]
        %v653 = vld [vmem:[%s470 + $0x15c] sm:$0xf]
        %v654 = vld [vmem:[%s470 + $0x160] sm:$0xf]
        %v655 = vld [vmem:[%s470 + $0x164] sm:$0xf]
        %v656 = vld [vmem:[%s470 + $0x168] sm:$0xf]
        %v657 = vld [vmem:[%s470 + $0x16c] sm:$0xf]
        %v658 = vld [vmem:[%s470 + $0x170] sm:$0xf]
        %v659 = vld [vmem:[%s470 + $0x174] sm:$0xf]
        %v660 = vld [vmem:[%s470 + $0x178] sm:$0xf]
        %v661 = vld [vmem:[%s470 + $0x17c] sm:$0xf]
        %v662 = vld [vmem:[%s470 + $0x180] sm:$0xf]
        %v663 = vld [vmem:[%s470 + $0x184] sm:$0xf]
        %v664 = vld [vmem:[%s470 + $0x188] sm:$0xf]
        %v665 = vld [vmem:[%s470 + $0x18c] sm:$0xf]
        %v666 = vld [vmem:[%s470 + $0x190] sm:$0xf]
        %v667 = vld [vmem:[%s470 + $0x194] sm:$0xf]
        %v668 = vld [vmem:[%s470 + $0x198] sm:$0xf]
        %v669 = vld [vmem:[%s470 + $0x19c] sm:$0xf]
        %v670 = vld [vmem:[%s470 + $0x1a0] sm:$0xf]
        %v671 = vld [vmem:[%s470 + $0x1a4] sm:$0xf]
        %v672 = vld [vmem:[%s470 + $0x1a8] sm:$0xf]
        %v673 = vld [vmem:[%s470 + $0x1ac] sm:$0xf]
        %v674 = vld [vmem:[%s470 + $0x1b0] sm:$0xf]
        %v675 = vld [vmem:[%s470 + $0x1b4] sm:$0xf]
        %v676 = vld [vmem:[%s470 + $0x1b8] sm:$0xf]
        %v677 = vld [vmem:[%s470 + $0x1bc] sm:$0xf]
        %v678 = vld [vmem:[%s470 + $0x1c0] sm:$0xf]
        %v679 = vld [vmem:[%s470 + $0x1c4] sm:$0xf]
        %v680 = vld [vmem:[%s470 + $0x1c8] sm:$0xf]
        %v681 = vld [vmem:[%s470 + $0x1cc] sm:$0xf]
        %v682 = vld [vmem:[%s470 + $0x1d0] sm:$0xf]
        %v683 = vld [vmem:[%s470 + $0x1d4] sm:$0xf]
        %v684 = vld [vmem:[%s470 + $0x1d8] sm:$0xf]
        %v685 = vld [vmem:[%s470 + $0x1dc] sm:$0xf]
        %v686 = vld [vmem:[%s470 + $0x1e0] sm:$0xf]
        %v687 = vld [vmem:[%s470 + $0x1e4] sm:$0xf]
        %v688 = vld [vmem:[%s470 + $0x1e8] sm:$0xf]
        %v689 = vld [vmem:[%s470 + $0x1ec] sm:$0xf]
        %v690 = vld [vmem:[%s470 + $0x1f0] sm:$0xf]
        %v691 = vld [vmem:[%s470 + $0x1f4] sm:$0xf]
        %v692 = vld [vmem:[%s470 + $0x1f8] sm:$0xf]
        %v693 = vld [vmem:[%s470 + $0x1fc] sm:$0xf]
        %v694 = vld [vmem:[%s470 + $0x200] sm:$0xf]
        %v695 = vld [vmem:[%s470 + $0x204] sm:$0xf]
        %v696 = vld [vmem:[%s470 + $0x208] sm:$0xf]
        %v697 = vld [vmem:[%s470 + $0x20c] sm:$0xf]
        %v698 = vld [vmem:[%s470 + $0x210] sm:$0xf]
        %v699 = vld [vmem:[%s470 + $0x214] sm:$0xf]
        %v700 = vld [vmem:[%s470 + $0x218] sm:$0xf]
        %v701 = vld [vmem:[%s470 + $0x21c] sm:$0xf]
        %v702 = vld [vmem:[%s470 + $0x220] sm:$0xf]
        %v703 = vld [vmem:[%s470 + $0x224] sm:$0xf]
        %v704 = vld [vmem:[%s470 + $0x228] sm:$0xf]
        %v705 = vld [vmem:[%s470 + $0x230] sm:$0xf]
        %v706 = vld [vmem:[%s470 + $0x234] sm:$0xf]
        %v707 = vld [vmem:[%s470 + $0x238] sm:$0xf]
        %v708 = vld [vmem:[%s470 + $0x23c] sm:$0xf]
        %v709 = vld [vmem:[%s470 + $0x240] sm:$0xf]
        %v710 = vld [vmem:[%s470 + $0x244] sm:$0xf]
        %v711 = vld [vmem:[%s470 + $0x248] sm:$0xf]
        %v712 = vld [vmem:[%s470 + $0x24c] sm:$0xf]
        %v713 = vld [vmem:[%s470 + $0x250] sm:$0xf]
        %v714 = vld [vmem:[%s470 + $0x254] sm:$0xf]
        %v715 = vld [vmem:[%s470 + $0x258] sm:$0xf]
        %v716 = vld [vmem:[%s470 + $0x25c] sm:$0xf]
        %v717 = vld [vmem:[%s470 + $0x260] sm:$0xf]
        %v718 = vld [vmem:[%s470 + $0x264] sm:$0xf]
        %v719 = vld [vmem:[%s470 + $0x268] sm:$0xf]
        %v720 = vld [vmem:[%s470 + $0x26c] sm:$0xf]
        %v721 = vld [vmem:[%s470 + $0x270] sm:$0xf]
        %v722 = vld [vmem:[%s470 + $0x274] sm:$0xf]
        %v723 = vld [vmem:[%s470 + $0x278] sm:$0xf]
        %v724 = vld [vmem:[%s470 + $0x27c] sm:$0xf]
        %v725 = vld [vmem:[%s470 + $0x280] sm:$0xf]
        %v726 = vld [vmem:[%s470 + $0x284] sm:$0xf]
        %v727 = vld [vmem:[%s470 + $0x288] sm:$0xf]
        %v728 = vld [vmem:[%s470 + $0x28c] sm:$0xf]
        %v729 = vld [vmem:[%s470 + $0x290] sm:$0xf]
        %v730 = vld [vmem:[%s470 + $0x294] sm:$0xf]
        %v731 = vld [vmem:[%s470 + $0x298] sm:$0xf]
        %v732 = vld [vmem:[%s470 + $0x29c] sm:$0xf]
        %v733 = vld [vmem:[%s470 + $0x2a0] sm:$0xf]
        %v734 = vld [vmem:[%s470 + $0x2a4] sm:$0xf]
        %v735 = vld [vmem:[%s470 + $0x2a8] sm:$0xf]
        %v736 = vld [vmem:[%s470 + $0x2ac] sm:$0xf]
        %v737 = vld [vmem:[%s470 + $0x2b0] sm:$0xf]
        %v738 = vld [vmem:[%s470 + $0x2b4] sm:$0xf]
        %v739 = vld [vmem:[%s470 + $0x2b8] sm:$0xf]
        %v740 = vld [vmem:[%s470 + $0x2c0] sm:$0xf]
        %v741 = vld [vmem:[%s470 + $0x2c4] sm:$0xf]
        %v742 = vld [vmem:[%s470 + $0x2c8] sm:$0xf]
        %v743 = vld [vmem:[%s470 + $0x2cc] sm:$0xf]
        %v744 = vld [vmem:[%s470 + $0x2d0] sm:$0xf]
        %v745 = vld [vmem:[%s470 + $0x2d4] sm:$0xf]
        %v746 = vld [vmem:[%s470 + $0x2d8] sm:$0xf]
        %v747 = vld [vmem:[%s470 + $0x2dc] sm:$0xf]
        %v748 = vld [vmem:[%s470 + $0x2e0] sm:$0xf]
        %v749 = vld [vmem:[%s470 + $0x2e4] sm:$0xf]
        %v750 = vld [vmem:[%s470 + $0x2e8] sm:$0xf]
        %v751 = vld [vmem:[%s470 + $0x2ec] sm:$0xf]
        %v752 = vld [vmem:[%s470 + $0x2f0] sm:$0xf]
        %v753 = vld [vmem:[%s470 + $0x2f4] sm:$0xf]
        %v754 = vld [vmem:[%s470 + $0x2f8] sm:$0xf]
        %v755 = vld [vmem:[%s470 + $0x2fc] sm:$0xf]
        %v756 = vld [vmem:[%s470 + $0x300] sm:$0xf]
        %v757 = vld [vmem:[%s470 + $0x304] sm:$0xf]
        %v758 = vld [vmem:[%s470 + $0x308] sm:$0xf]
        %v759 = vld [vmem:[%s470 + $0x30c] sm:$0xf]
        %v760 = vld [vmem:[%s470 + $0x310] sm:$0xf]
        %v761 = vld [vmem:[%s470 + $0x314] sm:$0xf]
        %v762 = vld [vmem:[%s470 + $0x318] sm:$0xf]
        %v763 = vld [vmem:[%s470 + $0x31c] sm:$0xf]
        %v764 = vld [vmem:[%s470 + $0x320] sm:$0xf]
        %v765 = vld [vmem:[%s470 + $0x324] sm:$0xf]
        %v766 = vld [vmem:[%s470 + $0x328] sm:$0xf]
        %v767 = vld [vmem:[%s470 + $0x32c] sm:$0xf]
        %v768 = vld [vmem:[%s470 + $0x330] sm:$0xf]
        %v769 = vld [vmem:[%s470 + $0x334] sm:$0xf]
        %v770 = vld [vmem:[%s470 + $0x338] sm:$0xf]
        %v771 = vld [vmem:[%s470 + $0x33c] sm:$0xf]
        %vm772 = vsmask.f32 3328
        %vm773 = vsmask.f32 7440
        %vm774 = vmor %vm772, %vm773
        %v776 = vshrl.u32 %v604, 16
        %v778 = vrot.slane %v776, 4
        %v779 = vshll.u32 %v604, 16
        %v781 = vrot.slane %v779, 5
        %v782 = vor.u32 %v778, %v781
        %v783 = vrot.slane %v782, 4
        %v785 = vshll.u32 %v605, 16
        %v787 = vrot.slane %v785, 5
        %v788 = vsel %vm774, %v783, %v787
        %v790 = vshrl.u32 %v608, 16
        %v792 = vrot.slane %v790, 4
        %v793 = vshll.u32 %v608, 16
        %v795 = vrot.slane %v793, 5
        %v796 = vor.u32 %v792, %v795
        %v797 = vrot.slane %v796, 4
        %v799 = vshll.u32 %v609, 16
        %v801 = vrot.slane %v799, 5
        %v802 = vsel %vm774, %v797, %v801
        %v804 = vshrl.u32 %v612, 16
        %v806 = vrot.slane %v804, 4
        %v807 = vshll.u32 %v612, 16
        %v809 = vrot.slane %v807, 5
        %v810 = vor.u32 %v806, %v809
        %v811 = vrot.slane %v810, 4
        %v813 = vshll.u32 %v613, 16
        %v815 = vrot.slane %v813, 5
        %v816 = vsel %vm774, %v811, %v815
        %v818 = vshrl.u32 %v616, 16
        %v820 = vrot.slane %v818, 4
        %v821 = vshll.u32 %v616, 16
        %v823 = vrot.slane %v821, 5
        %v824 = vor.u32 %v820, %v823
        %v825 = vrot.slane %v824, 4
        %v827 = vshll.u32 %v617, 16
        %v829 = vrot.slane %v827, 5
        %v830 = vsel %vm774, %v825, %v829
        %v832 = vshrl.u32 %v620, 16
        %v834 = vrot.slane %v832, 4
        %v835 = vshll.u32 %v620, 16
        %v837 = vrot.slane %v835, 5
        %v838 = vor.u32 %v834, %v837
        %v839 = vrot.slane %v838, 4
        %v841 = vshll.u32 %v621, 16
        %v843 = vrot.slane %v841, 5
        %v844 = vsel %vm774, %v839, %v843
        %v846 = vshrl.u32 %v624, 16
        %v848 = vrot.slane %v846, 4
        %v849 = vshll.u32 %v624, 16
        %v851 = vrot.slane %v849, 5
        %v852 = vor.u32 %v848, %v851
        %v853 = vrot.slane %v852, 4
        %v855 = vshll.u32 %v625, 16
        %v857 = vrot.slane %v855, 5
        %v858 = vsel %vm774, %v853, %v857
        %v860 = vshrl.u32 %v628, 16
        %v862 = vrot.slane %v860, 4
        %v863 = vshll.u32 %v628, 16
        %v865 = vrot.slane %v863, 5
        %v866 = vor.u32 %v862, %v865
        %v867 = vrot.slane %v866, 4
        %v869 = vshll.u32 %v629, 16
        %v871 = vrot.slane %v869, 5
        %v872 = vsel %vm774, %v867, %v871
        %v874 = vshrl.u32 %v632, 16
        %v876 = vrot.slane %v874, 4
        %v877 = vshll.u32 %v632, 16
        %v879 = vrot.slane %v877, 5
        %v880 = vor.u32 %v876, %v879
        %v881 = vrot.slane %v880, 4
        %v883 = vshll.u32 %v633, 16
        %v885 = vrot.slane %v883, 5
        %v886 = vsel %vm774, %v881, %v885
        %v888 = vshrl.u32 %v706, 16
        %v890 = vrot.slane %v888, 4
        %v891 = vshll.u32 %v706, 16
        %v893 = vrot.slane %v891, 5
        %v894 = vor.u32 %v890, %v893
        %v895 = vrot.slane %v894, 4
        %v897 = vshll.u32 %v707, 16
        %v899 = vrot.slane %v897, 5
        %v900 = vsel %vm774, %v895, %v899
        %v902 = vshrl.u32 %v710, 16
        %v904 = vrot.slane %v902, 4
        %v905 = vshll.u32 %v710, 16
        %v907 = vrot.slane %v905, 5
        %v908 = vor.u32 %v904, %v907
        %v909 = vrot.slane %v908, 4
        %v911 = vshll.u32 %v711, 16
        %v913 = vrot.slane %v911, 5
        %v914 = vsel %vm774, %v909, %v913
        %v916 = vshrl.u32 %v714, 16
        %v918 = vrot.slane %v916, 4
        %v919 = vshll.u32 %v714, 16
        %v921 = vrot.slane %v919, 5
        %v922 = vor.u32 %v918, %v921
        %v923 = vrot.slane %v922, 4
        %v925 = vshll.u32 %v715, 16
        %v927 = vrot.slane %v925, 5
        %v928 = vsel %vm774, %v923, %v927
        %v930 = vshrl.u32 %v718, 16
        %v932 = vrot.slane %v930, 4
        %v933 = vshll.u32 %v718, 16
        %v935 = vrot.slane %v933, 5
        %v936 = vor.u32 %v932, %v935
        %v937 = vrot.slane %v936, 4
        %v939 = vshll.u32 %v719, 16
        %v941 = vrot.slane %v939, 5
        %v942 = vsel %vm774, %v937, %v941
        %v944 = vshrl.u32 %v722, 16
        %v946 = vrot.slane %v944, 4
        %v947 = vshll.u32 %v722, 16
        %v949 = vrot.slane %v947, 5
        %v950 = vor.u32 %v946, %v949
        %v951 = vrot.slane %v950, 4
        %v953 = vshll.u32 %v723, 16
        %v955 = vrot.slane %v953, 5
        %v956 = vsel %vm774, %v951, %v955
        %v958 = vshrl.u32 %v726, 16
        %v960 = vrot.slane %v958, 4
        %v961 = vshll.u32 %v726, 16
        %v963 = vrot.slane %v961, 5
        %v964 = vor.u32 %v960, %v963
        %v965 = vrot.slane %v964, 4
        %v967 = vshll.u32 %v727, 16
        %v969 = vrot.slane %v967, 5
        %v970 = vsel %vm774, %v965, %v969
        %v972 = vshrl.u32 %v730, 16
        %v974 = vrot.slane %v972, 4
        %v975 = vshll.u32 %v730, 16
        %v977 = vrot.slane %v975, 5
        %v978 = vor.u32 %v974, %v977
        %v979 = vrot.slane %v978, 4
        %v981 = vshll.u32 %v731, 16
        %v983 = vrot.slane %v981, 5
        %v984 = vsel %vm774, %v979, %v983
        %v986 = vshrl.u32 %v734, 16
        %v988 = vrot.slane %v986, 4
        %v989 = vshll.u32 %v734, 16
        %v991 = vrot.slane %v989, 5
        %v992 = vor.u32 %v988, %v991
        %v993 = vrot.slane %v992, 4
        %v995 = vshll.u32 %v735, 16
        %v997 = vrot.slane %v995, 5
        %v998 = vsel %vm774, %v993, %v997
        %v999 = vld [vmem:[#allocation7] sm:$0xf]
        %v1000 = vld [vmem:[#allocation7 + $0x4] sm:$0xf]
        %v1001 = vld [vmem:[#allocation7 + $0x8] sm:$0xf]
        %v1002 = vld [vmem:[#allocation7 + $0xc] sm:$0xf]
        %v1003 = vld [vmem:[#allocation7 + $0x10] sm:$0xf]
        %v1004 = vld [vmem:[#allocation7 + $0x14] sm:$0xf]
        %v1005 = vld [vmem:[#allocation7 + $0x18] sm:$0xf]
        %v1006 = vld [vmem:[#allocation7 + $0x1c] sm:$0xf]
        %v1007 = vld [vmem:[#allocation7 + $0x20] sm:$0xf]
        %v1008 = vld [vmem:[#allocation7 + $0x24] sm:$0xf]
        %v1009 = vld [vmem:[#allocation7 + $0x28] sm:$0xf]
        %v1010 = vld [vmem:[#allocation7 + $0x2c] sm:$0xf]
        %v1011 = vld [vmem:[#allocation7 + $0x30] sm:$0xf]
        %v1012 = vld [vmem:[#allocation7 + $0x34] sm:$0xf]
        %v1013 = vld [vmem:[#allocation7 + $0x38] sm:$0xf]
        %v1014 = vld [vmem:[#allocation7 + $0x3c] sm:$0xf]
        %v1015 = vunpack.c.l.b16 %v788
        %v1016 = vunpack.c.l.b16 %v802
        %v1017 = vunpack.c.l.b16 %v816
        %v1018 = vunpack.c.l.b16 %v830
        %v1019 = vunpack.c.l.b16 %v844
        %v1020 = vunpack.c.l.b16 %v858
        %v1021 = vunpack.c.l.b16 %v872
        %v1022 = vunpack.c.l.b16 %v886
        %v1023 = vunpack.c.l.b16 %v900
        %v1024 = vunpack.c.l.b16 %v914
        %v1025 = vunpack.c.l.b16 %v928
        %v1026 = vunpack.c.l.b16 %v942
        %v1027 = vunpack.c.l.b16 %v956
        %v1028 = vunpack.c.l.b16 %v970
        %v1029 = vunpack.c.l.b16 %v984
        %v1030 = vunpack.c.l.b16 %v998
        %v1031 = vpack.c.b16 %v1016, %v1015
        %v1032 = vpack.c.b16 %v1018, %v1017
        %v1033 = vpack.c.b16 %v1020, %v1019
        %v1034 = vpack.c.b16 %v1022, %v1021
        %v1035 = vpack.c.b16 %v1024, %v1023
        %v1036 = vpack.c.b16 %v1026, %v1025
        %v1037 = vpack.c.b16 %v1028, %v1027
        %v1038 = vpack.c.b16 %v1030, %v1029
        %v1063 = vunpack.c.l.b16 %v999
        %v1064 = vunpack.c.l.b16 %v1000
        %v1065 = vunpack.c.l.b16 %v1001
        %v1066 = vunpack.c.l.b16 %v1002
        %v1067 = vunpack.c.l.b16 %v1003
        %v1068 = vunpack.c.l.b16 %v1004
        %v1069 = vunpack.c.l.b16 %v1005
        %v1070 = vunpack.c.l.b16 %v1006
        %v1071 = vunpack.c.l.b16 %v1007
        %v1072 = vunpack.c.l.b16 %v1008
        %v1073 = vunpack.c.l.b16 %v1009
        %v1074 = vunpack.c.l.b16 %v1010
        %v1075 = vunpack.c.l.b16 %v1011
        %v1076 = vunpack.c.l.b16 %v1012
        %v1077 = vunpack.c.l.b16 %v1013
        %v1078 = vunpack.c.l.b16 %v1014
        %v1079 = vpack.c.b16 %v1064, %v1063
        %v1080 = vpack.c.b16 %v1066, %v1065
        %v1081 = vpack.c.b16 %v1068, %v1067
        %v1082 = vpack.c.b16 %v1070, %v1069
        %v1083 = vpack.c.b16 %v1072, %v1071
        %v1084 = vpack.c.b16 %v1074, %v1073
        %v1085 = vpack.c.b16 %v1076, %v1075
        %v1086 = vpack.c.b16 %v1078, %v1077
        %1095 = vmatprep.subr.bf16.mxu0 0
        %1096 = vmatpush1.bf16.msra.mxu0 %v1079
        %1097 = vmatprep.subr.bf16.mxu0 0
        %1098 = vmatpush1.bf16.msra.mxu0 %v1080
        %1099 = vmatprep.subr.bf16.mxu0 0
        %1100 = vmatpush1.bf16.msra.mxu0 %v1081
        %1101 = vmatprep.subr.bf16.mxu0 0
        %1102 = vmatpush1.bf16.msra.mxu0 %v1082
        %1103 = vmatprep.subr.bf16.mxu0 0
        %1104 = vmatpush1.bf16.msra.mxu0 %v1083
        %1105 = vmatprep.subr.bf16.mxu0 0
        %1106 = vmatpush1.bf16.msra.mxu0 %v1084
        %1107 = vmatprep.subr.bf16.mxu0 0
        %1108 = vmatpush1.bf16.msra.mxu0 %v1085
        %1109 = vmatprep.subr.bf16.mxu0 0
        %1110 = vmatpush1.bf16.msra.mxu0 %v1086
        %1111 = vmatprep.subr.bf16.mxu0 0
        %1112 = vmatpush1.bf16.msra.mxu0 0
        %1113 = vmatprep.subr.bf16.mxu0 0
        %1114 = vmatpush1.bf16.msra.mxu0 0
        %1115 = vmatprep.subr.bf16.mxu0 0
        %1116 = vmatpush1.bf16.msra.mxu0 0
        %1117 = vmatprep.subr.bf16.mxu0 0
        %1118 = vmatpush1.bf16.msra.mxu0 0
        %1119 = vmatprep.subr.bf16.mxu0 0
        %1120 = vmatpush1.bf16.msra.mxu0 0
        %1121 = vmatprep.subr.bf16.mxu0 0
        %1122 = vmatpush1.bf16.msra.mxu0 0
        %1123 = vmatprep.subr.bf16.mxu0 0
        %1124 = vmatpush1.bf16.msra.mxu0 0
        %1125 = vmatprep.subr.bf16.mxu0 0
        %1126 = vmatpush1.bf16.msra.mxu0 0
        %1127 = vmatprep.mubr.bf16.mxu0 0
        %1128 = vmatmul.mubr.bf16.gmra.mrb[0].mxu0 %v1031
        %v1129 = vpop.f32.mrb[0].mxu0
        %v1130 = vadd.f32 0.0, %v1129
        %v1131 = vpop.f32.mrb[0].mxu0
        %v1132 = vpop.f32.mrb[0].mxu0
        %v1133 = vadd.f32 0.0, %v1132
        %v1134 = vpop.f32.mrb[0].mxu0
        %1135 = vmatprep.mubr.bf16.mxu0 0
        %1136 = vmatmul.mubr.bf16.gmra.mrb[0].mxu0 %v1032
        %v1137 = vpop.f32.mrb[0].mxu0
        %v1138 = vadd.f32 0.0, %v1137
        %v1139 = vpop.f32.mrb[0].mxu0
        %v1140 = vpop.f32.mrb[0].mxu0
        %v1141 = vadd.f32 0.0, %v1140
        %v1142 = vpop.f32.mrb[0].mxu0
        %1143 = vmatprep.mubr.bf16.mxu0 0
        %1144 = vmatmul.mubr.bf16.gmra.mrb[0].mxu0 %v1033
        %v1145 = vpop.f32.mrb[0].mxu0
        %v1146 = vadd.f32 0.0, %v1145
        %v1147 = vpop.f32.mrb[0].mxu0
        %v1148 = vpop.f32.mrb[0].mxu0
        %v1149 = vadd.f32 0.0, %v1148
        %v1150 = vpop.f32.mrb[0].mxu0
        %1151 = vmatprep.mubr.bf16.mxu0 0
        %1152 = vmatmul.mubr.bf16.gmra.mrb[0].mxu0 %v1034
        %v1153 = vpop.f32.mrb[0].mxu0
        %v1154 = vadd.f32 0.0, %v1153
        %v1155 = vpop.f32.mrb[0].mxu0
        %v1156 = vpop.f32.mrb[0].mxu0
        %v1157 = vadd.f32 0.0, %v1156
        %v1158 = vpop.f32.mrb[0].mxu0
        %1159 = vmatprep.mubr.bf16.mxu0 0
        %1160 = vmatmul.mubr.bf16.gmra.mrb[0].mxu0 %v1035
        %v1161 = vpop.f32.mrb[0].mxu0
        %v1162 = vadd.f32 0.0, %v1161
        %v1163 = vpop.f32.mrb[0].mxu0
        %v1164 = vpop.f32.mrb[0].mxu0
        %v1165 = vadd.f32 0.0, %v1164
        %v1166 = vpop.f32.mrb[0].mxu0
        %1167 = vmatprep.mubr.bf16.mxu0 0
        %1168 = vmatmul.mubr.bf16.gmra.mrb[0].mxu0 %v1036
        %v1169 = vpop.f32.mrb[0].mxu0
        %v1170 = vadd.f32 0.0, %v1169
        %v1171 = vpop.f32.mrb[0].mxu0
        %v1172 = vpop.f32.mrb[0].mxu0
        %v1173 = vadd.f32 0.0, %v1172
        %v1174 = vpop.f32.mrb[0].mxu0
        %1175 = vmatprep.mubr.bf16.mxu0 0
        %1176 = vmatmul.mubr.bf16.gmra.mrb[0].mxu0 %v1037
        %v1177 = vpop.f32.mrb[0].mxu0
        %v1178 = vadd.f32 0.0, %v1177
        %v1179 = vpop.f32.mrb[0].mxu0
        %v1180 = vpop.f32.mrb[0].mxu0
        %v1181 = vadd.f32 0.0, %v1180
        %v1182 = vpop.f32.mrb[0].mxu0
        %1183 = vmatprep.mubr.bf16.mxu0 0
        %1184 = vmatmul.mubr.bf16.gmra.mrb[0].mxu0 %v1038
        %v1185 = vpop.f32.mrb[0].mxu0
        %v1186 = vadd.f32 0.0, %v1185
        %v1187 = vpop.f32.mrb[0].mxu0
        %v1188 = vpop.f32.mrb[0].mxu0
        %v1189 = vadd.f32 0.0, %v1188
        %v1190 = vpop.f32.mrb[0].mxu0
        %1191 = vdwg.mxu0
        %v1192 = vld [vmem:[#allocation16] sm:$0x1]
        %v1193 = vld [vmem:[#allocation17] sm:$0x1]
        %v1194 = vadd.f32 %v1130, %v1133
        %v1195 = vadd.f32 %v1194, %v1138
        %v1196 = vadd.f32 %v1195, %v1141
        %v1197 = vadd.f32 %v1196, %v1146
        %v1198 = vadd.f32 %v1197, %v1149
        %v1199 = vadd.f32 %v1198, %v1154
        %v1200 = vadd.f32 %v1199, %v1157
        %v1201 = vrot.slane %v1200, 4
        %v1202 = vadd.f32 %v1200, %v1201
        %v1203 = vrot.slane %v1202, 2
        %v1204 = vadd.f32 %v1202, %v1203
        %v1205 = vrot.slane %v1204, 1
        %v1206 = vadd.f32 %v1204, %v1205
        %v1207 = vadd.f32 %v1162, %v1165
        %v1208 = vadd.f32 %v1207, %v1170
        %v1209 = vadd.f32 %v1208, %v1173
        %v1210 = vadd.f32 %v1209, %v1178
        %v1211 = vadd.f32 %v1210, %v1181
        %v1212 = vadd.f32 %v1211, %v1186
        %v1213 = vadd.f32 %v1212, %v1189
        %v1214 = vrot.slane %v1213, 4
        %v1215 = vadd.f32 %v1213, %v1214
        %v1216 = vrot.slane %v1215, 2
        %v1217 = vadd.f32 %v1215, %v1216
        %v1218 = vrot.slane %v1217, 1
        %v1219 = vadd.f32 %v1217, %v1218
        %v1220 = vrcp.pop 64.0
        %v1221 = vmul.f32 %v1206, %v1220
        %v1222 = vmul.f32 %v1219, %v1220
        %v1223 = vmul.f32 %v1130, %v1130
        %v1224 = vmul.f32 %v1133, %v1133
        %v1225 = vmul.f32 %v1138, %v1138
        %v1226 = vmul.f32 %v1141, %v1141
        %v1227 = vmul.f32 %v1146, %v1146
        %v1228 = vmul.f32 %v1149, %v1149
        %v1229 = vmul.f32 %v1154, %v1154
        %v1230 = vmul.f32 %v1157, %v1157
        %v1231 = vmul.f32 %v1162, %v1162
        %v1232 = vmul.f32 %v1165, %v1165
        %v1233 = vmul.f32 %v1170, %v1170
        %v1234 = vmul.f32 %v1173, %v1173
        %v1235 = vmul.f32 %v1178, %v1178
        %v1236 = vmul.f32 %v1181, %v1181
        %v1237 = vmul.f32 %v1186, %v1186
        %v1238 = vmul.f32 %v1189, %v1189
        %v1239 = vadd.f32 %v1223, %v1224
        %v1240 = vadd.f32 %v1239, %v1225
        %v1241 = vadd.f32 %v1240, %v1226
        %v1242 = vadd.f32 %v1241, %v1227
        %v1243 = vadd.f32 %v1242, %v1228
        %v1244 = vadd.f32 %v1243, %v1229
        %v1245 = vadd.f32 %v1244, %v1230
        %v1246 = vrot.slane %v1245, 4
        %v1247 = vadd.f32 %v1245, %v1246
        %v1248 = vrot.slane %v1247, 2
        %v1249 = vadd.f32 %v1247, %v1248
        %v1250 = vrot.slane %v1249, 1
        %v1251 = vadd.f32 %v1249, %v1250
        %v1252 = vadd.f32 %v1231, %v1232
        %v1253 = vadd.f32 %v1252, %v1233
        %v1254 = vadd.f32 %v1253, %v1234
        %v1255 = vadd.f32 %v1254, %v1235
        %v1256 = vadd.f32 %v1255, %v1236
        %v1257 = vadd.f32 %v1256, %v1237
        %v1258 = vadd.f32 %v1257, %v1238
        %v1259 = vrot.slane %v1258, 4
        %v1260 = vadd.f32 %v1258, %v1259
        %v1261 = vrot.slane %v1260, 2
        %v1262 = vadd.f32 %v1260, %v1261
        %v1263 = vrot.slane %v1262, 1
        %v1264 = vadd.f32 %v1262, %v1263
        %v1265 = vmul.f32 %v1251, %v1220
        %v1266 = vmul.f32 %v1264, %v1220
        %vm1269 = vcmask 1041409
        %v1270 = vsel %vm1269, %v1222, %v1221
        %vm1274 = vcmask 1043459
        %v1275 = vsel %vm1274, %v1266, %v1265
        %vm1277 = vcmask 1041408
        %v1278 = vsel %vm1277, %v1270, %v1275
        %1279 = vmatprep.subr.mxu0 0.0
        %1280 = vmatpush1.msra.mxu0 %v552
        %1281 = vmatprep.subr.mxu0 0.0
        %1282 = vmatpush1.msra.mxu0 %v553
        %1283 = vmatprep.subr.mxu0 0.0
        %1284 = vmatpush1.msra.mxu0 %v554
        %1285 = vmatprep.subr.mxu0 0.0
        %1286 = vmatpush1.msra.mxu0 %v555
        %1287 = vmatprep.subr.mxu0 0.0
        %1288 = vmatpush1.msra.mxu0 %v556
        %1289 = vmatprep.subr.mxu0 0.0
        %1290 = vmatpush1.msra.mxu0 %v557
        %1291 = vmatprep.subr.mxu0 0.0
        %1292 = vmatpush1.msra.mxu0 %v558
        %1293 = vmatprep.subr.mxu0 0.0
        %1294 = vmatpush1.msra.mxu0 %v559
        %1295 = vmatprep.subr.mxu0 0.0
        %1296 = vmatpush1.msra.mxu0 %v560
        %1297 = vmatprep.subr.mxu0 0.0
        %1298 = vmatpush1.msra.mxu0 %v561
        %1299 = vmatprep.subr.mxu0 0.0
        %1300 = vmatpush1.msra.mxu0 %v562
        %1301 = vmatprep.subr.mxu0 0.0
        %1302 = vmatpush1.msra.mxu0 %v563
        %1303 = vmatprep.subr.mxu0 0.0
        %1304 = vmatpush1.msra.mxu0 %v564
        %1305 = vmatprep.subr.mxu0 0.0
        %1306 = vmatpush1.msra.mxu0 %v565
        %1307 = vmatprep.subr.mxu0 0.0
        %1308 = vmatpush1.msra.mxu0 %v566
        %1309 = vmatprep.subr.mxu0 0.0
        %1310 = vmatpush1.msra.mxu0 %v567
        %1311 = vmatprep.subr.mxu0 0.0
        %1312 = vmatpush1.msra.mxu0 0.0
        %1313 = vmatprep.subr.mxu0 0.0
        %1314 = vmatpush1.msra.mxu0 0.0
        %1315 = vmatprep.subr.mxu0 0.0
        %1316 = vmatpush1.msra.mxu0 0.0
        %1317 = vmatprep.subr.mxu0 0.0
        %1318 = vmatpush1.msra.mxu0 0.0
        %1319 = vmatprep.subr.mxu0 0.0
        %1320 = vmatpush1.msra.mxu0 0.0
        %1321 = vmatprep.subr.mxu0 0.0
        %1322 = vmatpush1.msra.mxu0 0.0
        %1323 = vmatprep.subr.mxu0 0.0
        %1324 = vmatpush1.msra.mxu0 0.0
        %1325 = vmatprep.subr.mxu0 0.0
        %1326 = vmatpush1.msra.mxu0 0.0
        %1327 = vmatprep.subr.mxu0 0.0
        %1328 = vmatpush1.msra.mxu0 0.0
        %1329 = vmatprep.subr.mxu0 0.0
        %1330 = vmatpush1.msra.mxu0 0.0
        %1331 = vmatprep.subr.mxu0 0.0
        %1332 = vmatpush1.msra.mxu0 0.0
        %1333 = vmatprep.subr.mxu0 0.0
        %1334 = vmatpush1.msra.mxu0 0.0
        %1335 = vmatprep.subr.mxu0 0.0
        %1336 = vmatpush1.msra.mxu0 0.0
        %1337 = vmatprep.subr.mxu0 0.0
        %1338 = vmatpush1.msra.mxu0 0.0
        %1339 = vmatprep.subr.mxu0 0.0
        %1340 = vmatpush1.msra.mxu0 0.0
        %1341 = vmatprep.subr.mxu0 0.0
        %1342 = vmatpush1.msra.mxu0 0.0
        %1343 = vmatprep.mubr.f32.mxu0 0.0
        %1344 = vmatmul.mubr.f32.gmra.mrb[0].mxu0 %v1278
        %v1345 = vpop.f32.mrb[0].mxu0
        %v1346 = vadd.f32 0.0, %v1345
        %v1347 = vpop.f32.mrb[0].mxu0
        %1348 = vdwg.mxu0
        %v1349 = vmul.f32 %v1346, %v1346
        %v1351 = vrot.slane %v1349, 6
        %v1353 = vsub.f32 %v1346, %v1351
        %v1354 = vadd.f32 %v1353, 1e-05
        %v1355 = vrsqrt.pop %v1354
        %v1357 = vlaneseq
        %v1358 = vshrl.u32 %v1357, 7
        %v1359 = vsub.s32 0, %v1358
        %v1360 = vrot.slane %v1192, %v1359
        %v1362 = vmul.f32 %v1355, %v1360
        %v1365 = vunpack.c.l.s4 1966171168
        %v1366 = vunpack.c.0.s8 %v1365
        %v1367 = vlaneseq
        %v1368 = vshrl.u32 %v1367, 7
        %v1369 = vsub.s32 %v1366, %v1368
        %v1370 = vrot.slane %v1346, %v1369
        %v1371 = vcombine.high %v1370, %v1370
        %v1373 = vunpack.c.l.s4 1966171168
        %v1374 = vunpack.c.0.s8 %v1373
        %v1375 = vlaneseq
        %v1376 = vshrl.u32 %v1375, 7
        %v1377 = vsub.s32 %v1374, %v1376
        %v1378 = vrot.slane %v1370, %v1377
        %v1380 = vunpack.c.l.s4 1966171168
        %v1381 = vunpack.c.0.s8 %v1380
        %v1382 = vlaneseq
        %v1383 = vshrl.u32 %v1382, 7
        %v1384 = vsub.s32 %v1381, %v1383
        %v1385 = vrot.slane %v1371, %v1384
        %v1386 = vlaneseq
        %v1387 = vshrl.u32 %v1386, 7
        %v1388 = vsub.s32 0, %v1387
        %v1389 = vrot.slane %v1378, %v1388
        %v1390 = vlaneseq
        %v1391 = vshrl.u32 %v1390, 7
        %v1392 = vsub.s32 0, %v1391
        %v1393 = vrot.slane %v1385, %v1392
        %v1396 = vsub.f32 %v1130, %v1389
        %v1397 = vsub.f32 %v1133, %v1389
        %v1398 = vsub.f32 %v1138, %v1389
        %v1399 = vsub.f32 %v1141, %v1389
        %v1400 = vsub.f32 %v1146, %v1389
        %v1401 = vsub.f32 %v1149, %v1389
        %v1402 = vsub.f32 %v1154, %v1389
        %v1403 = vsub.f32 %v1157, %v1389
        %v1404 = vsub.f32 %v1162, %v1393
        %v1405 = vsub.f32 %v1165, %v1393
        %v1406 = vsub.f32 %v1170, %v1393
        %v1407 = vsub.f32 %v1173, %v1393
        %v1408 = vsub.f32 %v1178, %v1393
        %v1409 = vsub.f32 %v1181, %v1393
        %v1410 = vsub.f32 %v1186, %v1393
        %v1411 = vsub.f32 %v1189, %v1393
        %v1414 = vunpack.c.l.s4 1966171168
        %v1415 = vunpack.c.0.s8 %v1414
        %v1416 = vlaneseq
        %v1417 = vshrl.u32 %v1416, 7
        %v1418 = vsub.s32 %v1415, %v1417
        %v1419 = vrot.slane %v1362, %v1418
        %v1420 = vcombine.high %v1419, %v1419
        %v1422 = vunpack.c.l.s4 1966171168
        %v1423 = vunpack.c.0.s8 %v1422
        %v1424 = vlaneseq
        %v1425 = vshrl.u32 %v1424, 7
        %v1426 = vsub.s32 %v1423, %v1425
        %v1427 = vrot.slane %v1419, %v1426
        %v1429 = vunpack.c.l.s4 1966171168
        %v1430 = vunpack.c.0.s8 %v1429
        %v1431 = vlaneseq
        %v1432 = vshrl.u32 %v1431, 7
        %v1433 = vsub.s32 %v1430, %v1432
        %v1434 = vrot.slane %v1420, %v1433
        %v1435 = vcombine.high %v1427, %v1427
        %v1436 = vcombine.high %v1434, %v1434
        %v1437 = vlaneseq
        %v1438 = vshrl.u32 %v1437, 7
        %v1439 = vsub.s32 0, %v1438
        %v1440 = vrot.slane %v1435, %v1439
        %v1441 = vlaneseq
        %v1442 = vshrl.u32 %v1441, 7
        %v1443 = vsub.s32 0, %v1442
        %v1444 = vrot.slane %v1436, %v1443
        %v1447 = vmul.f32 %v1396, %v1440
        %v1448 = vmul.f32 %v1397, %v1440
        %v1449 = vmul.f32 %v1398, %v1440
        %v1450 = vmul.f32 %v1399, %v1440
        %v1451 = vmul.f32 %v1400, %v1440
        %v1452 = vmul.f32 %v1401, %v1440
        %v1453 = vmul.f32 %v1402, %v1440
        %v1454 = vmul.f32 %v1403, %v1440
        %v1455 = vmul.f32 %v1404, %v1444
        %v1456 = vmul.f32 %v1405, %v1444
        %v1457 = vmul.f32 %v1406, %v1444
        %v1458 = vmul.f32 %v1407, %v1444
        %v1459 = vmul.f32 %v1408, %v1444
        %v1460 = vmul.f32 %v1409, %v1444
        %v1461 = vmul.f32 %v1410, %v1444
        %v1462 = vmul.f32 %v1411, %v1444
        %v1464 = vlaneseq
        %v1465 = vshrl.u32 %v1464, 7
        %v1466 = vsub.s32 0, %v1465
        %v1467 = vrot.slane %v1193, %v1466
        %v1469 = vadd.f32 %v1447, %v1467
        %v1470 = vadd.f32 %v1448, %v1467
        %v1471 = vadd.f32 %v1449, %v1467
        %v1472 = vadd.f32 %v1450, %v1467
        %v1473 = vadd.f32 %v1451, %v1467
        %v1474 = vadd.f32 %v1452, %v1467
        %v1475 = vadd.f32 %v1453, %v1467
        %v1476 = vadd.f32 %v1454, %v1467
        %v1477 = vadd.f32 %v1455, %v1467
        %v1478 = vadd.f32 %v1456, %v1467
        %v1479 = vadd.f32 %v1457, %v1467
        %v1480 = vadd.f32 %v1458, %v1467
        %v1481 = vadd.f32 %v1459, %v1467
        %v1482 = vadd.f32 %v1460, %v1467
        %v1483 = vadd.f32 %v1461, %v1467
        %v1484 = vadd.f32 %v1462, %v1467
        %v1485 = vmax.f32 %v1469, 0.0
        %v1486 = vmax.f32 %v1470, 0.0
        %v1487 = vmax.f32 %v1471, 0.0
        %v1488 = vmax.f32 %v1472, 0.0
        %v1489 = vmax.f32 %v1473, 0.0
        %v1490 = vmax.f32 %v1474, 0.0
        %v1491 = vmax.f32 %v1475, 0.0
        %v1492 = vmax.f32 %v1476, 0.0
        %v1493 = vmax.f32 %v1477, 0.0
        %v1494 = vmax.f32 %v1478, 0.0
        %v1495 = vmax.f32 %v1479, 0.0
        %v1496 = vmax.f32 %v1480, 0.0
        %v1497 = vmax.f32 %v1481, 0.0
        %v1498 = vmax.f32 %v1482, 0.0
        %v1499 = vmax.f32 %v1483, 0.0
        %v1500 = vmax.f32 %v1484, 0.0
        %v1501 = vpack.c.bf16 %v1486, %v1485
        %v1502 = vpack.c.bf16 %v1488, %v1487
        %v1503 = vpack.c.bf16 %v1490, %v1489
        %v1504 = vpack.c.bf16 %v1492, %v1491
        %v1505 = vpack.c.bf16 %v1494, %v1493
        %v1506 = vpack.c.bf16 %v1496, %v1495
        %v1507 = vpack.c.bf16 %v1498, %v1497
        %v1508 = vpack.c.bf16 %v1500, %v1499
        %v1509 = vld [vmem:[#allocation14] sm:$0xf]
        %v1510 = vld [vmem:[#allocation14 + $0x4] sm:$0xf]
        %v1511 = vld [vmem:[#allocation14 + $0x8] sm:$0xf]
        %v1512 = vld [vmem:[#allocation14 + $0xc] sm:$0xf]
        %v1513 = vld [vmem:[#allocation14 + $0x10] sm:$0xf]
        %v1514 = vld [vmem:[#allocation14 + $0x14] sm:$0xf]
        %v1515 = vld [vmem:[#allocation14 + $0x18] sm:$0xf]
        %v1516 = vld [vmem:[#allocation14 + $0x1c] sm:$0xf]
        %v1517 = vld [vmem:[#allocation14 + $0x20] sm:$0xf]
        %v1518 = vld [vmem:[#allocation14 + $0x24] sm:$0xf]
        %v1519 = vld [vmem:[#allocation14 + $0x28] sm:$0xf]
        %v1520 = vld [vmem:[#allocation14 + $0x2c] sm:$0xf]
        %v1521 = vld [vmem:[#allocation14 + $0x30] sm:$0xf]
        %v1522 = vld [vmem:[#allocation14 + $0x34] sm:$0xf]
        %v1523 = vld [vmem:[#allocation14 + $0x38] sm:$0xf]
        %v1524 = vld [vmem:[#allocation14 + $0x3c] sm:$0xf]
        %vm1557 = vcmask 1040384
        %vm1558 = vcmask 1044484
        %vm1559 = vmor %vm1557, %vm1558
        %v1560 = vrot.slane %v592, 7
        %v1561 = vrot.slane %v1560, 4
        %v1562 = vrot.slane %v593, 7
        %v1563 = vsel %vm1559, %v1561, %v1562
        %v1564 = vrot.slane %v596, 7
        %v1565 = vrot.slane %v1564, 4
        %v1566 = vrot.slane %v597, 7
        %v1567 = vsel %vm1559, %v1565, %v1566
        %v1568 = vrot.slane %v600, 7
        %v1569 = vrot.slane %v1568, 4
        %v1570 = vrot.slane %v601, 7
        %v1571 = vsel %vm1559, %v1569, %v1570
        %v1572 = vrot.slane %v603, 7
        %v1573 = vrot.slane %v1572, 4
        %v1574 = vrot.slane %v604, 7
        %v1575 = vsel %vm1559, %v1573, %v1574
        %v1576 = vrot.slane %v607, 7
        %v1577 = vrot.slane %v1576, 4
        %v1578 = vrot.slane %v608, 7
        %v1579 = vsel %vm1559, %v1577, %v1578
        %v1580 = vrot.slane %v611, 7
        %v1581 = vrot.slane %v1580, 4
        %v1582 = vrot.slane %v612, 7
        %v1583 = vsel %vm1559, %v1581, %v1582
        %v1584 = vrot.slane %v615, 7
        %v1585 = vrot.slane %v1584, 4
        %v1586 = vrot.slane %v616, 7
        %v1587 = vsel %vm1559, %v1585, %v1586
        %v1588 = vrot.slane %v619, 7
        %v1589 = vrot.slane %v1588, 4
        %v1590 = vrot.slane %v620, 7
        %v1591 = vsel %vm1559, %v1589, %v1590
        %v1592 = vrot.slane %v694, 7
        %v1593 = vrot.slane %v1592, 4
        %v1594 = vrot.slane %v695, 7
        %v1595 = vsel %vm1559, %v1593, %v1594
        %v1596 = vrot.slane %v698, 7
        %v1597 = vrot.slane %v1596, 4
        %v1598 = vrot.slane %v699, 7
        %v1599 = vsel %vm1559, %v1597, %v1598
        %v1600 = vrot.slane %v702, 7
        %v1601 = vrot.slane %v1600, 4
        %v1602 = vrot.slane %v703, 7
        %v1603 = vsel %vm1559, %v1601, %v1602
        %v1604 = vrot.slane %v705, 7
        %v1605 = vrot.slane %v1604, 4
        %v1606 = vrot.slane %v706, 7
        %v1607 = vsel %vm1559, %v1605, %v1606
        %v1608 = vrot.slane %v709, 7
        %v1609 = vrot.slane %v1608, 4
        %v1610 = vrot.slane %v710, 7
        %v1611 = vsel %vm1559, %v1609, %v1610
        %v1612 = vrot.slane %v713, 7
        %v1613 = vrot.slane %v1612, 4
        %v1614 = vrot.slane %v714, 7
        %v1615 = vsel %vm1559, %v1613, %v1614
        %v1616 = vrot.slane %v717, 7
        %v1617 = vrot.slane %v1616, 4
        %v1618 = vrot.slane %v718, 7
        %v1619 = vsel %vm1559, %v1617, %v1618
        %v1620 = vrot.slane %v721, 7
        %v1621 = vrot.slane %v1620, 4
        %v1622 = vrot.slane %v722, 7
        %v1623 = vsel %vm1559, %v1621, %v1622
        %v1625 = vshrl.u32 %v593, 16
        %v1627 = vrot.slane %v1625, 4
        %v1628 = vshll.u32 %v593, 16
        %v1630 = vrot.slane %v1628, 5
        %v1631 = vor.u32 %v1627, %v1630
        %v1632 = vrot.slane %v1631, 4
        %v1634 = vshll.u32 %v594, 16
        %v1636 = vrot.slane %v1634, 5
        %v1637 = vsel %vm774, %v1632, %v1636
        %v1639 = vshrl.u32 %v597, 16
        %v1641 = vrot.slane %v1639, 4
        %v1642 = vshll.u32 %v597, 16
        %v1644 = vrot.slane %v1642, 5
        %v1645 = vor.u32 %v1641, %v1644
        %v1646 = vrot.slane %v1645, 4
        %v1648 = vshll.u32 %v598, 16
        %v1650 = vrot.slane %v1648, 5
        %v1651 = vsel %vm774, %v1646, %v1650
        %v1653 = vshrl.u32 %v601, 16
        %v1655 = vrot.slane %v1653, 4
        %v1656 = vshll.u32 %v601, 16
        %v1658 = vrot.slane %v1656, 5
        %v1659 = vor.u32 %v1655, %v1658
        %v1660 = vrot.slane %v1659, 4
        %v1662 = vshll.u32 %v602, 16
        %v1664 = vrot.slane %v1662, 5
        %v1665 = vsel %vm774, %v1660, %v1664
        %v1667 = vshrl.u32 %v695, 16
        %v1669 = vrot.slane %v1667, 4
        %v1670 = vshll.u32 %v695, 16
        %v1672 = vrot.slane %v1670, 5
        %v1673 = vor.u32 %v1669, %v1672
        %v1674 = vrot.slane %v1673, 4
        %v1676 = vshll.u32 %v696, 16
        %v1678 = vrot.slane %v1676, 5
        %v1679 = vsel %vm774, %v1674, %v1678
        %v1681 = vshrl.u32 %v699, 16
        %v1683 = vrot.slane %v1681, 4
        %v1684 = vshll.u32 %v699, 16
        %v1686 = vrot.slane %v1684, 5
        %v1687 = vor.u32 %v1683, %v1686
        %v1688 = vrot.slane %v1687, 4
        %v1690 = vshll.u32 %v700, 16
        %v1692 = vrot.slane %v1690, 5
        %v1693 = vsel %vm774, %v1688, %v1692
        %v1695 = vshrl.u32 %v703, 16
        %v1697 = vrot.slane %v1695, 4
        %v1698 = vshll.u32 %v703, 16
        %v1700 = vrot.slane %v1698, 5
        %v1701 = vor.u32 %v1697, %v1700
        %v1702 = vrot.slane %v1701, 4
        %v1704 = vshll.u32 %v704, 16
        %v1706 = vrot.slane %v1704, 5
        %v1707 = vsel %vm774, %v1702, %v1706
        %vm1724 = vcmask 1041408
        %vm1725 = vcmask 1045508
        %vm1726 = vmor %vm1724, %vm1725
        %v1727 = vrot.slane %v593, 6
        %v1728 = vrot.slane %v1727, 4
        %v1729 = vrot.slane %v594, 6
        %v1730 = vsel %vm1726, %v1728, %v1729
        %v1731 = vrot.slane %v597, 6
        %v1732 = vrot.slane %v1731, 4
        %v1733 = vrot.slane %v598, 6
        %v1734 = vsel %vm1726, %v1732, %v1733
        %v1735 = vrot.slane %v601, 6
        %v1736 = vrot.slane %v1735, 4
        %v1737 = vrot.slane %v602, 6
        %v1738 = vsel %vm1726, %v1736, %v1737
        %v1739 = vrot.slane %v604, 6
        %v1740 = vrot.slane %v1739, 4
        %v1741 = vrot.slane %v605, 6
        %v1742 = vsel %vm1726, %v1740, %v1741
        %v1743 = vrot.slane %v608, 6
        %v1744 = vrot.slane %v1743, 4
        %v1745 = vrot.slane %v609, 6
        %v1746 = vsel %vm1726, %v1744, %v1745
        %v1747 = vrot.slane %v612, 6
        %v1748 = vrot.slane %v1747, 4
        %v1749 = vrot.slane %v613, 6
        %v1750 = vsel %vm1726, %v1748, %v1749
        %v1751 = vrot.slane %v616, 6
        %v1752 = vrot.slane %v1751, 4
        %v1753 = vrot.slane %v617, 6
        %v1754 = vsel %vm1726, %v1752, %v1753
        %v1755 = vrot.slane %v620, 6
        %v1756 = vrot.slane %v1755, 4
        %v1757 = vrot.slane %v621, 6
        %v1758 = vsel %vm1726, %v1756, %v1757
        %v1759 = vrot.slane %v695, 6
        %v1760 = vrot.slane %v1759, 4
        %v1761 = vrot.slane %v696, 6
        %v1762 = vsel %vm1726, %v1760, %v1761
        %v1763 = vrot.slane %v699, 6
        %v1764 = vrot.slane %v1763, 4
        %v1765 = vrot.slane %v700, 6
        %v1766 = vsel %vm1726, %v1764, %v1765
        %v1767 = vrot.slane %v703, 6
        %v1768 = vrot.slane %v1767, 4
        %v1769 = vrot.slane %v704, 6
        %v1770 = vsel %vm1726, %v1768, %v1769
        %v1771 = vrot.slane %v706, 6
        %v1772 = vrot.slane %v1771, 4
        %v1773 = vrot.slane %v707, 6
        %v1774 = vsel %vm1726, %v1772, %v1773
        %v1775 = vrot.slane %v710, 6
        %v1776 = vrot.slane %v1775, 4
        %v1777 = vrot.slane %v711, 6
        %v1778 = vsel %vm1726, %v1776, %v1777
        %v1779 = vrot.slane %v714, 6
        %v1780 = vrot.slane %v1779, 4
        %v1781 = vrot.slane %v715, 6
        %v1782 = vsel %vm1726, %v1780, %v1781
        %v1783 = vrot.slane %v718, 6
        %v1784 = vrot.slane %v1783, 4
        %v1785 = vrot.slane %v719, 6
        %v1786 = vsel %vm1726, %v1784, %v1785
        %v1787 = vrot.slane %v722, 6
        %v1788 = vrot.slane %v1787, 4
        %v1789 = vrot.slane %v723, 6
        %v1790 = vsel %vm1726, %v1788, %v1789
        %v1803 = vrot.slane %v623, 7
        %v1804 = vrot.slane %v1803, 4
        %v1805 = vrot.slane %v624, 7
        %v1806 = vsel %vm1559, %v1804, %v1805
        %v1807 = vrot.slane %v627, 7
        %v1808 = vrot.slane %v1807, 4
        %v1809 = vrot.slane %v628, 7
        %v1810 = vsel %vm1559, %v1808, %v1809
        %v1811 = vrot.slane %v631, 7
        %v1812 = vrot.slane %v1811, 4
        %v1813 = vrot.slane %v632, 7
        %v1814 = vsel %vm1559, %v1812, %v1813
        %v1815 = vrot.slane %v725, 7
        %v1816 = vrot.slane %v1815, 4
        %v1817 = vrot.slane %v726, 7
        %v1818 = vsel %vm1559, %v1816, %v1817
        %v1819 = vrot.slane %v729, 7
        %v1820 = vrot.slane %v1819, 4
        %v1821 = vrot.slane %v730, 7
        %v1822 = vsel %vm1559, %v1820, %v1821
        %v1823 = vrot.slane %v733, 7
        %v1824 = vrot.slane %v1823, 4
        %v1825 = vrot.slane %v734, 7
        %v1826 = vsel %vm1559, %v1824, %v1825
        %v1833 = vrot.slane %v624, 6
        %v1834 = vrot.slane %v1833, 4
        %v1835 = vrot.slane %v625, 6
        %v1836 = vsel %vm1726, %v1834, %v1835
        %v1837 = vrot.slane %v628, 6
        %v1838 = vrot.slane %v1837, 4
        %v1839 = vrot.slane %v629, 6
        %v1840 = vsel %vm1726, %v1838, %v1839
        %v1841 = vrot.slane %v632, 6
        %v1842 = vrot.slane %v1841, 4
        %v1843 = vrot.slane %v633, 6
        %v1844 = vsel %vm1726, %v1842, %v1843
        %v1845 = vrot.slane %v726, 6
        %v1846 = vrot.slane %v1845, 4
        %v1847 = vrot.slane %v727, 6
        %v1848 = vsel %vm1726, %v1846, %v1847
        %v1849 = vrot.slane %v730, 6
        %v1850 = vrot.slane %v1849, 4
        %v1851 = vrot.slane %v731, 6
        %v1852 = vsel %vm1726, %v1850, %v1851
        %v1853 = vrot.slane %v734, 6
        %v1854 = vrot.slane %v1853, 4
        %v1855 = vrot.slane %v735, 6
        %v1856 = vsel %vm1726, %v1854, %v1855
        %v1869 = vrot.slane %v635, 7
        %v1870 = vrot.slane %v1869, 4
        %v1871 = vrot.slane %v636, 7
        %v1872 = vsel %vm1559, %v1870, %v1871
        %v1873 = vrot.slane %v638, 7
        %v1874 = vrot.slane %v1873, 4
        %v1875 = vrot.slane %v639, 7
        %v1876 = vsel %vm1559, %v1874, %v1875
        %v1877 = vrot.slane %v642, 7
        %v1878 = vrot.slane %v1877, 4
        %v1879 = vrot.slane %v643, 7
        %v1880 = vsel %vm1559, %v1878, %v1879
        %v1881 = vrot.slane %v737, 7
        %v1882 = vrot.slane %v1881, 4
        %v1883 = vrot.slane %v738, 7
        %v1884 = vsel %vm1559, %v1882, %v1883
        %v1885 = vrot.slane %v740, 7
        %v1886 = vrot.slane %v1885, 4
        %v1887 = vrot.slane %v741, 7
        %v1888 = vsel %vm1559, %v1886, %v1887
        %v1889 = vrot.slane %v744, 7
        %v1890 = vrot.slane %v1889, 4
        %v1891 = vrot.slane %v745, 7
        %v1892 = vsel %vm1559, %v1890, %v1891
        %v1894 = vshrl.u32 %v636, 16
        %v1896 = vrot.slane %v1894, 4
        %v1897 = vshll.u32 %v636, 16
        %v1899 = vrot.slane %v1897, 5
        %v1900 = vor.u32 %v1896, %v1899
        %v1901 = vrot.slane %v1900, 4
        %v1903 = vshll.u32 %v637, 16
        %v1905 = vrot.slane %v1903, 5
        %v1906 = vsel %vm774, %v1901, %v1905
        %v1908 = vshrl.u32 %v639, 16
        %v1910 = vrot.slane %v1908, 4
        %v1911 = vshll.u32 %v639, 16
        %v1913 = vrot.slane %v1911, 5
        %v1914 = vor.u32 %v1910, %v1913
        %v1915 = vrot.slane %v1914, 4
        %v1917 = vshll.u32 %v640, 16
        %v1919 = vrot.slane %v1917, 5
        %v1920 = vsel %vm774, %v1915, %v1919
        %v1922 = vshrl.u32 %v643, 16
        %v1924 = vrot.slane %v1922, 4
        %v1925 = vshll.u32 %v643, 16
        %v1927 = vrot.slane %v1925, 5
        %v1928 = vor.u32 %v1924, %v1927
        %v1929 = vrot.slane %v1928, 4
        %v1931 = vshll.u32 %v644, 16
        %v1933 = vrot.slane %v1931, 5
        %v1934 = vsel %vm774, %v1929, %v1933
        %v1936 = vshrl.u32 %v738, 16
        %v1938 = vrot.slane %v1936, 4
        %v1939 = vshll.u32 %v738, 16
        %v1941 = vrot.slane %v1939, 5
        %v1942 = vor.u32 %v1938, %v1941
        %v1943 = vrot.slane %v1942, 4
        %v1945 = vshll.u32 %v739, 16
        %v1947 = vrot.slane %v1945, 5
        %v1948 = vsel %vm774, %v1943, %v1947
        %v1950 = vshrl.u32 %v741, 16
        %v1952 = vrot.slane %v1950, 4
        %v1953 = vshll.u32 %v741, 16
        %v1955 = vrot.slane %v1953, 5
        %v1956 = vor.u32 %v1952, %v1955
        %v1957 = vrot.slane %v1956, 4
        %v1959 = vshll.u32 %v742, 16
        %v1961 = vrot.slane %v1959, 5
        %v1962 = vsel %vm774, %v1957, %v1961
        %v1964 = vshrl.u32 %v745, 16
        %v1966 = vrot.slane %v1964, 4
        %v1967 = vshll.u32 %v745, 16
        %v1969 = vrot.slane %v1967, 5
        %v1970 = vor.u32 %v1966, %v1969
        %v1971 = vrot.slane %v1970, 4
        %v1973 = vshll.u32 %v746, 16
        %v1975 = vrot.slane %v1973, 5
        %v1976 = vsel %vm774, %v1971, %v1975
        %v1983 = vrot.slane %v636, 6
        %v1984 = vrot.slane %v1983, 4
        %v1985 = vrot.slane %v637, 6
        %v1986 = vsel %vm1726, %v1984, %v1985
        %v1987 = vrot.slane %v639, 6
        %v1988 = vrot.slane %v1987, 4
        %v1989 = vrot.slane %v640, 6
        %v1990 = vsel %vm1726, %v1988, %v1989
        %v1991 = vrot.slane %v643, 6
        %v1992 = vrot.slane %v1991, 4
        %v1993 = vrot.slane %v644, 6
        %v1994 = vsel %vm1726, %v1992, %v1993
        %v1995 = vrot.slane %v738, 6
        %v1996 = vrot.slane %v1995, 4
        %v1997 = vrot.slane %v739, 6
        %v1998 = vsel %vm1726, %v1996, %v1997
        %v1999 = vrot.slane %v741, 6
        %v2000 = vrot.slane %v1999, 4
        %v2001 = vrot.slane %v742, 6
        %v2002 = vsel %vm1726, %v2000, %v2001
        %v2003 = vrot.slane %v745, 6
        %v2004 = vrot.slane %v2003, 4
        %v2005 = vrot.slane %v746, 6
        %v2006 = vsel %vm1726, %v2004, %v2005
        %v2007 = vunpack.c.l.b16 %v1563
        %v2008 = vunpack.c.l.b16 %v1567
        %v2009 = vunpack.c.l.b16 %v1571
        %v2010 = vunpack.c.l.b16 %v1575
        %v2011 = vunpack.c.l.b16 %v1579
        %v2012 = vunpack.c.l.b16 %v1583
        %v2013 = vunpack.c.l.b16 %v1587
        %v2014 = vunpack.c.l.b16 %v1591
        %v2015 = vunpack.c.l.b16 %v1595
        %v2016 = vunpack.c.l.b16 %v1599
        %v2017 = vunpack.c.l.b16 %v1603
        %v2018 = vunpack.c.l.b16 %v1607
        %v2019 = vunpack.c.l.b16 %v1611
        %v2020 = vunpack.c.l.b16 %v1615
        %v2021 = vunpack.c.l.b16 %v1619
        %v2022 = vunpack.c.l.b16 %v1623
        %v2023 = vpack.c.b16 %v2008, %v2007
        %v2024 = vpack.c.b16 %v2010, %v2009
        %v2025 = vpack.c.b16 %v2012, %v2011
        %v2026 = vpack.c.b16 %v2014, %v2013
        %v2027 = vpack.c.b16 %v2016, %v2015
        %v2028 = vpack.c.b16 %v2018, %v2017
        %v2029 = vpack.c.b16 %v2020, %v2019
        %v2030 = vpack.c.b16 %v2022, %v2021
        %v2039 = vunpack.c.l.b16 %v1637
        %v2040 = vunpack.c.l.b16 %v1651
        %v2041 = vunpack.c.l.b16 %v1665
        %v2042 = vunpack.c.l.b16 %v1679
        %v2043 = vunpack.c.l.b16 %v1693
        %v2044 = vunpack.c.l.b16 %v1707
        %v2045 = vpack.c.b16 %v2040, %v2039
        %v2046 = vpack.c.b16 %v1015, %v2041
        %v2047 = vpack.c.b16 %v1017, %v1016
        %v2048 = vpack.c.b16 %v1019, %v1018
        %v2049 = vpack.c.b16 %v2043, %v2042
        %v2050 = vpack.c.b16 %v1023, %v2044
        %v2051 = vpack.c.b16 %v1025, %v1024
        %v2052 = vpack.c.b16 %v1027, %v1026
        %v2061 = vunpack.c.l.b16 %v1730
        %v2062 = vunpack.c.l.b16 %v1734
        %v2063 = vunpack.c.l.b16 %v1738
        %v2064 = vunpack.c.l.b16 %v1742
        %v2065 = vunpack.c.l.b16 %v1746
        %v2066 = vunpack.c.l.b16 %v1750
        %v2067 = vunpack.c.l.b16 %v1754
        %v2068 = vunpack.c.l.b16 %v1758
        %v2069 = vunpack.c.l.b16 %v1762
        %v2070 = vunpack.c.l.b16 %v1766
        %v2071 = vunpack.c.l.b16 %v1770
        %v2072 = vunpack.c.l.b16 %v1774
        %v2073 = vunpack.c.l.b16 %v1778
        %v2074 = vunpack.c.l.b16 %v1782
        %v2075 = vunpack.c.l.b16 %v1786
        %v2076 = vunpack.c.l.b16 %v1790
        %v2077 = vpack.c.b16 %v2062, %v2061
        %v2078 = vpack.c.b16 %v2064, %v2063
        %v2079 = vpack.c.b16 %v2066, %v2065
        %v2080 = vpack.c.b16 %v2068, %v2067
        %v2081 = vpack.c.b16 %v2070, %v2069
        %v2082 = vpack.c.b16 %v2072, %v2071
        %v2083 = vpack.c.b16 %v2074, %v2073
        %v2084 = vpack.c.b16 %v2076, %v2075
        %v2093 = vunpack.c.l.b16 %v1806
        %v2094 = vunpack.c.l.b16 %v1810
        %v2095 = vunpack.c.l.b16 %v1814
        %v2096 = vunpack.c.l.b16 %v1818
        %v2097 = vunpack.c.l.b16 %v1822
        %v2098 = vunpack.c.l.b16 %v1826
        %v2099 = vpack.c.b16 %v2011, %v2010
        %v2100 = vpack.c.b16 %v2013, %v2012
        %v2101 = vpack.c.b16 %v2093, %v2014
        %v2102 = vpack.c.b16 %v2095, %v2094
        %v2103 = vpack.c.b16 %v2019, %v2018
        %v2104 = vpack.c.b16 %v2021, %v2020
        %v2105 = vpack.c.b16 %v2096, %v2022
        %v2106 = vpack.c.b16 %v2098, %v2097
        %v2115 = vunpack.c.l.b16 %v1836
        %v2116 = vunpack.c.l.b16 %v1840
        %v2117 = vunpack.c.l.b16 %v1844
        %v2118 = vunpack.c.l.b16 %v1848
        %v2119 = vunpack.c.l.b16 %v1852
        %v2120 = vunpack.c.l.b16 %v1856
        %v2121 = vpack.c.b16 %v2065, %v2064
        %v2122 = vpack.c.b16 %v2067, %v2066
        %v2123 = vpack.c.b16 %v2115, %v2068
        %v2124 = vpack.c.b16 %v2117, %v2116
        %v2125 = vpack.c.b16 %v2073, %v2072
        %v2126 = vpack.c.b16 %v2075, %v2074
        %v2127 = vpack.c.b16 %v2118, %v2076
        %v2128 = vpack.c.b16 %v2120, %v2119
        %v2137 = vunpack.c.l.b16 %v1872
        %v2138 = vunpack.c.l.b16 %v1876
        %v2139 = vunpack.c.l.b16 %v1880
        %v2140 = vunpack.c.l.b16 %v1884
        %v2141 = vunpack.c.l.b16 %v1888
        %v2142 = vunpack.c.l.b16 %v1892
        %v2143 = vpack.c.b16 %v2094, %v2093
        %v2144 = vpack.c.b16 %v2137, %v2095
        %v2145 = vpack.c.b16 %v2139, %v2138
        %v2146 = vpack.c.b16 %v2097, %v2096
        %v2147 = vpack.c.b16 %v2140, %v2098
        %v2148 = vpack.c.b16 %v2142, %v2141
        %v2155 = vunpack.c.l.b16 %v1906
        %v2156 = vunpack.c.l.b16 %v1920
        %v2157 = vunpack.c.l.b16 %v1934
        %v2158 = vunpack.c.l.b16 %v1948
        %v2159 = vunpack.c.l.b16 %v1962
        %v2160 = vunpack.c.l.b16 %v1976
        %v2161 = vpack.c.b16 %v1021, %v1020
        %v2162 = vpack.c.b16 %v2155, %v1022
        %v2163 = vpack.c.b16 %v2157, %v2156
        %v2164 = vpack.c.b16 %v1029, %v1028
        %v2165 = vpack.c.b16 %v2158, %v1030
        %v2166 = vpack.c.b16 %v2160, %v2159
        %v2173 = vunpack.c.l.b16 %v1986
        %v2174 = vunpack.c.l.b16 %v1990
        %v2175 = vunpack.c.l.b16 %v1994
        %v2176 = vunpack.c.l.b16 %v1998
        %v2177 = vunpack.c.l.b16 %v2002
        %v2178 = vunpack.c.l.b16 %v2006
        %v2179 = vpack.c.b16 %v2116, %v2115
        %v2180 = vpack.c.b16 %v2173, %v2117
        %v2181 = vpack.c.b16 %v2175, %v2174
        %v2182 = vpack.c.b16 %v2119, %v2118
        %v2183 = vpack.c.b16 %v2176, %v2120
        %v2184 = vpack.c.b16 %v2178, %v2177
        %v2191 = vld [vmem:[#allocation8] sm:$0xf]
        %v2192 = vld [vmem:[#allocation8 + $0x4] sm:$0xf]
        %v2193 = vld [vmem:[#allocation8 + $0x8] sm:$0xf]
        %v2194 = vld [vmem:[#allocation8 + $0xc] sm:$0xf]
        %v2195 = vld [vmem:[#allocation8 + $0x10] sm:$0xf]
        %v2196 = vld [vmem:[#allocation8 + $0x14] sm:$0xf]
        %v2197 = vld [vmem:[#allocation8 + $0x18] sm:$0xf]
        %v2198 = vld [vmem:[#allocation8 + $0x1c] sm:$0xf]
        %v2199 = vld [vmem:[#allocation8 + $0x20] sm:$0xf]
        %v2200 = vld [vmem:[#allocation8 + $0x24] sm:$0xf]
        %v2201 = vld [vmem:[#allocation8 + $0x28] sm:$0xf]
        %v2202 = vld [vmem:[#allocation8 + $0x2c] sm:$0xf]
        %v2203 = vld [vmem:[#allocation8 + $0x30] sm:$0xf]
        %v2204 = vld [vmem:[#allocation8 + $0x34] sm:$0xf]
        %v2205 = vld [vmem:[#allocation8 + $0x38] sm:$0xf]
        %v2206 = vld [vmem:[#allocation8 + $0x3c] sm:$0xf]
        %v2207 = vld [vmem:[#allocation8 + $0x40] sm:$0xf]
        %v2208 = vld [vmem:[#allocation8 + $0x44] sm:$0xf]
        %v2209 = vld [vmem:[#allocation8 + $0x48] sm:$0xf]
        %v2210 = vld [vmem:[#allocation8 + $0x4c] sm:$0xf]
        %v2211 = vld [vmem:[#allocation8 + $0x50] sm:$0xf]
        %v2212 = vld [vmem:[#allocation8 + $0x54] sm:$0xf]
        %v2213 = vld [vmem:[#allocation8 + $0x58] sm:$0xf]
        %v2214 = vld [vmem:[#allocation8 + $0x5c] sm:$0xf]
        %v2215 = vld [vmem:[#allocation8 + $0x60] sm:$0xf]
        %v2216 = vld [vmem:[#allocation8 + $0x64] sm:$0xf]
        %v2217 = vld [vmem:[#allocation8 + $0x68] sm:$0xf]
        %v2218 = vld [vmem:[#allocation8 + $0x6c] sm:$0xf]
        %v2219 = vld [vmem:[#allocation8 + $0x70] sm:$0xf]
        %v2220 = vld [vmem:[#allocation8 + $0x74] sm:$0xf]
        %v2221 = vld [vmem:[#allocation8 + $0x78] sm:$0xf]
        %v2222 = vld [vmem:[#allocation8 + $0x7c] sm:$0xf]
        %v2223 = vld [vmem:[#allocation8 + $0x80] sm:$0xf]
        %v2224 = vld [vmem:[#allocation8 + $0x84] sm:$0xf]
        %v2225 = vld [vmem:[#allocation8 + $0x88] sm:$0xf]
        %v2226 = vld [vmem:[#allocation8 + $0x8c] sm:$0xf]
        %v2227 = vld [vmem:[#allocation8 + $0x90] sm:$0xf]
        %v2228 = vld [vmem:[#allocation8 + $0x94] sm:$0xf]
        %v2229 = vld [vmem:[#allocation8 + $0x98] sm:$0xf]
        %v2230 = vld [vmem:[#allocation8 + $0x9c] sm:$0xf]
        %v2231 = vld [vmem:[#allocation8 + $0xa0] sm:$0xf]
        %v2232 = vld [vmem:[#allocation8 + $0xa4] sm:$0xf]
        %v2233 = vld [vmem:[#allocation8 + $0xa8] sm:$0xf]
        %v2234 = vld [vmem:[#allocation8 + $0xac] sm:$0xf]
        %v2235 = vld [vmem:[#allocation8 + $0xb0] sm:$0xf]
        %v2236 = vld [vmem:[#allocation8 + $0xb4] sm:$0xf]
        %v2237 = vld [vmem:[#allocation8 + $0xb8] sm:$0xf]
        %v2238 = vld [vmem:[#allocation8 + $0xbc] sm:$0xf]
        %v2239 = vld [vmem:[#allocation8 + $0xc0] sm:$0xf]
        %v2240 = vld [vmem:[#allocation8 + $0xc4] sm:$0xf]
        %v2241 = vld [vmem:[#allocation8 + $0xc8] sm:$0xf]
        %v2242 = vld [vmem:[#allocation8 + $0xcc] sm:$0xf]
        %v2243 = vld [vmem:[#allocation8 + $0xd0] sm:$0xf]
        %v2244 = vld [vmem:[#allocation8 + $0xd4] sm:$0xf]
        %v2245 = vld [vmem:[#allocation8 + $0xd8] sm:$0xf]
        %v2246 = vld [vmem:[#allocation8 + $0xdc] sm:$0xf]
        %v2247 = vld [vmem:[#allocation8 + $0xe0] sm:$0xf]
        %v2248 = vld [vmem:[#allocation8 + $0xe4] sm:$0xf]
        %v2249 = vld [vmem:[#allocation8 + $0xe8] sm:$0xf]
        %v2250 = vld [vmem:[#allocation8 + $0xec] sm:$0xf]
        %v2251 = vld [vmem:[#allocation8 + $0xf0] sm:$0xf]
        %v2252 = vld [vmem:[#allocation8 + $0xf4] sm:$0xf]
        %v2253 = vld [vmem:[#allocation8 + $0xf8] sm:$0xf]
        %v2254 = vld [vmem:[#allocation8 + $0xfc] sm:$0xf]
        %v2255 = vld [vmem:[#allocation8 + $0x100] sm:$0xf]
        %v2256 = vld [vmem:[#allocation8 + $0x104] sm:$0xf]
        %v2257 = vld [vmem:[#allocation8 + $0x108] sm:$0xf]
        %v2258 = vld [vmem:[#allocation8 + $0x10c] sm:$0xf]
        %v2259 = vld [vmem:[#allocation8 + $0x110] sm:$0xf]
        %v2260 = vld [vmem:[#allocation8 + $0x114] sm:$0xf]
        %v2261 = vld [vmem:[#allocation8 + $0x118] sm:$0xf]
        %v2262 = vld [vmem:[#allocation8 + $0x11c] sm:$0xf]
        %v2263 = vld [vmem:[#allocation8 + $0x120] sm:$0xf]
        %v2264 = vld [vmem:[#allocation8 + $0x124] sm:$0xf]
        %v2265 = vld [vmem:[#allocation8 + $0x128] sm:$0xf]
        %v2266 = vld [vmem:[#allocation8 + $0x12c] sm:$0xf]
        %v2267 = vld [vmem:[#allocation8 + $0x130] sm:$0xf]
        %v2268 = vld [vmem:[#allocation8 + $0x134] sm:$0xf]
        %v2269 = vld [vmem:[#allocation8 + $0x138] sm:$0xf]
        %v2270 = vld [vmem:[#allocation8 + $0x13c] sm:$0xf]
        %v2271 = vld [vmem:[#allocation8 + $0x140] sm:$0xf]
        %v2272 = vld [vmem:[#allocation8 + $0x144] sm:$0xf]
        %v2273 = vld [vmem:[#allocation8 + $0x148] sm:$0xf]
        %v2274 = vld [vmem:[#allocation8 + $0x14c] sm:$0xf]
        %v2275 = vld [vmem:[#allocation8 + $0x150] sm:$0xf]
        %v2276 = vld [vmem:[#allocation8 + $0x154] sm:$0xf]
        %v2277 = vld [vmem:[#allocation8 + $0x158] sm:$0xf]
        %v2278 = vld [vmem:[#allocation8 + $0x15c] sm:$0xf]
        %v2279 = vld [vmem:[#allocation8 + $0x160] sm:$0xf]
        %v2280 = vld [vmem:[#allocation8 + $0x164] sm:$0xf]
        %v2281 = vld [vmem:[#allocation8 + $0x168] sm:$0xf]
        %v2282 = vld [vmem:[#allocation8 + $0x16c] sm:$0xf]
        %v2283 = vld [vmem:[#allocation8 + $0x170] sm:$0xf]
        %v2284 = vld [vmem:[#allocation8 + $0x174] sm:$0xf]
        %v2285 = vld [vmem:[#allocation8 + $0x178] sm:$0xf]
        %v2286 = vld [vmem:[#allocation8 + $0x17c] sm:$0xf]
        %v2287 = vld [vmem:[#allocation8 + $0x180] sm:$0xf]
        %v2288 = vld [vmem:[#allocation8 + $0x184] sm:$0xf]
        %v2289 = vld [vmem:[#allocation8 + $0x188] sm:$0xf]
        %v2290 = vld [vmem:[#allocation8 + $0x18c] sm:$0xf]
        %v2291 = vld [vmem:[#allocation8 + $0x190] sm:$0xf]
        %v2292 = vld [vmem:[#allocation8 + $0x194] sm:$0xf]
        %v2293 = vld [vmem:[#allocation8 + $0x198] sm:$0xf]
        %v2294 = vld [vmem:[#allocation8 + $0x19c] sm:$0xf]
        %v2295 = vld [vmem:[#allocation8 + $0x1a0] sm:$0xf]
        %v2296 = vld [vmem:[#allocation8 + $0x1a4] sm:$0xf]
        %v2297 = vld [vmem:[#allocation8 + $0x1a8] sm:$0xf]
        %v2298 = vld [vmem:[#allocation8 + $0x1ac] sm:$0xf]
        %v2299 = vld [vmem:[#allocation8 + $0x1b0] sm:$0xf]
        %v2300 = vld [vmem:[#allocation8 + $0x1b4] sm:$0xf]
        %v2301 = vld [vmem:[#allocation8 + $0x1b8] sm:$0xf]
        %v2302 = vld [vmem:[#allocation8 + $0x1bc] sm:$0xf]
        %v2303 = vld [vmem:[#allocation8 + $0x1c0] sm:$0xf]
        %v2304 = vld [vmem:[#allocation8 + $0x1c4] sm:$0xf]
        %v2305 = vld [vmem:[#allocation8 + $0x1c8] sm:$0xf]
        %v2306 = vld [vmem:[#allocation8 + $0x1cc] sm:$0xf]
        %v2307 = vld [vmem:[#allocation8 + $0x1d0] sm:$0xf]
        %v2308 = vld [vmem:[#allocation8 + $0x1d4] sm:$0xf]
        %v2309 = vld [vmem:[#allocation8 + $0x1d8] sm:$0xf]
        %v2310 = vld [vmem:[#allocation8 + $0x1dc] sm:$0xf]
        %v2311 = vld [vmem:[#allocation8 + $0x1e0] sm:$0xf]
        %v2312 = vld [vmem:[#allocation8 + $0x1e4] sm:$0xf]
        %v2313 = vld [vmem:[#allocation8 + $0x1e8] sm:$0xf]
        %v2314 = vld [vmem:[#allocation8 + $0x1ec] sm:$0xf]
        %v2315 = vld [vmem:[#allocation8 + $0x1f0] sm:$0xf]
        %v2316 = vld [vmem:[#allocation8 + $0x1f4] sm:$0xf]
        %v2317 = vld [vmem:[#allocation8 + $0x1f8] sm:$0xf]
        %v2318 = vld [vmem:[#allocation8 + $0x1fc] sm:$0xf]
        %v2319 = vld [vmem:[#allocation8 + $0x200] sm:$0xf]
        %v2320 = vld [vmem:[#allocation8 + $0x204] sm:$0xf]
        %v2321 = vld [vmem:[#allocation8 + $0x208] sm:$0xf]
        %v2322 = vld [vmem:[#allocation8 + $0x20c] sm:$0xf]
        %v2323 = vld [vmem:[#allocation8 + $0x210] sm:$0xf]
        %v2324 = vld [vmem:[#allocation8 + $0x214] sm:$0xf]
        %v2325 = vld [vmem:[#allocation8 + $0x218] sm:$0xf]
        %v2326 = vld [vmem:[#allocation8 + $0x21c] sm:$0xf]
        %v2327 = vld [vmem:[#allocation8 + $0x220] sm:$0xf]
        %v2328 = vld [vmem:[#allocation8 + $0x224] sm:$0xf]
        %v2329 = vld [vmem:[#allocation8 + $0x228] sm:$0xf]
        %v2330 = vld [vmem:[#allocation8 + $0x22c] sm:$0xf]
        %v2331 = vld [vmem:[#allocation8 + $0x230] sm:$0xf]
        %v2332 = vld [vmem:[#allocation8 + $0x234] sm:$0xf]
        %v2333 = vld [vmem:[#allocation8 + $0x238] sm:$0xf]
        %v2334 = vld [vmem:[#allocation8 + $0x23c] sm:$0xf]
        %v2479 = vunpack.c.l.b16 %v2191
        %v2480 = vunpack.c.l.b16 %v2192
        %v2481 = vunpack.c.l.b16 %v2193
        %v2482 = vunpack.c.l.b16 %v2194
        %v2483 = vunpack.c.l.b16 %v2195
        %v2484 = vunpack.c.l.b16 %v2196
        %v2485 = vunpack.c.l.b16 %v2197
        %v2486 = vunpack.c.l.b16 %v2198
        %v2487 = vunpack.c.l.b16 %v2199
        %v2488 = vunpack.c.l.b16 %v2200
        %v2489 = vunpack.c.l.b16 %v2201
        %v2490 = vunpack.c.l.b16 %v2202
        %v2491 = vunpack.c.l.b16 %v2203
        %v2492 = vunpack.c.l.b16 %v2204
        %v2493 = vunpack.c.l.b16 %v2205
        %v2494 = vunpack.c.l.b16 %v2206
        %v2495 = vunpack.c.l.b16 %v2207
        %v2496 = vunpack.c.l.b16 %v2208
        %v2497 = vunpack.c.l.b16 %v2209
        %v2498 = vunpack.c.l.b16 %v2210
        %v2499 = vunpack.c.l.b16 %v2211
        %v2500 = vunpack.c.l.b16 %v2212
        %v2501 = vunpack.c.l.b16 %v2213
        %v2502 = vunpack.c.l.b16 %v2214
        %v2503 = vunpack.c.l.b16 %v2215
        %v2504 = vunpack.c.l.b16 %v2216
        %v2505 = vunpack.c.l.b16 %v2217
        %v2506 = vunpack.c.l.b16 %v2218
        %v2507 = vunpack.c.l.b16 %v2219
        %v2508 = vunpack.c.l.b16 %v2220
        %v2509 = vunpack.c.l.b16 %v2221
        %v2510 = vunpack.c.l.b16 %v2222
        %v2511 = vunpack.c.l.b16 %v2223
        %v2512 = vunpack.c.l.b16 %v2224
        %v2513 = vunpack.c.l.b16 %v2225
        %v2514 = vunpack.c.l.b16 %v2226
        %v2515 = vunpack.c.l.b16 %v2227
        %v2516 = vunpack.c.l.b16 %v2228
        %v2517 = vunpack.c.l.b16 %v2229
        %v2518 = vunpack.c.l.b16 %v2230
        %v2519 = vunpack.c.l.b16 %v2231
        %v2520 = vunpack.c.l.b16 %v2232
        %v2521 = vunpack.c.l.b16 %v2233
        %v2522 = vunpack.c.l.b16 %v2234
        %v2523 = vunpack.c.l.b16 %v2235
        %v2524 = vunpack.c.l.b16 %v2236
        %v2525 = vunpack.c.l.b16 %v2237
        %v2526 = vunpack.c.l.b16 %v2238
        %v2527 = vunpack.c.l.b16 %v2239
        %v2528 = vunpack.c.l.b16 %v2240
        %v2529 = vunpack.c.l.b16 %v2241
        %v2530 = vunpack.c.l.b16 %v2242
        %v2531 = vunpack.c.l.b16 %v2243
        %v2532 = vunpack.c.l.b16 %v2244
        %v2533 = vunpack.c.l.b16 %v2245
        %v2534 = vunpack.c.l.b16 %v2246
        %v2535 = vunpack.c.l.b16 %v2247
        %v2536 = vunpack.c.l.b16 %v2248
        %v2537 = vunpack.c.l.b16 %v2249
        %v2538 = vunpack.c.l.b16 %v2250
        %v2539 = vunpack.c.l.b16 %v2251
        %v2540 = vunpack.c.l.b16 %v2252
        %v2541 = vunpack.c.l.b16 %v2253
        %v2542 = vunpack.c.l.b16 %v2254
        %v2543 = vunpack.c.l.b16 %v2255
        %v2544 = vunpack.c.l.b16 %v2256
        %v2545 = vunpack.c.l.b16 %v2257
        %v2546 = vunpack.c.l.b16 %v2258
        %v2547 = vunpack.c.l.b16 %v2259
        %v2548 = vunpack.c.l.b16 %v2260
        %v2549 = vunpack.c.l.b16 %v2261
        %v2550 = vunpack.c.l.b16 %v2262
        %v2551 = vunpack.c.l.b16 %v2263
        %v2552 = vunpack.c.l.b16 %v2264
        %v2553 = vunpack.c.l.b16 %v2265
        %v2554 = vunpack.c.l.b16 %v2266
        %v2555 = vunpack.c.l.b16 %v2267
        %v2556 = vunpack.c.l.b16 %v2268
        %v2557 = vunpack.c.l.b16 %v2269
        %v2558 = vunpack.c.l.b16 %v2270
        %v2559 = vunpack.c.l.b16 %v2271
        %v2560 = vunpack.c.l.b16 %v2272
        %v2561 = vunpack.c.l.b16 %v2273
        %v2562 = vunpack.c.l.b16 %v2274
        %v2563 = vunpack.c.l.b16 %v2275
        %v2564 = vunpack.c.l.b16 %v2276
        %v2565 = vunpack.c.l.b16 %v2277
        %v2566 = vunpack.c.l.b16 %v2278
        %v2567 = vunpack.c.l.b16 %v2279
        %v2568 = vunpack.c.l.b16 %v2280
        %v2569 = vunpack.c.l.b16 %v2281
        %v2570 = vunpack.c.l.b16 %v2282
        %v2571 = vunpack.c.l.b16 %v2283
        %v2572 = vunpack.c.l.b16 %v2284
        %v2573 = vunpack.c.l.b16 %v2285
        %v2574 = vunpack.c.l.b16 %v2286
        %v2575 = vunpack.c.l.b16 %v2287
        %v2576 = vunpack.c.l.b16 %v2288
        %v2577 = vunpack.c.l.b16 %v2289
        %v2578 = vunpack.c.l.b16 %v2290
        %v2579 = vunpack.c.l.b16 %v2291
        %v2580 = vunpack.c.l.b16 %v2292
        %v2581 = vunpack.c.l.b16 %v2293
        %v2582 = vunpack.c.l.b16 %v2294
        %v2583 = vunpack.c.l.b16 %v2295
        %v2584 = vunpack.c.l.b16 %v2296
        %v2585 = vunpack.c.l.b16 %v2297
        %v2586 = vunpack.c.l.b16 %v2298
        %v2587 = vunpack.c.l.b16 %v2299
        %v2588 = vunpack.c.l.b16 %v2300
        %v2589 = vunpack.c.l.b16 %v2301
        %v2590 = vunpack.c.l.b16 %v2302
        %v2591 = vunpack.c.l.b16 %v2303
        %v2592 = vunpack.c.l.b16 %v2304
        %v2593 = vunpack.c.l.b16 %v2305
        %v2594 = vunpack.c.l.b16 %v2306
        %v2595 = vunpack.c.l.b16 %v2307
        %v2596 = vunpack.c.l.b16 %v2308
        %v2597 = vunpack.c.l.b16 %v2309
        %v2598 = vunpack.c.l.b16 %v2310
        %v2599 = vunpack.c.l.b16 %v2311
        %v2600 = vunpack.c.l.b16 %v2312
        %v2601 = vunpack.c.l.b16 %v2313
        %v2602 = vunpack.c.l.b16 %v2314
        %v2603 = vunpack.c.l.b16 %v2315
        %v2604 = vunpack.c.l.b16 %v2316
        %v2605 = vunpack.c.l.b16 %v2317
        %v2606 = vunpack.c.l.b16 %v2318
        %v2607 = vunpack.c.l.b16 %v2319
        %v2608 = vunpack.c.l.b16 %v2320
        %v2609 = vunpack.c.l.b16 %v2321
        %v2610 = vunpack.c.l.b16 %v2322
        %v2611 = vunpack.c.l.b16 %v2323
        %v2612 = vunpack.c.l.b16 %v2324
        %v2613 = vunpack.c.l.b16 %v2325
        %v2614 = vunpack.c.l.b16 %v2326
        %v2615 = vunpack.c.l.b16 %v2327
        %v2616 = vunpack.c.l.b16 %v2328
        %v2617 = vunpack.c.l.b16 %v2329
        %v2618 = vunpack.c.l.b16 %v2330
        %v2619 = vunpack.c.l.b16 %v2331
        %v2620 = vunpack.c.l.b16 %v2332
        %v2621 = vunpack.c.l.b16 %v2333
        %v2622 = vunpack.c.l.b16 %v2334
        %v2623 = vpack.c.b16 %v2480, %v2479
        %v2624 = vpack.c.b16 %v2482, %v2481
        %v2625 = vpack.c.b16 %v2484, %v2483
        %v2626 = vpack.c.b16 %v2486, %v2485
        %v2627 = vpack.c.b16 %v2488, %v2487
        %v2628 = vpack.c.b16 %v2490, %v2489
        %v2629 = vpack.c.b16 %v2492, %v2491
        %v2630 = vpack.c.b16 %v2494, %v2493
        %v2631 = vpack.c.b16 %v2496, %v2495
        %v2632 = vpack.c.b16 %v2498, %v2497
        %v2633 = vpack.c.b16 %v2500, %v2499
        %v2634 = vpack.c.b16 %v2502, %v2501
        %v2635 = vpack.c.b16 %v2504, %v2503
        %v2636 = vpack.c.b16 %v2506, %v2505
        %v2637 = vpack.c.b16 %v2508, %v2507
        %v2638 = vpack.c.b16 %v2510, %v2509
        %v2639 = vpack.c.b16 %v2512, %v2511
        %v2640 = vpack.c.b16 %v2514, %v2513
        %v2641 = vpack.c.b16 %v2516, %v2515
        %v2642 = vpack.c.b16 %v2518, %v2517
        %v2643 = vpack.c.b16 %v2520, %v2519
        %v2644 = vpack.c.b16 %v2522, %v2521
        %v2645 = vpack.c.b16 %v2524, %v2523
        %v2646 = vpack.c.b16 %v2526, %v2525
        %v2647 = vpack.c.b16 %v2528, %v2527
        %v2648 = vpack.c.b16 %v2530, %v2529
        %v2649 = vpack.c.b16 %v2532, %v2531
        %v2650 = vpack.c.b16 %v2534, %v2533
        %v2651 = vpack.c.b16 %v2536, %v2535
        %v2652 = vpack.c.b16 %v2538, %v2537
        %v2653 = vpack.c.b16 %v2540, %v2539
        %v2654 = vpack.c.b16 %v2542, %v2541
        %v2655 = vpack.c.b16 %v2544, %v2543
        %v2656 = vpack.c.b16 %v2546, %v2545
        %v2657 = vpack.c.b16 %v2548, %v2547
        %v2658 = vpack.c.b16 %v2550, %v2549
        %v2659 = vpack.c.b16 %v2552, %v2551
        %v2660 = vpack.c.b16 %v2554, %v2553
        %v2661 = vpack.c.b16 %v2556, %v2555
        %v2662 = vpack.c.b16 %v2558, %v2557
        %v2663 = vpack.c.b16 %v2560, %v2559
        %v2664 = vpack.c.b16 %v2562, %v2561
        %v2665 = vpack.c.b16 %v2564, %v2563
        %v2666 = vpack.c.b16 %v2566, %v2565
        %v2667 = vpack.c.b16 %v2568, %v2567
        %v2668 = vpack.c.b16 %v2570, %v2569
        %v2669 = vpack.c.b16 %v2572, %v2571
        %v2670 = vpack.c.b16 %v2574, %v2573
        %v2671 = vpack.c.b16 %v2576, %v2575
        %v2672 = vpack.c.b16 %v2578, %v2577
        %v2673 = vpack.c.b16 %v2580, %v2579
        %v2674 = vpack.c.b16 %v2582, %v2581
        %v2675 = vpack.c.b16 %v2584, %v2583
        %v2676 = vpack.c.b16 %v2586, %v2585
        %v2677 = vpack.c.b16 %v2588, %v2587
        %v2678 = vpack.c.b16 %v2590, %v2589
        %v2679 = vpack.c.b16 %v2592, %v2591
        %v2680 = vpack.c.b16 %v2594, %v2593
        %v2681 = vpack.c.b16 %v2596, %v2595
        %v2682 = vpack.c.b16 %v2598, %v2597
        %v2683 = vpack.c.b16 %v2600, %v2599
        %v2684 = vpack.c.b16 %v2602, %v2601
        %v2685 = vpack.c.b16 %v2604, %v2603
        %v2686 = vpack.c.b16 %v2606, %v2605
        %v2687 = vpack.c.b16 %v2608, %v2607
        %v2688 = vpack.c.b16 %v2610, %v2609
        %v2689 = vpack.c.b16 %v2612, %v2611
        %v2690 = vpack.c.b16 %v2614, %v2613
        %v2691 = vpack.c.b16 %v2616, %v2615
        %v2692 = vpack.c.b16 %v2618, %v2617
        %v2693 = vpack.c.b16 %v2620, %v2619
        %v2694 = vpack.c.b16 %v2622, %v2621
        %2767 = vmatprep.subr.bf16.mxu0 0
        %2768 = vmatpush1.bf16.msra.mxu0 %v2623
        %2769 = vmatprep.subr.bf16.mxu0 0
        %2770 = vmatpush1.bf16.msra.mxu0 %v2624
        %2771 = vmatprep.subr.bf16.mxu0 0
        %2772 = vmatpush1.bf16.msra.mxu0 %v2625
        %2773 = vmatprep.subr.bf16.mxu0 0
        %2774 = vmatpush1.bf16.msra.mxu0 %v2626
        %2775 = vmatprep.subr.bf16.mxu0 0
        %2776 = vmatpush1.bf16.msra.mxu0 %v2627
        %2777 = vmatprep.subr.bf16.mxu0 0
        %2778 = vmatpush1.bf16.msra.mxu0 %v2628
        %2779 = vmatprep.subr.bf16.mxu0 0
        %2780 = vmatpush1.bf16.msra.mxu0 %v2629
        %2781 = vmatprep.subr.bf16.mxu0 0
        %2782 = vmatpush1.bf16.msra.mxu0 %v2630
        %2783 = vmatprep.subr.bf16.mxu0 0
        %2784 = vmatpush1.bf16.msra.mxu0 %v2631
        %2785 = vmatprep.subr.bf16.mxu0 0
        %2786 = vmatpush1.bf16.msra.mxu0 %v2632
        %2787 = vmatprep.subr.bf16.mxu0 0
        %2788 = vmatpush1.bf16.msra.mxu0 %v2633
        %2789 = vmatprep.subr.bf16.mxu0 0
        %2790 = vmatpush1.bf16.msra.mxu0 %v2634
        %2791 = vmatprep.subr.bf16.mxu0 0
        %2792 = vmatpush1.bf16.msra.mxu0 %v2635
        %2793 = vmatprep.subr.bf16.mxu0 0
        %2794 = vmatpush1.bf16.msra.mxu0 %v2636
        %2795 = vmatprep.subr.bf16.mxu0 0
        %2796 = vmatpush1.bf16.msra.mxu0 %v2637
        %2797 = vmatprep.subr.bf16.mxu0 0
        %2798 = vmatpush1.bf16.msra.mxu0 %v2638
        %2799 = vmatprep.mubr.bf16.mxu0 %v2045
        %2800 = vmatmul.mubr.bf16.gmra.mrb[0].mxu0 %v2023
        %v2801 = vpop.f32.mrb[0].mxu0
        %v2802 = vadd.f32 0.0, %v2801
        %v2803 = vpop.f32.mrb[0].mxu0
        %v2804 = vpop.f32.mrb[0].mxu0
        %v2805 = vadd.f32 0.0, %v2804
        %v2806 = vpop.f32.mrb[0].mxu0
        %2807 = vmatprep.mubr.bf16.mxu0 %v2046
        %2808 = vmatmul.mubr.bf16.gmra.mrb[0].mxu0 %v2024
        %v2809 = vpop.f32.mrb[0].mxu0
        %v2810 = vadd.f32 0.0, %v2809
        %v2811 = vpop.f32.mrb[0].mxu0
        %v2812 = vpop.f32.mrb[0].mxu0
        %v2813 = vadd.f32 0.0, %v2812
        %v2814 = vpop.f32.mrb[0].mxu0
        %2815 = vmatprep.mubr.bf16.mxu0 %v2047
        %2816 = vmatmul.mubr.bf16.gmra.mrb[0].mxu0 %v2025
        %v2817 = vpop.f32.mrb[0].mxu0
        %v2818 = vadd.f32 0.0, %v2817
        %v2819 = vpop.f32.mrb[0].mxu0
        %v2820 = vpop.f32.mrb[0].mxu0
        %v2821 = vadd.f32 0.0, %v2820
        %v2822 = vpop.f32.mrb[0].mxu0
        %2823 = vmatprep.mubr.bf16.mxu0 %v2048
        %2824 = vmatmul.mubr.bf16.gmra.mrb[0].mxu0 %v2026
        %v2825 = vpop.f32.mrb[0].mxu0
        %v2826 = vadd.f32 0.0, %v2825
        %v2827 = vpop.f32.mrb[0].mxu0
        %v2828 = vpop.f32.mrb[0].mxu0
        %v2829 = vadd.f32 0.0, %v2828
        %v2830 = vpop.f32.mrb[0].mxu0
        %2831 = vmatprep.mubr.bf16.mxu0 %v2049
        %2832 = vmatmul.mubr.bf16.gmra.mrb[0].mxu0 %v2027
        %v2833 = vpop.f32.mrb[0].mxu0
        %v2834 = vadd.f32 0.0, %v2833
        %v2835 = vpop.f32.mrb[0].mxu0
        %v2836 = vpop.f32.mrb[0].mxu0
        %v2837 = vadd.f32 0.0, %v2836
        %v2838 = vpop.f32.mrb[0].mxu0
        %2839 = vmatprep.mubr.bf16.mxu0 %v2050
        %2840 = vmatmul.mubr.bf16.gmra.mrb[0].mxu0 %v2028
        %v2841 = vpop.f32.mrb[0].mxu0
        %v2842 = vadd.f32 0.0, %v2841
        %v2843 = vpop.f32.mrb[0].mxu0
        %v2844 = vpop.f32.mrb[0].mxu0
        %v2845 = vadd.f32 0.0, %v2844
        %v2846 = vpop.f32.mrb[0].mxu0
        %2847 = vmatprep.mubr.bf16.mxu0 %v2051
        %2848 = vmatmul.mubr.bf16.gmra.mrb[0].mxu0 %v2029
        %v2849 = vpop.f32.mrb[0].mxu0
        %v2850 = vadd.f32 0.0, %v2849
        %v2851 = vpop.f32.mrb[0].mxu0
        %v2852 = vpop.f32.mrb[0].mxu0
        %v2853 = vadd.f32 0.0, %v2852
        %v2854 = vpop.f32.mrb[0].mxu0
        %2855 = vmatprep.mubr.bf16.mxu0 %v2052
        %2856 = vmatmul.mubr.bf16.gmra.mrb[0].mxu0 %v2030
        %v2857 = vpop.f32.mrb[0].mxu0
        %v2858 = vadd.f32 0.0, %v2857
        %v2859 = vpop.f32.mrb[0].mxu0
        %v2860 = vpop.f32.mrb[0].mxu0
        %v2861 = vadd.f32 0.0, %v2860
        %v2862 = vpop.f32.mrb[0].mxu0
        %2863 = vdwg.mxu0
        %2864 = vmatprep.subr.bf16.mxu0 0
        %2865 = vmatpush1.bf16.msra.mxu0 %v2639
        %2866 = vmatprep.subr.bf16.mxu0 0
        %2867 = vmatpush1.bf16.msra.mxu0 %v2640
        %2868 = vmatprep.subr.bf16.mxu0 0
        %2869 = vmatpush1.bf16.msra.mxu0 %v2641
        %2870 = vmatprep.subr.bf16.mxu0 0
        %2871 = vmatpush1.bf16.msra.mxu0 %v2642
        %2872 = vmatprep.subr.bf16.mxu0 0
        %2873 = vmatpush1.bf16.msra.mxu0 %v2643
        %2874 = vmatprep.subr.bf16.mxu0 0
        %2875 = vmatpush1.bf16.msra.mxu0 %v2644
        %2876 = vmatprep.subr.bf16.mxu0 0
        %2877 = vmatpush1.bf16.msra.mxu0 %v2645
        %2878 = vmatprep.subr.bf16.mxu0 0
        %2879 = vmatpush1.bf16.msra.mxu0 %v2646
        %2880 = vmatprep.subr.bf16.mxu0 0
        %2881 = vmatpush1.bf16.msra.mxu0 %v2647
        %2882 = vmatprep.subr.bf16.mxu0 0
        %2883 = vmatpush1.bf16.msra.mxu0 %v2648
        %2884 = vmatprep.subr.bf16.mxu0 0
        %2885 = vmatpush1.bf16.msra.mxu0 %v2649
        %2886 = vmatprep.subr.bf16.mxu0 0
        %2887 = vmatpush1.bf16.msra.mxu0 %v2650
        %2888 = vmatprep.subr.bf16.mxu0 0
        %2889 = vmatpush1.bf16.msra.mxu0 %v2651
        %2890 = vmatprep.subr.bf16.mxu0 0
        %2891 = vmatpush1.bf16.msra.mxu0 %v2652
        %2892 = vmatprep.subr.bf16.mxu0 0
        %2893 = vmatpush1.bf16.msra.mxu0 %v2653
        %2894 = vmatprep.subr.bf16.mxu0 0
        %2895 = vmatpush1.bf16.msra.mxu0 %v2654
        %2896 = vmatprep.mubr.bf16.mxu0 %v2099
        %2897 = vmatmul.mubr.bf16.gmra.mrb[0].mxu0 %v2077
        %v2898 = vpop.f32.mrb[0].mxu0
        %v2899 = vadd.f32 %v2802, %v2898
        %v2900 = vpop.f32.mrb[0].mxu0
        %v2901 = vpop.f32.mrb[0].mxu0
        %v2902 = vadd.f32 %v2805, %v2901
        %v2903 = vpop.f32.mrb[0].mxu0
        %2904 = vmatprep.mubr.bf16.mxu0 %v2100
        %2905 = vmatmul.mubr.bf16.gmra.mrb[0].mxu0 %v2078
        %v2906 = vpop.f32.mrb[0].mxu0
        %v2907 = vadd.f32 %v2810, %v2906
        %v2908 = vpop.f32.mrb[0].mxu0
        %v2909 = vpop.f32.mrb[0].mxu0
        %v2910 = vadd.f32 %v2813, %v2909
        %v2911 = vpop.f32.mrb[0].mxu0
        %2912 = vmatprep.mubr.bf16.mxu0 %v2101
        %2913 = vmatmul.mubr.bf16.gmra.mrb[0].mxu0 %v2079
        %v2914 = vpop.f32.mrb[0].mxu0
        %v2915 = vadd.f32 %v2818, %v2914
        %v2916 = vpop.f32.mrb[0].mxu0
        %v2917 = vpop.f32.mrb[0].mxu0
        %v2918 = vadd.f32 %v2821, %v2917
        %v2919 = vpop.f32.mrb[0].mxu0
        %2920 = vmatprep.mubr.bf16.mxu0 %v2102
        %2921 = vmatmul.mubr.bf16.gmra.mrb[0].mxu0 %v2080
        %v2922 = vpop.f32.mrb[0].mxu0
        %v2923 = vadd.f32 %v2826, %v2922
        %v2924 = vpop.f32.mrb[0].mxu0
        %v2925 = vpop.f32.mrb[0].mxu0
        %v2926 = vadd.f32 %v2829, %v2925
        %v2927 = vpop.f32.mrb[0].mxu0
        %2928 = vmatprep.mubr.bf16.mxu0 %v2103
        %2929 = vmatmul.mubr.bf16.gmra.mrb[0].mxu0 %v2081
        %v2930 = vpop.f32.mrb[0].mxu0
        %v2931 = vadd.f32 %v2834, %v2930
        %v2932 = vpop.f32.mrb[0].mxu0
        %v2933 = vpop.f32.mrb[0].mxu0
        %v2934 = vadd.f32 %v2837, %v2933
        %v2935 = vpop.f32.mrb[0].mxu0
        %2936 = vmatprep.mubr.bf16.mxu0 %v2104
        %2937 = vmatmul.mubr.bf16.gmra.mrb[0].mxu0 %v2082
        %v2938 = vpop.f32.mrb[0].mxu0
        %v2939 = vadd.f32 %v2842, %v2938
        %v2940 = vpop.f32.mrb[0].mxu0
        %v2941 = vpop.f32.mrb[0].mxu0
        %v2942 = vadd.f32 %v2845, %v2941
        %v2943 = vpop.f32.mrb[0].mxu0
        %2944 = vmatprep.mubr.bf16.mxu0 %v2105
        %2945 = vmatmul.mubr.bf16.gmra.mrb[0].mxu0 %v2083
        %v2946 = vpop.f32.mrb[0].mxu0
        %v2947 = vadd.f32 %v2850, %v2946
        %v2948 = vpop.f32.mrb[0].mxu0
        %v2949 = vpop.f32.mrb[0].mxu0
        %v2950 = vadd.f32 %v2853, %v2949
        %v2951 = vpop.f32.mrb[0].mxu0
        %2952 = vmatprep.mubr.bf16.mxu0 %v2106
        %2953 = vmatmul.mubr.bf16.gmra.mrb[0].mxu0 %v2084
        %v2954 = vpop.f32.mrb[0].mxu0
        %v2955 = vadd.f32 %v2858, %v2954
        %v2956 = vpop.f32.mrb[0].mxu0
        %v2957 = vpop.f32.mrb[0].mxu0
        %v2958 = vadd.f32 %v2861, %v2957
        %v2959 = vpop.f32.mrb[0].mxu0
        %2960 = vdwg.mxu0
        %2961 = vmatprep.subr.bf16.mxu0 0
        %2962 = vmatpush1.bf16.msra.mxu0 %v2655
        %2963 = vmatprep.subr.bf16.mxu0 0
        %2964 = vmatpush1.bf16.msra.mxu0 %v2656
        %2965 = vmatprep.subr.bf16.mxu0 0
        %2966 = vmatpush1.bf16.msra.mxu0 %v2657
        %2967 = vmatprep.subr.bf16.mxu0 0
        %2968 = vmatpush1.bf16.msra.mxu0 %v2658
        %2969 = vmatprep.subr.bf16.mxu0 0
        %2970 = vmatpush1.bf16.msra.mxu0 %v2659
        %2971 = vmatprep.subr.bf16.mxu0 0
        %2972 = vmatpush1.bf16.msra.mxu0 %v2660
        %2973 = vmatprep.subr.bf16.mxu0 0
        %2974 = vmatpush1.bf16.msra.mxu0 %v2661
        %2975 = vmatprep.subr.bf16.mxu0 0
        %2976 = vmatpush1.bf16.msra.mxu0 %v2662
        %2977 = vmatprep.subr.bf16.mxu0 0
        %2978 = vmatpush1.bf16.msra.mxu0 %v2663
        %2979 = vmatprep.subr.bf16.mxu0 0
        %2980 = vmatpush1.bf16.msra.mxu0 %v2664
        %2981 = vmatprep.subr.bf16.mxu0 0
        %2982 = vmatpush1.bf16.msra.mxu0 %v2665
        %2983 = vmatprep.subr.bf16.mxu0 0
        %2984 = vmatpush1.bf16.msra.mxu0 %v2666
        %2985 = vmatprep.subr.bf16.mxu0 0
        %2986 = vmatpush1.bf16.msra.mxu0 %v2667
        %2987 = vmatprep.subr.bf16.mxu0 0
        %2988 = vmatpush1.bf16.msra.mxu0 %v2668
        %2989 = vmatprep.subr.bf16.mxu0 0
        %2990 = vmatpush1.bf16.msra.mxu0 %v2669
        %2991 = vmatprep.subr.bf16.mxu0 0
        %2992 = vmatpush1.bf16.msra.mxu0 %v2670
        %2993 = vmatprep.mubr.bf16.mxu0 %v2121
        %2994 = vmatmul.mubr.bf16.gmra.mrb[0].mxu0 %v1031
        %v2995 = vpop.f32.mrb[0].mxu0
        %v2996 = vadd.f32 %v2899, %v2995
        %v2997 = vpop.f32.mrb[0].mxu0
        %v2998 = vpop.f32.mrb[0].mxu0
        %v2999 = vadd.f32 %v2902, %v2998
        %v3000 = vpop.f32.mrb[0].mxu0
        %3001 = vmatprep.mubr.bf16.mxu0 %v2122
        %3002 = vmatmul.mubr.bf16.gmra.mrb[0].mxu0 %v1032
        %v3003 = vpop.f32.mrb[0].mxu0
        %v3004 = vadd.f32 %v2907, %v3003
        %v3005 = vpop.f32.mrb[0].mxu0
        %v3006 = vpop.f32.mrb[0].mxu0
        %v3007 = vadd.f32 %v2910, %v3006
        %v3008 = vpop.f32.mrb[0].mxu0
        %3009 = vmatprep.mubr.bf16.mxu0 %v2123
        %3010 = vmatmul.mubr.bf16.gmra.mrb[0].mxu0 %v1033
        %v3011 = vpop.f32.mrb[0].mxu0
        %v3012 = vadd.f32 %v2915, %v3011
        %v3013 = vpop.f32.mrb[0].mxu0
        %v3014 = vpop.f32.mrb[0].mxu0
        %v3015 = vadd.f32 %v2918, %v3014
        %v3016 = vpop.f32.mrb[0].mxu0
        %3017 = vmatprep.mubr.bf16.mxu0 %v2124
        %3018 = vmatmul.mubr.bf16.gmra.mrb[0].mxu0 %v1034
        %v3019 = vpop.f32.mrb[0].mxu0
        %v3020 = vadd.f32 %v2923, %v3019
        %v3021 = vpop.f32.mrb[0].mxu0
        %v3022 = vpop.f32.mrb[0].mxu0
        %v3023 = vadd.f32 %v2926, %v3022
        %v3024 = vpop.f32.mrb[0].mxu0
        %3025 = vmatprep.mubr.bf16.mxu0 %v2125
        %3026 = vmatmul.mubr.bf16.gmra.mrb[0].mxu0 %v1035
        %v3027 = vpop.f32.mrb[0].mxu0
        %v3028 = vadd.f32 %v2931, %v3027
        %v3029 = vpop.f32.mrb[0].mxu0
        %v3030 = vpop.f32.mrb[0].mxu0
        %v3031 = vadd.f32 %v2934, %v3030
        %v3032 = vpop.f32.mrb[0].mxu0
        %3033 = vmatprep.mubr.bf16.mxu0 %v2126
        %3034 = vmatmul.mubr.bf16.gmra.mrb[0].mxu0 %v1036
        %v3035 = vpop.f32.mrb[0].mxu0
        %v3036 = vadd.f32 %v2939, %v3035
        %v3037 = vpop.f32.mrb[0].mxu0
        %v3038 = vpop.f32.mrb[0].mxu0
        %v3039 = vadd.f32 %v2942, %v3038
        %v3040 = vpop.f32.mrb[0].mxu0
        %3041 = vmatprep.mubr.bf16.mxu0 %v2127
        %3042 = vmatmul.mubr.bf16.gmra.mrb[0].mxu0 %v1037
        %v3043 = vpop.f32.mrb[0].mxu0
        %v3044 = vadd.f32 %v2947, %v3043
        %v3045 = vpop.f32.mrb[0].mxu0
        %v3046 = vpop.f32.mrb[0].mxu0
        %v3047 = vadd.f32 %v2950, %v3046
        %v3048 = vpop.f32.mrb[0].mxu0
        %3049 = vmatprep.mubr.bf16.mxu0 %v2128
        %3050 = vmatmul.mubr.bf16.gmra.mrb[0].mxu0 %v1038
        %v3051 = vpop.f32.mrb[0].mxu0
        %v3052 = vadd.f32 %v2955, %v3051
        %v3053 = vpop.f32.mrb[0].mxu0
        %v3054 = vpop.f32.mrb[0].mxu0
        %v3055 = vadd.f32 %v2958, %v3054
        %v3056 = vpop.f32.mrb[0].mxu0
        %3057 = vdwg.mxu0
        %3058 = vmatprep.subr.bf16.mxu0 0
        %3059 = vmatpush1.bf16.msra.mxu0 %v2671
        %3060 = vmatprep.subr.bf16.mxu0 0
        %3061 = vmatpush1.bf16.msra.mxu0 %v2672
        %3062 = vmatprep.subr.bf16.mxu0 0
        %3063 = vmatpush1.bf16.msra.mxu0 %v2673
        %3064 = vmatprep.subr.bf16.mxu0 0
        %3065 = vmatpush1.bf16.msra.mxu0 %v2674
        %3066 = vmatprep.subr.bf16.mxu0 0
        %3067 = vmatpush1.bf16.msra.mxu0 %v2675
        %3068 = vmatprep.subr.bf16.mxu0 0
        %3069 = vmatpush1.bf16.msra.mxu0 %v2676
        %3070 = vmatprep.subr.bf16.mxu0 0
        %3071 = vmatpush1.bf16.msra.mxu0 %v2677
        %3072 = vmatprep.subr.bf16.mxu0 0
        %3073 = vmatpush1.bf16.msra.mxu0 %v2678
        %3074 = vmatprep.subr.bf16.mxu0 0
        %3075 = vmatpush1.bf16.msra.mxu0 %v2679
        %3076 = vmatprep.subr.bf16.mxu0 0
        %3077 = vmatpush1.bf16.msra.mxu0 %v2680
        %3078 = vmatprep.subr.bf16.mxu0 0
        %3079 = vmatpush1.bf16.msra.mxu0 %v2681
        %3080 = vmatprep.subr.bf16.mxu0 0
        %3081 = vmatpush1.bf16.msra.mxu0 %v2682
        %3082 = vmatprep.subr.bf16.mxu0 0
        %3083 = vmatpush1.bf16.msra.mxu0 %v2683
        %3084 = vmatprep.subr.bf16.mxu0 0
        %3085 = vmatpush1.bf16.msra.mxu0 %v2684
        %3086 = vmatprep.subr.bf16.mxu0 0
        %3087 = vmatpush1.bf16.msra.mxu0 %v2685
        %3088 = vmatprep.subr.bf16.mxu0 0
        %3089 = vmatpush1.bf16.msra.mxu0 %v2686
        %3090 = vmatprep.mubr.bf16.mxu0 %v2048
        %3091 = vmatmul.mubr.bf16.gmra.mrb[0].mxu0 %v2026
        %v3092 = vpop.f32.mrb[0].mxu0
        %v3093 = vadd.f32 %v2996, %v3092
        %v3094 = vpop.f32.mrb[0].mxu0
        %v3095 = vpop.f32.mrb[0].mxu0
        %v3096 = vadd.f32 %v2999, %v3095
        %v3097 = vpop.f32.mrb[0].mxu0
        %3098 = vmatprep.mubr.bf16.mxu0 %v2161
        %3099 = vmatmul.mubr.bf16.gmra.mrb[0].mxu0 %v2143
        %v3100 = vpop.f32.mrb[0].mxu0
        %v3101 = vadd.f32 %v3004, %v3100
        %v3102 = vpop.f32.mrb[0].mxu0
        %v3103 = vpop.f32.mrb[0].mxu0
        %v3104 = vadd.f32 %v3007, %v3103
        %v3105 = vpop.f32.mrb[0].mxu0
        %3106 = vmatprep.mubr.bf16.mxu0 %v2162
        %3107 = vmatmul.mubr.bf16.gmra.mrb[0].mxu0 %v2144
        %v3108 = vpop.f32.mrb[0].mxu0
        %v3109 = vadd.f32 %v3012, %v3108
        %v3110 = vpop.f32.mrb[0].mxu0
        %v3111 = vpop.f32.mrb[0].mxu0
        %v3112 = vadd.f32 %v3015, %v3111
        %v3113 = vpop.f32.mrb[0].mxu0
        %3114 = vmatprep.mubr.bf16.mxu0 %v2163
        %3115 = vmatmul.mubr.bf16.gmra.mrb[0].mxu0 %v2145
        %v3116 = vpop.f32.mrb[0].mxu0
        %v3117 = vadd.f32 %v3020, %v3116
        %v3118 = vpop.f32.mrb[0].mxu0
        %v3119 = vpop.f32.mrb[0].mxu0
        %v3120 = vadd.f32 %v3023, %v3119
        %v3121 = vpop.f32.mrb[0].mxu0
        %3122 = vmatprep.mubr.bf16.mxu0 %v2052
        %3123 = vmatmul.mubr.bf16.gmra.mrb[0].mxu0 %v2030
        %v3124 = vpop.f32.mrb[0].mxu0
        %v3125 = vadd.f32 %v3028, %v3124
        %v3126 = vpop.f32.mrb[0].mxu0
        %v3127 = vpop.f32.mrb[0].mxu0
        %v3128 = vadd.f32 %v3031, %v3127
        %v3129 = vpop.f32.mrb[0].mxu0
        %3130 = vmatprep.mubr.bf16.mxu0 %v2164
        %3131 = vmatmul.mubr.bf16.gmra.mrb[0].mxu0 %v2146
        %v3132 = vpop.f32.mrb[0].mxu0
        %v3133 = vadd.f32 %v3036, %v3132
        %v3134 = vpop.f32.mrb[0].mxu0
        %v3135 = vpop.f32.mrb[0].mxu0
        %v3136 = vadd.f32 %v3039, %v3135
        %v3137 = vpop.f32.mrb[0].mxu0
        %3138 = vmatprep.mubr.bf16.mxu0 %v2165
        %3139 = vmatmul.mubr.bf16.gmra.mrb[0].mxu0 %v2147
        %v3140 = vpop.f32.mrb[0].mxu0
        %v3141 = vadd.f32 %v3044, %v3140
        %v3142 = vpop.f32.mrb[0].mxu0
        %v3143 = vpop.f32.mrb[0].mxu0
        %v3144 = vadd.f32 %v3047, %v3143
        %v3145 = vpop.f32.mrb[0].mxu0
        %3146 = vmatprep.mubr.bf16.mxu0 %v2166
        %3147 = vmatmul.mubr.bf16.gmra.mrb[0].mxu0 %v2148
        %v3148 = vpop.f32.mrb[0].mxu0
        %v3149 = vadd.f32 %v3052, %v3148
        %v3150 = vpop.f32.mrb[0].mxu0
        %v3151 = vpop.f32.mrb[0].mxu0
        %v3152 = vadd.f32 %v3055, %v3151
        %v3153 = vpop.f32.mrb[0].mxu0
        %3154 = vdwg.mxu0
        %3155 = vmatprep.subr.bf16.mxu0 0
        %3156 = vmatpush1.bf16.msra.mxu0 %v2687
        %3157 = vmatprep.subr.bf16.mxu0 0
        %3158 = vmatpush1.bf16.msra.mxu0 %v2688
        %3159 = vmatprep.subr.bf16.mxu0 0
        %3160 = vmatpush1.bf16.msra.mxu0 %v2689
        %3161 = vmatprep.subr.bf16.mxu0 0
        %3162 = vmatpush1.bf16.msra.mxu0 %v2690
        %3163 = vmatprep.subr.bf16.mxu0 0
        %3164 = vmatpush1.bf16.msra.mxu0 %v2691
        %3165 = vmatprep.subr.bf16.mxu0 0
        %3166 = vmatpush1.bf16.msra.mxu0 %v2692
        %3167 = vmatprep.subr.bf16.mxu0 0
        %3168 = vmatpush1.bf16.msra.mxu0 %v2693
        %3169 = vmatprep.subr.bf16.mxu0 0
        %3170 = vmatpush1.bf16.msra.mxu0 %v2694
        %3171 = vmatprep.subr.bf16.mxu0 0
        %3172 = vmatpush1.bf16.msra.mxu0 0
        %3173 = vmatprep.subr.bf16.mxu0 0
        %3174 = vmatpush1.bf16.msra.mxu0 0
        %3175 = vmatprep.subr.bf16.mxu0 0
        %3176 = vmatpush1.bf16.msra.mxu0 0
        %3177 = vmatprep.subr.bf16.mxu0 0
        %3178 = vmatpush1.bf16.msra.mxu0 0
        %3179 = vmatprep.subr.bf16.mxu0 0
        %3180 = vmatpush1.bf16.msra.mxu0 0
        %3181 = vmatprep.subr.bf16.mxu0 0
        %3182 = vmatpush1.bf16.msra.mxu0 0
        %3183 = vmatprep.subr.bf16.mxu0 0
        %3184 = vmatpush1.bf16.msra.mxu0 0
        %3185 = vmatprep.subr.bf16.mxu0 0
        %3186 = vmatpush1.bf16.msra.mxu0 0
        %3187 = vmatprep.mubr.bf16.mxu0 0
        %3188 = vmatmul.mubr.bf16.gmra.mrb[0].mxu0 %v2080
        %v3189 = vpop.f32.mrb[0].mxu0
        %v3190 = vadd.f32 %v3093, %v3189
        %v3191 = vpop.f32.mrb[0].mxu0
        %v3192 = vpop.f32.mrb[0].mxu0
        %v3193 = vadd.f32 %v3096, %v3192
        %v3194 = vpop.f32.mrb[0].mxu0
        %3195 = vmatprep.mubr.bf16.mxu0 0
        %3196 = vmatmul.mubr.bf16.gmra.mrb[0].mxu0 %v2179
        %v3197 = vpop.f32.mrb[0].mxu0
        %v3198 = vadd.f32 %v3101, %v3197
        %v3199 = vpop.f32.mrb[0].mxu0
        %v3200 = vpop.f32.mrb[0].mxu0
        %v3201 = vadd.f32 %v3104, %v3200
        %v3202 = vpop.f32.mrb[0].mxu0
        %3203 = vmatprep.mubr.bf16.mxu0 0
        %3204 = vmatmul.mubr.bf16.gmra.mrb[0].mxu0 %v2180
        %v3205 = vpop.f32.mrb[0].mxu0
        %v3206 = vadd.f32 %v3109, %v3205
        %v3207 = vpop.f32.mrb[0].mxu0
        %v3208 = vpop.f32.mrb[0].mxu0
        %v3209 = vadd.f32 %v3112, %v3208
        %v3210 = vpop.f32.mrb[0].mxu0
        %3211 = vmatprep.mubr.bf16.mxu0 0
        %3212 = vmatmul.mubr.bf16.gmra.mrb[0].mxu0 %v2181
        %v3213 = vpop.f32.mrb[0].mxu0
        %v3214 = vadd.f32 %v3117, %v3213
        %v3215 = vpop.f32.mrb[0].mxu0
        %v3216 = vpop.f32.mrb[0].mxu0
        %v3217 = vadd.f32 %v3120, %v3216
        %v3218 = vpop.f32.mrb[0].mxu0
        %3219 = vmatprep.mubr.bf16.mxu0 0
        %3220 = vmatmul.mubr.bf16.gmra.mrb[0].mxu0 %v2084
        %v3221 = vpop.f32.mrb[0].mxu0
        %v3222 = vadd.f32 %v3125, %v3221
        %v3223 = vpop.f32.mrb[0].mxu0
        %v3224 = vpop.f32.mrb[0].mxu0
        %v3225 = vadd.f32 %v3128, %v3224
        %v3226 = vpop.f32.mrb[0].mxu0
        %3227 = vmatprep.mubr.bf16.mxu0 0
        %3228 = vmatmul.mubr.bf16.gmra.mrb[0].mxu0 %v2182
        %v3229 = vpop.f32.mrb[0].mxu0
        %v3230 = vadd.f32 %v3133, %v3229
        %v3231 = vpop.f32.mrb[0].mxu0
        %v3232 = vpop.f32.mrb[0].mxu0
        %v3233 = vadd.f32 %v3136, %v3232
        %v3234 = vpop.f32.mrb[0].mxu0
        %3235 = vmatprep.mubr.bf16.mxu0 0
        %3236 = vmatmul.mubr.bf16.gmra.mrb[0].mxu0 %v2183
        %v3237 = vpop.f32.mrb[0].mxu0
        %v3238 = vadd.f32 %v3141, %v3237
        %v3239 = vpop.f32.mrb[0].mxu0
        %v3240 = vpop.f32.mrb[0].mxu0
        %v3241 = vadd.f32 %v3144, %v3240
        %v3242 = vpop.f32.mrb[0].mxu0
        %3243 = vmatprep.mubr.bf16.mxu0 0
        %3244 = vmatmul.mubr.bf16.gmra.mrb[0].mxu0 %v2184
        %v3245 = vpop.f32.mrb[0].mxu0
        %v3246 = vadd.f32 %v3149, %v3245
        %v3247 = vpop.f32.mrb[0].mxu0
        %v3248 = vpop.f32.mrb[0].mxu0
        %v3249 = vadd.f32 %v3152, %v3248
        %v3250 = vpop.f32.mrb[0].mxu0
        %3251 = vdwg.mxu0
        %s3252 = scalar_lea.vmem [#allocation16], 1
        %v3253 = vld [vmem:[%s3252] sm:$0x1]
        %s3254 = scalar_lea.vmem [#allocation17], 1
        %v3255 = vld [vmem:[%s3254] sm:$0x1]
        %v3256 = vadd.f32 %v3190, %v3193
        %v3257 = vadd.f32 %v3256, %v3198
        %v3258 = vadd.f32 %v3257, %v3201
        %v3259 = vadd.f32 %v3258, %v3206
        %v3260 = vadd.f32 %v3259, %v3209
        %v3261 = vadd.f32 %v3260, %v3214
        %v3262 = vadd.f32 %v3261, %v3217
        %v3263 = vrot.slane %v3262, 4
        %v3264 = vadd.f32 %v3262, %v3263
        %v3265 = vrot.slane %v3264, 2
        %v3266 = vadd.f32 %v3264, %v3265
        %v3267 = vrot.slane %v3266, 1
        %v3268 = vadd.f32 %v3266, %v3267
        %v3269 = vadd.f32 %v3222, %v3225
        %v3270 = vadd.f32 %v3269, %v3230
        %v3271 = vadd.f32 %v3270, %v3233
        %v3272 = vadd.f32 %v3271, %v3238
        %v3273 = vadd.f32 %v3272, %v3241
        %v3274 = vadd.f32 %v3273, %v3246
        %v3275 = vadd.f32 %v3274, %v3249
        %v3276 = vrot.slane %v3275, 4
        %v3277 = vadd.f32 %v3275, %v3276
        %v3278 = vrot.slane %v3277, 2
        %v3279 = vadd.f32 %v3277, %v3278
        %v3280 = vrot.slane %v3279, 1
        %v3281 = vadd.f32 %v3279, %v3280
        %v3282 = vmul.f32 %v3268, %v1220
        %v3283 = vmul.f32 %v3281, %v1220
        %v3284 = vmul.f32 %v3190, %v3190
        %v3285 = vmul.f32 %v3193, %v3193
        %v3286 = vmul.f32 %v3198, %v3198
        %v3287 = vmul.f32 %v3201, %v3201
        %v3288 = vmul.f32 %v3206, %v3206
        %v3289 = vmul.f32 %v3209, %v3209
        %v3290 = vmul.f32 %v3214, %v3214
        %v3291 = vmul.f32 %v3217, %v3217
        %v3292 = vmul.f32 %v3222, %v3222
        %v3293 = vmul.f32 %v3225, %v3225
        %v3294 = vmul.f32 %v3230, %v3230
        %v3295 = vmul.f32 %v3233, %v3233
        %v3296 = vmul.f32 %v3238, %v3238
        %v3297 = vmul.f32 %v3241, %v3241
        %v3298 = vmul.f32 %v3246, %v3246
        %v3299 = vmul.f32 %v3249, %v3249
        %v3300 = vadd.f32 %v3284, %v3285
        %v3301 = vadd.f32 %v3300, %v3286
        %v3302 = vadd.f32 %v3301, %v3287
        %v3303 = vadd.f32 %v3302, %v3288
        %v3304 = vadd.f32 %v3303, %v3289
        %v3305 = vadd.f32 %v3304, %v3290
        %v3306 = vadd.f32 %v3305, %v3291
        %v3307 = vrot.slane %v3306, 4
        %v3308 = vadd.f32 %v3306, %v3307
        %v3309 = vrot.slane %v3308, 2
        %v3310 = vadd.f32 %v3308, %v3309
        %v3311 = vrot.slane %v3310, 1
        %v3312 = vadd.f32 %v3310, %v3311
        %v3313 = vadd.f32 %v3292, %v3293
        %v3314 = vadd.f32 %v3313, %v3294
        %v3315 = vadd.f32 %v3314, %v3295
        %v3316 = vadd.f32 %v3315, %v3296
        %v3317 = vadd.f32 %v3316, %v3297
        %v3318 = vadd.f32 %v3317, %v3298
        %v3319 = vadd.f32 %v3318, %v3299
        %v3320 = vrot.slane %v3319, 4
        %v3321 = vadd.f32 %v3319, %v3320
        %v3322 = vrot.slane %v3321, 2
        %v3323 = vadd.f32 %v3321, %v3322
        %v3324 = vrot.slane %v3323, 1
        %v3325 = vadd.f32 %v3323, %v3324
        %v3326 = vmul.f32 %v3312, %v1220
        %v3327 = vmul.f32 %v3325, %v1220
        %v3330 = vsel %vm1269, %v3283, %v3282
        %v3334 = vsel %vm1274, %v3327, %v3326
        %v3336 = vsel %vm1277, %v3330, %v3334
        %3337 = vmatprep.subr.mxu0 0.0
        %3338 = vmatpush1.msra.mxu0 %v552
        %3339 = vmatprep.subr.mxu0 0.0
        %3340 = vmatpush1.msra.mxu0 %v553
        %3341 = vmatprep.subr.mxu0 0.0
        %3342 = vmatpush1.msra.mxu0 %v554
        %3343 = vmatprep.subr.mxu0 0.0
        %3344 = vmatpush1.msra.mxu0 %v555
        %3345 = vmatprep.subr.mxu0 0.0
        %3346 = vmatpush1.msra.mxu0 %v556
        %3347 = vmatprep.subr.mxu0 0.0
        %3348 = vmatpush1.msra.mxu0 %v557
        %3349 = vmatprep.subr.mxu0 0.0
        %3350 = vmatpush1.msra.mxu0 %v558
        %3351 = vmatprep.subr.mxu0 0.0
        %3352 = vmatpush1.msra.mxu0 %v559
        %3353 = vmatprep.subr.mxu0 0.0
        %3354 = vmatpush1.msra.mxu0 %v560
        %3355 = vmatprep.subr.mxu0 0.0
        %3356 = vmatpush1.msra.mxu0 %v561
        %3357 = vmatprep.subr.mxu0 0.0
        %3358 = vmatpush1.msra.mxu0 %v562
        %3359 = vmatprep.subr.mxu0 0.0
        %3360 = vmatpush1.msra.mxu0 %v563
        %3361 = vmatprep.subr.mxu0 0.0
        %3362 = vmatpush1.msra.mxu0 %v564
        %3363 = vmatprep.subr.mxu0 0.0
        %3364 = vmatpush1.msra.mxu0 %v565
        %3365 = vmatprep.subr.mxu0 0.0
        %3366 = vmatpush1.msra.mxu0 %v566
        %3367 = vmatprep.subr.mxu0 0.0
        %3368 = vmatpush1.msra.mxu0 %v567
        %3369 = vmatprep.subr.mxu0 0.0
        %3370 = vmatpush1.msra.mxu0 0.0
        %3371 = vmatprep.subr.mxu0 0.0
        %3372 = vmatpush1.msra.mxu0 0.0
        %3373 = vmatprep.subr.mxu0 0.0
        %3374 = vmatpush1.msra.mxu0 0.0
        %3375 = vmatprep.subr.mxu0 0.0
        %3376 = vmatpush1.msra.mxu0 0.0
        %3377 = vmatprep.subr.mxu0 0.0
        %3378 = vmatpush1.msra.mxu0 0.0
        %3379 = vmatprep.subr.mxu0 0.0
        %3380 = vmatpush1.msra.mxu0 0.0
        %3381 = vmatprep.subr.mxu0 0.0
        %3382 = vmatpush1.msra.mxu0 0.0
        %3383 = vmatprep.subr.mxu0 0.0
        %3384 = vmatpush1.msra.mxu0 0.0
        %3385 = vmatprep.subr.mxu0 0.0
        %3386 = vmatpush1.msra.mxu0 0.0
        %3387 = vmatprep.subr.mxu0 0.0
        %3388 = vmatpush1.msra.mxu0 0.0
        %3389 = vmatprep.subr.mxu0 0.0
        %3390 = vmatpush1.msra.mxu0 0.0
        %3391 = vmatprep.subr.mxu0 0.0
        %3392 = vmatpush1.msra.mxu0 0.0
        %3393 = vmatprep.subr.mxu0 0.0
        %3394 = vmatpush1.msra.mxu0 0.0
        %3395 = vmatprep.subr.mxu0 0.0
        %3396 = vmatpush1.msra.mxu0 0.0
        %3397 = vmatprep.subr.mxu0 0.0
        %3398 = vmatpush1.msra.mxu0 0.0
        %3399 = vmatprep.subr.mxu0 0.0
        %3400 = vmatpush1.msra.mxu0 0.0
        %3401 = vmatprep.mubr.f32.mxu0 0.0
        %3402 = vmatmul.mubr.f32.gmra.mrb[0].mxu0 %v3336
        %v3403 = vpop.f32.mrb[0].mxu0
        %v3404 = vadd.f32 0.0, %v3403
        %v3405 = vpop.f32.mrb[0].mxu0
        %3406 = vdwg.mxu0
        %v3407 = vmul.f32 %v3404, %v3404
        %v3409 = vrot.slane %v3407, 6
        %v3411 = vsub.f32 %v3404, %v3409
        %v3412 = vadd.f32 %v3411, 1e-05
        %v3413 = vrsqrt.pop %v3412
        %v3415 = vlaneseq
        %v3416 = vshrl.u32 %v3415, 7
        %v3417 = vsub.s32 0, %v3416
        %v3418 = vrot.slane %v3253, %v3417
        %v3420 = vmul.f32 %v3413, %v3418
        %v3423 = vunpack.c.l.s4 1966171168
        %v3424 = vunpack.c.0.s8 %v3423
        %v3425 = vlaneseq
        %v3426 = vshrl.u32 %v3425, 7
        %v3427 = vsub.s32 %v3424, %v3426
        %v3428 = vrot.slane %v3404, %v3427
        %v3429 = vcombine.high %v3428, %v3428
        %v3431 = vunpack.c.l.s4 1966171168
        %v3432 = vunpack.c.0.s8 %v3431
        %v3433 = vlaneseq
        %v3434 = vshrl.u32 %v3433, 7
        %v3435 = vsub.s32 %v3432, %v3434
        %v3436 = vrot.slane %v3428, %v3435
        %v3438 = vunpack.c.l.s4 1966171168
        %v3439 = vunpack.c.0.s8 %v3438
        %v3440 = vlaneseq
        %v3441 = vshrl.u32 %v3440, 7
        %v3442 = vsub.s32 %v3439, %v3441
        %v3443 = vrot.slane %v3429, %v3442
        %v3444 = vlaneseq
        %v3445 = vshrl.u32 %v3444, 7
        %v3446 = vsub.s32 0, %v3445
        %v3447 = vrot.slane %v3436, %v3446
        %v3448 = vlaneseq
        %v3449 = vshrl.u32 %v3448, 7
        %v3450 = vsub.s32 0, %v3449
        %v3451 = vrot.slane %v3443, %v3450
        %v3454 = vsub.f32 %v3190, %v3447
        %v3455 = vsub.f32 %v3193, %v3447
        %v3456 = vsub.f32 %v3198, %v3447
        %v3457 = vsub.f32 %v3201, %v3447
        %v3458 = vsub.f32 %v3206, %v3447
        %v3459 = vsub.f32 %v3209, %v3447
        %v3460 = vsub.f32 %v3214, %v3447
        %v3461 = vsub.f32 %v3217, %v3447
        %v3462 = vsub.f32 %v3222, %v3451
        %v3463 = vsub.f32 %v3225, %v3451
        %v3464 = vsub.f32 %v3230, %v3451
        %v3465 = vsub.f32 %v3233, %v3451
        %v3466 = vsub.f32 %v3238, %v3451
        %v3467 = vsub.f32 %v3241, %v3451
        %v3468 = vsub.f32 %v3246, %v3451
        %v3469 = vsub.f32 %v3249, %v3451
        %v3472 = vunpack.c.l.s4 1966171168
        %v3473 = vunpack.c.0.s8 %v3472
        %v3474 = vlaneseq
        %v3475 = vshrl.u32 %v3474, 7
        %v3476 = vsub.s32 %v3473, %v3475
        %v3477 = vrot.slane %v3420, %v3476
        %v3478 = vcombine.high %v3477, %v3477
        %v3480 = vunpack.c.l.s4 1966171168
        %v3481 = vunpack.c.0.s8 %v3480
        %v3482 = vlaneseq
        %v3483 = vshrl.u32 %v3482, 7
        %v3484 = vsub.s32 %v3481, %v3483
        %v3485 = vrot.slane %v3477, %v3484
        %v3487 = vunpack.c.l.s4 1966171168
        %v3488 = vunpack.c.0.s8 %v3487
        %v3489 = vlaneseq
        %v3490 = vshrl.u32 %v3489, 7
        %v3491 = vsub.s32 %v3488, %v3490
        %v3492 = vrot.slane %v3478, %v3491
        %v3493 = vcombine.high %v3485, %v3485
        %v3494 = vcombine.high %v3492, %v3492
        %v3495 = vlaneseq
        %v3496 = vshrl.u32 %v3495, 7
        %v3497 = vsub.s32 0, %v3496
        %v3498 = vrot.slane %v3493, %v3497
        %v3499 = vlaneseq
        %v3500 = vshrl.u32 %v3499, 7
        %v3501 = vsub.s32 0, %v3500
        %v3502 = vrot.slane %v3494, %v3501
        %v3505 = vmul.f32 %v3454, %v3498
        %v3506 = vmul.f32 %v3455, %v3498
        %v3507 = vmul.f32 %v3456, %v3498
        %v3508 = vmul.f32 %v3457, %v3498
        %v3509 = vmul.f32 %v3458, %v3498
        %v3510 = vmul.f32 %v3459, %v3498
        %v3511 = vmul.f32 %v3460, %v3498
        %v3512 = vmul.f32 %v3461, %v3498
        %v3513 = vmul.f32 %v3462, %v3502
        %v3514 = vmul.f32 %v3463, %v3502
        %v3515 = vmul.f32 %v3464, %v3502
        %v3516 = vmul.f32 %v3465, %v3502
        %v3517 = vmul.f32 %v3466, %v3502
        %v3518 = vmul.f32 %v3467, %v3502
        %v3519 = vmul.f32 %v3468, %v3502
        %v3520 = vmul.f32 %v3469, %v3502
        %v3522 = vlaneseq
        %v3523 = vshrl.u32 %v3522, 7
        %v3524 = vsub.s32 0, %v3523
        %v3525 = vrot.slane %v3255, %v3524
        %v3527 = vadd.f32 %v3505, %v3525
        %v3528 = vadd.f32 %v3506, %v3525
        %v3529 = vadd.f32 %v3507, %v3525
        %v3530 = vadd.f32 %v3508, %v3525
        %v3531 = vadd.f32 %v3509, %v3525
        %v3532 = vadd.f32 %v3510, %v3525
        %v3533 = vadd.f32 %v3511, %v3525
        %v3534 = vadd.f32 %v3512, %v3525
        %v3535 = vadd.f32 %v3513, %v3525
        %v3536 = vadd.f32 %v3514, %v3525
        %v3537 = vadd.f32 %v3515, %v3525
        %v3538 = vadd.f32 %v3516, %v3525
        %v3539 = vadd.f32 %v3517, %v3525
        %v3540 = vadd.f32 %v3518, %v3525
        %v3541 = vadd.f32 %v3519, %v3525
        %v3542 = vadd.f32 %v3520, %v3525
        %v3543 = vmax.f32 %v3527, 0.0
        %v3544 = vmax.f32 %v3528, 0.0
        %v3545 = vmax.f32 %v3529, 0.0
        %v3546 = vmax.f32 %v3530, 0.0
        %v3547 = vmax.f32 %v3531, 0.0
        %v3548 = vmax.f32 %v3532, 0.0
        %v3549 = vmax.f32 %v3533, 0.0
        %v3550 = vmax.f32 %v3534, 0.0
        %v3551 = vmax.f32 %v3535, 0.0
        %v3552 = vmax.f32 %v3536, 0.0
        %v3553 = vmax.f32 %v3537, 0.0
        %v3554 = vmax.f32 %v3538, 0.0
        %v3555 = vmax.f32 %v3539, 0.0
        %v3556 = vmax.f32 %v3540, 0.0
        %v3557 = vmax.f32 %v3541, 0.0
        %v3558 = vmax.f32 %v3542, 0.0
        %v3559 = vpack.c.bf16 %v3544, %v3543
        %v3560 = vpack.c.bf16 %v3546, %v3545
        %v3561 = vpack.c.bf16 %v3548, %v3547
        %v3562 = vpack.c.bf16 %v3550, %v3549
        %v3563 = vpack.c.bf16 %v3552, %v3551
        %v3564 = vpack.c.bf16 %v3554, %v3553
        %v3565 = vpack.c.bf16 %v3556, %v3555
        %v3566 = vpack.c.bf16 %v3558, %v3557
        %s3567 = scalar_lea.vmem [#allocation14], 64
        %v3568 = vld [vmem:[%s3567] sm:$0xf]
        %v3569 = vld [vmem:[%s3567 + $0x4] sm:$0xf]
        %v3570 = vld [vmem:[%s3567 + $0x8] sm:$0xf]
        %v3571 = vld [vmem:[%s3567 + $0xc] sm:$0xf]
        %v3572 = vld [vmem:[%s3567 + $0x10] sm:$0xf]
        %v3573 = vld [vmem:[%s3567 + $0x14] sm:$0xf]
        %v3574 = vld [vmem:[%s3567 + $0x18] sm:$0xf]
        %v3575 = vld [vmem:[%s3567 + $0x1c] sm:$0xf]
        %v3576 = vld [vmem:[%s3567 + $0x20] sm:$0xf]
        %v3577 = vld [vmem:[%s3567 + $0x24] sm:$0xf]
        %v3578 = vld [vmem:[%s3567 + $0x28] sm:$0xf]
        %v3579 = vld [vmem:[%s3567 + $0x2c] sm:$0xf]
        %v3580 = vld [vmem:[%s3567 + $0x30] sm:$0xf]
        %v3581 = vld [vmem:[%s3567 + $0x34] sm:$0xf]
        %v3582 = vld [vmem:[%s3567 + $0x38] sm:$0xf]
        %v3583 = vld [vmem:[%s3567 + $0x3c] sm:$0xf]
        %v3600 = vunpack.c.l.b16 %v3568
        %v3601 = vunpack.c.l.b16 %v3569
        %v3602 = vunpack.c.l.b16 %v3570
        %v3603 = vunpack.c.l.b16 %v3571
        %v3604 = vunpack.c.l.b16 %v3572
        %v3605 = vunpack.c.l.b16 %v3573
        %v3606 = vunpack.c.l.b16 %v3574
        %v3607 = vunpack.c.l.b16 %v3575
        %v3608 = vunpack.c.l.b16 %v3576
        %v3609 = vunpack.c.l.b16 %v3577
        %v3610 = vunpack.c.l.b16 %v3578
        %v3611 = vunpack.c.l.b16 %v3579
        %v3612 = vunpack.c.l.b16 %v3580
        %v3613 = vunpack.c.l.b16 %v3581
        %v3614 = vunpack.c.l.b16 %v3582
        %v3615 = vunpack.c.l.b16 %v3583
        %v3616 = vpack.c.b16 %v3601, %v3600
        %v3617 = vpack.c.b16 %v3603, %v3602
        %v3618 = vpack.c.b16 %v3605, %v3604
        %v3619 = vpack.c.b16 %v3607, %v3606
        %v3620 = vpack.c.b16 %v3609, %v3608
        %v3621 = vpack.c.b16 %v3611, %v3610
        %v3622 = vpack.c.b16 %v3613, %v3612
        %v3623 = vpack.c.b16 %v3615, %v3614
        %3632 = vmatprep.subr.bf16.mxu0 0
        %3633 = vmatpush1.bf16.msra.mxu0 %v3616
        %3634 = vmatprep.subr.bf16.mxu0 0
        %3635 = vmatpush1.bf16.msra.mxu0 %v3617
        %3636 = vmatprep.subr.bf16.mxu0 0
        %3637 = vmatpush1.bf16.msra.mxu0 %v3618
        %3638 = vmatprep.subr.bf16.mxu0 0
        %3639 = vmatpush1.bf16.msra.mxu0 %v3619
        %3640 = vmatprep.subr.bf16.mxu0 0
        %3641 = vmatpush1.bf16.msra.mxu0 %v3620
        %3642 = vmatprep.subr.bf16.mxu0 0
        %3643 = vmatpush1.bf16.msra.mxu0 %v3621
        %3644 = vmatprep.subr.bf16.mxu0 0
        %3645 = vmatpush1.bf16.msra.mxu0 %v3622
        %3646 = vmatprep.subr.bf16.mxu0 0
        %3647 = vmatpush1.bf16.msra.mxu0 %v3623
        %3648 = vmatprep.subr.bf16.mxu0 0
        %3649 = vmatpush1.bf16.msra.mxu0 0
        %3650 = vmatprep.subr.bf16.mxu0 0
        %3651 = vmatpush1.bf16.msra.mxu0 0
        %3652 = vmatprep.subr.bf16.mxu0 0
        %3653 = vmatpush1.bf16.msra.mxu0 0
        %3654 = vmatprep.subr.bf16.mxu0 0
        %3655 = vmatpush1.bf16.msra.mxu0 0
        %3656 = vmatprep.subr.bf16.mxu0 0
        %3657 = vmatpush1.bf16.msra.mxu0 0
        %3658 = vmatprep.subr.bf16.mxu0 0
        %3659 = vmatpush1.bf16.msra.mxu0 0
        %3660 = vmatprep.subr.bf16.mxu0 0
        %3661 = vmatpush1.bf16.msra.mxu0 0
        %3662 = vmatprep.subr.bf16.mxu0 0
        %3663 = vmatpush1.bf16.msra.mxu0 0
        %3664 = vmatprep.mubr.bf16.mxu0 0
        %3665 = vmatmul.mubr.bf16.gmra.mrb[0].mxu0 %v3559
        %v3666 = vpop.f32.mrb[0].mxu0
        %v3667 = vadd.f32 0.0, %v3666
        %v3668 = vpop.f32.mrb[0].mxu0
        %v3669 = vpop.f32.mrb[0].mxu0
        %v3670 = vadd.f32 0.0, %v3669
        %v3671 = vpop.f32.mrb[0].mxu0
        %3672 = vmatprep.mubr.bf16.mxu0 0
        %3673 = vmatmul.mubr.bf16.gmra.mrb[0].mxu0 %v3560
        %v3674 = vpop.f32.mrb[0].mxu0
        %v3675 = vadd.f32 0.0, %v3674
        %v3676 = vpop.f32.mrb[0].mxu0
        %v3677 = vpop.f32.mrb[0].mxu0
        %v3678 = vadd.f32 0.0, %v3677
        %v3679 = vpop.f32.mrb[0].mxu0
        %3680 = vmatprep.mubr.bf16.mxu0 0
        %3681 = vmatmul.mubr.bf16.gmra.mrb[0].mxu0 %v3561
        %v3682 = vpop.f32.mrb[0].mxu0
        %v3683 = vadd.f32 0.0, %v3682
        %v3684 = vpop.f32.mrb[0].mxu0
        %v3685 = vpop.f32.mrb[0].mxu0
        %v3686 = vadd.f32 0.0, %v3685
        %v3687 = vpop.f32.mrb[0].mxu0
        %3688 = vmatprep.mubr.bf16.mxu0 0
        %3689 = vmatmul.mubr.bf16.gmra.mrb[0].mxu0 %v3562
        %v3690 = vpop.f32.mrb[0].mxu0
        %v3691 = vadd.f32 0.0, %v3690
        %v3692 = vpop.f32.mrb[0].mxu0
        %v3693 = vpop.f32.mrb[0].mxu0
        %v3694 = vadd.f32 0.0, %v3693
        %v3695 = vpop.f32.mrb[0].mxu0
        %3696 = vmatprep.mubr.bf16.mxu0 0
        %3697 = vmatmul.mubr.bf16.gmra.mrb[0].mxu0 %v3563
        %v3698 = vpop.f32.mrb[0].mxu0
        %v3699 = vadd.f32 0.0, %v3698
        %v3700 = vpop.f32.mrb[0].mxu0
        %v3701 = vpop.f32.mrb[0].mxu0
        %v3702 = vadd.f32 0.0, %v3701
        %v3703 = vpop.f32.mrb[0].mxu0
        %3704 = vmatprep.mubr.bf16.mxu0 0
        %3705 = vmatmul.mubr.bf16.gmra.mrb[0].mxu0 %v3564
        %v3706 = vpop.f32.mrb[0].mxu0
        %v3707 = vadd.f32 0.0, %v3706
        %v3708 = vpop.f32.mrb[0].mxu0
        %v3709 = vpop.f32.mrb[0].mxu0
        %v3710 = vadd.f32 0.0, %v3709
        %v3711 = vpop.f32.mrb[0].mxu0
        %3712 = vmatprep.mubr.bf16.mxu0 0
        %3713 = vmatmul.mubr.bf16.gmra.mrb[0].mxu0 %v3565
        %v3714 = vpop.f32.mrb[0].mxu0
        %v3715 = vadd.f32 0.0, %v3714
        %v3716 = vpop.f32.mrb[0].mxu0
        %v3717 = vpop.f32.mrb[0].mxu0
        %v3718 = vadd.f32 0.0, %v3717
        %v3719 = vpop.f32.mrb[0].mxu0
        %3720 = vmatprep.mubr.bf16.mxu0 0
        %3721 = vmatmul.mubr.bf16.gmra.mrb[0].mxu0 %v3566
        %v3722 = vpop.f32.mrb[0].mxu0
        %v3723 = vadd.f32 0.0, %v3722
        %v3724 = vpop.f32.mrb[0].mxu0
        %v3725 = vpop.f32.mrb[0].mxu0
        %v3726 = vadd.f32 0.0, %v3725
        %v3727 = vpop.f32.mrb[0].mxu0
        %3728 = vdwg.mxu0
        %v3745 = vunpack.c.l.b16 %v1509
        %v3746 = vunpack.c.l.b16 %v1510
        %v3747 = vunpack.c.l.b16 %v1511
        %v3748 = vunpack.c.l.b16 %v1512
        %v3749 = vunpack.c.l.b16 %v1513
        %v3750 = vunpack.c.l.b16 %v1514
        %v3751 = vunpack.c.l.b16 %v1515
        %v3752 = vunpack.c.l.b16 %v1516
        %v3753 = vunpack.c.l.b16 %v1517
        %v3754 = vunpack.c.l.b16 %v1518
        %v3755 = vunpack.c.l.b16 %v1519
        %v3756 = vunpack.c.l.b16 %v1520
        %v3757 = vunpack.c.l.b16 %v1521
        %v3758 = vunpack.c.l.b16 %v1522
        %v3759 = vunpack.c.l.b16 %v1523
        %v3760 = vunpack.c.l.b16 %v1524
        %v3761 = vpack.c.b16 %v3746, %v3745
        %v3762 = vpack.c.b16 %v3748, %v3747
        %v3763 = vpack.c.b16 %v3750, %v3749
        %v3764 = vpack.c.b16 %v3752, %v3751
        %v3765 = vpack.c.b16 %v3754, %v3753
        %v3766 = vpack.c.b16 %v3756, %v3755
        %v3767 = vpack.c.b16 %v3758, %v3757
        %v3768 = vpack.c.b16 %v3760, %v3759
        %3777 = vmatprep.subr.bf16.mxu0 0
        %3778 = vmatpush1.bf16.msra.mxu0 %v3761
        %3779 = vmatprep.subr.bf16.mxu0 0
        %3780 = vmatpush1.bf16.msra.mxu0 %v3762
        %3781 = vmatprep.subr.bf16.mxu0 0
        %3782 = vmatpush1.bf16.msra.mxu0 %v3763
        %3783 = vmatprep.subr.bf16.mxu0 0
        %3784 = vmatpush1.bf16.msra.mxu0 %v3764
        %3785 = vmatprep.subr.bf16.mxu0 0
        %3786 = vmatpush1.bf16.msra.mxu0 %v3765
        %3787 = vmatprep.subr.bf16.mxu0 0
        %3788 = vmatpush1.bf16.msra.mxu0 %v3766
        %3789 = vmatprep.subr.bf16.mxu0 0
        %3790 = vmatpush1.bf16.msra.mxu0 %v3767
        %3791 = vmatprep.subr.bf16.mxu0 0
        %3792 = vmatpush1.bf16.msra.mxu0 %v3768
        %3793 = vmatprep.subr.bf16.mxu0 0
        %3794 = vmatpush1.bf16.msra.mxu0 0
        %3795 = vmatprep.subr.bf16.mxu0 0
        %3796 = vmatpush1.bf16.msra.mxu0 0
        %3797 = vmatprep.subr.bf16.mxu0 0
        %3798 = vmatpush1.bf16.msra.mxu0 0
        %3799 = vmatprep.subr.bf16.mxu0 0
        %3800 = vmatpush1.bf16.msra.mxu0 0
        %3801 = vmatprep.subr.bf16.mxu0 0
        %3802 = vmatpush1.bf16.msra.mxu0 0
        %3803 = vmatprep.subr.bf16.mxu0 0
        %3804 = vmatpush1.bf16.msra.mxu0 0
        %3805 = vmatprep.subr.bf16.mxu0 0
        %3806 = vmatpush1.bf16.msra.mxu0 0
        %3807 = vmatprep.subr.bf16.mxu0 0
        %3808 = vmatpush1.bf16.msra.mxu0 0
        %3809 = vmatprep.mubr.bf16.mxu0 0
        %3810 = vmatmul.mubr.bf16.gmra.mrb[0].mxu0 %v1501
        %v3811 = vpop.f32.mrb[0].mxu0
        %v3812 = vadd.f32 %v3667, %v3811
        %v3813 = vpop.f32.mrb[0].mxu0
        %v3814 = vpop.f32.mrb[0].mxu0
        %v3815 = vadd.f32 %v3670, %v3814
        %v3816 = vpop.f32.mrb[0].mxu0
        %3817 = vmatprep.mubr.bf16.mxu0 0
        %3818 = vmatmul.mubr.bf16.gmra.mrb[0].mxu0 %v1502
        %v3819 = vpop.f32.mrb[0].mxu0
        %v3820 = vadd.f32 %v3675, %v3819
        %v3821 = vpop.f32.mrb[0].mxu0
        %v3822 = vpop.f32.mrb[0].mxu0
        %v3823 = vadd.f32 %v3678, %v3822
        %v3824 = vpop.f32.mrb[0].mxu0
        %3825 = vmatprep.mubr.bf16.mxu0 0
        %3826 = vmatmul.mubr.bf16.gmra.mrb[0].mxu0 %v1503
        %v3827 = vpop.f32.mrb[0].mxu0
        %v3828 = vadd.f32 %v3683, %v3827
        %v3829 = vpop.f32.mrb[0].mxu0
        %v3830 = vpop.f32.mrb[0].mxu0
        %v3831 = vadd.f32 %v3686, %v3830
        %v3832 = vpop.f32.mrb[0].mxu0
        %3833 = vmatprep.mubr.bf16.mxu0 0
        %3834 = vmatmul.mubr.bf16.gmra.mrb[0].mxu0 %v1504
        %v3835 = vpop.f32.mrb[0].mxu0
        %v3836 = vadd.f32 %v3691, %v3835
        %v3837 = vpop.f32.mrb[0].mxu0
        %v3838 = vpop.f32.mrb[0].mxu0
        %v3839 = vadd.f32 %v3694, %v3838
        %v3840 = vpop.f32.mrb[0].mxu0
        %3841 = vmatprep.mubr.bf16.mxu0 0
        %3842 = vmatmul.mubr.bf16.gmra.mrb[0].mxu0 %v1505
        %v3843 = vpop.f32.mrb[0].mxu0
        %v3844 = vadd.f32 %v3699, %v3843
        %v3845 = vpop.f32.mrb[0].mxu0
        %v3846 = vpop.f32.mrb[0].mxu0
        %v3847 = vadd.f32 %v3702, %v3846
        %v3848 = vpop.f32.mrb[0].mxu0
        %3849 = vmatprep.mubr.bf16.mxu0 0
        %3850 = vmatmul.mubr.bf16.gmra.mrb[0].mxu0 %v1506
        %v3851 = vpop.f32.mrb[0].mxu0
        %v3852 = vadd.f32 %v3707, %v3851
        %v3853 = vpop.f32.mrb[0].mxu0
        %v3854 = vpop.f32.mrb[0].mxu0
        %v3855 = vadd.f32 %v3710, %v3854
        %v3856 = vpop.f32.mrb[0].mxu0
        %3857 = vmatprep.mubr.bf16.mxu0 0
        %3858 = vmatmul.mubr.bf16.gmra.mrb[0].mxu0 %v1507
        %v3859 = vpop.f32.mrb[0].mxu0
        %v3860 = vadd.f32 %v3715, %v3859
        %v3861 = vpop.f32.mrb[0].mxu0
        %v3862 = vpop.f32.mrb[0].mxu0
        %v3863 = vadd.f32 %v3718, %v3862
        %v3864 = vpop.f32.mrb[0].mxu0
        %3865 = vmatprep.mubr.bf16.mxu0 0
        %3866 = vmatmul.mubr.bf16.gmra.mrb[0].mxu0 %v1508
        %v3867 = vpop.f32.mrb[0].mxu0
        %v3868 = vadd.f32 %v3723, %v3867
        %v3869 = vpop.f32.mrb[0].mxu0
        %v3870 = vpop.f32.mrb[0].mxu0
        %v3871 = vadd.f32 %v3726, %v3870
        %v3872 = vpop.f32.mrb[0].mxu0
        %3873 = vdwg.mxu0
        %vm3874 = vsmask.f32 2304
        %vm3875 = vsmask.f32 6416
        %vm3876 = vmor %vm3874, %vm3875
        %v3878 = vshrl.u32 %v580, 16
        %v3880 = vrot.slane %v3878, 5
        %v3881 = vshll.u32 %v580, 16
        %v3883 = vrot.slane %v3881, 6
        %v3884 = vor.u32 %v3880, %v3883
        %v3885 = vrot.slane %v3884, 4
        %v3887 = vshrl.u32 %v581, 16
        %v3889 = vrot.slane %v3887, 5
        %v3890 = vshll.u32 %v581, 16
        %v3892 = vrot.slane %v3890, 6
        %v3893 = vor.u32 %v3889, %v3892
        %v3894 = vsel %vm3876, %v3885, %v3893
        %v3896 = vshrl.u32 %v584, 16
        %v3898 = vrot.slane %v3896, 5
        %v3899 = vshll.u32 %v584, 16
        %v3901 = vrot.slane %v3899, 6
        %v3902 = vor.u32 %v3898, %v3901
        %v3903 = vrot.slane %v3902, 4
        %v3905 = vshrl.u32 %v585, 16
        %v3907 = vrot.slane %v3905, 5
        %v3908 = vshll.u32 %v585, 16
        %v3910 = vrot.slane %v3908, 6
        %v3911 = vor.u32 %v3907, %v3910
        %v3912 = vsel %vm3876, %v3903, %v3911
        %v3914 = vshrl.u32 %v588, 16
        %v3916 = vrot.slane %v3914, 5
        %v3917 = vshll.u32 %v588, 16
        %v3919 = vrot.slane %v3917, 6
        %v3920 = vor.u32 %v3916, %v3919
        %v3921 = vrot.slane %v3920, 4
        %v3923 = vshrl.u32 %v589, 16
        %v3925 = vrot.slane %v3923, 5
        %v3926 = vshll.u32 %v589, 16
        %v3928 = vrot.slane %v3926, 6
        %v3929 = vor.u32 %v3925, %v3928
        %v3930 = vsel %vm3876, %v3921, %v3929
        %v3932 = vshrl.u32 %v592, 16
        %v3934 = vrot.slane %v3932, 5
        %v3935 = vshll.u32 %v592, 16
        %v3937 = vrot.slane %v3935, 6
        %v3938 = vor.u32 %v3934, %v3937
        %v3939 = vrot.slane %v3938, 4
        %v3940 = vrot.slane %v1625, 5
        %v3941 = vrot.slane %v1628, 6
        %v3942 = vor.u32 %v3940, %v3941
        %v3943 = vsel %vm3876, %v3939, %v3942
        %v3945 = vshrl.u32 %v596, 16
        %v3947 = vrot.slane %v3945, 5
        %v3948 = vshll.u32 %v596, 16
        %v3950 = vrot.slane %v3948, 6
        %v3951 = vor.u32 %v3947, %v3950
        %v3952 = vrot.slane %v3951, 4
        %v3953 = vrot.slane %v1639, 5
        %v3954 = vrot.slane %v1642, 6
        %v3955 = vor.u32 %v3953, %v3954
        %v3956 = vsel %vm3876, %v3952, %v3955
        %v3958 = vshrl.u32 %v600, 16
        %v3960 = vrot.slane %v3958, 5
        %v3961 = vshll.u32 %v600, 16
        %v3963 = vrot.slane %v3961, 6
        %v3964 = vor.u32 %v3960, %v3963
        %v3965 = vrot.slane %v3964, 4
        %v3966 = vrot.slane %v1653, 5
        %v3967 = vrot.slane %v1656, 6
        %v3968 = vor.u32 %v3966, %v3967
        %v3969 = vsel %vm3876, %v3965, %v3968
        %v3971 = vshrl.u32 %v603, 16
        %v3973 = vrot.slane %v3971, 5
        %v3974 = vshll.u32 %v603, 16
        %v3976 = vrot.slane %v3974, 6
        %v3977 = vor.u32 %v3973, %v3976
        %v3978 = vrot.slane %v3977, 4
        %v3979 = vrot.slane %v776, 5
        %v3980 = vrot.slane %v779, 6
        %v3981 = vor.u32 %v3979, %v3980
        %v3982 = vsel %vm3876, %v3978, %v3981
        %v3984 = vshrl.u32 %v607, 16
        %v3986 = vrot.slane %v3984, 5
        %v3987 = vshll.u32 %v607, 16
        %v3989 = vrot.slane %v3987, 6
        %v3990 = vor.u32 %v3986, %v3989
        %v3991 = vrot.slane %v3990, 4
        %v3992 = vrot.slane %v790, 5
        %v3993 = vrot.slane %v793, 6
        %v3994 = vor.u32 %v3992, %v3993
        %v3995 = vsel %vm3876, %v3991, %v3994
        %v3997 = vshrl.u32 %v682, 16
        %v3999 = vrot.slane %v3997, 5
        %v4000 = vshll.u32 %v682, 16
        %v4002 = vrot.slane %v4000, 6
        %v4003 = vor.u32 %v3999, %v4002
        %v4004 = vrot.slane %v4003, 4
        %v4006 = vshrl.u32 %v683, 16
        %v4008 = vrot.slane %v4006, 5
        %v4009 = vshll.u32 %v683, 16
        %v4011 = vrot.slane %v4009, 6
        %v4012 = vor.u32 %v4008, %v4011
        %v4013 = vsel %vm3876, %v4004, %v4012
        %v4015 = vshrl.u32 %v686, 16
        %v4017 = vrot.slane %v4015, 5
        %v4018 = vshll.u32 %v686, 16
        %v4020 = vrot.slane %v4018, 6
        %v4021 = vor.u32 %v4017, %v4020
        %v4022 = vrot.slane %v4021, 4
        %v4024 = vshrl.u32 %v687, 16
        %v4026 = vrot.slane %v4024, 5
        %v4027 = vshll.u32 %v687, 16
        %v4029 = vrot.slane %v4027, 6
        %v4030 = vor.u32 %v4026, %v4029
        %v4031 = vsel %vm3876, %v4022, %v4030
        %v4033 = vshrl.u32 %v690, 16
        %v4035 = vrot.slane %v4033, 5
        %v4036 = vshll.u32 %v690, 16
        %v4038 = vrot.slane %v4036, 6
        %v4039 = vor.u32 %v4035, %v4038
        %v4040 = vrot.slane %v4039, 4
        %v4042 = vshrl.u32 %v691, 16
        %v4044 = vrot.slane %v4042, 5
        %v4045 = vshll.u32 %v691, 16
        %v4047 = vrot.slane %v4045, 6
        %v4048 = vor.u32 %v4044, %v4047
        %v4049 = vsel %vm3876, %v4040, %v4048
        %v4051 = vshrl.u32 %v694, 16
        %v4053 = vrot.slane %v4051, 5
        %v4054 = vshll.u32 %v694, 16
        %v4056 = vrot.slane %v4054, 6
        %v4057 = vor.u32 %v4053, %v4056
        %v4058 = vrot.slane %v4057, 4
        %v4059 = vrot.slane %v1667, 5
        %v4060 = vrot.slane %v1670, 6
        %v4061 = vor.u32 %v4059, %v4060
        %v4062 = vsel %vm3876, %v4058, %v4061
        %v4064 = vshrl.u32 %v698, 16
        %v4066 = vrot.slane %v4064, 5
        %v4067 = vshll.u32 %v698, 16
        %v4069 = vrot.slane %v4067, 6
        %v4070 = vor.u32 %v4066, %v4069
        %v4071 = vrot.slane %v4070, 4
        %v4072 = vrot.slane %v1681, 5
        %v4073 = vrot.slane %v1684, 6
        %v4074 = vor.u32 %v4072, %v4073
        %v4075 = vsel %vm3876, %v4071, %v4074
        %v4077 = vshrl.u32 %v702, 16
        %v4079 = vrot.slane %v4077, 5
        %v4080 = vshll.u32 %v702, 16
        %v4082 = vrot.slane %v4080, 6
        %v4083 = vor.u32 %v4079, %v4082
        %v4084 = vrot.slane %v4083, 4
        %v4085 = vrot.slane %v1695, 5
        %v4086 = vrot.slane %v1698, 6
        %v4087 = vor.u32 %v4085, %v4086
        %v4088 = vsel %vm3876, %v4084, %v4087
        %v4090 = vshrl.u32 %v705, 16
        %v4092 = vrot.slane %v4090, 5
        %v4093 = vshll.u32 %v705, 16
        %v4095 = vrot.slane %v4093, 6
        %v4096 = vor.u32 %v4092, %v4095
        %v4097 = vrot.slane %v4096, 4
        %v4098 = vrot.slane %v888, 5
        %v4099 = vrot.slane %v891, 6
        %v4100 = vor.u32 %v4098, %v4099
        %v4101 = vsel %vm3876, %v4097, %v4100
        %v4103 = vshrl.u32 %v709, 16
        %v4105 = vrot.slane %v4103, 5
        %v4106 = vshll.u32 %v709, 16
        %v4108 = vrot.slane %v4106, 6
        %v4109 = vor.u32 %v4105, %v4108
        %v4110 = vrot.slane %v4109, 4
        %v4111 = vrot.slane %v902, 5
        %v4112 = vrot.slane %v905, 6
        %v4113 = vor.u32 %v4111, %v4112
        %v4114 = vsel %vm3876, %v4110, %v4113
        %v4115 = vrot.slane %v3887, 4
        %v4116 = vrot.slane %v3890, 5
        %v4117 = vor.u32 %v4115, %v4116
        %v4118 = vrot.slane %v4117, 4
        %v4120 = vshll.u32 %v582, 16
        %v4122 = vrot.slane %v4120, 5
        %v4123 = vsel %vm774, %v4118, %v4122
        %v4124 = vrot.slane %v3905, 4
        %v4125 = vrot.slane %v3908, 5
        %v4126 = vor.u32 %v4124, %v4125
        %v4127 = vrot.slane %v4126, 4
        %v4129 = vshll.u32 %v586, 16
        %v4131 = vrot.slane %v4129, 5
        %v4132 = vsel %vm774, %v4127, %v4131
        %v4133 = vrot.slane %v3923, 4
        %v4134 = vrot.slane %v3926, 5
        %v4135 = vor.u32 %v4133, %v4134
        %v4136 = vrot.slane %v4135, 4
        %v4138 = vshll.u32 %v590, 16
        %v4140 = vrot.slane %v4138, 5
        %v4141 = vsel %vm774, %v4136, %v4140
        %v4142 = vrot.slane %v4006, 4
        %v4143 = vrot.slane %v4009, 5
        %v4144 = vor.u32 %v4142, %v4143
        %v4145 = vrot.slane %v4144, 4
        %v4147 = vshll.u32 %v684, 16
        %v4149 = vrot.slane %v4147, 5
        %v4150 = vsel %vm774, %v4145, %v4149
        %v4151 = vrot.slane %v4024, 4
        %v4152 = vrot.slane %v4027, 5
        %v4153 = vor.u32 %v4151, %v4152
        %v4154 = vrot.slane %v4153, 4
        %v4156 = vshll.u32 %v688, 16
        %v4158 = vrot.slane %v4156, 5
        %v4159 = vsel %vm774, %v4154, %v4158
        %v4160 = vrot.slane %v4042, 4
        %v4161 = vrot.slane %v4045, 5
        %v4162 = vor.u32 %v4160, %v4161
        %v4163 = vrot.slane %v4162, 4
        %v4165 = vshll.u32 %v692, 16
        %v4167 = vrot.slane %v4165, 5
        %v4168 = vsel %vm774, %v4163, %v4167
        %vm4169 = vsmask.f32 256
        %vm4170 = vsmask.f32 4368
        %vm4171 = vmor %vm4169, %vm4170
        %v4172 = vrot.slane %v3887, 7
        %v4173 = vrot.slane %v4172, 4
        %v4174 = vshrl.u32 %v582, 16
        %v4176 = vrot.slane %v4174, 7
        %v4177 = vor.u32 %v4176, %v4120
        %v4178 = vsel %vm4171, %v4173, %v4177
        %v4179 = vrot.slane %v3905, 7
        %v4180 = vrot.slane %v4179, 4
        %v4181 = vshrl.u32 %v586, 16
        %v4183 = vrot.slane %v4181, 7
        %v4184 = vor.u32 %v4183, %v4129
        %v4185 = vsel %vm4171, %v4180, %v4184
        %v4186 = vrot.slane %v3923, 7
        %v4187 = vrot.slane %v4186, 4
        %v4188 = vshrl.u32 %v590, 16
        %v4190 = vrot.slane %v4188, 7
        %v4191 = vor.u32 %v4190, %v4138
        %v4192 = vsel %vm4171, %v4187, %v4191
        %v4193 = vrot.slane %v1625, 7
        %v4194 = vrot.slane %v4193, 4
        %v4195 = vshrl.u32 %v594, 16
        %v4197 = vrot.slane %v4195, 7
        %v4198 = vor.u32 %v4197, %v1634
        %v4199 = vsel %vm4171, %v4194, %v4198
        %v4200 = vrot.slane %v1639, 7
        %v4201 = vrot.slane %v4200, 4
        %v4202 = vshrl.u32 %v598, 16
        %v4204 = vrot.slane %v4202, 7
        %v4205 = vor.u32 %v4204, %v1648
        %v4206 = vsel %vm4171, %v4201, %v4205
        %v4207 = vrot.slane %v1653, 7
        %v4208 = vrot.slane %v4207, 4
        %v4209 = vshrl.u32 %v602, 16
        %v4211 = vrot.slane %v4209, 7
        %v4212 = vor.u32 %v4211, %v1662
        %v4213 = vsel %vm4171, %v4208, %v4212
        %v4214 = vrot.slane %v776, 7
        %v4215 = vrot.slane %v4214, 4
        %v4216 = vshrl.u32 %v605, 16
        %v4218 = vrot.slane %v4216, 7
        %v4219 = vor.u32 %v4218, %v785
        %v4220 = vsel %vm4171, %v4215, %v4219
        %v4221 = vrot.slane %v790, 7
        %v4222 = vrot.slane %v4221, 4
        %v4223 = vshrl.u32 %v609, 16
        %v4225 = vrot.slane %v4223, 7
        %v4226 = vor.u32 %v4225, %v799
        %v4227 = vsel %vm4171, %v4222, %v4226
        %v4228 = vrot.slane %v4006, 7
        %v4229 = vrot.slane %v4228, 4
        %v4230 = vshrl.u32 %v684, 16
        %v4232 = vrot.slane %v4230, 7
        %v4233 = vor.u32 %v4232, %v4147
        %v4234 = vsel %vm4171, %v4229, %v4233
        %v4235 = vrot.slane %v4024, 7
        %v4236 = vrot.slane %v4235, 4
        %v4237 = vshrl.u32 %v688, 16
        %v4239 = vrot.slane %v4237, 7
        %v4240 = vor.u32 %v4239, %v4156
        %v4241 = vsel %vm4171, %v4236, %v4240
        %v4242 = vrot.slane %v4042, 7
        %v4243 = vrot.slane %v4242, 4
        %v4244 = vshrl.u32 %v692, 16
        %v4246 = vrot.slane %v4244, 7
        %v4247 = vor.u32 %v4246, %v4165
        %v4248 = vsel %vm4171, %v4243, %v4247
        %v4249 = vrot.slane %v1667, 7
        %v4250 = vrot.slane %v4249, 4
        %v4251 = vshrl.u32 %v696, 16
        %v4253 = vrot.slane %v4251, 7
        %v4254 = vor.u32 %v4253, %v1676
        %v4255 = vsel %vm4171, %v4250, %v4254
        %v4256 = vrot.slane %v1681, 7
        %v4257 = vrot.slane %v4256, 4
        %v4258 = vshrl.u32 %v700, 16
        %v4260 = vrot.slane %v4258, 7
        %v4261 = vor.u32 %v4260, %v1690
        %v4262 = vsel %vm4171, %v4257, %v4261
        %v4263 = vrot.slane %v1695, 7
        %v4264 = vrot.slane %v4263, 4
        %v4265 = vshrl.u32 %v704, 16
        %v4267 = vrot.slane %v4265, 7
        %v4268 = vor.u32 %v4267, %v1704
        %v4269 = vsel %vm4171, %v4264, %v4268
        %v4270 = vrot.slane %v888, 7
        %v4271 = vrot.slane %v4270, 4
        %v4272 = vshrl.u32 %v707, 16
        %v4274 = vrot.slane %v4272, 7
        %v4275 = vor.u32 %v4274, %v897
        %v4276 = vsel %vm4171, %v4271, %v4275
        %v4277 = vrot.slane %v902, 7
        %v4278 = vrot.slane %v4277, 4
        %v4279 = vshrl.u32 %v711, 16
        %v4281 = vrot.slane %v4279, 7
        %v4282 = vor.u32 %v4281, %v911
        %v4283 = vsel %vm4171, %v4278, %v4282
        %v4285 = vshrl.u32 %v611, 16
        %v4287 = vrot.slane %v4285, 5
        %v4288 = vshll.u32 %v611, 16
        %v4290 = vrot.slane %v4288, 6
        %v4291 = vor.u32 %v4287, %v4290
        %v4292 = vrot.slane %v4291, 4
        %v4293 = vrot.slane %v804, 5
        %v4294 = vrot.slane %v807, 6
        %v4295 = vor.u32 %v4293, %v4294
        %v4296 = vsel %vm3876, %v4292, %v4295
        %v4298 = vshrl.u32 %v615, 16
        %v4300 = vrot.slane %v4298, 5
        %v4301 = vshll.u32 %v615, 16
        %v4303 = vrot.slane %v4301, 6
        %v4304 = vor.u32 %v4300, %v4303
        %v4305 = vrot.slane %v4304, 4
        %v4306 = vrot.slane %v818, 5
        %v4307 = vrot.slane %v821, 6
        %v4308 = vor.u32 %v4306, %v4307
        %v4309 = vsel %vm3876, %v4305, %v4308
        %v4311 = vshrl.u32 %v619, 16
        %v4313 = vrot.slane %v4311, 5
        %v4314 = vshll.u32 %v619, 16
        %v4316 = vrot.slane %v4314, 6
        %v4317 = vor.u32 %v4313, %v4316
        %v4318 = vrot.slane %v4317, 4
        %v4319 = vrot.slane %v832, 5
        %v4320 = vrot.slane %v835, 6
        %v4321 = vor.u32 %v4319, %v4320
        %v4322 = vsel %vm3876, %v4318, %v4321
        %v4324 = vshrl.u32 %v623, 16
        %v4326 = vrot.slane %v4324, 5
        %v4327 = vshll.u32 %v623, 16
        %v4329 = vrot.slane %v4327, 6
        %v4330 = vor.u32 %v4326, %v4329
        %v4331 = vrot.slane %v4330, 4
        %v4332 = vrot.slane %v846, 5
        %v4333 = vrot.slane %v849, 6
        %v4334 = vor.u32 %v4332, %v4333
        %v4335 = vsel %vm3876, %v4331, %v4334
        %v4337 = vshrl.u32 %v627, 16
        %v4339 = vrot.slane %v4337, 5
        %v4340 = vshll.u32 %v627, 16
        %v4342 = vrot.slane %v4340, 6
        %v4343 = vor.u32 %v4339, %v4342
        %v4344 = vrot.slane %v4343, 4
        %v4345 = vrot.slane %v860, 5
        %v4346 = vrot.slane %v863, 6
        %v4347 = vor.u32 %v4345, %v4346
        %v4348 = vsel %vm3876, %v4344, %v4347
        %v4350 = vshrl.u32 %v631, 16
        %v4352 = vrot.slane %v4350, 5
        %v4353 = vshll.u32 %v631, 16
        %v4355 = vrot.slane %v4353, 6
        %v4356 = vor.u32 %v4352, %v4355
        %v4357 = vrot.slane %v4356, 4
        %v4358 = vrot.slane %v874, 5
        %v4359 = vrot.slane %v877, 6
        %v4360 = vor.u32 %v4358, %v4359
        %v4361 = vsel %vm3876, %v4357, %v4360
        %v4363 = vshrl.u32 %v713, 16
        %v4365 = vrot.slane %v4363, 5
        %v4366 = vshll.u32 %v713, 16
        %v4368 = vrot.slane %v4366, 6
        %v4369 = vor.u32 %v4365, %v4368
        %v4370 = vrot.slane %v4369, 4
        %v4371 = vrot.slane %v916, 5
        %v4372 = vrot.slane %v919, 6
        %v4373 = vor.u32 %v4371, %v4372
        %v4374 = vsel %vm3876, %v4370, %v4373
        %v4376 = vshrl.u32 %v717, 16
        %v4378 = vrot.slane %v4376, 5
        %v4379 = vshll.u32 %v717, 16
        %v4381 = vrot.slane %v4379, 6
        %v4382 = vor.u32 %v4378, %v4381
        %v4383 = vrot.slane %v4382, 4
        %v4384 = vrot.slane %v930, 5
        %v4385 = vrot.slane %v933, 6
        %v4386 = vor.u32 %v4384, %v4385
        %v4387 = vsel %vm3876, %v4383, %v4386
        %v4389 = vshrl.u32 %v721, 16
        %v4391 = vrot.slane %v4389, 5
        %v4392 = vshll.u32 %v721, 16
        %v4394 = vrot.slane %v4392, 6
        %v4395 = vor.u32 %v4391, %v4394
        %v4396 = vrot.slane %v4395, 4
        %v4397 = vrot.slane %v944, 5
        %v4398 = vrot.slane %v947, 6
        %v4399 = vor.u32 %v4397, %v4398
        %v4400 = vsel %vm3876, %v4396, %v4399
        %v4402 = vshrl.u32 %v725, 16
        %v4404 = vrot.slane %v4402, 5
        %v4405 = vshll.u32 %v725, 16
        %v4407 = vrot.slane %v4405, 6
        %v4408 = vor.u32 %v4404, %v4407
        %v4409 = vrot.slane %v4408, 4
        %v4410 = vrot.slane %v958, 5
        %v4411 = vrot.slane %v961, 6
        %v4412 = vor.u32 %v4410, %v4411
        %v4413 = vsel %vm3876, %v4409, %v4412
        %v4415 = vshrl.u32 %v729, 16
        %v4417 = vrot.slane %v4415, 5
        %v4418 = vshll.u32 %v729, 16
        %v4420 = vrot.slane %v4418, 6
        %v4421 = vor.u32 %v4417, %v4420
        %v4422 = vrot.slane %v4421, 4
        %v4423 = vrot.slane %v972, 5
        %v4424 = vrot.slane %v975, 6
        %v4425 = vor.u32 %v4423, %v4424
        %v4426 = vsel %vm3876, %v4422, %v4425
        %v4428 = vshrl.u32 %v733, 16
        %v4430 = vrot.slane %v4428, 5
        %v4431 = vshll.u32 %v733, 16
        %v4433 = vrot.slane %v4431, 6
        %v4434 = vor.u32 %v4430, %v4433
        %v4435 = vrot.slane %v4434, 4
        %v4436 = vrot.slane %v986, 5
        %v4437 = vrot.slane %v989, 6
        %v4438 = vor.u32 %v4436, %v4437
        %v4439 = vsel %vm3876, %v4435, %v4438
        %v4440 = vrot.slane %v804, 7
        %v4441 = vrot.slane %v4440, 4
        %v4442 = vshrl.u32 %v613, 16
        %v4444 = vrot.slane %v4442, 7
        %v4445 = vor.u32 %v4444, %v813
        %v4446 = vsel %vm4171, %v4441, %v4445
        %v4447 = vrot.slane %v818, 7
        %v4448 = vrot.slane %v4447, 4
        %v4449 = vshrl.u32 %v617, 16
        %v4451 = vrot.slane %v4449, 7
        %v4452 = vor.u32 %v4451, %v827
        %v4453 = vsel %vm4171, %v4448, %v4452
        %v4454 = vrot.slane %v832, 7
        %v4455 = vrot.slane %v4454, 4
        %v4456 = vshrl.u32 %v621, 16
        %v4458 = vrot.slane %v4456, 7
        %v4459 = vor.u32 %v4458, %v841
        %v4460 = vsel %vm4171, %v4455, %v4459
        %v4461 = vrot.slane %v846, 7
        %v4462 = vrot.slane %v4461, 4
        %v4463 = vshrl.u32 %v625, 16
        %v4465 = vrot.slane %v4463, 7
        %v4466 = vor.u32 %v4465, %v855
        %v4467 = vsel %vm4171, %v4462, %v4466
        %v4468 = vrot.slane %v860, 7
        %v4469 = vrot.slane %v4468, 4
        %v4470 = vshrl.u32 %v629, 16
        %v4472 = vrot.slane %v4470, 7
        %v4473 = vor.u32 %v4472, %v869
        %v4474 = vsel %vm4171, %v4469, %v4473
        %v4475 = vrot.slane %v874, 7
        %v4476 = vrot.slane %v4475, 4
        %v4477 = vshrl.u32 %v633, 16
        %v4479 = vrot.slane %v4477, 7
        %v4480 = vor.u32 %v4479, %v883
        %v4481 = vsel %vm4171, %v4476, %v4480
        %v4482 = vrot.slane %v916, 7
        %v4483 = vrot.slane %v4482, 4
        %v4484 = vshrl.u32 %v715, 16
        %v4486 = vrot.slane %v4484, 7
        %v4487 = vor.u32 %v4486, %v925
        %v4488 = vsel %vm4171, %v4483, %v4487
        %v4489 = vrot.slane %v930, 7
        %v4490 = vrot.slane %v4489, 4
        %v4491 = vshrl.u32 %v719, 16
        %v4493 = vrot.slane %v4491, 7
        %v4494 = vor.u32 %v4493, %v939
        %v4495 = vsel %vm4171, %v4490, %v4494
        %v4496 = vrot.slane %v944, 7
        %v4497 = vrot.slane %v4496, 4
        %v4498 = vshrl.u32 %v723, 16
        %v4500 = vrot.slane %v4498, 7
        %v4501 = vor.u32 %v4500, %v953
        %v4502 = vsel %vm4171, %v4497, %v4501
        %v4503 = vrot.slane %v958, 7
        %v4504 = vrot.slane %v4503, 4
        %v4505 = vshrl.u32 %v727, 16
        %v4507 = vrot.slane %v4505, 7
        %v4508 = vor.u32 %v4507, %v967
        %v4509 = vsel %vm4171, %v4504, %v4508
        %v4510 = vrot.slane %v972, 7
        %v4511 = vrot.slane %v4510, 4
        %v4512 = vshrl.u32 %v731, 16
        %v4514 = vrot.slane %v4512, 7
        %v4515 = vor.u32 %v4514, %v981
        %v4516 = vsel %vm4171, %v4511, %v4515
        %v4517 = vrot.slane %v986, 7
        %v4518 = vrot.slane %v4517, 4
        %v4519 = vshrl.u32 %v735, 16
        %v4521 = vrot.slane %v4519, 7
        %v4522 = vor.u32 %v4521, %v995
        %v4523 = vsel %vm4171, %v4518, %v4522
        %v4525 = vshrl.u32 %v635, 16
        %v4527 = vrot.slane %v4525, 5
        %v4528 = vshll.u32 %v635, 16
        %v4530 = vrot.slane %v4528, 6
        %v4531 = vor.u32 %v4527, %v4530
        %v4532 = vrot.slane %v4531, 4
        %v4533 = vrot.slane %v1894, 5
        %v4534 = vrot.slane %v1897, 6
        %v4535 = vor.u32 %v4533, %v4534
        %v4536 = vsel %vm3876, %v4532, %v4535
        %v4538 = vshrl.u32 %v638, 16
        %v4540 = vrot.slane %v4538, 5
        %v4541 = vshll.u32 %v638, 16
        %v4543 = vrot.slane %v4541, 6
        %v4544 = vor.u32 %v4540, %v4543
        %v4545 = vrot.slane %v4544, 4
        %v4546 = vrot.slane %v1908, 5
        %v4547 = vrot.slane %v1911, 6
        %v4548 = vor.u32 %v4546, %v4547
        %v4549 = vsel %vm3876, %v4545, %v4548
        %v4551 = vshrl.u32 %v642, 16
        %v4553 = vrot.slane %v4551, 5
        %v4554 = vshll.u32 %v642, 16
        %v4556 = vrot.slane %v4554, 6
        %v4557 = vor.u32 %v4553, %v4556
        %v4558 = vrot.slane %v4557, 4
        %v4559 = vrot.slane %v1922, 5
        %v4560 = vrot.slane %v1925, 6
        %v4561 = vor.u32 %v4559, %v4560
        %v4562 = vsel %vm3876, %v4558, %v4561
        %v4564 = vshrl.u32 %v646, 16
        %v4566 = vrot.slane %v4564, 5
        %v4567 = vshll.u32 %v646, 16
        %v4569 = vrot.slane %v4567, 6
        %v4570 = vor.u32 %v4566, %v4569
        %v4571 = vrot.slane %v4570, 4
        %v4573 = vshrl.u32 %v647, 16
        %v4575 = vrot.slane %v4573, 5
        %v4576 = vshll.u32 %v647, 16
        %v4578 = vrot.slane %v4576, 6
        %v4579 = vor.u32 %v4575, %v4578
        %v4580 = vsel %vm3876, %v4571, %v4579
        %v4582 = vshrl.u32 %v650, 16
        %v4584 = vrot.slane %v4582, 5
        %v4585 = vshll.u32 %v650, 16
        %v4587 = vrot.slane %v4585, 6
        %v4588 = vor.u32 %v4584, %v4587
        %v4589 = vrot.slane %v4588, 4
        %v4591 = vshrl.u32 %v651, 16
        %v4593 = vrot.slane %v4591, 5
        %v4594 = vshll.u32 %v651, 16
        %v4596 = vrot.slane %v4594, 6
        %v4597 = vor.u32 %v4593, %v4596
        %v4598 = vsel %vm3876, %v4589, %v4597
        %v4600 = vshrl.u32 %v654, 16
        %v4602 = vrot.slane %v4600, 5
        %v4603 = vshll.u32 %v654, 16
        %v4605 = vrot.slane %v4603, 6
        %v4606 = vor.u32 %v4602, %v4605
        %v4607 = vrot.slane %v4606, 4
        %v4609 = vshrl.u32 %v655, 16
        %v4611 = vrot.slane %v4609, 5
        %v4612 = vshll.u32 %v655, 16
        %v4614 = vrot.slane %v4612, 6
        %v4615 = vor.u32 %v4611, %v4614
        %v4616 = vsel %vm3876, %v4607, %v4615
        %v4618 = vshrl.u32 %v737, 16
        %v4620 = vrot.slane %v4618, 5
        %v4621 = vshll.u32 %v737, 16
        %v4623 = vrot.slane %v4621, 6
        %v4624 = vor.u32 %v4620, %v4623
        %v4625 = vrot.slane %v4624, 4
        %v4626 = vrot.slane %v1936, 5
        %v4627 = vrot.slane %v1939, 6
        %v4628 = vor.u32 %v4626, %v4627
        %v4629 = vsel %vm3876, %v4625, %v4628
        %v4631 = vshrl.u32 %v740, 16
        %v4633 = vrot.slane %v4631, 5
        %v4634 = vshll.u32 %v740, 16
        %v4636 = vrot.slane %v4634, 6
        %v4637 = vor.u32 %v4633, %v4636
        %v4638 = vrot.slane %v4637, 4
        %v4639 = vrot.slane %v1950, 5
        %v4640 = vrot.slane %v1953, 6
        %v4641 = vor.u32 %v4639, %v4640
        %v4642 = vsel %vm3876, %v4638, %v4641
        %v4644 = vshrl.u32 %v744, 16
        %v4646 = vrot.slane %v4644, 5
        %v4647 = vshll.u32 %v744, 16
        %v4649 = vrot.slane %v4647, 6
        %v4650 = vor.u32 %v4646, %v4649
        %v4651 = vrot.slane %v4650, 4
        %v4652 = vrot.slane %v1964, 5
        %v4653 = vrot.slane %v1967, 6
        %v4654 = vor.u32 %v4652, %v4653
        %v4655 = vsel %vm3876, %v4651, %v4654
        %v4657 = vshrl.u32 %v748, 16
        %v4659 = vrot.slane %v4657, 5
        %v4660 = vshll.u32 %v748, 16
        %v4662 = vrot.slane %v4660, 6
        %v4663 = vor.u32 %v4659, %v4662
        %v4664 = vrot.slane %v4663, 4
        %v4666 = vshrl.u32 %v749, 16
        %v4668 = vrot.slane %v4666, 5
        %v4669 = vshll.u32 %v749, 16
        %v4671 = vrot.slane %v4669, 6
        %v4672 = vor.u32 %v4668, %v4671
        %v4673 = vsel %vm3876, %v4664, %v4672
        %v4675 = vshrl.u32 %v752, 16
        %v4677 = vrot.slane %v4675, 5
        %v4678 = vshll.u32 %v752, 16
        %v4680 = vrot.slane %v4678, 6
        %v4681 = vor.u32 %v4677, %v4680
        %v4682 = vrot.slane %v4681, 4
        %v4684 = vshrl.u32 %v753, 16
        %v4686 = vrot.slane %v4684, 5
        %v4687 = vshll.u32 %v753, 16
        %v4689 = vrot.slane %v4687, 6
        %v4690 = vor.u32 %v4686, %v4689
        %v4691 = vsel %vm3876, %v4682, %v4690
        %v4693 = vshrl.u32 %v756, 16
        %v4695 = vrot.slane %v4693, 5
        %v4696 = vshll.u32 %v756, 16
        %v4698 = vrot.slane %v4696, 6
        %v4699 = vor.u32 %v4695, %v4698
        %v4700 = vrot.slane %v4699, 4
        %v4702 = vshrl.u32 %v757, 16
        %v4704 = vrot.slane %v4702, 5
        %v4705 = vshll.u32 %v757, 16
        %v4707 = vrot.slane %v4705, 6
        %v4708 = vor.u32 %v4704, %v4707
        %v4709 = vsel %vm3876, %v4700, %v4708
        %v4710 = vrot.slane %v4573, 4
        %v4711 = vrot.slane %v4576, 5
        %v4712 = vor.u32 %v4710, %v4711
        %v4713 = vrot.slane %v4712, 4
        %v4715 = vshll.u32 %v648, 16
        %v4717 = vrot.slane %v4715, 5
        %v4718 = vsel %vm774, %v4713, %v4717
        %v4719 = vrot.slane %v4591, 4
        %v4720 = vrot.slane %v4594, 5
        %v4721 = vor.u32 %v4719, %v4720
        %v4722 = vrot.slane %v4721, 4
        %v4724 = vshll.u32 %v652, 16
        %v4726 = vrot.slane %v4724, 5
        %v4727 = vsel %vm774, %v4722, %v4726
        %v4728 = vrot.slane %v4609, 4
        %v4729 = vrot.slane %v4612, 5
        %v4730 = vor.u32 %v4728, %v4729
        %v4731 = vrot.slane %v4730, 4
        %v4733 = vshll.u32 %v656, 16
        %v4735 = vrot.slane %v4733, 5
        %v4736 = vsel %vm774, %v4731, %v4735
        %v4737 = vrot.slane %v4666, 4
        %v4738 = vrot.slane %v4669, 5
        %v4739 = vor.u32 %v4737, %v4738
        %v4740 = vrot.slane %v4739, 4
        %v4742 = vshll.u32 %v750, 16
        %v4744 = vrot.slane %v4742, 5
        %v4745 = vsel %vm774, %v4740, %v4744
        %v4746 = vrot.slane %v4684, 4
        %v4747 = vrot.slane %v4687, 5
        %v4748 = vor.u32 %v4746, %v4747
        %v4749 = vrot.slane %v4748, 4
        %v4751 = vshll.u32 %v754, 16
        %v4753 = vrot.slane %v4751, 5
        %v4754 = vsel %vm774, %v4749, %v4753
        %v4755 = vrot.slane %v4702, 4
        %v4756 = vrot.slane %v4705, 5
        %v4757 = vor.u32 %v4755, %v4756
        %v4758 = vrot.slane %v4757, 4
        %v4760 = vshll.u32 %v758, 16
        %v4762 = vrot.slane %v4760, 5
        %v4763 = vsel %vm774, %v4758, %v4762
        %v4764 = vrot.slane %v1894, 7
        %v4765 = vrot.slane %v4764, 4
        %v4766 = vshrl.u32 %v637, 16
        %v4768 = vrot.slane %v4766, 7
        %v4769 = vor.u32 %v4768, %v1903
        %v4770 = vsel %vm4171, %v4765, %v4769
        %v4771 = vrot.slane %v1908, 7
        %v4772 = vrot.slane %v4771, 4
        %v4773 = vshrl.u32 %v640, 16
        %v4775 = vrot.slane %v4773, 7
        %v4776 = vor.u32 %v4775, %v1917
        %v4777 = vsel %vm4171, %v4772, %v4776
        %v4778 = vrot.slane %v1922, 7
        %v4779 = vrot.slane %v4778, 4
        %v4780 = vshrl.u32 %v644, 16
        %v4782 = vrot.slane %v4780, 7
        %v4783 = vor.u32 %v4782, %v1931
        %v4784 = vsel %vm4171, %v4779, %v4783
        %v4785 = vrot.slane %v4573, 7
        %v4786 = vrot.slane %v4785, 4
        %v4787 = vshrl.u32 %v648, 16
        %v4789 = vrot.slane %v4787, 7
        %v4790 = vor.u32 %v4789, %v4715
        %v4791 = vsel %vm4171, %v4786, %v4790
        %v4792 = vrot.slane %v4591, 7
        %v4793 = vrot.slane %v4792, 4
        %v4794 = vshrl.u32 %v652, 16
        %v4796 = vrot.slane %v4794, 7
        %v4797 = vor.u32 %v4796, %v4724
        %v4798 = vsel %vm4171, %v4793, %v4797
        %v4799 = vrot.slane %v4609, 7
        %v4800 = vrot.slane %v4799, 4
        %v4801 = vshrl.u32 %v656, 16
        %v4803 = vrot.slane %v4801, 7
        %v4804 = vor.u32 %v4803, %v4733
        %v4805 = vsel %vm4171, %v4800, %v4804
        %v4806 = vrot.slane %v1936, 7
        %v4807 = vrot.slane %v4806, 4
        %v4808 = vshrl.u32 %v739, 16
        %v4810 = vrot.slane %v4808, 7
        %v4811 = vor.u32 %v4810, %v1945
        %v4812 = vsel %vm4171, %v4807, %v4811
        %v4813 = vrot.slane %v1950, 7
        %v4814 = vrot.slane %v4813, 4
        %v4815 = vshrl.u32 %v742, 16
        %v4817 = vrot.slane %v4815, 7
        %v4818 = vor.u32 %v4817, %v1959
        %v4819 = vsel %vm4171, %v4814, %v4818
        %v4820 = vrot.slane %v1964, 7
        %v4821 = vrot.slane %v4820, 4
        %v4822 = vshrl.u32 %v746, 16
        %v4824 = vrot.slane %v4822, 7
        %v4825 = vor.u32 %v4824, %v1973
        %v4826 = vsel %vm4171, %v4821, %v4825
        %v4827 = vrot.slane %v4666, 7
        %v4828 = vrot.slane %v4827, 4
        %v4829 = vshrl.u32 %v750, 16
        %v4831 = vrot.slane %v4829, 7
        %v4832 = vor.u32 %v4831, %v4742
        %v4833 = vsel %vm4171, %v4828, %v4832
        %v4834 = vrot.slane %v4684, 7
        %v4835 = vrot.slane %v4834, 4
        %v4836 = vshrl.u32 %v754, 16
        %v4838 = vrot.slane %v4836, 7
        %v4839 = vor.u32 %v4838, %v4751
        %v4840 = vsel %vm4171, %v4835, %v4839
        %v4841 = vrot.slane %v4702, 7
        %v4842 = vrot.slane %v4841, 4
        %v4843 = vshrl.u32 %v758, 16
        %v4845 = vrot.slane %v4843, 7
        %v4846 = vor.u32 %v4845, %v4760
        %v4847 = vsel %vm4171, %v4842, %v4846
        %v4848 = vunpack.c.l.b16 %v3894
        %v4849 = vunpack.c.l.b16 %v3912
        %v4850 = vunpack.c.l.b16 %v3930
        %v4851 = vunpack.c.l.b16 %v3943
        %v4852 = vunpack.c.l.b16 %v3956
        %v4853 = vunpack.c.l.b16 %v3969
        %v4854 = vunpack.c.l.b16 %v3982
        %v4855 = vunpack.c.l.b16 %v3995
        %v4856 = vunpack.c.l.b16 %v4013
        %v4857 = vunpack.c.l.b16 %v4031
        %v4858 = vunpack.c.l.b16 %v4049
        %v4859 = vunpack.c.l.b16 %v4062
        %v4860 = vunpack.c.l.b16 %v4075
        %v4861 = vunpack.c.l.b16 %v4088
        %v4862 = vunpack.c.l.b16 %v4101
        %v4863 = vunpack.c.l.b16 %v4114
        %v4864 = vpack.c.b16 %v4849, %v4848
        %v4865 = vpack.c.b16 %v4851, %v4850
        %v4866 = vpack.c.b16 %v4853, %v4852
        %v4867 = vpack.c.b16 %v4855, %v4854
        %v4868 = vpack.c.b16 %v4857, %v4856
        %v4869 = vpack.c.b16 %v4859, %v4858
        %v4870 = vpack.c.b16 %v4861, %v4860
        %v4871 = vpack.c.b16 %v4863, %v4862
        %v4880 = vunpack.c.l.b16 %v4123
        %v4881 = vunpack.c.l.b16 %v4132
        %v4882 = vunpack.c.l.b16 %v4141
        %v4883 = vunpack.c.l.b16 %v4150
        %v4884 = vunpack.c.l.b16 %v4159
        %v4885 = vunpack.c.l.b16 %v4168
        %v4886 = vpack.c.b16 %v4881, %v4880
        %v4887 = vpack.c.b16 %v2039, %v4882
        %v4888 = vpack.c.b16 %v2041, %v2040
        %v4889 = vpack.c.b16 %v4884, %v4883
        %v4890 = vpack.c.b16 %v2042, %v4885
        %v4891 = vpack.c.b16 %v2044, %v2043
        %v4898 = vunpack.c.l.b16 %v4178
        %v4899 = vunpack.c.l.b16 %v4185
        %v4900 = vunpack.c.l.b16 %v4192
        %v4901 = vunpack.c.l.b16 %v4199
        %v4902 = vunpack.c.l.b16 %v4206
        %v4903 = vunpack.c.l.b16 %v4213
        %v4904 = vunpack.c.l.b16 %v4220
        %v4905 = vunpack.c.l.b16 %v4227
        %v4906 = vunpack.c.l.b16 %v4234
        %v4907 = vunpack.c.l.b16 %v4241
        %v4908 = vunpack.c.l.b16 %v4248
        %v4909 = vunpack.c.l.b16 %v4255
        %v4910 = vunpack.c.l.b16 %v4262
        %v4911 = vunpack.c.l.b16 %v4269
        %v4912 = vunpack.c.l.b16 %v4276
        %v4913 = vunpack.c.l.b16 %v4283
        %v4914 = vpack.c.b16 %v4899, %v4898
        %v4915 = vpack.c.b16 %v4901, %v4900
        %v4916 = vpack.c.b16 %v4903, %v4902
        %v4917 = vpack.c.b16 %v4905, %v4904
        %v4918 = vpack.c.b16 %v4907, %v4906
        %v4919 = vpack.c.b16 %v4909, %v4908
        %v4920 = vpack.c.b16 %v4911, %v4910
        %v4921 = vpack.c.b16 %v4913, %v4912
        %v4930 = vunpack.c.l.b16 %v4296
        %v4931 = vunpack.c.l.b16 %v4309
        %v4932 = vunpack.c.l.b16 %v4322
        %v4933 = vunpack.c.l.b16 %v4335
        %v4934 = vunpack.c.l.b16 %v4348
        %v4935 = vunpack.c.l.b16 %v4361
        %v4936 = vunpack.c.l.b16 %v4374
        %v4937 = vunpack.c.l.b16 %v4387
        %v4938 = vunpack.c.l.b16 %v4400
        %v4939 = vunpack.c.l.b16 %v4413
        %v4940 = vunpack.c.l.b16 %v4426
        %v4941 = vunpack.c.l.b16 %v4439
        %v4942 = vpack.c.b16 %v4931, %v4930
        %v4943 = vpack.c.b16 %v4933, %v4932
        %v4944 = vpack.c.b16 %v4935, %v4934
        %v4945 = vpack.c.b16 %v4937, %v4936
        %v4946 = vpack.c.b16 %v4939, %v4938
        %v4947 = vpack.c.b16 %v4941, %v4940
        %v4954 = vunpack.c.l.b16 %v4446
        %v4955 = vunpack.c.l.b16 %v4453
        %v4956 = vunpack.c.l.b16 %v4460
        %v4957 = vunpack.c.l.b16 %v4467
        %v4958 = vunpack.c.l.b16 %v4474
        %v4959 = vunpack.c.l.b16 %v4481
        %v4960 = vunpack.c.l.b16 %v4488
        %v4961 = vunpack.c.l.b16 %v4495
        %v4962 = vunpack.c.l.b16 %v4502
        %v4963 = vunpack.c.l.b16 %v4509
        %v4964 = vunpack.c.l.b16 %v4516
        %v4965 = vunpack.c.l.b16 %v4523
        %v4966 = vpack.c.b16 %v4955, %v4954
        %v4967 = vpack.c.b16 %v4957, %v4956
        %v4968 = vpack.c.b16 %v4959, %v4958
        %v4969 = vpack.c.b16 %v4961, %v4960
        %v4970 = vpack.c.b16 %v4963, %v4962
        %v4971 = vpack.c.b16 %v4965, %v4964
        %v4978 = vunpack.c.l.b16 %v4536
        %v4979 = vunpack.c.l.b16 %v4549
        %v4980 = vunpack.c.l.b16 %v4562
        %v4981 = vunpack.c.l.b16 %v4580
        %v4982 = vunpack.c.l.b16 %v4598
        %v4983 = vunpack.c.l.b16 %v4616
        %v4984 = vunpack.c.l.b16 %v4629
        %v4985 = vunpack.c.l.b16 %v4642
        %v4986 = vunpack.c.l.b16 %v4655
        %v4987 = vunpack.c.l.b16 %v4673
        %v4988 = vunpack.c.l.b16 %v4691
        %v4989 = vunpack.c.l.b16 %v4709
        %v4990 = vpack.c.b16 %v4979, %v4978
        %v4991 = vpack.c.b16 %v4981, %v4980
        %v4992 = vpack.c.b16 %v4983, %v4982
        %v4993 = vpack.c.b16 %v4985, %v4984
        %v4994 = vpack.c.b16 %v4987, %v4986
        %v4995 = vpack.c.b16 %v4989, %v4988
        %v5002 = vunpack.c.l.b16 %v4718
        %v5003 = vunpack.c.l.b16 %v4727
        %v5004 = vunpack.c.l.b16 %v4736
        %v5005 = vunpack.c.l.b16 %v4745
        %v5006 = vunpack.c.l.b16 %v4754
        %v5007 = vunpack.c.l.b16 %v4763
        %v5008 = vpack.c.b16 %v2156, %v2155
        %v5009 = vpack.c.b16 %v5002, %v2157
        %v5010 = vpack.c.b16 %v5004, %v5003
        %v5011 = vpack.c.b16 %v2159, %v2158
        %v5012 = vpack.c.b16 %v5005, %v2160
        %v5013 = vpack.c.b16 %v5007, %v5006
        %v5020 = vunpack.c.l.b16 %v4770
        %v5021 = vunpack.c.l.b16 %v4777
        %v5022 = vunpack.c.l.b16 %v4784
        %v5023 = vunpack.c.l.b16 %v4791
        %v5024 = vunpack.c.l.b16 %v4798
        %v5025 = vunpack.c.l.b16 %v4805
        %v5026 = vunpack.c.l.b16 %v4812
        %v5027 = vunpack.c.l.b16 %v4819
        %v5028 = vunpack.c.l.b16 %v4826
        %v5029 = vunpack.c.l.b16 %v4833
        %v5030 = vunpack.c.l.b16 %v4840
        %v5031 = vunpack.c.l.b16 %v4847
        %v5032 = vpack.c.b16 %v5021, %v5020
        %v5033 = vpack.c.b16 %v5023, %v5022
        %v5034 = vpack.c.b16 %v5025, %v5024
        %v5035 = vpack.c.b16 %v5027, %v5026
        %v5036 = vpack.c.b16 %v5029, %v5028
        %v5037 = vpack.c.b16 %v5031, %v5030
        %v5044 = vld [vmem:[#allocation10] sm:$0xf]
        %v5045 = vld [vmem:[#allocation10 + $0x4] sm:$0xf]
        %v5046 = vld [vmem:[#allocation10 + $0x8] sm:$0xf]
        %v5047 = vld [vmem:[#allocation10 + $0xc] sm:$0xf]
        %v5048 = vld [vmem:[#allocation10 + $0x10] sm:$0xf]
        %v5049 = vld [vmem:[#allocation10 + $0x14] sm:$0xf]
        %v5050 = vld [vmem:[#allocation10 + $0x18] sm:$0xf]
        %v5051 = vld [vmem:[#allocation10 + $0x1c] sm:$0xf]
        %v5052 = vld [vmem:[#allocation10 + $0x20] sm:$0xf]
        %v5053 = vld [vmem:[#allocation10 + $0x24] sm:$0xf]
        %v5054 = vld [vmem:[#allocation10 + $0x28] sm:$0xf]
        %v5055 = vld [vmem:[#allocation10 + $0x2c] sm:$0xf]
        %v5056 = vld [vmem:[#allocation10 + $0x30] sm:$0xf]
        %v5057 = vld [vmem:[#allocation10 + $0x34] sm:$0xf]
        %v5058 = vld [vmem:[#allocation10 + $0x38] sm:$0xf]
        %v5059 = vld [vmem:[#allocation10 + $0x3c] sm:$0xf]
        %v5060 = vld [vmem:[#allocation10 + $0x40] sm:$0xf]
        %v5061 = vld [vmem:[#allocation10 + $0x44] sm:$0xf]
        %v5062 = vld [vmem:[#allocation10 + $0x48] sm:$0xf]
        %v5063 = vld [vmem:[#allocation10 + $0x4c] sm:$0xf]
        %v5064 = vld [vmem:[#allocation10 + $0x50] sm:$0xf]
        %v5065 = vld [vmem:[#allocation10 + $0x54] sm:$0xf]
        %v5066 = vld [vmem:[#allocation10 + $0x58] sm:$0xf]
        %v5067 = vld [vmem:[#allocation10 + $0x5c] sm:$0xf]
        %v5068 = vld [vmem:[#allocation10 + $0x60] sm:$0xf]
        %v5069 = vld [vmem:[#allocation10 + $0x64] sm:$0xf]
        %v5070 = vld [vmem:[#allocation10 + $0x68] sm:$0xf]
        %v5071 = vld [vmem:[#allocation10 + $0x6c] sm:$0xf]
        %v5072 = vld [vmem:[#allocation10 + $0x70] sm:$0xf]
        %v5073 = vld [vmem:[#allocation10 + $0x74] sm:$0xf]
        %v5074 = vld [vmem:[#allocation10 + $0x78] sm:$0xf]
        %v5075 = vld [vmem:[#allocation10 + $0x7c] sm:$0xf]
        %v5076 = vld [vmem:[#allocation10 + $0x80] sm:$0xf]
        %v5077 = vld [vmem:[#allocation10 + $0x84] sm:$0xf]
        %v5078 = vld [vmem:[#allocation10 + $0x88] sm:$0xf]
        %v5079 = vld [vmem:[#allocation10 + $0x8c] sm:$0xf]
        %v5080 = vld [vmem:[#allocation10 + $0x90] sm:$0xf]
        %v5081 = vld [vmem:[#allocation10 + $0x94] sm:$0xf]
        %v5082 = vld [vmem:[#allocation10 + $0x98] sm:$0xf]
        %v5083 = vld [vmem:[#allocation10 + $0x9c] sm:$0xf]
        %v5084 = vld [vmem:[#allocation10 + $0xa0] sm:$0xf]
        %v5085 = vld [vmem:[#allocation10 + $0xa4] sm:$0xf]
        %v5086 = vld [vmem:[#allocation10 + $0xa8] sm:$0xf]
        %v5087 = vld [vmem:[#allocation10 + $0xac] sm:$0xf]
        %v5088 = vld [vmem:[#allocation10 + $0xb0] sm:$0xf]
        %v5089 = vld [vmem:[#allocation10 + $0xb4] sm:$0xf]
        %v5090 = vld [vmem:[#allocation10 + $0xb8] sm:$0xf]
        %v5091 = vld [vmem:[#allocation10 + $0xbc] sm:$0xf]
        %v5092 = vld [vmem:[#allocation10 + $0xc0] sm:$0xf]
        %v5093 = vld [vmem:[#allocation10 + $0xc4] sm:$0xf]
        %v5094 = vld [vmem:[#allocation10 + $0xc8] sm:$0xf]
        %v5095 = vld [vmem:[#allocation10 + $0xcc] sm:$0xf]
        %v5096 = vld [vmem:[#allocation10 + $0xd0] sm:$0xf]
        %v5097 = vld [vmem:[#allocation10 + $0xd4] sm:$0xf]
        %v5098 = vld [vmem:[#allocation10 + $0xd8] sm:$0xf]
        %v5099 = vld [vmem:[#allocation10 + $0xdc] sm:$0xf]
        %v5100 = vld [vmem:[#allocation10 + $0xe0] sm:$0xf]
        %v5101 = vld [vmem:[#allocation10 + $0xe4] sm:$0xf]
        %v5102 = vld [vmem:[#allocation10 + $0xe8] sm:$0xf]
        %v5103 = vld [vmem:[#allocation10 + $0xec] sm:$0xf]
        %v5104 = vld [vmem:[#allocation10 + $0xf0] sm:$0xf]
        %v5105 = vld [vmem:[#allocation10 + $0xf4] sm:$0xf]
        %v5106 = vld [vmem:[#allocation10 + $0xf8] sm:$0xf]
        %v5107 = vld [vmem:[#allocation10 + $0xfc] sm:$0xf]
        %v5108 = vld [vmem:[#allocation10 + $0x100] sm:$0xf]
        %v5109 = vld [vmem:[#allocation10 + $0x104] sm:$0xf]
        %v5110 = vld [vmem:[#allocation10 + $0x108] sm:$0xf]
        %v5111 = vld [vmem:[#allocation10 + $0x10c] sm:$0xf]
        %v5112 = vld [vmem:[#allocation10 + $0x110] sm:$0xf]
        %v5113 = vld [vmem:[#allocation10 + $0x114] sm:$0xf]
        %v5114 = vld [vmem:[#allocation10 + $0x118] sm:$0xf]
        %v5115 = vld [vmem:[#allocation10 + $0x11c] sm:$0xf]
        %v5116 = vld [vmem:[#allocation10 + $0x120] sm:$0xf]
        %v5117 = vld [vmem:[#allocation10 + $0x124] sm:$0xf]
        %v5118 = vld [vmem:[#allocation10 + $0x128] sm:$0xf]
        %v5119 = vld [vmem:[#allocation10 + $0x12c] sm:$0xf]
        %v5120 = vld [vmem:[#allocation10 + $0x130] sm:$0xf]
        %v5121 = vld [vmem:[#allocation10 + $0x134] sm:$0xf]
        %v5122 = vld [vmem:[#allocation10 + $0x138] sm:$0xf]
        %v5123 = vld [vmem:[#allocation10 + $0x13c] sm:$0xf]
        %v5124 = vld [vmem:[#allocation10 + $0x140] sm:$0xf]
        %v5125 = vld [vmem:[#allocation10 + $0x144] sm:$0xf]
        %v5126 = vld [vmem:[#allocation10 + $0x148] sm:$0xf]
        %v5127 = vld [vmem:[#allocation10 + $0x14c] sm:$0xf]
        %v5128 = vld [vmem:[#allocation10 + $0x150] sm:$0xf]
        %v5129 = vld [vmem:[#allocation10 + $0x154] sm:$0xf]
        %v5130 = vld [vmem:[#allocation10 + $0x158] sm:$0xf]
        %v5131 = vld [vmem:[#allocation10 + $0x15c] sm:$0xf]
        %v5132 = vld [vmem:[#allocation10 + $0x160] sm:$0xf]
        %v5133 = vld [vmem:[#allocation10 + $0x164] sm:$0xf]
        %v5134 = vld [vmem:[#allocation10 + $0x168] sm:$0xf]
        %v5135 = vld [vmem:[#allocation10 + $0x16c] sm:$0xf]
        %v5136 = vld [vmem:[#allocation10 + $0x170] sm:$0xf]
        %v5137 = vld [vmem:[#allocation10 + $0x174] sm:$0xf]
        %v5138 = vld [vmem:[#allocation10 + $0x178] sm:$0xf]
        %v5139 = vld [vmem:[#allocation10 + $0x17c] sm:$0xf]
        %v5140 = vld [vmem:[#allocation10 + $0x180] sm:$0xf]
        %v5141 = vld [vmem:[#allocation10 + $0x184] sm:$0xf]
        %v5142 = vld [vmem:[#allocation10 + $0x188] sm:$0xf]
        %v5143 = vld [vmem:[#allocation10 + $0x18c] sm:$0xf]
        %v5144 = vld [vmem:[#allocation10 + $0x190] sm:$0xf]
        %v5145 = vld [vmem:[#allocation10 + $0x194] sm:$0xf]
        %v5146 = vld [vmem:[#allocation10 + $0x198] sm:$0xf]
        %v5147 = vld [vmem:[#allocation10 + $0x19c] sm:$0xf]
        %v5148 = vld [vmem:[#allocation10 + $0x1a0] sm:$0xf]
        %v5149 = vld [vmem:[#allocation10 + $0x1a4] sm:$0xf]
        %v5150 = vld [vmem:[#allocation10 + $0x1a8] sm:$0xf]
        %v5151 = vld [vmem:[#allocation10 + $0x1ac] sm:$0xf]
        %v5152 = vld [vmem:[#allocation10 + $0x1b0] sm:$0xf]
        %v5153 = vld [vmem:[#allocation10 + $0x1b4] sm:$0xf]
        %v5154 = vld [vmem:[#allocation10 + $0x1b8] sm:$0xf]
        %v5155 = vld [vmem:[#allocation10 + $0x1bc] sm:$0xf]
        %v5156 = vld [vmem:[#allocation10 + $0x1c0] sm:$0xf]
        %v5157 = vld [vmem:[#allocation10 + $0x1c4] sm:$0xf]
        %v5158 = vld [vmem:[#allocation10 + $0x1c8] sm:$0xf]
        %v5159 = vld [vmem:[#allocation10 + $0x1cc] sm:$0xf]
        %v5160 = vld [vmem:[#allocation10 + $0x1d0] sm:$0xf]
        %v5161 = vld [vmem:[#allocation10 + $0x1d4] sm:$0xf]
        %v5162 = vld [vmem:[#allocation10 + $0x1d8] sm:$0xf]
        %v5163 = vld [vmem:[#allocation10 + $0x1dc] sm:$0xf]
        %v5164 = vld [vmem:[#allocation10 + $0x1e0] sm:$0xf]
        %v5165 = vld [vmem:[#allocation10 + $0x1e4] sm:$0xf]
        %v5166 = vld [vmem:[#allocation10 + $0x1e8] sm:$0xf]
        %v5167 = vld [vmem:[#allocation10 + $0x1ec] sm:$0xf]
        %v5168 = vld [vmem:[#allocation10 + $0x1f0] sm:$0xf]
        %v5169 = vld [vmem:[#allocation10 + $0x1f4] sm:$0xf]
        %v5170 = vld [vmem:[#allocation10 + $0x1f8] sm:$0xf]
        %v5171 = vld [vmem:[#allocation10 + $0x1fc] sm:$0xf]
        %v5172 = vld [vmem:[#allocation10 + $0x200] sm:$0xf]
        %v5173 = vld [vmem:[#allocation10 + $0x204] sm:$0xf]
        %v5174 = vld [vmem:[#allocation10 + $0x208] sm:$0xf]
        %v5175 = vld [vmem:[#allocation10 + $0x20c] sm:$0xf]
        %v5176 = vld [vmem:[#allocation10 + $0x210] sm:$0xf]
        %v5177 = vld [vmem:[#allocation10 + $0x214] sm:$0xf]
        %v5178 = vld [vmem:[#allocation10 + $0x218] sm:$0xf]
        %v5179 = vld [vmem:[#allocation10 + $0x21c] sm:$0xf]
        %v5180 = vld [vmem:[#allocation10 + $0x220] sm:$0xf]
        %v5181 = vld [vmem:[#allocation10 + $0x224] sm:$0xf]
        %v5182 = vld [vmem:[#allocation10 + $0x228] sm:$0xf]
        %v5183 = vld [vmem:[#allocation10 + $0x22c] sm:$0xf]
        %v5184 = vld [vmem:[#allocation10 + $0x230] sm:$0xf]
        %v5185 = vld [vmem:[#allocation10 + $0x234] sm:$0xf]
        %v5186 = vld [vmem:[#allocation10 + $0x238] sm:$0xf]
        %v5187 = vld [vmem:[#allocation10 + $0x23c] sm:$0xf]
        %v5332 = vunpack.c.l.b16 %v5044
        %v5333 = vunpack.c.l.b16 %v5045
        %v5334 = vunpack.c.l.b16 %v5046
        %v5335 = vunpack.c.l.b16 %v5047
        %v5336 = vunpack.c.l.b16 %v5048
        %v5337 = vunpack.c.l.b16 %v5049
        %v5338 = vunpack.c.l.b16 %v5050
        %v5339 = vunpack.c.l.b16 %v5051
        %v5340 = vunpack.c.l.b16 %v5052
        %v5341 = vunpack.c.l.b16 %v5053
        %v5342 = vunpack.c.l.b16 %v5054
        %v5343 = vunpack.c.l.b16 %v5055
        %v5344 = vunpack.c.l.b16 %v5056
        %v5345 = vunpack.c.l.b16 %v5057
        %v5346 = vunpack.c.l.b16 %v5058
        %v5347 = vunpack.c.l.b16 %v5059
        %v5348 = vunpack.c.l.b16 %v5060
        %v5349 = vunpack.c.l.b16 %v5061
        %v5350 = vunpack.c.l.b16 %v5062
        %v5351 = vunpack.c.l.b16 %v5063
        %v5352 = vunpack.c.l.b16 %v5064
        %v5353 = vunpack.c.l.b16 %v5065
        %v5354 = vunpack.c.l.b16 %v5066
        %v5355 = vunpack.c.l.b16 %v5067
        %v5356 = vunpack.c.l.b16 %v5068
        %v5357 = vunpack.c.l.b16 %v5069
        %v5358 = vunpack.c.l.b16 %v5070
        %v5359 = vunpack.c.l.b16 %v5071
        %v5360 = vunpack.c.l.b16 %v5072
        %v5361 = vunpack.c.l.b16 %v5073
        %v5362 = vunpack.c.l.b16 %v5074
        %v5363 = vunpack.c.l.b16 %v5075
        %v5364 = vunpack.c.l.b16 %v5076
        %v5365 = vunpack.c.l.b16 %v5077
        %v5366 = vunpack.c.l.b16 %v5078
        %v5367 = vunpack.c.l.b16 %v5079
        %v5368 = vunpack.c.l.b16 %v5080
        %v5369 = vunpack.c.l.b16 %v5081
        %v5370 = vunpack.c.l.b16 %v5082
        %v5371 = vunpack.c.l.b16 %v5083
        %v5372 = vunpack.c.l.b16 %v5084
        %v5373 = vunpack.c.l.b16 %v5085
        %v5374 = vunpack.c.l.b16 %v5086
        %v5375 = vunpack.c.l.b16 %v5087
        %v5376 = vunpack.c.l.b16 %v5088
        %v5377 = vunpack.c.l.b16 %v5089
        %v5378 = vunpack.c.l.b16 %v5090
        %v5379 = vunpack.c.l.b16 %v5091
        %v5380 = vunpack.c.l.b16 %v5092
        %v5381 = vunpack.c.l.b16 %v5093
        %v5382 = vunpack.c.l.b16 %v5094
        %v5383 = vunpack.c.l.b16 %v5095
        %v5384 = vunpack.c.l.b16 %v5096
        %v5385 = vunpack.c.l.b16 %v5097
        %v5386 = vunpack.c.l.b16 %v5098
        %v5387 = vunpack.c.l.b16 %v5099
        %v5388 = vunpack.c.l.b16 %v5100
        %v5389 = vunpack.c.l.b16 %v5101
        %v5390 = vunpack.c.l.b16 %v5102
        %v5391 = vunpack.c.l.b16 %v5103
        %v5392 = vunpack.c.l.b16 %v5104
        %v5393 = vunpack.c.l.b16 %v5105
        %v5394 = vunpack.c.l.b16 %v5106
        %v5395 = vunpack.c.l.b16 %v5107
        %v5396 = vunpack.c.l.b16 %v5108
        %v5397 = vunpack.c.l.b16 %v5109
        %v5398 = vunpack.c.l.b16 %v5110
        %v5399 = vunpack.c.l.b16 %v5111
        %v5400 = vunpack.c.l.b16 %v5112
        %v5401 = vunpack.c.l.b16 %v5113
        %v5402 = vunpack.c.l.b16 %v5114
        %v5403 = vunpack.c.l.b16 %v5115
        %v5404 = vunpack.c.l.b16 %v5116
        %v5405 = vunpack.c.l.b16 %v5117
        %v5406 = vunpack.c.l.b16 %v5118
        %v5407 = vunpack.c.l.b16 %v5119
        %v5408 = vunpack.c.l.b16 %v5120
        %v5409 = vunpack.c.l.b16 %v5121
        %v5410 = vunpack.c.l.b16 %v5122
        %v5411 = vunpack.c.l.b16 %v5123
        %v5412 = vunpack.c.l.b16 %v5124
        %v5413 = vunpack.c.l.b16 %v5125
        %v5414 = vunpack.c.l.b16 %v5126
        %v5415 = vunpack.c.l.b16 %v5127
        %v5416 = vunpack.c.l.b16 %v5128
        %v5417 = vunpack.c.l.b16 %v5129
        %v5418 = vunpack.c.l.b16 %v5130
        %v5419 = vunpack.c.l.b16 %v5131
        %v5420 = vunpack.c.l.b16 %v5132
        %v5421 = vunpack.c.l.b16 %v5133
        %v5422 = vunpack.c.l.b16 %v5134
        %v5423 = vunpack.c.l.b16 %v5135
        %v5424 = vunpack.c.l.b16 %v5136
        %v5425 = vunpack.c.l.b16 %v5137
        %v5426 = vunpack.c.l.b16 %v5138
        %v5427 = vunpack.c.l.b16 %v5139
        %v5428 = vunpack.c.l.b16 %v5140
        %v5429 = vunpack.c.l.b16 %v5141
        %v5430 = vunpack.c.l.b16 %v5142
        %v5431 = vunpack.c.l.b16 %v5143
        %v5432 = vunpack.c.l.b16 %v5144
        %v5433 = vunpack.c.l.b16 %v5145
        %v5434 = vunpack.c.l.b16 %v5146
        %v5435 = vunpack.c.l.b16 %v5147
        %v5436 = vunpack.c.l.b16 %v5148
        %v5437 = vunpack.c.l.b16 %v5149
        %v5438 = vunpack.c.l.b16 %v5150
        %v5439 = vunpack.c.l.b16 %v5151
        %v5440 = vunpack.c.l.b16 %v5152
        %v5441 = vunpack.c.l.b16 %v5153
        %v5442 = vunpack.c.l.b16 %v5154
        %v5443 = vunpack.c.l.b16 %v5155
        %v5444 = vunpack.c.l.b16 %v5156
        %v5445 = vunpack.c.l.b16 %v5157
        %v5446 = vunpack.c.l.b16 %v5158
        %v5447 = vunpack.c.l.b16 %v5159
        %v5448 = vunpack.c.l.b16 %v5160
        %v5449 = vunpack.c.l.b16 %v5161
        %v5450 = vunpack.c.l.b16 %v5162
        %v5451 = vunpack.c.l.b16 %v5163
        %v5452 = vunpack.c.l.b16 %v5164
        %v5453 = vunpack.c.l.b16 %v5165
        %v5454 = vunpack.c.l.b16 %v5166
        %v5455 = vunpack.c.l.b16 %v5167
        %v5456 = vunpack.c.l.b16 %v5168
        %v5457 = vunpack.c.l.b16 %v5169
        %v5458 = vunpack.c.l.b16 %v5170
        %v5459 = vunpack.c.l.b16 %v5171
        %v5460 = vunpack.c.l.b16 %v5172
        %v5461 = vunpack.c.l.b16 %v5173
        %v5462 = vunpack.c.l.b16 %v5174
        %v5463 = vunpack.c.l.b16 %v5175
        %v5464 = vunpack.c.l.b16 %v5176
        %v5465 = vunpack.c.l.b16 %v5177
        %v5466 = vunpack.c.l.b16 %v5178
        %v5467 = vunpack.c.l.b16 %v5179
        %v5468 = vunpack.c.l.b16 %v5180
        %v5469 = vunpack.c.l.b16 %v5181
        %v5470 = vunpack.c.l.b16 %v5182
        %v5471 = vunpack.c.l.b16 %v5183
        %v5472 = vunpack.c.l.b16 %v5184
        %v5473 = vunpack.c.l.b16 %v5185
        %v5474 = vunpack.c.l.b16 %v5186
        %v5475 = vunpack.c.l.b16 %v5187
        %v5476 = vpack.c.b16 %v5333, %v5332
        %v5477 = vpack.c.b16 %v5335, %v5334
        %v5478 = vpack.c.b16 %v5337, %v5336
        %v5479 = vpack.c.b16 %v5339, %v5338
        %v5480 = vpack.c.b16 %v5341, %v5340
        %v5481 = vpack.c.b16 %v5343, %v5342
        %v5482 = vpack.c.b16 %v5345, %v5344
        %v5483 = vpack.c.b16 %v5347, %v5346
        %v5484 = vpack.c.b16 %v5349, %v5348
        %v5485 = vpack.c.b16 %v5351, %v5350
        %v5486 = vpack.c.b16 %v5353, %v5352
        %v5487 = vpack.c.b16 %v5355, %v5354
        %v5488 = vpack.c.b16 %v5357, %v5356
        %v5489 = vpack.c.b16 %v5359, %v5358
        %v5490 = vpack.c.b16 %v5361, %v5360
        %v5491 = vpack.c.b16 %v5363, %v5362
        %v5492 = vpack.c.b16 %v5365, %v5364
        %v5493 = vpack.c.b16 %v5367, %v5366
        %v5494 = vpack.c.b16 %v5369, %v5368
        %v5495 = vpack.c.b16 %v5371, %v5370
        %v5496 = vpack.c.b16 %v5373, %v5372
        %v5497 = vpack.c.b16 %v5375, %v5374
        %v5498 = vpack.c.b16 %v5377, %v5376
        %v5499 = vpack.c.b16 %v5379, %v5378
        %v5500 = vpack.c.b16 %v5381, %v5380
        %v5501 = vpack.c.b16 %v5383, %v5382
        %v5502 = vpack.c.b16 %v5385, %v5384
        %v5503 = vpack.c.b16 %v5387, %v5386
        %v5504 = vpack.c.b16 %v5389, %v5388
        %v5505 = vpack.c.b16 %v5391, %v5390
        %v5506 = vpack.c.b16 %v5393, %v5392
        %v5507 = vpack.c.b16 %v5395, %v5394
        %v5508 = vpack.c.b16 %v5397, %v5396
        %v5509 = vpack.c.b16 %v5399, %v5398
        %v5510 = vpack.c.b16 %v5401, %v5400
        %v5511 = vpack.c.b16 %v5403, %v5402
        %v5512 = vpack.c.b16 %v5405, %v5404
        %v5513 = vpack.c.b16 %v5407, %v5406
        %v5514 = vpack.c.b16 %v5409, %v5408
        %v5515 = vpack.c.b16 %v5411, %v5410
        %v5516 = vpack.c.b16 %v5413, %v5412
        %v5517 = vpack.c.b16 %v5415, %v5414
        %v5518 = vpack.c.b16 %v5417, %v5416
        %v5519 = vpack.c.b16 %v5419, %v5418
        %v5520 = vpack.c.b16 %v5421, %v5420
        %v5521 = vpack.c.b16 %v5423, %v5422
        %v5522 = vpack.c.b16 %v5425, %v5424
        %v5523 = vpack.c.b16 %v5427, %v5426
        %v5524 = vpack.c.b16 %v5429, %v5428
        %v5525 = vpack.c.b16 %v5431, %v5430
        %v5526 = vpack.c.b16 %v5433, %v5432
        %v5527 = vpack.c.b16 %v5435, %v5434
        %v5528 = vpack.c.b16 %v5437, %v5436
        %v5529 = vpack.c.b16 %v5439, %v5438
        %v5530 = vpack.c.b16 %v5441, %v5440
        %v5531 = vpack.c.b16 %v5443, %v5442
        %v5532 = vpack.c.b16 %v5445, %v5444
        %v5533 = vpack.c.b16 %v5447, %v5446
        %v5534 = vpack.c.b16 %v5449, %v5448
        %v5535 = vpack.c.b16 %v5451, %v5450
        %v5536 = vpack.c.b16 %v5453, %v5452
        %v5537 = vpack.c.b16 %v5455, %v5454
        %v5538 = vpack.c.b16 %v5457, %v5456
        %v5539 = vpack.c.b16 %v5459, %v5458
        %v5540 = vpack.c.b16 %v5461, %v5460
        %v5541 = vpack.c.b16 %v5463, %v5462
        %v5542 = vpack.c.b16 %v5465, %v5464
        %v5543 = vpack.c.b16 %v5467, %v5466
        %v5544 = vpack.c.b16 %v5469, %v5468
        %v5545 = vpack.c.b16 %v5471, %v5470
        %v5546 = vpack.c.b16 %v5473, %v5472
        %v5547 = vpack.c.b16 %v5475, %v5474
        %5620 = vmatprep.subr.bf16.mxu0 0
        %5621 = vmatpush1.bf16.msra.mxu0 %v5476
        %5622 = vmatprep.subr.bf16.mxu0 0
        %5623 = vmatpush1.bf16.msra.mxu0 %v5477
        %5624 = vmatprep.subr.bf16.mxu0 0
        %5625 = vmatpush1.bf16.msra.mxu0 %v5478
        %5626 = vmatprep.subr.bf16.mxu0 0
        %5627 = vmatpush1.bf16.msra.mxu0 %v5479
        %5628 = vmatprep.subr.bf16.mxu0 0
        %5629 = vmatpush1.bf16.msra.mxu0 %v5480
        %5630 = vmatprep.subr.bf16.mxu0 0
        %5631 = vmatpush1.bf16.msra.mxu0 %v5481
        %5632 = vmatprep.subr.bf16.mxu0 0
        %5633 = vmatpush1.bf16.msra.mxu0 %v5482
        %5634 = vmatprep.subr.bf16.mxu0 0
        %5635 = vmatpush1.bf16.msra.mxu0 %v5483
        %5636 = vmatprep.subr.bf16.mxu0 0
        %5637 = vmatpush1.bf16.msra.mxu0 %v5484
        %5638 = vmatprep.subr.bf16.mxu0 0
        %5639 = vmatpush1.bf16.msra.mxu0 %v5485
        %5640 = vmatprep.subr.bf16.mxu0 0
        %5641 = vmatpush1.bf16.msra.mxu0 %v5486
        %5642 = vmatprep.subr.bf16.mxu0 0
        %5643 = vmatpush1.bf16.msra.mxu0 %v5487
        %5644 = vmatprep.subr.bf16.mxu0 0
        %5645 = vmatpush1.bf16.msra.mxu0 %v5488
        %5646 = vmatprep.subr.bf16.mxu0 0
        %5647 = vmatpush1.bf16.msra.mxu0 %v5489
        %5648 = vmatprep.subr.bf16.mxu0 0
        %5649 = vmatpush1.bf16.msra.mxu0 %v5490
        %5650 = vmatprep.subr.bf16.mxu0 0
        %5651 = vmatpush1.bf16.msra.mxu0 %v5491
        %5652 = vmatprep.mubr.bf16.mxu0 %v4886
        %5653 = vmatmul.mubr.bf16.gmra.mrb[0].mxu0 %v4864
        %v5654 = vpop.f32.mrb[0].mxu0
        %v5655 = vadd.f32 0.0, %v5654
        %v5656 = vpop.f32.mrb[0].mxu0
        %v5657 = vpop.f32.mrb[0].mxu0
        %v5658 = vadd.f32 0.0, %v5657
        %v5659 = vpop.f32.mrb[0].mxu0
        %5660 = vmatprep.mubr.bf16.mxu0 %v4887
        %5661 = vmatmul.mubr.bf16.gmra.mrb[0].mxu0 %v4865
        %v5662 = vpop.f32.mrb[0].mxu0
        %v5663 = vadd.f32 0.0, %v5662
        %v5664 = vpop.f32.mrb[0].mxu0
        %v5665 = vpop.f32.mrb[0].mxu0
        %v5666 = vadd.f32 0.0, %v5665
        %v5667 = vpop.f32.mrb[0].mxu0
        %5668 = vmatprep.mubr.bf16.mxu0 %v4888
        %5669 = vmatmul.mubr.bf16.gmra.mrb[0].mxu0 %v4866
        %v5670 = vpop.f32.mrb[0].mxu0
        %v5671 = vadd.f32 0.0, %v5670
        %v5672 = vpop.f32.mrb[0].mxu0
        %v5673 = vpop.f32.mrb[0].mxu0
        %v5674 = vadd.f32 0.0, %v5673
        %v5675 = vpop.f32.mrb[0].mxu0
        %5676 = vmatprep.mubr.bf16.mxu0 %v1031
        %5677 = vmatmul.mubr.bf16.gmra.mrb[0].mxu0 %v4867
        %v5678 = vpop.f32.mrb[0].mxu0
        %v5679 = vadd.f32 0.0, %v5678
        %v5680 = vpop.f32.mrb[0].mxu0
        %v5681 = vpop.f32.mrb[0].mxu0
        %v5682 = vadd.f32 0.0, %v5681
        %v5683 = vpop.f32.mrb[0].mxu0
        %5684 = vmatprep.mubr.bf16.mxu0 %v4889
        %5685 = vmatmul.mubr.bf16.gmra.mrb[0].mxu0 %v4868
        %v5686 = vpop.f32.mrb[0].mxu0
        %v5687 = vadd.f32 0.0, %v5686
        %v5688 = vpop.f32.mrb[0].mxu0
        %v5689 = vpop.f32.mrb[0].mxu0
        %v5690 = vadd.f32 0.0, %v5689
        %v5691 = vpop.f32.mrb[0].mxu0
        %5692 = vmatprep.mubr.bf16.mxu0 %v4890
        %5693 = vmatmul.mubr.bf16.gmra.mrb[0].mxu0 %v4869
        %v5694 = vpop.f32.mrb[0].mxu0
        %v5695 = vadd.f32 0.0, %v5694
        %v5696 = vpop.f32.mrb[0].mxu0
        %v5697 = vpop.f32.mrb[0].mxu0
        %v5698 = vadd.f32 0.0, %v5697
        %v5699 = vpop.f32.mrb[0].mxu0
        %5700 = vmatprep.mubr.bf16.mxu0 %v4891
        %5701 = vmatmul.mubr.bf16.gmra.mrb[0].mxu0 %v4870
        %v5702 = vpop.f32.mrb[0].mxu0
        %v5703 = vadd.f32 0.0, %v5702
        %v5704 = vpop.f32.mrb[0].mxu0
        %v5705 = vpop.f32.mrb[0].mxu0
        %v5706 = vadd.f32 0.0, %v5705
        %v5707 = vpop.f32.mrb[0].mxu0
        %5708 = vmatprep.mubr.bf16.mxu0 %v1035
        %5709 = vmatmul.mubr.bf16.gmra.mrb[0].mxu0 %v4871
        %v5710 = vpop.f32.mrb[0].mxu0
        %v5711 = vadd.f32 0.0, %v5710
        %v5712 = vpop.f32.mrb[0].mxu0
        %v5713 = vpop.f32.mrb[0].mxu0
        %v5714 = vadd.f32 0.0, %v5713
        %v5715 = vpop.f32.mrb[0].mxu0
        %5716 = vdwg.mxu0
        %5717 = vmatprep.subr.bf16.mxu0 0
        %5718 = vmatpush1.bf16.msra.mxu0 %v5492
        %5719 = vmatprep.subr.bf16.mxu0 0
        %5720 = vmatpush1.bf16.msra.mxu0 %v5493
        %5721 = vmatprep.subr.bf16.mxu0 0
        %5722 = vmatpush1.bf16.msra.mxu0 %v5494
        %5723 = vmatprep.subr.bf16.mxu0 0
        %5724 = vmatpush1.bf16.msra.mxu0 %v5495
        %5725 = vmatprep.subr.bf16.mxu0 0
        %5726 = vmatpush1.bf16.msra.mxu0 %v5496
        %5727 = vmatprep.subr.bf16.mxu0 0
        %5728 = vmatpush1.bf16.msra.mxu0 %v5497
        %5729 = vmatprep.subr.bf16.mxu0 0
        %5730 = vmatpush1.bf16.msra.mxu0 %v5498
        %5731 = vmatprep.subr.bf16.mxu0 0
        %5732 = vmatpush1.bf16.msra.mxu0 %v5499
        %5733 = vmatprep.subr.bf16.mxu0 0
        %5734 = vmatpush1.bf16.msra.mxu0 %v5500
        %5735 = vmatprep.subr.bf16.mxu0 0
        %5736 = vmatpush1.bf16.msra.mxu0 %v5501
        %5737 = vmatprep.subr.bf16.mxu0 0
        %5738 = vmatpush1.bf16.msra.mxu0 %v5502
        %5739 = vmatprep.subr.bf16.mxu0 0
        %5740 = vmatpush1.bf16.msra.mxu0 %v5503
        %5741 = vmatprep.subr.bf16.mxu0 0
        %5742 = vmatpush1.bf16.msra.mxu0 %v5504
        %5743 = vmatprep.subr.bf16.mxu0 0
        %5744 = vmatpush1.bf16.msra.mxu0 %v5505
        %5745 = vmatprep.subr.bf16.mxu0 0
        %5746 = vmatpush1.bf16.msra.mxu0 %v5506
        %5747 = vmatprep.subr.bf16.mxu0 0
        %5748 = vmatpush1.bf16.msra.mxu0 %v5507
        %5749 = vmatprep.mubr.bf16.mxu0 %v4867
        %5750 = vmatmul.mubr.bf16.gmra.mrb[0].mxu0 %v4914
        %v5751 = vpop.f32.mrb[0].mxu0
        %v5752 = vadd.f32 %v5655, %v5751
        %v5753 = vpop.f32.mrb[0].mxu0
        %v5754 = vpop.f32.mrb[0].mxu0
        %v5755 = vadd.f32 %v5658, %v5754
        %v5756 = vpop.f32.mrb[0].mxu0
        %5757 = vmatprep.mubr.bf16.mxu0 %v4942
        %5758 = vmatmul.mubr.bf16.gmra.mrb[0].mxu0 %v4915
        %v5759 = vpop.f32.mrb[0].mxu0
        %v5760 = vadd.f32 %v5663, %v5759
        %v5761 = vpop.f32.mrb[0].mxu0
        %v5762 = vpop.f32.mrb[0].mxu0
        %v5763 = vadd.f32 %v5666, %v5762
        %v5764 = vpop.f32.mrb[0].mxu0
        %5765 = vmatprep.mubr.bf16.mxu0 %v4943
        %5766 = vmatmul.mubr.bf16.gmra.mrb[0].mxu0 %v4916
        %v5767 = vpop.f32.mrb[0].mxu0
        %v5768 = vadd.f32 %v5671, %v5767
        %v5769 = vpop.f32.mrb[0].mxu0
        %v5770 = vpop.f32.mrb[0].mxu0
        %v5771 = vadd.f32 %v5674, %v5770
        %v5772 = vpop.f32.mrb[0].mxu0
        %5773 = vmatprep.mubr.bf16.mxu0 %v4944
        %5774 = vmatmul.mubr.bf16.gmra.mrb[0].mxu0 %v4917
        %v5775 = vpop.f32.mrb[0].mxu0
        %v5776 = vadd.f32 %v5679, %v5775
        %v5777 = vpop.f32.mrb[0].mxu0
        %v5778 = vpop.f32.mrb[0].mxu0
        %v5779 = vadd.f32 %v5682, %v5778
        %v5780 = vpop.f32.mrb[0].mxu0
        %5781 = vmatprep.mubr.bf16.mxu0 %v4871
        %5782 = vmatmul.mubr.bf16.gmra.mrb[0].mxu0 %v4918
        %v5783 = vpop.f32.mrb[0].mxu0
        %v5784 = vadd.f32 %v5687, %v5783
        %v5785 = vpop.f32.mrb[0].mxu0
        %v5786 = vpop.f32.mrb[0].mxu0
        %v5787 = vadd.f32 %v5690, %v5786
        %v5788 = vpop.f32.mrb[0].mxu0
        %5789 = vmatprep.mubr.bf16.mxu0 %v4945
        %5790 = vmatmul.mubr.bf16.gmra.mrb[0].mxu0 %v4919
        %v5791 = vpop.f32.mrb[0].mxu0
        %v5792 = vadd.f32 %v5695, %v5791
        %v5793 = vpop.f32.mrb[0].mxu0
        %v5794 = vpop.f32.mrb[0].mxu0
        %v5795 = vadd.f32 %v5698, %v5794
        %v5796 = vpop.f32.mrb[0].mxu0
        %5797 = vmatprep.mubr.bf16.mxu0 %v4946
        %5798 = vmatmul.mubr.bf16.gmra.mrb[0].mxu0 %v4920
        %v5799 = vpop.f32.mrb[0].mxu0
        %v5800 = vadd.f32 %v5703, %v5799
        %v5801 = vpop.f32.mrb[0].mxu0
        %v5802 = vpop.f32.mrb[0].mxu0
        %v5803 = vadd.f32 %v5706, %v5802
        %v5804 = vpop.f32.mrb[0].mxu0
        %5805 = vmatprep.mubr.bf16.mxu0 %v4947
        %5806 = vmatmul.mubr.bf16.gmra.mrb[0].mxu0 %v4921
        %v5807 = vpop.f32.mrb[0].mxu0
        %v5808 = vadd.f32 %v5711, %v5807
        %v5809 = vpop.f32.mrb[0].mxu0
        %v5810 = vpop.f32.mrb[0].mxu0
        %v5811 = vadd.f32 %v5714, %v5810
        %v5812 = vpop.f32.mrb[0].mxu0
        %5813 = vdwg.mxu0
        %5814 = vmatprep.subr.bf16.mxu0 0
        %5815 = vmatpush1.bf16.msra.mxu0 %v5508
        %5816 = vmatprep.subr.bf16.mxu0 0
        %5817 = vmatpush1.bf16.msra.mxu0 %v5509
        %5818 = vmatprep.subr.bf16.mxu0 0
        %5819 = vmatpush1.bf16.msra.mxu0 %v5510
        %5820 = vmatprep.subr.bf16.mxu0 0
        %5821 = vmatpush1.bf16.msra.mxu0 %v5511
        %5822 = vmatprep.subr.bf16.mxu0 0
        %5823 = vmatpush1.bf16.msra.mxu0 %v5512
        %5824 = vmatprep.subr.bf16.mxu0 0
        %5825 = vmatpush1.bf16.msra.mxu0 %v5513
        %5826 = vmatprep.subr.bf16.mxu0 0
        %5827 = vmatpush1.bf16.msra.mxu0 %v5514
        %5828 = vmatprep.subr.bf16.mxu0 0
        %5829 = vmatpush1.bf16.msra.mxu0 %v5515
        %5830 = vmatprep.subr.bf16.mxu0 0
        %5831 = vmatpush1.bf16.msra.mxu0 %v5516
        %5832 = vmatprep.subr.bf16.mxu0 0
        %5833 = vmatpush1.bf16.msra.mxu0 %v5517
        %5834 = vmatprep.subr.bf16.mxu0 0
        %5835 = vmatpush1.bf16.msra.mxu0 %v5518
        %5836 = vmatprep.subr.bf16.mxu0 0
        %5837 = vmatpush1.bf16.msra.mxu0 %v5519
        %5838 = vmatprep.subr.bf16.mxu0 0
        %5839 = vmatpush1.bf16.msra.mxu0 %v5520
        %5840 = vmatprep.subr.bf16.mxu0 0
        %5841 = vmatpush1.bf16.msra.mxu0 %v5521
        %5842 = vmatprep.subr.bf16.mxu0 0
        %5843 = vmatpush1.bf16.msra.mxu0 %v5522
        %5844 = vmatprep.subr.bf16.mxu0 0
        %5845 = vmatpush1.bf16.msra.mxu0 %v5523
        %5846 = vmatprep.mubr.bf16.mxu0 %v4917
        %5847 = vmatmul.mubr.bf16.gmra.mrb[0].mxu0 %v1031
        %v5848 = vpop.f32.mrb[0].mxu0
        %v5849 = vadd.f32 %v5752, %v5848
        %v5850 = vpop.f32.mrb[0].mxu0
        %v5851 = vpop.f32.mrb[0].mxu0
        %v5852 = vadd.f32 %v5755, %v5851
        %v5853 = vpop.f32.mrb[0].mxu0
        %5854 = vmatprep.mubr.bf16.mxu0 %v4966
        %5855 = vmatmul.mubr.bf16.gmra.mrb[0].mxu0 %v1032
        %v5856 = vpop.f32.mrb[0].mxu0
        %v5857 = vadd.f32 %v5760, %v5856
        %v5858 = vpop.f32.mrb[0].mxu0
        %v5859 = vpop.f32.mrb[0].mxu0
        %v5860 = vadd.f32 %v5763, %v5859
        %v5861 = vpop.f32.mrb[0].mxu0
        %5862 = vmatprep.mubr.bf16.mxu0 %v4967
        %5863 = vmatmul.mubr.bf16.gmra.mrb[0].mxu0 %v1033
        %v5864 = vpop.f32.mrb[0].mxu0
        %v5865 = vadd.f32 %v5768, %v5864
        %v5866 = vpop.f32.mrb[0].mxu0
        %v5867 = vpop.f32.mrb[0].mxu0
        %v5868 = vadd.f32 %v5771, %v5867
        %v5869 = vpop.f32.mrb[0].mxu0
        %5870 = vmatprep.mubr.bf16.mxu0 %v4968
        %5871 = vmatmul.mubr.bf16.gmra.mrb[0].mxu0 %v1034
        %v5872 = vpop.f32.mrb[0].mxu0
        %v5873 = vadd.f32 %v5776, %v5872
        %v5874 = vpop.f32.mrb[0].mxu0
        %v5875 = vpop.f32.mrb[0].mxu0
        %v5876 = vadd.f32 %v5779, %v5875
        %v5877 = vpop.f32.mrb[0].mxu0
        %5878 = vmatprep.mubr.bf16.mxu0 %v4921
        %5879 = vmatmul.mubr.bf16.gmra.mrb[0].mxu0 %v1035
        %v5880 = vpop.f32.mrb[0].mxu0
        %v5881 = vadd.f32 %v5784, %v5880
        %v5882 = vpop.f32.mrb[0].mxu0
        %v5883 = vpop.f32.mrb[0].mxu0
        %v5884 = vadd.f32 %v5787, %v5883
        %v5885 = vpop.f32.mrb[0].mxu0
        %5886 = vmatprep.mubr.bf16.mxu0 %v4969
        %5887 = vmatmul.mubr.bf16.gmra.mrb[0].mxu0 %v1036
        %v5888 = vpop.f32.mrb[0].mxu0
        %v5889 = vadd.f32 %v5792, %v5888
        %v5890 = vpop.f32.mrb[0].mxu0
        %v5891 = vpop.f32.mrb[0].mxu0
        %v5892 = vadd.f32 %v5795, %v5891
        %v5893 = vpop.f32.mrb[0].mxu0
        %5894 = vmatprep.mubr.bf16.mxu0 %v4970
        %5895 = vmatmul.mubr.bf16.gmra.mrb[0].mxu0 %v1037
        %v5896 = vpop.f32.mrb[0].mxu0
        %v5897 = vadd.f32 %v5800, %v5896
        %v5898 = vpop.f32.mrb[0].mxu0
        %v5899 = vpop.f32.mrb[0].mxu0
        %v5900 = vadd.f32 %v5803, %v5899
        %v5901 = vpop.f32.mrb[0].mxu0
        %5902 = vmatprep.mubr.bf16.mxu0 %v4971
        %5903 = vmatmul.mubr.bf16.gmra.mrb[0].mxu0 %v1038
        %v5904 = vpop.f32.mrb[0].mxu0
        %v5905 = vadd.f32 %v5808, %v5904
        %v5906 = vpop.f32.mrb[0].mxu0
        %v5907 = vpop.f32.mrb[0].mxu0
        %v5908 = vadd.f32 %v5811, %v5907
        %v5909 = vpop.f32.mrb[0].mxu0
        %5910 = vdwg.mxu0
        %5911 = vmatprep.subr.bf16.mxu0 0
        %5912 = vmatpush1.bf16.msra.mxu0 %v5524
        %5913 = vmatprep.subr.bf16.mxu0 0
        %5914 = vmatpush1.bf16.msra.mxu0 %v5525
        %5915 = vmatprep.subr.bf16.mxu0 0
        %5916 = vmatpush1.bf16.msra.mxu0 %v5526
        %5917 = vmatprep.subr.bf16.mxu0 0
        %5918 = vmatpush1.bf16.msra.mxu0 %v5527
        %5919 = vmatprep.subr.bf16.mxu0 0
        %5920 = vmatpush1.bf16.msra.mxu0 %v5528
        %5921 = vmatprep.subr.bf16.mxu0 0
        %5922 = vmatpush1.bf16.msra.mxu0 %v5529
        %5923 = vmatprep.subr.bf16.mxu0 0
        %5924 = vmatpush1.bf16.msra.mxu0 %v5530
        %5925 = vmatprep.subr.bf16.mxu0 0
        %5926 = vmatpush1.bf16.msra.mxu0 %v5531
        %5927 = vmatprep.subr.bf16.mxu0 0
        %5928 = vmatpush1.bf16.msra.mxu0 %v5532
        %5929 = vmatprep.subr.bf16.mxu0 0
        %5930 = vmatpush1.bf16.msra.mxu0 %v5533
        %5931 = vmatprep.subr.bf16.mxu0 0
        %5932 = vmatpush1.bf16.msra.mxu0 %v5534
        %5933 = vmatprep.subr.bf16.mxu0 0
        %5934 = vmatpush1.bf16.msra.mxu0 %v5535
        %5935 = vmatprep.subr.bf16.mxu0 0
        %5936 = vmatpush1.bf16.msra.mxu0 %v5536
        %5937 = vmatprep.subr.bf16.mxu0 0
        %5938 = vmatpush1.bf16.msra.mxu0 %v5537
        %5939 = vmatprep.subr.bf16.mxu0 0
        %5940 = vmatpush1.bf16.msra.mxu0 %v5538
        %5941 = vmatprep.subr.bf16.mxu0 0
        %5942 = vmatpush1.bf16.msra.mxu0 %v5539
        %5943 = vmatprep.mubr.bf16.mxu0 %v1034
        %5944 = vmatmul.mubr.bf16.gmra.mrb[0].mxu0 %v4944
        %v5945 = vpop.f32.mrb[0].mxu0
        %v5946 = vadd.f32 %v5849, %v5945
        %v5947 = vpop.f32.mrb[0].mxu0
        %v5948 = vpop.f32.mrb[0].mxu0
        %v5949 = vadd.f32 %v5852, %v5948
        %v5950 = vpop.f32.mrb[0].mxu0
        %5951 = vmatprep.mubr.bf16.mxu0 %v5008
        %5952 = vmatmul.mubr.bf16.gmra.mrb[0].mxu0 %v4990
        %v5953 = vpop.f32.mrb[0].mxu0
        %v5954 = vadd.f32 %v5857, %v5953
        %v5955 = vpop.f32.mrb[0].mxu0
        %v5956 = vpop.f32.mrb[0].mxu0
        %v5957 = vadd.f32 %v5860, %v5956
        %v5958 = vpop.f32.mrb[0].mxu0
        %5959 = vmatprep.mubr.bf16.mxu0 %v5009
        %5960 = vmatmul.mubr.bf16.gmra.mrb[0].mxu0 %v4991
        %v5961 = vpop.f32.mrb[0].mxu0
        %v5962 = vadd.f32 %v5865, %v5961
        %v5963 = vpop.f32.mrb[0].mxu0
        %v5964 = vpop.f32.mrb[0].mxu0
        %v5965 = vadd.f32 %v5868, %v5964
        %v5966 = vpop.f32.mrb[0].mxu0
        %5967 = vmatprep.mubr.bf16.mxu0 %v5010
        %5968 = vmatmul.mubr.bf16.gmra.mrb[0].mxu0 %v4992
        %v5969 = vpop.f32.mrb[0].mxu0
        %v5970 = vadd.f32 %v5873, %v5969
        %v5971 = vpop.f32.mrb[0].mxu0
        %v5972 = vpop.f32.mrb[0].mxu0
        %v5973 = vadd.f32 %v5876, %v5972
        %v5974 = vpop.f32.mrb[0].mxu0
        %5975 = vmatprep.mubr.bf16.mxu0 %v1038
        %5976 = vmatmul.mubr.bf16.gmra.mrb[0].mxu0 %v4947
        %v5977 = vpop.f32.mrb[0].mxu0
        %v5978 = vadd.f32 %v5881, %v5977
        %v5979 = vpop.f32.mrb[0].mxu0
        %v5980 = vpop.f32.mrb[0].mxu0
        %v5981 = vadd.f32 %v5884, %v5980
        %v5982 = vpop.f32.mrb[0].mxu0
        %5983 = vmatprep.mubr.bf16.mxu0 %v5011
        %5984 = vmatmul.mubr.bf16.gmra.mrb[0].mxu0 %v4993
        %v5985 = vpop.f32.mrb[0].mxu0
        %v5986 = vadd.f32 %v5889, %v5985
        %v5987 = vpop.f32.mrb[0].mxu0
        %v5988 = vpop.f32.mrb[0].mxu0
        %v5989 = vadd.f32 %v5892, %v5988
        %v5990 = vpop.f32.mrb[0].mxu0
        %5991 = vmatprep.mubr.bf16.mxu0 %v5012
        %5992 = vmatmul.mubr.bf16.gmra.mrb[0].mxu0 %v4994
        %v5993 = vpop.f32.mrb[0].mxu0
        %v5994 = vadd.f32 %v5897, %v5993
        %v5995 = vpop.f32.mrb[0].mxu0
        %v5996 = vpop.f32.mrb[0].mxu0
        %v5997 = vadd.f32 %v5900, %v5996
        %v5998 = vpop.f32.mrb[0].mxu0
        %5999 = vmatprep.mubr.bf16.mxu0 %v5013
        %6000 = vmatmul.mubr.bf16.gmra.mrb[0].mxu0 %v4995
        %v6001 = vpop.f32.mrb[0].mxu0
        %v6002 = vadd.f32 %v5905, %v6001
        %v6003 = vpop.f32.mrb[0].mxu0
        %v6004 = vpop.f32.mrb[0].mxu0
        %v6005 = vadd.f32 %v5908, %v6004
        %v6006 = vpop.f32.mrb[0].mxu0
        %6007 = vdwg.mxu0
        %6008 = vmatprep.subr.bf16.mxu0 0
        %6009 = vmatpush1.bf16.msra.mxu0 %v5540
        %6010 = vmatprep.subr.bf16.mxu0 0
        %6011 = vmatpush1.bf16.msra.mxu0 %v5541
        %6012 = vmatprep.subr.bf16.mxu0 0
        %6013 = vmatpush1.bf16.msra.mxu0 %v5542
        %6014 = vmatprep.subr.bf16.mxu0 0
        %6015 = vmatpush1.bf16.msra.mxu0 %v5543
        %6016 = vmatprep.subr.bf16.mxu0 0
        %6017 = vmatpush1.bf16.msra.mxu0 %v5544
        %6018 = vmatprep.subr.bf16.mxu0 0
        %6019 = vmatpush1.bf16.msra.mxu0 %v5545
        %6020 = vmatprep.subr.bf16.mxu0 0
        %6021 = vmatpush1.bf16.msra.mxu0 %v5546
        %6022 = vmatprep.subr.bf16.mxu0 0
        %6023 = vmatpush1.bf16.msra.mxu0 %v5547
        %6024 = vmatprep.subr.bf16.mxu0 0
        %6025 = vmatpush1.bf16.msra.mxu0 0
        %6026 = vmatprep.subr.bf16.mxu0 0
        %6027 = vmatpush1.bf16.msra.mxu0 0
        %6028 = vmatprep.subr.bf16.mxu0 0
        %6029 = vmatpush1.bf16.msra.mxu0 0
        %6030 = vmatprep.subr.bf16.mxu0 0
        %6031 = vmatpush1.bf16.msra.mxu0 0
        %6032 = vmatprep.subr.bf16.mxu0 0
        %6033 = vmatpush1.bf16.msra.mxu0 0
        %6034 = vmatprep.subr.bf16.mxu0 0
        %6035 = vmatpush1.bf16.msra.mxu0 0
        %6036 = vmatprep.subr.bf16.mxu0 0
        %6037 = vmatpush1.bf16.msra.mxu0 0
        %6038 = vmatprep.subr.bf16.mxu0 0
        %6039 = vmatpush1.bf16.msra.mxu0 0
        %6040 = vmatprep.mubr.bf16.mxu0 0
        %6041 = vmatmul.mubr.bf16.gmra.mrb[0].mxu0 %v4968
        %v6042 = vpop.f32.mrb[0].mxu0
        %v6043 = vadd.f32 %v5946, %v6042
        %v6044 = vpop.f32.mrb[0].mxu0
        %v6045 = vpop.f32.mrb[0].mxu0
        %v6046 = vadd.f32 %v5949, %v6045
        %v6047 = vpop.f32.mrb[0].mxu0
        %6048 = vmatprep.mubr.bf16.mxu0 0
        %6049 = vmatmul.mubr.bf16.gmra.mrb[0].mxu0 %v5032
        %v6050 = vpop.f32.mrb[0].mxu0
        %v6051 = vadd.f32 %v5954, %v6050
        %v6052 = vpop.f32.mrb[0].mxu0
        %v6053 = vpop.f32.mrb[0].mxu0
        %v6054 = vadd.f32 %v5957, %v6053
        %v6055 = vpop.f32.mrb[0].mxu0
        %6056 = vmatprep.mubr.bf16.mxu0 0
        %6057 = vmatmul.mubr.bf16.gmra.mrb[0].mxu0 %v5033
        %v6058 = vpop.f32.mrb[0].mxu0
        %v6059 = vadd.f32 %v5962, %v6058
        %v6060 = vpop.f32.mrb[0].mxu0
        %v6061 = vpop.f32.mrb[0].mxu0
        %v6062 = vadd.f32 %v5965, %v6061
        %v6063 = vpop.f32.mrb[0].mxu0
        %6064 = vmatprep.mubr.bf16.mxu0 0
        %6065 = vmatmul.mubr.bf16.gmra.mrb[0].mxu0 %v5034
        %v6066 = vpop.f32.mrb[0].mxu0
        %v6067 = vadd.f32 %v5970, %v6066
        %v6068 = vpop.f32.mrb[0].mxu0
        %v6069 = vpop.f32.mrb[0].mxu0
        %v6070 = vadd.f32 %v5973, %v6069
        %v6071 = vpop.f32.mrb[0].mxu0
        %6072 = vmatprep.mubr.bf16.mxu0 0
        %6073 = vmatmul.mubr.bf16.gmra.mrb[0].mxu0 %v4971
        %v6074 = vpop.f32.mrb[0].mxu0
        %v6075 = vadd.f32 %v5978, %v6074
        %v6076 = vpop.f32.mrb[0].mxu0
        %v6077 = vpop.f32.mrb[0].mxu0
        %v6078 = vadd.f32 %v5981, %v6077
        %v6079 = vpop.f32.mrb[0].mxu0
        %6080 = vmatprep.mubr.bf16.mxu0 0
        %6081 = vmatmul.mubr.bf16.gmra.mrb[0].mxu0 %v5035
        %v6082 = vpop.f32.mrb[0].mxu0
        %v6083 = vadd.f32 %v5986, %v6082
        %v6084 = vpop.f32.mrb[0].mxu0
        %v6085 = vpop.f32.mrb[0].mxu0
        %v6086 = vadd.f32 %v5989, %v6085
        %v6087 = vpop.f32.mrb[0].mxu0
        %6088 = vmatprep.mubr.bf16.mxu0 0
        %6089 = vmatmul.mubr.bf16.gmra.mrb[0].mxu0 %v5036
        %v6090 = vpop.f32.mrb[0].mxu0
        %v6091 = vadd.f32 %v5994, %v6090
        %v6092 = vpop.f32.mrb[0].mxu0
        %v6093 = vpop.f32.mrb[0].mxu0
        %v6094 = vadd.f32 %v5997, %v6093
        %v6095 = vpop.f32.mrb[0].mxu0
        %6096 = vmatprep.mubr.bf16.mxu0 0
        %6097 = vmatmul.mubr.bf16.gmra.mrb[0].mxu0 %v5037
        %v6098 = vpop.f32.mrb[0].mxu0
        %v6099 = vadd.f32 %v6002, %v6098
        %v6100 = vpop.f32.mrb[0].mxu0
        %v6101 = vpop.f32.mrb[0].mxu0
        %v6102 = vadd.f32 %v6005, %v6101
        %v6103 = vpop.f32.mrb[0].mxu0
        %6104 = vdwg.mxu0
        %s6105 = scalar_lea.vmem [#allocation16], 2
        %v6106 = vld [vmem:[%s6105] sm:$0x1]
        %s6107 = scalar_lea.vmem [#allocation17], 2
        %v6108 = vld [vmem:[%s6107] sm:$0x1]
        %v6109 = vadd.f32 %v6043, %v6046
        %v6110 = vadd.f32 %v6109, %v6051
        %v6111 = vadd.f32 %v6110, %v6054
        %v6112 = vadd.f32 %v6111, %v6059
        %v6113 = vadd.f32 %v6112, %v6062
        %v6114 = vadd.f32 %v6113, %v6067
        %v6115 = vadd.f32 %v6114, %v6070
        %v6116 = vrot.slane %v6115, 4
        %v6117 = vadd.f32 %v6115, %v6116
        %v6118 = vrot.slane %v6117, 2
        %v6119 = vadd.f32 %v6117, %v6118
        %v6120 = vrot.slane %v6119, 1
        %v6121 = vadd.f32 %v6119, %v6120
        %v6122 = vadd.f32 %v6075, %v6078
        %v6123 = vadd.f32 %v6122, %v6083
        %v6124 = vadd.f32 %v6123, %v6086
        %v6125 = vadd.f32 %v6124, %v6091
        %v6126 = vadd.f32 %v6125, %v6094
        %v6127 = vadd.f32 %v6126, %v6099
        %v6128 = vadd.f32 %v6127, %v6102
        %v6129 = vrot.slane %v6128, 4
        %v6130 = vadd.f32 %v6128, %v6129
        %v6131 = vrot.slane %v6130, 2
        %v6132 = vadd.f32 %v6130, %v6131
        %v6133 = vrot.slane %v6132, 1
        %v6134 = vadd.f32 %v6132, %v6133
        %v6135 = vmul.f32 %v6121, %v1220
        %v6136 = vmul.f32 %v6134, %v1220
        %v6137 = vmul.f32 %v6043, %v6043
        %v6138 = vmul.f32 %v6046, %v6046
        %v6139 = vmul.f32 %v6051, %v6051
        %v6140 = vmul.f32 %v6054, %v6054
        %v6141 = vmul.f32 %v6059, %v6059
        %v6142 = vmul.f32 %v6062, %v6062
        %v6143 = vmul.f32 %v6067, %v6067
        %v6144 = vmul.f32 %v6070, %v6070
        %v6145 = vmul.f32 %v6075, %v6075
        %v6146 = vmul.f32 %v6078, %v6078
        %v6147 = vmul.f32 %v6083, %v6083
        %v6148 = vmul.f32 %v6086, %v6086
        %v6149 = vmul.f32 %v6091, %v6091
        %v6150 = vmul.f32 %v6094, %v6094
        %v6151 = vmul.f32 %v6099, %v6099
        %v6152 = vmul.f32 %v6102, %v6102
        %v6153 = vadd.f32 %v6137, %v6138
        %v6154 = vadd.f32 %v6153, %v6139
        %v6155 = vadd.f32 %v6154, %v6140
        %v6156 = vadd.f32 %v6155, %v6141
        %v6157 = vadd.f32 %v6156, %v6142
        %v6158 = vadd.f32 %v6157, %v6143
        %v6159 = vadd.f32 %v6158, %v6144
        %v6160 = vrot.slane %v6159, 4
        %v6161 = vadd.f32 %v6159, %v6160
        %v6162 = vrot.slane %v6161, 2
        %v6163 = vadd.f32 %v6161, %v6162
        %v6164 = vrot.slane %v6163, 1
        %v6165 = vadd.f32 %v6163, %v6164
        %v6166 = vadd.f32 %v6145, %v6146
        %v6167 = vadd.f32 %v6166, %v6147
        %v6168 = vadd.f32 %v6167, %v6148
        %v6169 = vadd.f32 %v6168, %v6149
        %v6170 = vadd.f32 %v6169, %v6150
        %v6171 = vadd.f32 %v6170, %v6151
        %v6172 = vadd.f32 %v6171, %v6152
        %v6173 = vrot.slane %v6172, 4
        %v6174 = vadd.f32 %v6172, %v6173
        %v6175 = vrot.slane %v6174, 2
        %v6176 = vadd.f32 %v6174, %v6175
        %v6177 = vrot.slane %v6176, 1
        %v6178 = vadd.f32 %v6176, %v6177
        %v6179 = vmul.f32 %v6165, %v1220
        %v6180 = vmul.f32 %v6178, %v1220
        %v6183 = vsel %vm1269, %v6136, %v6135
        %v6187 = vsel %vm1274, %v6180, %v6179
        %v6189 = vsel %vm1277, %v6183, %v6187
        %6190 = vmatprep.subr.mxu0 0.0
        %6191 = vmatpush1.msra.mxu0 %v552
        %6192 = vmatprep.subr.mxu0 0.0
        %6193 = vmatpush1.msra.mxu0 %v553
        %6194 = vmatprep.subr.mxu0 0.0
        %6195 = vmatpush1.msra.mxu0 %v554
        %6196 = vmatprep.subr.mxu0 0.0
        %6197 = vmatpush1.msra.mxu0 %v555
        %6198 = vmatprep.subr.mxu0 0.0
        %6199 = vmatpush1.msra.mxu0 %v556
        %6200 = vmatprep.subr.mxu0 0.0
        %6201 = vmatpush1.msra.mxu0 %v557
        %6202 = vmatprep.subr.mxu0 0.0
        %6203 = vmatpush1.msra.mxu0 %v558
        %6204 = vmatprep.subr.mxu0 0.0
        %6205 = vmatpush1.msra.mxu0 %v559
        %6206 = vmatprep.subr.mxu0 0.0
        %6207 = vmatpush1.msra.mxu0 %v560
        %6208 = vmatprep.subr.mxu0 0.0
        %6209 = vmatpush1.msra.mxu0 %v561
        %6210 = vmatprep.subr.mxu0 0.0
        %6211 = vmatpush1.msra.mxu0 %v562
        %6212 = vmatprep.subr.mxu0 0.0
        %6213 = vmatpush1.msra.mxu0 %v563
        %6214 = vmatprep.subr.mxu0 0.0
        %6215 = vmatpush1.msra.mxu0 %v564
        %6216 = vmatprep.subr.mxu0 0.0
        %6217 = vmatpush1.msra.mxu0 %v565
        %6218 = vmatprep.subr.mxu0 0.0
        %6219 = vmatpush1.msra.mxu0 %v566
        %6220 = vmatprep.subr.mxu0 0.0
        %6221 = vmatpush1.msra.mxu0 %v567
        %6222 = vmatprep.subr.mxu0 0.0
        %6223 = vmatpush1.msra.mxu0 0.0
        %6224 = vmatprep.subr.mxu0 0.0
        %6225 = vmatpush1.msra.mxu0 0.0
        %6226 = vmatprep.subr.mxu0 0.0
        %6227 = vmatpush1.msra.mxu0 0.0
        %6228 = vmatprep.subr.mxu0 0.0
        %6229 = vmatpush1.msra.mxu0 0.0
        %6230 = vmatprep.subr.mxu0 0.0
        %6231 = vmatpush1.msra.mxu0 0.0
        %6232 = vmatprep.subr.mxu0 0.0
        %6233 = vmatpush1.msra.mxu0 0.0
        %6234 = vmatprep.subr.mxu0 0.0
        %6235 = vmatpush1.msra.mxu0 0.0
        %6236 = vmatprep.subr.mxu0 0.0
        %6237 = vmatpush1.msra.mxu0 0.0
        %6238 = vmatprep.subr.mxu0 0.0
        %6239 = vmatpush1.msra.mxu0 0.0
        %6240 = vmatprep.subr.mxu0 0.0
        %6241 = vmatpush1.msra.mxu0 0.0
        %6242 = vmatprep.subr.mxu0 0.0
        %6243 = vmatpush1.msra.mxu0 0.0
        %6244 = vmatprep.subr.mxu0 0.0
        %6245 = vmatpush1.msra.mxu0 0.0
        %6246 = vmatprep.subr.mxu0 0.0
        %6247 = vmatpush1.msra.mxu0 0.0
        %6248 = vmatprep.subr.mxu0 0.0
        %6249 = vmatpush1.msra.mxu0 0.0
        %6250 = vmatprep.subr.mxu0 0.0
        %6251 = vmatpush1.msra.mxu0 0.0
        %6252 = vmatprep.subr.mxu0 0.0
        %6253 = vmatpush1.msra.mxu0 0.0
        %6254 = vmatprep.mubr.f32.mxu0 0.0
        %6255 = vmatmul.mubr.f32.gmra.mrb[0].mxu0 %v6189
        %v6256 = vpop.f32.mrb[0].mxu0
        %v6257 = vadd.f32 0.0, %v6256
        %v6258 = vpop.f32.mrb[0].mxu0
        %6259 = vdwg.mxu0
        %v6260 = vmul.f32 %v6257, %v6257
        %v6262 = vrot.slane %v6260, 6
        %v6264 = vsub.f32 %v6257, %v6262
        %v6265 = vadd.f32 %v6264, 1e-05
        %v6266 = vrsqrt.pop %v6265
        %v6268 = vlaneseq
        %v6269 = vshrl.u32 %v6268, 7
        %v6270 = vsub.s32 0, %v6269
        %v6271 = vrot.slane %v6106, %v6270
        %v6273 = vmul.f32 %v6266, %v6271
        %v6276 = vunpack.c.l.s4 1966171168
        %v6277 = vunpack.c.0.s8 %v6276
        %v6278 = vlaneseq
        %v6279 = vshrl.u32 %v6278, 7
        %v6280 = vsub.s32 %v6277, %v6279
        %v6281 = vrot.slane %v6257, %v6280
        %v6282 = vcombine.high %v6281, %v6281
        %v6284 = vunpack.c.l.s4 1966171168
        %v6285 = vunpack.c.0.s8 %v6284
        %v6286 = vlaneseq
        %v6287 = vshrl.u32 %v6286, 7
        %v6288 = vsub.s32 %v6285, %v6287
        %v6289 = vrot.slane %v6281, %v6288
        %v6291 = vunpack.c.l.s4 1966171168
        %v6292 = vunpack.c.0.s8 %v6291
        %v6293 = vlaneseq
        %v6294 = vshrl.u32 %v6293, 7
        %v6295 = vsub.s32 %v6292, %v6294
        %v6296 = vrot.slane %v6282, %v6295
        %v6297 = vlaneseq
        %v6298 = vshrl.u32 %v6297, 7
        %v6299 = vsub.s32 0, %v6298
        %v6300 = vrot.slane %v6289, %v6299
        %v6301 = vlaneseq
        %v6302 = vshrl.u32 %v6301, 7
        %v6303 = vsub.s32 0, %v6302
        %v6304 = vrot.slane %v6296, %v6303
        %v6307 = vsub.f32 %v6043, %v6300
        %v6308 = vsub.f32 %v6046, %v6300
        %v6309 = vsub.f32 %v6051, %v6300
        %v6310 = vsub.f32 %v6054, %v6300
        %v6311 = vsub.f32 %v6059, %v6300
        %v6312 = vsub.f32 %v6062, %v6300
        %v6313 = vsub.f32 %v6067, %v6300
        %v6314 = vsub.f32 %v6070, %v6300
        %v6315 = vsub.f32 %v6075, %v6304
        %v6316 = vsub.f32 %v6078, %v6304
        %v6317 = vsub.f32 %v6083, %v6304
        %v6318 = vsub.f32 %v6086, %v6304
        %v6319 = vsub.f32 %v6091, %v6304
        %v6320 = vsub.f32 %v6094, %v6304
        %v6321 = vsub.f32 %v6099, %v6304
        %v6322 = vsub.f32 %v6102, %v6304
        %v6325 = vunpack.c.l.s4 1966171168
        %v6326 = vunpack.c.0.s8 %v6325
        %v6327 = vlaneseq
        %v6328 = vshrl.u32 %v6327, 7
        %v6329 = vsub.s32 %v6326, %v6328
        %v6330 = vrot.slane %v6273, %v6329
        %v6331 = vcombine.high %v6330, %v6330
        %v6333 = vunpack.c.l.s4 1966171168
        %v6334 = vunpack.c.0.s8 %v6333
        %v6335 = vlaneseq
        %v6336 = vshrl.u32 %v6335, 7
        %v6337 = vsub.s32 %v6334, %v6336
        %v6338 = vrot.slane %v6330, %v6337
        %v6340 = vunpack.c.l.s4 1966171168
        %v6341 = vunpack.c.0.s8 %v6340
        %v6342 = vlaneseq
        %v6343 = vshrl.u32 %v6342, 7
        %v6344 = vsub.s32 %v6341, %v6343
        %v6345 = vrot.slane %v6331, %v6344
        %v6346 = vcombine.high %v6338, %v6338
        %v6347 = vcombine.high %v6345, %v6345
        %v6348 = vlaneseq
        %v6349 = vshrl.u32 %v6348, 7
        %v6350 = vsub.s32 0, %v6349
        %v6351 = vrot.slane %v6346, %v6350
        %v6352 = vlaneseq
        %v6353 = vshrl.u32 %v6352, 7
        %v6354 = vsub.s32 0, %v6353
        %v6355 = vrot.slane %v6347, %v6354
        %v6358 = vmul.f32 %v6307, %v6351
        %v6359 = vmul.f32 %v6308, %v6351
        %v6360 = vmul.f32 %v6309, %v6351
        %v6361 = vmul.f32 %v6310, %v6351
        %v6362 = vmul.f32 %v6311, %v6351
        %v6363 = vmul.f32 %v6312, %v6351
        %v6364 = vmul.f32 %v6313, %v6351
        %v6365 = vmul.f32 %v6314, %v6351
        %v6366 = vmul.f32 %v6315, %v6355
        %v6367 = vmul.f32 %v6316, %v6355
        %v6368 = vmul.f32 %v6317, %v6355
        %v6369 = vmul.f32 %v6318, %v6355
        %v6370 = vmul.f32 %v6319, %v6355
        %v6371 = vmul.f32 %v6320, %v6355
        %v6372 = vmul.f32 %v6321, %v6355
        %v6373 = vmul.f32 %v6322, %v6355
        %v6375 = vlaneseq
        %v6376 = vshrl.u32 %v6375, 7
        %v6377 = vsub.s32 0, %v6376
        %v6378 = vrot.slane %v6108, %v6377
        %v6380 = vadd.f32 %v6358, %v6378
        %v6381 = vadd.f32 %v6359, %v6378
        %v6382 = vadd.f32 %v6360, %v6378
        %v6383 = vadd.f32 %v6361, %v6378
        %v6384 = vadd.f32 %v6362, %v6378
        %v6385 = vadd.f32 %v6363, %v6378
        %v6386 = vadd.f32 %v6364, %v6378
        %v6387 = vadd.f32 %v6365, %v6378
        %v6388 = vadd.f32 %v6366, %v6378
        %v6389 = vadd.f32 %v6367, %v6378
        %v6390 = vadd.f32 %v6368, %v6378
        %v6391 = vadd.f32 %v6369, %v6378
        %v6392 = vadd.f32 %v6370, %v6378
        %v6393 = vadd.f32 %v6371, %v6378
        %v6394 = vadd.f32 %v6372, %v6378
        %v6395 = vadd.f32 %v6373, %v6378
        %v6396 = vmax.f32 %v6380, 0.0
        %v6397 = vmax.f32 %v6381, 0.0
        %v6398 = vmax.f32 %v6382, 0.0
        %v6399 = vmax.f32 %v6383, 0.0
        %v6400 = vmax.f32 %v6384, 0.0
        %v6401 = vmax.f32 %v6385, 0.0
        %v6402 = vmax.f32 %v6386, 0.0
        %v6403 = vmax.f32 %v6387, 0.0
        %v6404 = vmax.f32 %v6388, 0.0
        %v6405 = vmax.f32 %v6389, 0.0
        %v6406 = vmax.f32 %v6390, 0.0
        %v6407 = vmax.f32 %v6391, 0.0
        %v6408 = vmax.f32 %v6392, 0.0
        %v6409 = vmax.f32 %v6393, 0.0
        %v6410 = vmax.f32 %v6394, 0.0
        %v6411 = vmax.f32 %v6395, 0.0
        %v6412 = vpack.c.bf16 %v6397, %v6396
        %v6413 = vpack.c.bf16 %v6399, %v6398
        %v6414 = vpack.c.bf16 %v6401, %v6400
        %v6415 = vpack.c.bf16 %v6403, %v6402
        %v6416 = vpack.c.bf16 %v6405, %v6404
        %v6417 = vpack.c.bf16 %v6407, %v6406
        %v6418 = vpack.c.bf16 %v6409, %v6408
        %v6419 = vpack.c.bf16 %v6411, %v6410
        %s6420 = scalar_lea.vmem [#allocation14], 128
        %v6421 = vld [vmem:[%s6420] sm:$0xf]
        %v6422 = vld [vmem:[%s6420 + $0x4] sm:$0xf]
        %v6423 = vld [vmem:[%s6420 + $0x8] sm:$0xf]
        %v6424 = vld [vmem:[%s6420 + $0xc] sm:$0xf]
        %v6425 = vld [vmem:[%s6420 + $0x10] sm:$0xf]
        %v6426 = vld [vmem:[%s6420 + $0x14] sm:$0xf]
        %v6427 = vld [vmem:[%s6420 + $0x18] sm:$0xf]
        %v6428 = vld [vmem:[%s6420 + $0x1c] sm:$0xf]
        %v6429 = vld [vmem:[%s6420 + $0x20] sm:$0xf]
        %v6430 = vld [vmem:[%s6420 + $0x24] sm:$0xf]
        %v6431 = vld [vmem:[%s6420 + $0x28] sm:$0xf]
        %v6432 = vld [vmem:[%s6420 + $0x2c] sm:$0xf]
        %v6433 = vld [vmem:[%s6420 + $0x30] sm:$0xf]
        %v6434 = vld [vmem:[%s6420 + $0x34] sm:$0xf]
        %v6435 = vld [vmem:[%s6420 + $0x38] sm:$0xf]
        %v6436 = vld [vmem:[%s6420 + $0x3c] sm:$0xf]
        %v6453 = vunpack.c.l.b16 %v6421
        %v6454 = vunpack.c.l.b16 %v6422
        %v6455 = vunpack.c.l.b16 %v6423
        %v6456 = vunpack.c.l.b16 %v6424
        %v6457 = vunpack.c.l.b16 %v6425
        %v6458 = vunpack.c.l.b16 %v6426
        %v6459 = vunpack.c.l.b16 %v6427
        %v6460 = vunpack.c.l.b16 %v6428
        %v6461 = vunpack.c.l.b16 %v6429
        %v6462 = vunpack.c.l.b16 %v6430
        %v6463 = vunpack.c.l.b16 %v6431
        %v6464 = vunpack.c.l.b16 %v6432
        %v6465 = vunpack.c.l.b16 %v6433
        %v6466 = vunpack.c.l.b16 %v6434
        %v6467 = vunpack.c.l.b16 %v6435
        %v6468 = vunpack.c.l.b16 %v6436
        %v6469 = vpack.c.b16 %v6454, %v6453
        %v6470 = vpack.c.b16 %v6456, %v6455
        %v6471 = vpack.c.b16 %v6458, %v6457
        %v6472 = vpack.c.b16 %v6460, %v6459
        %v6473 = vpack.c.b16 %v6462, %v6461
        %v6474 = vpack.c.b16 %v6464, %v6463
        %v6475 = vpack.c.b16 %v6466, %v6465
        %v6476 = vpack.c.b16 %v6468, %v6467
        %6485 = vmatprep.subr.bf16.mxu0 0
        %6486 = vmatpush1.bf16.msra.mxu0 %v6469
        %6487 = vmatprep.subr.bf16.mxu0 0
        %6488 = vmatpush1.bf16.msra.mxu0 %v6470
        %6489 = vmatprep.subr.bf16.mxu0 0
        %6490 = vmatpush1.bf16.msra.mxu0 %v6471
        %6491 = vmatprep.subr.bf16.mxu0 0
        %6492 = vmatpush1.bf16.msra.mxu0 %v6472
        %6493 = vmatprep.subr.bf16.mxu0 0
        %6494 = vmatpush1.bf16.msra.mxu0 %v6473
        %6495 = vmatprep.subr.bf16.mxu0 0
        %6496 = vmatpush1.bf16.msra.mxu0 %v6474
        %6497 = vmatprep.subr.bf16.mxu0 0
        %6498 = vmatpush1.bf16.msra.mxu0 %v6475
        %6499 = vmatprep.subr.bf16.mxu0 0
        %6500 = vmatpush1.bf16.msra.mxu0 %v6476
        %6501 = vmatprep.subr.bf16.mxu0 0
        %6502 = vmatpush1.bf16.msra.mxu0 0
        %6503 = vmatprep.subr.bf16.mxu0 0
        %6504 = vmatpush1.bf16.msra.mxu0 0
        %6505 = vmatprep.subr.bf16.mxu0 0
        %6506 = vmatpush1.bf16.msra.mxu0 0
        %6507 = vmatprep.subr.bf16.mxu0 0
        %6508 = vmatpush1.bf16.msra.mxu0 0
        %6509 = vmatprep.subr.bf16.mxu0 0
        %6510 = vmatpush1.bf16.msra.mxu0 0
        %6511 = vmatprep.subr.bf16.mxu0 0
        %6512 = vmatpush1.bf16.msra.mxu0 0
        %6513 = vmatprep.subr.bf16.mxu0 0
        %6514 = vmatpush1.bf16.msra.mxu0 0
        %6515 = vmatprep.subr.bf16.mxu0 0
        %6516 = vmatpush1.bf16.msra.mxu0 0
        %6517 = vmatprep.mubr.bf16.mxu0 0
        %6518 = vmatmul.mubr.bf16.gmra.mrb[0].mxu0 %v6412
        %v6519 = vpop.f32.mrb[0].mxu0
        %v6520 = vadd.f32 0.0, %v6519
        %v6521 = vpop.f32.mrb[0].mxu0
        %v6522 = vpop.f32.mrb[0].mxu0
        %v6523 = vadd.f32 0.0, %v6522
        %v6524 = vpop.f32.mrb[0].mxu0
        %6525 = vmatprep.mubr.bf16.mxu0 0
        %6526 = vmatmul.mubr.bf16.gmra.mrb[0].mxu0 %v6413
        %v6527 = vpop.f32.mrb[0].mxu0
        %v6528 = vadd.f32 0.0, %v6527
        %v6529 = vpop.f32.mrb[0].mxu0
        %v6530 = vpop.f32.mrb[0].mxu0
        %v6531 = vadd.f32 0.0, %v6530
        %v6532 = vpop.f32.mrb[0].mxu0
        %6533 = vmatprep.mubr.bf16.mxu0 0
        %6534 = vmatmul.mubr.bf16.gmra.mrb[0].mxu0 %v6414
        %v6535 = vpop.f32.mrb[0].mxu0
        %v6536 = vadd.f32 0.0, %v6535
        %v6537 = vpop.f32.mrb[0].mxu0
        %v6538 = vpop.f32.mrb[0].mxu0
        %v6539 = vadd.f32 0.0, %v6538
        %v6540 = vpop.f32.mrb[0].mxu0
        %6541 = vmatprep.mubr.bf16.mxu0 0
        %6542 = vmatmul.mubr.bf16.gmra.mrb[0].mxu0 %v6415
        %v6543 = vpop.f32.mrb[0].mxu0
        %v6544 = vadd.f32 0.0, %v6543
        %v6545 = vpop.f32.mrb[0].mxu0
        %v6546 = vpop.f32.mrb[0].mxu0
        %v6547 = vadd.f32 0.0, %v6546
        %v6548 = vpop.f32.mrb[0].mxu0
        %6549 = vmatprep.mubr.bf16.mxu0 0
        %6550 = vmatmul.mubr.bf16.gmra.mrb[0].mxu0 %v6416
        %v6551 = vpop.f32.mrb[0].mxu0
        %v6552 = vadd.f32 0.0, %v6551
        %v6553 = vpop.f32.mrb[0].mxu0
        %v6554 = vpop.f32.mrb[0].mxu0
        %v6555 = vadd.f32 0.0, %v6554
        %v6556 = vpop.f32.mrb[0].mxu0
        %6557 = vmatprep.mubr.bf16.mxu0 0
        %6558 = vmatmul.mubr.bf16.gmra.mrb[0].mxu0 %v6417
        %v6559 = vpop.f32.mrb[0].mxu0
        %v6560 = vadd.f32 0.0, %v6559
        %v6561 = vpop.f32.mrb[0].mxu0
        %v6562 = vpop.f32.mrb[0].mxu0
        %v6563 = vadd.f32 0.0, %v6562
        %v6564 = vpop.f32.mrb[0].mxu0
        %6565 = vmatprep.mubr.bf16.mxu0 0
        %6566 = vmatmul.mubr.bf16.gmra.mrb[0].mxu0 %v6418
        %v6567 = vpop.f32.mrb[0].mxu0
        %v6568 = vadd.f32 0.0, %v6567
        %v6569 = vpop.f32.mrb[0].mxu0
        %v6570 = vpop.f32.mrb[0].mxu0
        %v6571 = vadd.f32 0.0, %v6570
        %v6572 = vpop.f32.mrb[0].mxu0
        %6573 = vmatprep.mubr.bf16.mxu0 0
        %6574 = vmatmul.mubr.bf16.gmra.mrb[0].mxu0 %v6419
        %v6575 = vpop.f32.mrb[0].mxu0
        %v6576 = vadd.f32 0.0, %v6575
        %v6577 = vpop.f32.mrb[0].mxu0
        %v6578 = vpop.f32.mrb[0].mxu0
        %v6579 = vadd.f32 0.0, %v6578
        %v6580 = vpop.f32.mrb[0].mxu0
        %6581 = vdwg.mxu0
        %v6582 = vadd.f32 %v3812, %v6520
        %v6583 = vadd.f32 %v3815, %v6523
        %v6584 = vadd.f32 %v3820, %v6528
        %v6585 = vadd.f32 %v3823, %v6531
        %v6586 = vadd.f32 %v3828, %v6536
        %v6587 = vadd.f32 %v3831, %v6539
        %v6588 = vadd.f32 %v3836, %v6544
        %v6589 = vadd.f32 %v3839, %v6547
        %v6590 = vadd.f32 %v3844, %v6552
        %v6591 = vadd.f32 %v3847, %v6555
        %v6592 = vadd.f32 %v3852, %v6560
        %v6593 = vadd.f32 %v3855, %v6563
        %v6594 = vadd.f32 %v3860, %v6568
        %v6595 = vadd.f32 %v3863, %v6571
        %v6596 = vadd.f32 %v3868, %v6576
        %v6597 = vadd.f32 %v3871, %v6579
        %v6599 = vshrl.u32 %v569, 16
        %v6601 = vrot.slane %v6599, 4
        %v6602 = vshll.u32 %v569, 16
        %v6604 = vrot.slane %v6602, 5
        %v6605 = vor.u32 %v6601, %v6604
        %v6606 = vrot.slane %v6605, 4
        %v6608 = vshll.u32 %v570, 16
        %v6610 = vrot.slane %v6608, 5
        %v6611 = vsel %vm774, %v6606, %v6610
        %v6613 = vshrl.u32 %v573, 16
        %v6615 = vrot.slane %v6613, 4
        %v6616 = vshll.u32 %v573, 16
        %v6618 = vrot.slane %v6616, 5
        %v6619 = vor.u32 %v6615, %v6618
        %v6620 = vrot.slane %v6619, 4
        %v6622 = vshll.u32 %v574, 16
        %v6624 = vrot.slane %v6622, 5
        %v6625 = vsel %vm774, %v6620, %v6624
        %v6627 = vshrl.u32 %v577, 16
        %v6629 = vrot.slane %v6627, 4
        %v6630 = vshll.u32 %v577, 16
        %v6632 = vrot.slane %v6630, 5
        %v6633 = vor.u32 %v6629, %v6632
        %v6634 = vrot.slane %v6633, 4
        %v6636 = vshll.u32 %v578, 16
        %v6638 = vrot.slane %v6636, 5
        %v6639 = vsel %vm774, %v6634, %v6638
        %v6641 = vshrl.u32 %v671, 16
        %v6643 = vrot.slane %v6641, 4
        %v6644 = vshll.u32 %v671, 16
        %v6646 = vrot.slane %v6644, 5
        %v6647 = vor.u32 %v6643, %v6646
        %v6648 = vrot.slane %v6647, 4
        %v6650 = vshll.u32 %v672, 16
        %v6652 = vrot.slane %v6650, 5
        %v6653 = vsel %vm774, %v6648, %v6652
        %v6655 = vshrl.u32 %v675, 16
        %v6657 = vrot.slane %v6655, 4
        %v6658 = vshll.u32 %v675, 16
        %v6660 = vrot.slane %v6658, 5
        %v6661 = vor.u32 %v6657, %v6660
        %v6662 = vrot.slane %v6661, 4
        %v6664 = vshll.u32 %v676, 16
        %v6666 = vrot.slane %v6664, 5
        %v6667 = vsel %vm774, %v6662, %v6666
        %v6669 = vshrl.u32 %v679, 16
        %v6671 = vrot.slane %v6669, 4
        %v6672 = vshll.u32 %v679, 16
        %v6674 = vrot.slane %v6672, 5
        %v6675 = vor.u32 %v6671, %v6674
        %v6676 = vrot.slane %v6675, 4
        %v6678 = vshll.u32 %v680, 16
        %v6680 = vrot.slane %v6678, 5
        %v6681 = vsel %vm774, %v6676, %v6680
        %vm6710 = vcmask 1042432
        %vm6711 = vcmask 1046532
        %vm6712 = vmor %vm6710, %vm6711
        %v6713 = vrot.slane %v570, 5
        %v6714 = vrot.slane %v6713, 4
        %v6715 = vrot.slane %v571, 5
        %v6716 = vsel %vm6712, %v6714, %v6715
        %v6717 = vrot.slane %v574, 5
        %v6718 = vrot.slane %v6717, 4
        %v6719 = vrot.slane %v575, 5
        %v6720 = vsel %vm6712, %v6718, %v6719
        %v6721 = vrot.slane %v578, 5
        %v6722 = vrot.slane %v6721, 4
        %v6723 = vrot.slane %v579, 5
        %v6724 = vsel %vm6712, %v6722, %v6723
        %v6725 = vrot.slane %v582, 5
        %v6726 = vrot.slane %v6725, 4
        %v6727 = vrot.slane %v583, 5
        %v6728 = vsel %vm6712, %v6726, %v6727
        %v6729 = vrot.slane %v586, 5
        %v6730 = vrot.slane %v6729, 4
        %v6731 = vrot.slane %v587, 5
        %v6732 = vsel %vm6712, %v6730, %v6731
        %v6733 = vrot.slane %v590, 5
        %v6734 = vrot.slane %v6733, 4
        %v6735 = vrot.slane %v591, 5
        %v6736 = vsel %vm6712, %v6734, %v6735
        %v6737 = vrot.slane %v594, 5
        %v6738 = vrot.slane %v6737, 4
        %v6739 = vrot.slane %v595, 5
        %v6740 = vsel %vm6712, %v6738, %v6739
        %v6741 = vrot.slane %v598, 5
        %v6742 = vrot.slane %v6741, 4
        %v6743 = vrot.slane %v599, 5
        %v6744 = vsel %vm6712, %v6742, %v6743
        %v6745 = vrot.slane %v672, 5
        %v6746 = vrot.slane %v6745, 4
        %v6747 = vrot.slane %v673, 5
        %v6748 = vsel %vm6712, %v6746, %v6747
        %v6749 = vrot.slane %v676, 5
        %v6750 = vrot.slane %v6749, 4
        %v6751 = vrot.slane %v677, 5
        %v6752 = vsel %vm6712, %v6750, %v6751
        %v6753 = vrot.slane %v680, 5
        %v6754 = vrot.slane %v6753, 4
        %v6755 = vrot.slane %v681, 5
        %v6756 = vsel %vm6712, %v6754, %v6755
        %v6757 = vrot.slane %v684, 5
        %v6758 = vrot.slane %v6757, 4
        %v6759 = vrot.slane %v685, 5
        %v6760 = vsel %vm6712, %v6758, %v6759
        %v6761 = vrot.slane %v688, 5
        %v6762 = vrot.slane %v6761, 4
        %v6763 = vrot.slane %v689, 5
        %v6764 = vsel %vm6712, %v6762, %v6763
        %v6765 = vrot.slane %v692, 5
        %v6766 = vrot.slane %v6765, 4
        %v6767 = vrot.slane %v693, 5
        %v6768 = vsel %vm6712, %v6766, %v6767
        %v6769 = vrot.slane %v696, 5
        %v6770 = vrot.slane %v6769, 4
        %v6771 = vrot.slane %v697, 5
        %v6772 = vsel %vm6712, %v6770, %v6771
        %v6773 = vrot.slane %v700, 5
        %v6774 = vrot.slane %v6773, 4
        %v6775 = vrot.slane %v701, 5
        %v6776 = vsel %vm6712, %v6774, %v6775
        %v6793 = vrot.slane %v605, 5
        %v6794 = vrot.slane %v6793, 4
        %v6795 = vrot.slane %v606, 5
        %v6796 = vsel %vm6712, %v6794, %v6795
        %v6797 = vrot.slane %v609, 5
        %v6798 = vrot.slane %v6797, 4
        %v6799 = vrot.slane %v610, 5
        %v6800 = vsel %vm6712, %v6798, %v6799
        %v6801 = vrot.slane %v613, 5
        %v6802 = vrot.slane %v6801, 4
        %v6803 = vrot.slane %v614, 5
        %v6804 = vsel %vm6712, %v6802, %v6803
        %v6805 = vrot.slane %v617, 5
        %v6806 = vrot.slane %v6805, 4
        %v6807 = vrot.slane %v618, 5
        %v6808 = vsel %vm6712, %v6806, %v6807
        %v6809 = vrot.slane %v621, 5
        %v6810 = vrot.slane %v6809, 4
        %v6811 = vrot.slane %v622, 5
        %v6812 = vsel %vm6712, %v6810, %v6811
        %v6813 = vrot.slane %v625, 5
        %v6814 = vrot.slane %v6813, 4
        %v6815 = vrot.slane %v626, 5
        %v6816 = vsel %vm6712, %v6814, %v6815
        %v6817 = vrot.slane %v629, 5
        %v6818 = vrot.slane %v6817, 4
        %v6819 = vrot.slane %v630, 5
        %v6820 = vsel %vm6712, %v6818, %v6819
        %v6821 = vrot.slane %v633, 5
        %v6822 = vrot.slane %v6821, 4
        %v6823 = vrot.slane %v634, 5
        %v6824 = vsel %vm6712, %v6822, %v6823
        %v6825 = vrot.slane %v707, 5
        %v6826 = vrot.slane %v6825, 4
        %v6827 = vrot.slane %v708, 5
        %v6828 = vsel %vm6712, %v6826, %v6827
        %v6829 = vrot.slane %v711, 5
        %v6830 = vrot.slane %v6829, 4
        %v6831 = vrot.slane %v712, 5
        %v6832 = vsel %vm6712, %v6830, %v6831
        %v6833 = vrot.slane %v715, 5
        %v6834 = vrot.slane %v6833, 4
        %v6835 = vrot.slane %v716, 5
        %v6836 = vsel %vm6712, %v6834, %v6835
        %v6837 = vrot.slane %v719, 5
        %v6838 = vrot.slane %v6837, 4
        %v6839 = vrot.slane %v720, 5
        %v6840 = vsel %vm6712, %v6838, %v6839
        %v6841 = vrot.slane %v723, 5
        %v6842 = vrot.slane %v6841, 4
        %v6843 = vrot.slane %v724, 5
        %v6844 = vsel %vm6712, %v6842, %v6843
        %v6845 = vrot.slane %v727, 5
        %v6846 = vrot.slane %v6845, 4
        %v6847 = vrot.slane %v728, 5
        %v6848 = vsel %vm6712, %v6846, %v6847
        %v6849 = vrot.slane %v731, 5
        %v6850 = vrot.slane %v6849, 4
        %v6851 = vrot.slane %v732, 5
        %v6852 = vsel %vm6712, %v6850, %v6851
        %v6853 = vrot.slane %v735, 5
        %v6854 = vrot.slane %v6853, 4
        %v6855 = vrot.slane %v736, 5
        %v6856 = vsel %vm6712, %v6854, %v6855
        %v6858 = vshrl.u32 %v659, 16
        %v6860 = vrot.slane %v6858, 4
        %v6861 = vshll.u32 %v659, 16
        %v6863 = vrot.slane %v6861, 5
        %v6864 = vor.u32 %v6860, %v6863
        %v6865 = vrot.slane %v6864, 4
        %v6867 = vshll.u32 %v660, 16
        %v6869 = vrot.slane %v6867, 5
        %v6870 = vsel %vm774, %v6865, %v6869
        %v6872 = vshrl.u32 %v663, 16
        %v6874 = vrot.slane %v6872, 4
        %v6875 = vshll.u32 %v663, 16
        %v6877 = vrot.slane %v6875, 5
        %v6878 = vor.u32 %v6874, %v6877
        %v6879 = vrot.slane %v6878, 4
        %v6881 = vshll.u32 %v664, 16
        %v6883 = vrot.slane %v6881, 5
        %v6884 = vsel %vm774, %v6879, %v6883
        %v6886 = vshrl.u32 %v667, 16
        %v6888 = vrot.slane %v6886, 4
        %v6889 = vshll.u32 %v667, 16
        %v6891 = vrot.slane %v6889, 5
        %v6892 = vor.u32 %v6888, %v6891
        %v6893 = vrot.slane %v6892, 4
        %v6895 = vshll.u32 %v668, 16
        %v6897 = vrot.slane %v6895, 5
        %v6898 = vsel %vm774, %v6893, %v6897
        %v6900 = vshrl.u32 %v761, 16
        %v6902 = vrot.slane %v6900, 4
        %v6903 = vshll.u32 %v761, 16
        %v6905 = vrot.slane %v6903, 5
        %v6906 = vor.u32 %v6902, %v6905
        %v6907 = vrot.slane %v6906, 4
        %v6909 = vshll.u32 %v762, 16
        %v6911 = vrot.slane %v6909, 5
        %v6912 = vsel %vm774, %v6907, %v6911
        %v6914 = vshrl.u32 %v765, 16
        %v6916 = vrot.slane %v6914, 4
        %v6917 = vshll.u32 %v765, 16
        %v6919 = vrot.slane %v6917, 5
        %v6920 = vor.u32 %v6916, %v6919
        %v6921 = vrot.slane %v6920, 4
        %v6923 = vshll.u32 %v766, 16
        %v6925 = vrot.slane %v6923, 5
        %v6926 = vsel %vm774, %v6921, %v6925
        %v6928 = vshrl.u32 %v769, 16
        %v6930 = vrot.slane %v6928, 4
        %v6931 = vshll.u32 %v769, 16
        %v6933 = vrot.slane %v6931, 5
        %v6934 = vor.u32 %v6930, %v6933
        %v6935 = vrot.slane %v6934, 4
        %v6937 = vshll.u32 %v770, 16
        %v6939 = vrot.slane %v6937, 5
        %v6940 = vsel %vm774, %v6935, %v6939
        %v6969 = vrot.slane %v640, 5
        %v6970 = vrot.slane %v6969, 4
        %v6971 = vrot.slane %v641, 5
        %v6972 = vsel %vm6712, %v6970, %v6971
        %v6973 = vrot.slane %v644, 5
        %v6974 = vrot.slane %v6973, 4
        %v6975 = vrot.slane %v645, 5
        %v6976 = vsel %vm6712, %v6974, %v6975
        %v6977 = vrot.slane %v648, 5
        %v6978 = vrot.slane %v6977, 4
        %v6979 = vrot.slane %v649, 5
        %v6980 = vsel %vm6712, %v6978, %v6979
        %v6981 = vrot.slane %v652, 5
        %v6982 = vrot.slane %v6981, 4
        %v6983 = vrot.slane %v653, 5
        %v6984 = vsel %vm6712, %v6982, %v6983
        %v6985 = vrot.slane %v656, 5
        %v6986 = vrot.slane %v6985, 4
        %v6987 = vrot.slane %v657, 5
        %v6988 = vsel %vm6712, %v6986, %v6987
        %v6989 = vrot.slane %v660, 5
        %v6990 = vrot.slane %v6989, 4
        %v6991 = vrot.slane %v661, 5
        %v6992 = vsel %vm6712, %v6990, %v6991
        %v6993 = vrot.slane %v664, 5
        %v6994 = vrot.slane %v6993, 4
        %v6995 = vrot.slane %v665, 5
        %v6996 = vsel %vm6712, %v6994, %v6995
        %v6997 = vrot.slane %v668, 5
        %v6998 = vrot.slane %v6997, 4
        %v6999 = vrot.slane %v669, 5
        %v7000 = vsel %vm6712, %v6998, %v6999
        %v7001 = vrot.slane %v742, 5
        %v7002 = vrot.slane %v7001, 4
        %v7003 = vrot.slane %v743, 5
        %v7004 = vsel %vm6712, %v7002, %v7003
        %v7005 = vrot.slane %v746, 5
        %v7006 = vrot.slane %v7005, 4
        %v7007 = vrot.slane %v747, 5
        %v7008 = vsel %vm6712, %v7006, %v7007
        %v7009 = vrot.slane %v750, 5
        %v7010 = vrot.slane %v7009, 4
        %v7011 = vrot.slane %v751, 5
        %v7012 = vsel %vm6712, %v7010, %v7011
        %v7013 = vrot.slane %v754, 5
        %v7014 = vrot.slane %v7013, 4
        %v7015 = vrot.slane %v755, 5
        %v7016 = vsel %vm6712, %v7014, %v7015
        %v7017 = vrot.slane %v758, 5
        %v7018 = vrot.slane %v7017, 4
        %v7019 = vrot.slane %v759, 5
        %v7020 = vsel %vm6712, %v7018, %v7019
        %v7021 = vrot.slane %v762, 5
        %v7022 = vrot.slane %v7021, 4
        %v7023 = vrot.slane %v763, 5
        %v7024 = vsel %vm6712, %v7022, %v7023
        %v7025 = vrot.slane %v766, 5
        %v7026 = vrot.slane %v7025, 4
        %v7027 = vrot.slane %v767, 5
        %v7028 = vsel %vm6712, %v7026, %v7027
        %v7029 = vrot.slane %v770, 5
        %v7030 = vrot.slane %v7029, 4
        %v7031 = vrot.slane %v771, 5
        %v7032 = vsel %vm6712, %v7030, %v7031
        %v7045 = vunpack.c.l.b16 %v568
        %v7046 = vunpack.c.l.b16 %v572
        %v7047 = vunpack.c.l.b16 %v576
        %v7048 = vunpack.c.l.b16 %v580
        %v7049 = vunpack.c.l.b16 %v584
        %v7050 = vunpack.c.l.b16 %v588
        %v7051 = vunpack.c.l.b16 %v592
        %v7052 = vunpack.c.l.b16 %v596
        %v7053 = vunpack.c.l.b16 %v670
        %v7054 = vunpack.c.l.b16 %v674
        %v7055 = vunpack.c.l.b16 %v678
        %v7056 = vunpack.c.l.b16 %v682
        %v7057 = vunpack.c.l.b16 %v686
        %v7058 = vunpack.c.l.b16 %v690
        %v7059 = vunpack.c.l.b16 %v694
        %v7060 = vunpack.c.l.b16 %v698
        %v7061 = vpack.c.b16 %v7046, %v7045
        %v7062 = vpack.c.b16 %v7048, %v7047
        %v7063 = vpack.c.b16 %v7050, %v7049
        %v7064 = vpack.c.b16 %v7052, %v7051
        %v7065 = vpack.c.b16 %v7054, %v7053
        %v7066 = vpack.c.b16 %v7056, %v7055
        %v7067 = vpack.c.b16 %v7058, %v7057
        %v7068 = vpack.c.b16 %v7060, %v7059
        %v7077 = vunpack.c.l.b16 %v6611
        %v7078 = vunpack.c.l.b16 %v6625
        %v7079 = vunpack.c.l.b16 %v6639
        %v7080 = vunpack.c.l.b16 %v6653
        %v7081 = vunpack.c.l.b16 %v6667
        %v7082 = vunpack.c.l.b16 %v6681
        %v7083 = vpack.c.b16 %v7078, %v7077
        %v7084 = vpack.c.b16 %v4880, %v7079
        %v7085 = vpack.c.b16 %v4882, %v4881
        %v7086 = vpack.c.b16 %v7081, %v7080
        %v7087 = vpack.c.b16 %v4883, %v7082
        %v7088 = vpack.c.b16 %v4885, %v4884
        %v7095 = vunpack.c.l.b16 %v6716
        %v7096 = vunpack.c.l.b16 %v6720
        %v7097 = vunpack.c.l.b16 %v6724
        %v7098 = vunpack.c.l.b16 %v6728
        %v7099 = vunpack.c.l.b16 %v6732
        %v7100 = vunpack.c.l.b16 %v6736
        %v7101 = vunpack.c.l.b16 %v6740
        %v7102 = vunpack.c.l.b16 %v6744
        %v7103 = vunpack.c.l.b16 %v6748
        %v7104 = vunpack.c.l.b16 %v6752
        %v7105 = vunpack.c.l.b16 %v6756
        %v7106 = vunpack.c.l.b16 %v6760
        %v7107 = vunpack.c.l.b16 %v6764
        %v7108 = vunpack.c.l.b16 %v6768
        %v7109 = vunpack.c.l.b16 %v6772
        %v7110 = vunpack.c.l.b16 %v6776
        %v7111 = vpack.c.b16 %v7096, %v7095
        %v7112 = vpack.c.b16 %v7098, %v7097
        %v7113 = vpack.c.b16 %v7100, %v7099
        %v7114 = vpack.c.b16 %v7102, %v7101
        %v7115 = vpack.c.b16 %v7104, %v7103
        %v7116 = vpack.c.b16 %v7106, %v7105
        %v7117 = vpack.c.b16 %v7108, %v7107
        %v7118 = vpack.c.b16 %v7110, %v7109
        %v7127 = vunpack.c.l.b16 %v603
        %v7128 = vunpack.c.l.b16 %v607
        %v7129 = vunpack.c.l.b16 %v611
        %v7130 = vunpack.c.l.b16 %v615
        %v7131 = vunpack.c.l.b16 %v619
        %v7132 = vunpack.c.l.b16 %v623
        %v7133 = vunpack.c.l.b16 %v627
        %v7134 = vunpack.c.l.b16 %v631
        %v7135 = vunpack.c.l.b16 %v705
        %v7136 = vunpack.c.l.b16 %v709
        %v7137 = vunpack.c.l.b16 %v713
        %v7138 = vunpack.c.l.b16 %v717
        %v7139 = vunpack.c.l.b16 %v721
        %v7140 = vunpack.c.l.b16 %v725
        %v7141 = vunpack.c.l.b16 %v729
        %v7142 = vunpack.c.l.b16 %v733
        %v7143 = vpack.c.b16 %v7128, %v7127
        %v7144 = vpack.c.b16 %v7130, %v7129
        %v7145 = vpack.c.b16 %v7132, %v7131
        %v7146 = vpack.c.b16 %v7134, %v7133
        %v7147 = vpack.c.b16 %v7136, %v7135
        %v7148 = vpack.c.b16 %v7138, %v7137
        %v7149 = vpack.c.b16 %v7140, %v7139
        %v7150 = vpack.c.b16 %v7142, %v7141
        %v7159 = vunpack.c.l.b16 %v6796
        %v7160 = vunpack.c.l.b16 %v6800
        %v7161 = vunpack.c.l.b16 %v6804
        %v7162 = vunpack.c.l.b16 %v6808
        %v7163 = vunpack.c.l.b16 %v6812
        %v7164 = vunpack.c.l.b16 %v6816
        %v7165 = vunpack.c.l.b16 %v6820
        %v7166 = vunpack.c.l.b16 %v6824
        %v7167 = vunpack.c.l.b16 %v6828
        %v7168 = vunpack.c.l.b16 %v6832
        %v7169 = vunpack.c.l.b16 %v6836
        %v7170 = vunpack.c.l.b16 %v6840
        %v7171 = vunpack.c.l.b16 %v6844
        %v7172 = vunpack.c.l.b16 %v6848
        %v7173 = vunpack.c.l.b16 %v6852
        %v7174 = vunpack.c.l.b16 %v6856
        %v7175 = vpack.c.b16 %v7160, %v7159
        %v7176 = vpack.c.b16 %v7162, %v7161
        %v7177 = vpack.c.b16 %v7164, %v7163
        %v7178 = vpack.c.b16 %v7166, %v7165
        %v7179 = vpack.c.b16 %v7168, %v7167
        %v7180 = vpack.c.b16 %v7170, %v7169
        %v7181 = vpack.c.b16 %v7172, %v7171
        %v7182 = vpack.c.b16 %v7174, %v7173
        %v7203 = vunpack.c.l.b16 %v638
        %v7204 = vunpack.c.l.b16 %v642
        %v7205 = vunpack.c.l.b16 %v646
        %v7206 = vunpack.c.l.b16 %v650
        %v7207 = vunpack.c.l.b16 %v654
        %v7208 = vunpack.c.l.b16 %v658
        %v7209 = vunpack.c.l.b16 %v662
        %v7210 = vunpack.c.l.b16 %v666
        %v7211 = vunpack.c.l.b16 %v740
        %v7212 = vunpack.c.l.b16 %v744
        %v7213 = vunpack.c.l.b16 %v748
        %v7214 = vunpack.c.l.b16 %v752
        %v7215 = vunpack.c.l.b16 %v756
        %v7216 = vunpack.c.l.b16 %v760
        %v7217 = vunpack.c.l.b16 %v764
        %v7218 = vunpack.c.l.b16 %v768
        %v7219 = vpack.c.b16 %v7204, %v7203
        %v7220 = vpack.c.b16 %v7206, %v7205
        %v7221 = vpack.c.b16 %v7208, %v7207
        %v7222 = vpack.c.b16 %v7210, %v7209
        %v7223 = vpack.c.b16 %v7212, %v7211
        %v7224 = vpack.c.b16 %v7214, %v7213
        %v7225 = vpack.c.b16 %v7216, %v7215
        %v7226 = vpack.c.b16 %v7218, %v7217
        %v7235 = vunpack.c.l.b16 %v6870
        %v7236 = vunpack.c.l.b16 %v6884
        %v7237 = vunpack.c.l.b16 %v6898
        %v7238 = vunpack.c.l.b16 %v6912
        %v7239 = vunpack.c.l.b16 %v6926
        %v7240 = vunpack.c.l.b16 %v6940
        %v7241 = vpack.c.b16 %v5003, %v5002
        %v7242 = vpack.c.b16 %v7235, %v5004
        %v7243 = vpack.c.b16 %v7237, %v7236
        %v7244 = vpack.c.b16 %v5006, %v5005
        %v7245 = vpack.c.b16 %v7238, %v5007
        %v7246 = vpack.c.b16 %v7240, %v7239
        %v7253 = vunpack.c.l.b16 %v6972
        %v7254 = vunpack.c.l.b16 %v6976
        %v7255 = vunpack.c.l.b16 %v6980
        %v7256 = vunpack.c.l.b16 %v6984
        %v7257 = vunpack.c.l.b16 %v6988
        %v7258 = vunpack.c.l.b16 %v6992
        %v7259 = vunpack.c.l.b16 %v6996
        %v7260 = vunpack.c.l.b16 %v7000
        %v7261 = vunpack.c.l.b16 %v7004
        %v7262 = vunpack.c.l.b16 %v7008
        %v7263 = vunpack.c.l.b16 %v7012
        %v7264 = vunpack.c.l.b16 %v7016
        %v7265 = vunpack.c.l.b16 %v7020
        %v7266 = vunpack.c.l.b16 %v7024
        %v7267 = vunpack.c.l.b16 %v7028
        %v7268 = vunpack.c.l.b16 %v7032
        %v7269 = vpack.c.b16 %v7254, %v7253
        %v7270 = vpack.c.b16 %v7256, %v7255
        %v7271 = vpack.c.b16 %v7258, %v7257
        %v7272 = vpack.c.b16 %v7260, %v7259
        %v7273 = vpack.c.b16 %v7262, %v7261
        %v7274 = vpack.c.b16 %v7264, %v7263
        %v7275 = vpack.c.b16 %v7266, %v7265
        %v7276 = vpack.c.b16 %v7268, %v7267
        %v7285 = vld [vmem:[#allocation11] sm:$0xf]
        %v7286 = vld [vmem:[#allocation11 + $0x4] sm:$0xf]
        %v7287 = vld [vmem:[#allocation11 + $0x8] sm:$0xf]
        %v7288 = vld [vmem:[#allocation11 + $0xc] sm:$0xf]
        %v7289 = vld [vmem:[#allocation11 + $0x10] sm:$0xf]
        %v7290 = vld [vmem:[#allocation11 + $0x14] sm:$0xf]
        %v7291 = vld [vmem:[#allocation11 + $0x18] sm:$0xf]
        %v7292 = vld [vmem:[#allocation11 + $0x1c] sm:$0xf]
        %v7293 = vld [vmem:[#allocation11 + $0x20] sm:$0xf]
        %v7294 = vld [vmem:[#allocation11 + $0x24] sm:$0xf]
        %v7295 = vld [vmem:[#allocation11 + $0x28] sm:$0xf]
        %v7296 = vld [vmem:[#allocation11 + $0x2c] sm:$0xf]
        %v7297 = vld [vmem:[#allocation11 + $0x30] sm:$0xf]
        %v7298 = vld [vmem:[#allocation11 + $0x34] sm:$0xf]
        %v7299 = vld [vmem:[#allocation11 + $0x38] sm:$0xf]
        %v7300 = vld [vmem:[#allocation11 + $0x3c] sm:$0xf]
        %v7301 = vld [vmem:[#allocation11 + $0x40] sm:$0xf]
        %v7302 = vld [vmem:[#allocation11 + $0x44] sm:$0xf]
        %v7303 = vld [vmem:[#allocation11 + $0x48] sm:$0xf]
        %v7304 = vld [vmem:[#allocation11 + $0x4c] sm:$0xf]
        %v7305 = vld [vmem:[#allocation11 + $0x50] sm:$0xf]
        %v7306 = vld [vmem:[#allocation11 + $0x54] sm:$0xf]
        %v7307 = vld [vmem:[#allocation11 + $0x58] sm:$0xf]
        %v7308 = vld [vmem:[#allocation11 + $0x5c] sm:$0xf]
        %v7309 = vld [vmem:[#allocation11 + $0x60] sm:$0xf]
        %v7310 = vld [vmem:[#allocation11 + $0x64] sm:$0xf]
        %v7311 = vld [vmem:[#allocation11 + $0x68] sm:$0xf]
        %v7312 = vld [vmem:[#allocation11 + $0x6c] sm:$0xf]
        %v7313 = vld [vmem:[#allocation11 + $0x70] sm:$0xf]
        %v7314 = vld [vmem:[#allocation11 + $0x74] sm:$0xf]
        %v7315 = vld [vmem:[#allocation11 + $0x78] sm:$0xf]
        %v7316 = vld [vmem:[#allocation11 + $0x7c] sm:$0xf]
        %v7317 = vld [vmem:[#allocation11 + $0x80] sm:$0xf]
        %v7318 = vld [vmem:[#allocation11 + $0x84] sm:$0xf]
        %v7319 = vld [vmem:[#allocation11 + $0x88] sm:$0xf]
        %v7320 = vld [vmem:[#allocation11 + $0x8c] sm:$0xf]
        %v7321 = vld [vmem:[#allocation11 + $0x90] sm:$0xf]
        %v7322 = vld [vmem:[#allocation11 + $0x94] sm:$0xf]
        %v7323 = vld [vmem:[#allocation11 + $0x98] sm:$0xf]
        %v7324 = vld [vmem:[#allocation11 + $0x9c] sm:$0xf]
        %v7325 = vld [vmem:[#allocation11 + $0xa0] sm:$0xf]
        %v7326 = vld [vmem:[#allocation11 + $0xa4] sm:$0xf]
        %v7327 = vld [vmem:[#allocation11 + $0xa8] sm:$0xf]
        %v7328 = vld [vmem:[#allocation11 + $0xac] sm:$0xf]
        %v7329 = vld [vmem:[#allocation11 + $0xb0] sm:$0xf]
        %v7330 = vld [vmem:[#allocation11 + $0xb4] sm:$0xf]
        %v7331 = vld [vmem:[#allocation11 + $0xb8] sm:$0xf]
        %v7332 = vld [vmem:[#allocation11 + $0xbc] sm:$0xf]
        %v7333 = vld [vmem:[#allocation11 + $0xc0] sm:$0xf]
        %v7334 = vld [vmem:[#allocation11 + $0xc4] sm:$0xf]
        %v7335 = vld [vmem:[#allocation11 + $0xc8] sm:$0xf]
        %v7336 = vld [vmem:[#allocation11 + $0xcc] sm:$0xf]
        %v7337 = vld [vmem:[#allocation11 + $0xd0] sm:$0xf]
        %v7338 = vld [vmem:[#allocation11 + $0xd4] sm:$0xf]
        %v7339 = vld [vmem:[#allocation11 + $0xd8] sm:$0xf]
        %v7340 = vld [vmem:[#allocation11 + $0xdc] sm:$0xf]
        %v7341 = vld [vmem:[#allocation11 + $0xe0] sm:$0xf]
        %v7342 = vld [vmem:[#allocation11 + $0xe4] sm:$0xf]
        %v7343 = vld [vmem:[#allocation11 + $0xe8] sm:$0xf]
        %v7344 = vld [vmem:[#allocation11 + $0xec] sm:$0xf]
        %v7345 = vld [vmem:[#allocation11 + $0xf0] sm:$0xf]
        %v7346 = vld [vmem:[#allocation11 + $0xf4] sm:$0xf]
        %v7347 = vld [vmem:[#allocation11 + $0xf8] sm:$0xf]
        %v7348 = vld [vmem:[#allocation11 + $0xfc] sm:$0xf]
        %v7349 = vld [vmem:[#allocation11 + $0x100] sm:$0xf]
        %v7350 = vld [vmem:[#allocation11 + $0x104] sm:$0xf]
        %v7351 = vld [vmem:[#allocation11 + $0x108] sm:$0xf]
        %v7352 = vld [vmem:[#allocation11 + $0x10c] sm:$0xf]
        %v7353 = vld [vmem:[#allocation11 + $0x110] sm:$0xf]
        %v7354 = vld [vmem:[#allocation11 + $0x114] sm:$0xf]
        %v7355 = vld [vmem:[#allocation11 + $0x118] sm:$0xf]
        %v7356 = vld [vmem:[#allocation11 + $0x11c] sm:$0xf]
        %v7357 = vld [vmem:[#allocation11 + $0x120] sm:$0xf]
        %v7358 = vld [vmem:[#allocation11 + $0x124] sm:$0xf]
        %v7359 = vld [vmem:[#allocation11 + $0x128] sm:$0xf]
        %v7360 = vld [vmem:[#allocation11 + $0x12c] sm:$0xf]
        %v7361 = vld [vmem:[#allocation11 + $0x130] sm:$0xf]
        %v7362 = vld [vmem:[#allocation11 + $0x134] sm:$0xf]
        %v7363 = vld [vmem:[#allocation11 + $0x138] sm:$0xf]
        %v7364 = vld [vmem:[#allocation11 + $0x13c] sm:$0xf]
        %v7365 = vld [vmem:[#allocation11 + $0x140] sm:$0xf]
        %v7366 = vld [vmem:[#allocation11 + $0x144] sm:$0xf]
        %v7367 = vld [vmem:[#allocation11 + $0x148] sm:$0xf]
        %v7368 = vld [vmem:[#allocation11 + $0x14c] sm:$0xf]
        %v7369 = vld [vmem:[#allocation11 + $0x150] sm:$0xf]
        %v7370 = vld [vmem:[#allocation11 + $0x154] sm:$0xf]
        %v7371 = vld [vmem:[#allocation11 + $0x158] sm:$0xf]
        %v7372 = vld [vmem:[#allocation11 + $0x15c] sm:$0xf]
        %v7373 = vld [vmem:[#allocation11 + $0x160] sm:$0xf]
        %v7374 = vld [vmem:[#allocation11 + $0x164] sm:$0xf]
        %v7375 = vld [vmem:[#allocation11 + $0x168] sm:$0xf]
        %v7376 = vld [vmem:[#allocation11 + $0x16c] sm:$0xf]
        %v7377 = vld [vmem:[#allocation11 + $0x170] sm:$0xf]
        %v7378 = vld [vmem:[#allocation11 + $0x174] sm:$0xf]
        %v7379 = vld [vmem:[#allocation11 + $0x178] sm:$0xf]
        %v7380 = vld [vmem:[#allocation11 + $0x17c] sm:$0xf]
        %v7381 = vld [vmem:[#allocation11 + $0x180] sm:$0xf]
        %v7382 = vld [vmem:[#allocation11 + $0x184] sm:$0xf]
        %v7383 = vld [vmem:[#allocation11 + $0x188] sm:$0xf]
        %v7384 = vld [vmem:[#allocation11 + $0x18c] sm:$0xf]
        %v7385 = vld [vmem:[#allocation11 + $0x190] sm:$0xf]
        %v7386 = vld [vmem:[#allocation11 + $0x194] sm:$0xf]
        %v7387 = vld [vmem:[#allocation11 + $0x198] sm:$0xf]
        %v7388 = vld [vmem:[#allocation11 + $0x19c] sm:$0xf]
        %v7389 = vld [vmem:[#allocation11 + $0x1a0] sm:$0xf]
        %v7390 = vld [vmem:[#allocation11 + $0x1a4] sm:$0xf]
        %v7391 = vld [vmem:[#allocation11 + $0x1a8] sm:$0xf]
        %v7392 = vld [vmem:[#allocation11 + $0x1ac] sm:$0xf]
        %v7393 = vld [vmem:[#allocation11 + $0x1b0] sm:$0xf]
        %v7394 = vld [vmem:[#allocation11 + $0x1b4] sm:$0xf]
        %v7395 = vld [vmem:[#allocation11 + $0x1b8] sm:$0xf]
        %v7396 = vld [vmem:[#allocation11 + $0x1bc] sm:$0xf]
        %v7397 = vld [vmem:[#allocation11 + $0x1c0] sm:$0xf]
        %v7398 = vld [vmem:[#allocation11 + $0x1c4] sm:$0xf]
        %v7399 = vld [vmem:[#allocation11 + $0x1c8] sm:$0xf]
        %v7400 = vld [vmem:[#allocation11 + $0x1cc] sm:$0xf]
        %v7401 = vld [vmem:[#allocation11 + $0x1d0] sm:$0xf]
        %v7402 = vld [vmem:[#allocation11 + $0x1d4] sm:$0xf]
        %v7403 = vld [vmem:[#allocation11 + $0x1d8] sm:$0xf]
        %v7404 = vld [vmem:[#allocation11 + $0x1dc] sm:$0xf]
        %v7405 = vld [vmem:[#allocation11 + $0x1e0] sm:$0xf]
        %v7406 = vld [vmem:[#allocation11 + $0x1e4] sm:$0xf]
        %v7407 = vld [vmem:[#allocation11 + $0x1e8] sm:$0xf]
        %v7408 = vld [vmem:[#allocation11 + $0x1ec] sm:$0xf]
        %v7409 = vld [vmem:[#allocation11 + $0x1f0] sm:$0xf]
        %v7410 = vld [vmem:[#allocation11 + $0x1f4] sm:$0xf]
        %v7411 = vld [vmem:[#allocation11 + $0x1f8] sm:$0xf]
        %v7412 = vld [vmem:[#allocation11 + $0x1fc] sm:$0xf]
        %v7413 = vld [vmem:[#allocation11 + $0x200] sm:$0xf]
        %v7414 = vld [vmem:[#allocation11 + $0x204] sm:$0xf]
        %v7415 = vld [vmem:[#allocation11 + $0x208] sm:$0xf]
        %v7416 = vld [vmem:[#allocation11 + $0x20c] sm:$0xf]
        %v7417 = vld [vmem:[#allocation11 + $0x210] sm:$0xf]
        %v7418 = vld [vmem:[#allocation11 + $0x214] sm:$0xf]
        %v7419 = vld [vmem:[#allocation11 + $0x218] sm:$0xf]
        %v7420 = vld [vmem:[#allocation11 + $0x21c] sm:$0xf]
        %v7421 = vld [vmem:[#allocation11 + $0x220] sm:$0xf]
        %v7422 = vld [vmem:[#allocation11 + $0x224] sm:$0xf]
        %v7423 = vld [vmem:[#allocation11 + $0x228] sm:$0xf]
        %v7424 = vld [vmem:[#allocation11 + $0x22c] sm:$0xf]
        %v7425 = vld [vmem:[#allocation11 + $0x230] sm:$0xf]
        %v7426 = vld [vmem:[#allocation11 + $0x234] sm:$0xf]
        %v7427 = vld [vmem:[#allocation11 + $0x238] sm:$0xf]
        %v7428 = vld [vmem:[#allocation11 + $0x23c] sm:$0xf]
        %v7573 = vunpack.c.l.b16 %v7285
        %v7574 = vunpack.c.l.b16 %v7286
        %v7575 = vunpack.c.l.b16 %v7287
        %v7576 = vunpack.c.l.b16 %v7288
        %v7577 = vunpack.c.l.b16 %v7289
        %v7578 = vunpack.c.l.b16 %v7290
        %v7579 = vunpack.c.l.b16 %v7291
        %v7580 = vunpack.c.l.b16 %v7292
        %v7581 = vunpack.c.l.b16 %v7293
        %v7582 = vunpack.c.l.b16 %v7294
        %v7583 = vunpack.c.l.b16 %v7295
        %v7584 = vunpack.c.l.b16 %v7296
        %v7585 = vunpack.c.l.b16 %v7297
        %v7586 = vunpack.c.l.b16 %v7298
        %v7587 = vunpack.c.l.b16 %v7299
        %v7588 = vunpack.c.l.b16 %v7300
        %v7589 = vunpack.c.l.b16 %v7301
        %v7590 = vunpack.c.l.b16 %v7302
        %v7591 = vunpack.c.l.b16 %v7303
        %v7592 = vunpack.c.l.b16 %v7304
        %v7593 = vunpack.c.l.b16 %v7305
        %v7594 = vunpack.c.l.b16 %v7306
        %v7595 = vunpack.c.l.b16 %v7307
        %v7596 = vunpack.c.l.b16 %v7308
        %v7597 = vunpack.c.l.b16 %v7309
        %v7598 = vunpack.c.l.b16 %v7310
        %v7599 = vunpack.c.l.b16 %v7311
        %v7600 = vunpack.c.l.b16 %v7312
        %v7601 = vunpack.c.l.b16 %v7313
        %v7602 = vunpack.c.l.b16 %v7314
        %v7603 = vunpack.c.l.b16 %v7315
        %v7604 = vunpack.c.l.b16 %v7316
        %v7605 = vunpack.c.l.b16 %v7317
        %v7606 = vunpack.c.l.b16 %v7318
        %v7607 = vunpack.c.l.b16 %v7319
        %v7608 = vunpack.c.l.b16 %v7320
        %v7609 = vunpack.c.l.b16 %v7321
        %v7610 = vunpack.c.l.b16 %v7322
        %v7611 = vunpack.c.l.b16 %v7323
        %v7612 = vunpack.c.l.b16 %v7324
        %v7613 = vunpack.c.l.b16 %v7325
        %v7614 = vunpack.c.l.b16 %v7326
        %v7615 = vunpack.c.l.b16 %v7327
        %v7616 = vunpack.c.l.b16 %v7328
        %v7617 = vunpack.c.l.b16 %v7329
        %v7618 = vunpack.c.l.b16 %v7330
        %v7619 = vunpack.c.l.b16 %v7331
        %v7620 = vunpack.c.l.b16 %v7332
        %v7621 = vunpack.c.l.b16 %v7333
        %v7622 = vunpack.c.l.b16 %v7334
        %v7623 = vunpack.c.l.b16 %v7335
        %v7624 = vunpack.c.l.b16 %v7336
        %v7625 = vunpack.c.l.b16 %v7337
        %v7626 = vunpack.c.l.b16 %v7338
        %v7627 = vunpack.c.l.b16 %v7339
        %v7628 = vunpack.c.l.b16 %v7340
        %v7629 = vunpack.c.l.b16 %v7341
        %v7630 = vunpack.c.l.b16 %v7342
        %v7631 = vunpack.c.l.b16 %v7343
        %v7632 = vunpack.c.l.b16 %v7344
        %v7633 = vunpack.c.l.b16 %v7345
        %v7634 = vunpack.c.l.b16 %v7346
        %v7635 = vunpack.c.l.b16 %v7347
        %v7636 = vunpack.c.l.b16 %v7348
        %v7637 = vunpack.c.l.b16 %v7349
        %v7638 = vunpack.c.l.b16 %v7350
        %v7639 = vunpack.c.l.b16 %v7351
        %v7640 = vunpack.c.l.b16 %v7352
        %v7641 = vunpack.c.l.b16 %v7353
        %v7642 = vunpack.c.l.b16 %v7354
        %v7643 = vunpack.c.l.b16 %v7355
        %v7644 = vunpack.c.l.b16 %v7356
        %v7645 = vunpack.c.l.b16 %v7357
        %v7646 = vunpack.c.l.b16 %v7358
        %v7647 = vunpack.c.l.b16 %v7359
        %v7648 = vunpack.c.l.b16 %v7360
        %v7649 = vunpack.c.l.b16 %v7361
        %v7650 = vunpack.c.l.b16 %v7362
        %v7651 = vunpack.c.l.b16 %v7363
        %v7652 = vunpack.c.l.b16 %v7364
        %v7653 = vunpack.c.l.b16 %v7365
        %v7654 = vunpack.c.l.b16 %v7366
        %v7655 = vunpack.c.l.b16 %v7367
        %v7656 = vunpack.c.l.b16 %v7368
        %v7657 = vunpack.c.l.b16 %v7369
        %v7658 = vunpack.c.l.b16 %v7370
        %v7659 = vunpack.c.l.b16 %v7371
        %v7660 = vunpack.c.l.b16 %v7372
        %v7661 = vunpack.c.l.b16 %v7373
        %v7662 = vunpack.c.l.b16 %v7374
        %v7663 = vunpack.c.l.b16 %v7375
        %v7664 = vunpack.c.l.b16 %v7376
        %v7665 = vunpack.c.l.b16 %v7377
        %v7666 = vunpack.c.l.b16 %v7378
        %v7667 = vunpack.c.l.b16 %v7379
        %v7668 = vunpack.c.l.b16 %v7380
        %v7669 = vunpack.c.l.b16 %v7381
        %v7670 = vunpack.c.l.b16 %v7382
        %v7671 = vunpack.c.l.b16 %v7383
        %v7672 = vunpack.c.l.b16 %v7384
        %v7673 = vunpack.c.l.b16 %v7385
        %v7674 = vunpack.c.l.b16 %v7386
        %v7675 = vunpack.c.l.b16 %v7387
        %v7676 = vunpack.c.l.b16 %v7388
        %v7677 = vunpack.c.l.b16 %v7389
        %v7678 = vunpack.c.l.b16 %v7390
        %v7679 = vunpack.c.l.b16 %v7391
        %v7680 = vunpack.c.l.b16 %v7392
        %v7681 = vunpack.c.l.b16 %v7393
        %v7682 = vunpack.c.l.b16 %v7394
        %v7683 = vunpack.c.l.b16 %v7395
        %v7684 = vunpack.c.l.b16 %v7396
        %v7685 = vunpack.c.l.b16 %v7397
        %v7686 = vunpack.c.l.b16 %v7398
        %v7687 = vunpack.c.l.b16 %v7399
        %v7688 = vunpack.c.l.b16 %v7400
        %v7689 = vunpack.c.l.b16 %v7401
        %v7690 = vunpack.c.l.b16 %v7402
        %v7691 = vunpack.c.l.b16 %v7403
        %v7692 = vunpack.c.l.b16 %v7404
        %v7693 = vunpack.c.l.b16 %v7405
        %v7694 = vunpack.c.l.b16 %v7406
        %v7695 = vunpack.c.l.b16 %v7407
        %v7696 = vunpack.c.l.b16 %v7408
        %v7697 = vunpack.c.l.b16 %v7409
        %v7698 = vunpack.c.l.b16 %v7410
        %v7699 = vunpack.c.l.b16 %v7411
        %v7700 = vunpack.c.l.b16 %v7412
        %v7701 = vunpack.c.l.b16 %v7413
        %v7702 = vunpack.c.l.b16 %v7414
        %v7703 = vunpack.c.l.b16 %v7415
        %v7704 = vunpack.c.l.b16 %v7416
        %v7705 = vunpack.c.l.b16 %v7417
        %v7706 = vunpack.c.l.b16 %v7418
        %v7707 = vunpack.c.l.b16 %v7419
        %v7708 = vunpack.c.l.b16 %v7420
        %v7709 = vunpack.c.l.b16 %v7421
        %v7710 = vunpack.c.l.b16 %v7422
        %v7711 = vunpack.c.l.b16 %v7423
        %v7712 = vunpack.c.l.b16 %v7424
        %v7713 = vunpack.c.l.b16 %v7425
        %v7714 = vunpack.c.l.b16 %v7426
        %v7715 = vunpack.c.l.b16 %v7427
        %v7716 = vunpack.c.l.b16 %v7428
        %v7717 = vpack.c.b16 %v7574, %v7573
        %v7718 = vpack.c.b16 %v7576, %v7575
        %v7719 = vpack.c.b16 %v7578, %v7577
        %v7720 = vpack.c.b16 %v7580, %v7579
        %v7721 = vpack.c.b16 %v7582, %v7581
        %v7722 = vpack.c.b16 %v7584, %v7583
        %v7723 = vpack.c.b16 %v7586, %v7585
        %v7724 = vpack.c.b16 %v7588, %v7587
        %v7725 = vpack.c.b16 %v7590, %v7589
        %v7726 = vpack.c.b16 %v7592, %v7591
        %v7727 = vpack.c.b16 %v7594, %v7593
        %v7728 = vpack.c.b16 %v7596, %v7595
        %v7729 = vpack.c.b16 %v7598, %v7597
        %v7730 = vpack.c.b16 %v7600, %v7599
        %v7731 = vpack.c.b16 %v7602, %v7601
        %v7732 = vpack.c.b16 %v7604, %v7603
        %v7733 = vpack.c.b16 %v7606, %v7605
        %v7734 = vpack.c.b16 %v7608, %v7607
        %v7735 = vpack.c.b16 %v7610, %v7609
        %v7736 = vpack.c.b16 %v7612, %v7611
        %v7737 = vpack.c.b16 %v7614, %v7613
        %v7738 = vpack.c.b16 %v7616, %v7615
        %v7739 = vpack.c.b16 %v7618, %v7617
        %v7740 = vpack.c.b16 %v7620, %v7619
        %v7741 = vpack.c.b16 %v7622, %v7621
        %v7742 = vpack.c.b16 %v7624, %v7623
        %v7743 = vpack.c.b16 %v7626, %v7625
        %v7744 = vpack.c.b16 %v7628, %v7627
        %v7745 = vpack.c.b16 %v7630, %v7629
        %v7746 = vpack.c.b16 %v7632, %v7631
        %v7747 = vpack.c.b16 %v7634, %v7633
        %v7748 = vpack.c.b16 %v7636, %v7635
        %v7749 = vpack.c.b16 %v7638, %v7637
        %v7750 = vpack.c.b16 %v7640, %v7639
        %v7751 = vpack.c.b16 %v7642, %v7641
        %v7752 = vpack.c.b16 %v7644, %v7643
        %v7753 = vpack.c.b16 %v7646, %v7645
        %v7754 = vpack.c.b16 %v7648, %v7647
        %v7755 = vpack.c.b16 %v7650, %v7649
        %v7756 = vpack.c.b16 %v7652, %v7651
        %v7757 = vpack.c.b16 %v7654, %v7653
        %v7758 = vpack.c.b16 %v7656, %v7655
        %v7759 = vpack.c.b16 %v7658, %v7657
        %v7760 = vpack.c.b16 %v7660, %v7659
        %v7761 = vpack.c.b16 %v7662, %v7661
        %v7762 = vpack.c.b16 %v7664, %v7663
        %v7763 = vpack.c.b16 %v7666, %v7665
        %v7764 = vpack.c.b16 %v7668, %v7667
        %v7765 = vpack.c.b16 %v7670, %v7669
        %v7766 = vpack.c.b16 %v7672, %v7671
        %v7767 = vpack.c.b16 %v7674, %v7673
        %v7768 = vpack.c.b16 %v7676, %v7675
        %v7769 = vpack.c.b16 %v7678, %v7677
        %v7770 = vpack.c.b16 %v7680, %v7679
        %v7771 = vpack.c.b16 %v7682, %v7681
        %v7772 = vpack.c.b16 %v7684, %v7683
        %v7773 = vpack.c.b16 %v7686, %v7685
        %v7774 = vpack.c.b16 %v7688, %v7687
        %v7775 = vpack.c.b16 %v7690, %v7689
        %v7776 = vpack.c.b16 %v7692, %v7691
        %v7777 = vpack.c.b16 %v7694, %v7693
        %v7778 = vpack.c.b16 %v7696, %v7695
        %v7779 = vpack.c.b16 %v7698, %v7697
        %v7780 = vpack.c.b16 %v7700, %v7699
        %v7781 = vpack.c.b16 %v7702, %v7701
        %v7782 = vpack.c.b16 %v7704, %v7703
        %v7783 = vpack.c.b16 %v7706, %v7705
        %v7784 = vpack.c.b16 %v7708, %v7707
        %v7785 = vpack.c.b16 %v7710, %v7709
        %v7786 = vpack.c.b16 %v7712, %v7711
        %v7787 = vpack.c.b16 %v7714, %v7713
        %v7788 = vpack.c.b16 %v7716, %v7715
        %7861 = vmatprep.subr.bf16.mxu0 0
        %7862 = vmatpush1.bf16.msra.mxu0 %v7717
        %7863 = vmatprep.subr.bf16.mxu0 0
        %7864 = vmatpush1.bf16.msra.mxu0 %v7718
        %7865 = vmatprep.subr.bf16.mxu0 0
        %7866 = vmatpush1.bf16.msra.mxu0 %v7719
        %7867 = vmatprep.subr.bf16.mxu0 0
        %7868 = vmatpush1.bf16.msra.mxu0 %v7720
        %7869 = vmatprep.subr.bf16.mxu0 0
        %7870 = vmatpush1.bf16.msra.mxu0 %v7721
        %7871 = vmatprep.subr.bf16.mxu0 0
        %7872 = vmatpush1.bf16.msra.mxu0 %v7722
        %7873 = vmatprep.subr.bf16.mxu0 0
        %7874 = vmatpush1.bf16.msra.mxu0 %v7723
        %7875 = vmatprep.subr.bf16.mxu0 0
        %7876 = vmatpush1.bf16.msra.mxu0 %v7724
        %7877 = vmatprep.subr.bf16.mxu0 0
        %7878 = vmatpush1.bf16.msra.mxu0 %v7725
        %7879 = vmatprep.subr.bf16.mxu0 0
        %7880 = vmatpush1.bf16.msra.mxu0 %v7726
        %7881 = vmatprep.subr.bf16.mxu0 0
        %7882 = vmatpush1.bf16.msra.mxu0 %v7727
        %7883 = vmatprep.subr.bf16.mxu0 0
        %7884 = vmatpush1.bf16.msra.mxu0 %v7728
        %7885 = vmatprep.subr.bf16.mxu0 0
        %7886 = vmatpush1.bf16.msra.mxu0 %v7729
        %7887 = vmatprep.subr.bf16.mxu0 0
        %7888 = vmatpush1.bf16.msra.mxu0 %v7730
        %7889 = vmatprep.subr.bf16.mxu0 0
        %7890 = vmatpush1.bf16.msra.mxu0 %v7731
        %7891 = vmatprep.subr.bf16.mxu0 0
        %7892 = vmatpush1.bf16.msra.mxu0 %v7732
        %7893 = vmatprep.mubr.bf16.mxu0 %v7083
        %7894 = vmatmul.mubr.bf16.gmra.mrb[0].mxu0 %v7061
        %v7895 = vpop.f32.mrb[0].mxu0
        %v7896 = vadd.f32 0.0, %v7895
        %v7897 = vpop.f32.mrb[0].mxu0
        %v7898 = vpop.f32.mrb[0].mxu0
        %v7899 = vadd.f32 0.0, %v7898
        %v7900 = vpop.f32.mrb[0].mxu0
        %7901 = vmatprep.mubr.bf16.mxu0 %v7084
        %7902 = vmatmul.mubr.bf16.gmra.mrb[0].mxu0 %v7062
        %v7903 = vpop.f32.mrb[0].mxu0
        %v7904 = vadd.f32 0.0, %v7903
        %v7905 = vpop.f32.mrb[0].mxu0
        %v7906 = vpop.f32.mrb[0].mxu0
        %v7907 = vadd.f32 0.0, %v7906
        %v7908 = vpop.f32.mrb[0].mxu0
        %7909 = vmatprep.mubr.bf16.mxu0 %v7085
        %7910 = vmatmul.mubr.bf16.gmra.mrb[0].mxu0 %v7063
        %v7911 = vpop.f32.mrb[0].mxu0
        %v7912 = vadd.f32 0.0, %v7911
        %v7913 = vpop.f32.mrb[0].mxu0
        %v7914 = vpop.f32.mrb[0].mxu0
        %v7915 = vadd.f32 0.0, %v7914
        %v7916 = vpop.f32.mrb[0].mxu0
        %7917 = vmatprep.mubr.bf16.mxu0 %v2045
        %7918 = vmatmul.mubr.bf16.gmra.mrb[0].mxu0 %v7064
        %v7919 = vpop.f32.mrb[0].mxu0
        %v7920 = vadd.f32 0.0, %v7919
        %v7921 = vpop.f32.mrb[0].mxu0
        %v7922 = vpop.f32.mrb[0].mxu0
        %v7923 = vadd.f32 0.0, %v7922
        %v7924 = vpop.f32.mrb[0].mxu0
        %7925 = vmatprep.mubr.bf16.mxu0 %v7086
        %7926 = vmatmul.mubr.bf16.gmra.mrb[0].mxu0 %v7065
        %v7927 = vpop.f32.mrb[0].mxu0
        %v7928 = vadd.f32 0.0, %v7927
        %v7929 = vpop.f32.mrb[0].mxu0
        %v7930 = vpop.f32.mrb[0].mxu0
        %v7931 = vadd.f32 0.0, %v7930
        %v7932 = vpop.f32.mrb[0].mxu0
        %7933 = vmatprep.mubr.bf16.mxu0 %v7087
        %7934 = vmatmul.mubr.bf16.gmra.mrb[0].mxu0 %v7066
        %v7935 = vpop.f32.mrb[0].mxu0
        %v7936 = vadd.f32 0.0, %v7935
        %v7937 = vpop.f32.mrb[0].mxu0
        %v7938 = vpop.f32.mrb[0].mxu0
        %v7939 = vadd.f32 0.0, %v7938
        %v7940 = vpop.f32.mrb[0].mxu0
        %7941 = vmatprep.mubr.bf16.mxu0 %v7088
        %7942 = vmatmul.mubr.bf16.gmra.mrb[0].mxu0 %v7067
        %v7943 = vpop.f32.mrb[0].mxu0
        %v7944 = vadd.f32 0.0, %v7943
        %v7945 = vpop.f32.mrb[0].mxu0
        %v7946 = vpop.f32.mrb[0].mxu0
        %v7947 = vadd.f32 0.0, %v7946
        %v7948 = vpop.f32.mrb[0].mxu0
        %7949 = vmatprep.mubr.bf16.mxu0 %v2049
        %7950 = vmatmul.mubr.bf16.gmra.mrb[0].mxu0 %v7068
        %v7951 = vpop.f32.mrb[0].mxu0
        %v7952 = vadd.f32 0.0, %v7951
        %v7953 = vpop.f32.mrb[0].mxu0
        %v7954 = vpop.f32.mrb[0].mxu0
        %v7955 = vadd.f32 0.0, %v7954
        %v7956 = vpop.f32.mrb[0].mxu0
        %7957 = vdwg.mxu0
        %7958 = vmatprep.subr.bf16.mxu0 0
        %7959 = vmatpush1.bf16.msra.mxu0 %v7733
        %7960 = vmatprep.subr.bf16.mxu0 0
        %7961 = vmatpush1.bf16.msra.mxu0 %v7734
        %7962 = vmatprep.subr.bf16.mxu0 0
        %7963 = vmatpush1.bf16.msra.mxu0 %v7735
        %7964 = vmatprep.subr.bf16.mxu0 0
        %7965 = vmatpush1.bf16.msra.mxu0 %v7736
        %7966 = vmatprep.subr.bf16.mxu0 0
        %7967 = vmatpush1.bf16.msra.mxu0 %v7737
        %7968 = vmatprep.subr.bf16.mxu0 0
        %7969 = vmatpush1.bf16.msra.mxu0 %v7738
        %7970 = vmatprep.subr.bf16.mxu0 0
        %7971 = vmatpush1.bf16.msra.mxu0 %v7739
        %7972 = vmatprep.subr.bf16.mxu0 0
        %7973 = vmatpush1.bf16.msra.mxu0 %v7740
        %7974 = vmatprep.subr.bf16.mxu0 0
        %7975 = vmatpush1.bf16.msra.mxu0 %v7741
        %7976 = vmatprep.subr.bf16.mxu0 0
        %7977 = vmatpush1.bf16.msra.mxu0 %v7742
        %7978 = vmatprep.subr.bf16.mxu0 0
        %7979 = vmatpush1.bf16.msra.mxu0 %v7743
        %7980 = vmatprep.subr.bf16.mxu0 0
        %7981 = vmatpush1.bf16.msra.mxu0 %v7744
        %7982 = vmatprep.subr.bf16.mxu0 0
        %7983 = vmatpush1.bf16.msra.mxu0 %v7745
        %7984 = vmatprep.subr.bf16.mxu0 0
        %7985 = vmatpush1.bf16.msra.mxu0 %v7746
        %7986 = vmatprep.subr.bf16.mxu0 0
        %7987 = vmatpush1.bf16.msra.mxu0 %v7747
        %7988 = vmatprep.subr.bf16.mxu0 0
        %7989 = vmatpush1.bf16.msra.mxu0 %v7748
        %7990 = vmatprep.mubr.bf16.mxu0 %v7143
        %7991 = vmatmul.mubr.bf16.gmra.mrb[0].mxu0 %v7111
        %v7992 = vpop.f32.mrb[0].mxu0
        %v7993 = vadd.f32 %v7896, %v7992
        %v7994 = vpop.f32.mrb[0].mxu0
        %v7995 = vpop.f32.mrb[0].mxu0
        %v7996 = vadd.f32 %v7899, %v7995
        %v7997 = vpop.f32.mrb[0].mxu0
        %7998 = vmatprep.mubr.bf16.mxu0 %v7144
        %7999 = vmatmul.mubr.bf16.gmra.mrb[0].mxu0 %v7112
        %v8000 = vpop.f32.mrb[0].mxu0
        %v8001 = vadd.f32 %v7904, %v8000
        %v8002 = vpop.f32.mrb[0].mxu0
        %v8003 = vpop.f32.mrb[0].mxu0
        %v8004 = vadd.f32 %v7907, %v8003
        %v8005 = vpop.f32.mrb[0].mxu0
        %8006 = vmatprep.mubr.bf16.mxu0 %v7145
        %8007 = vmatmul.mubr.bf16.gmra.mrb[0].mxu0 %v7113
        %v8008 = vpop.f32.mrb[0].mxu0
        %v8009 = vadd.f32 %v7912, %v8008
        %v8010 = vpop.f32.mrb[0].mxu0
        %v8011 = vpop.f32.mrb[0].mxu0
        %v8012 = vadd.f32 %v7915, %v8011
        %v8013 = vpop.f32.mrb[0].mxu0
        %8014 = vmatprep.mubr.bf16.mxu0 %v7146
        %8015 = vmatmul.mubr.bf16.gmra.mrb[0].mxu0 %v7114
        %v8016 = vpop.f32.mrb[0].mxu0
        %v8017 = vadd.f32 %v7920, %v8016
        %v8018 = vpop.f32.mrb[0].mxu0
        %v8019 = vpop.f32.mrb[0].mxu0
        %v8020 = vadd.f32 %v7923, %v8019
        %v8021 = vpop.f32.mrb[0].mxu0
        %8022 = vmatprep.mubr.bf16.mxu0 %v7147
        %8023 = vmatmul.mubr.bf16.gmra.mrb[0].mxu0 %v7115
        %v8024 = vpop.f32.mrb[0].mxu0
        %v8025 = vadd.f32 %v7928, %v8024
        %v8026 = vpop.f32.mrb[0].mxu0
        %v8027 = vpop.f32.mrb[0].mxu0
        %v8028 = vadd.f32 %v7931, %v8027
        %v8029 = vpop.f32.mrb[0].mxu0
        %8030 = vmatprep.mubr.bf16.mxu0 %v7148
        %8031 = vmatmul.mubr.bf16.gmra.mrb[0].mxu0 %v7116
        %v8032 = vpop.f32.mrb[0].mxu0
        %v8033 = vadd.f32 %v7936, %v8032
        %v8034 = vpop.f32.mrb[0].mxu0
        %v8035 = vpop.f32.mrb[0].mxu0
        %v8036 = vadd.f32 %v7939, %v8035
        %v8037 = vpop.f32.mrb[0].mxu0
        %8038 = vmatprep.mubr.bf16.mxu0 %v7149
        %8039 = vmatmul.mubr.bf16.gmra.mrb[0].mxu0 %v7117
        %v8040 = vpop.f32.mrb[0].mxu0
        %v8041 = vadd.f32 %v7944, %v8040
        %v8042 = vpop.f32.mrb[0].mxu0
        %v8043 = vpop.f32.mrb[0].mxu0
        %v8044 = vadd.f32 %v7947, %v8043
        %v8045 = vpop.f32.mrb[0].mxu0
        %8046 = vmatprep.mubr.bf16.mxu0 %v7150
        %8047 = vmatmul.mubr.bf16.gmra.mrb[0].mxu0 %v7118
        %v8048 = vpop.f32.mrb[0].mxu0
        %v8049 = vadd.f32 %v7952, %v8048
        %v8050 = vpop.f32.mrb[0].mxu0
        %v8051 = vpop.f32.mrb[0].mxu0
        %v8052 = vadd.f32 %v7955, %v8051
        %v8053 = vpop.f32.mrb[0].mxu0
        %8054 = vdwg.mxu0
        %8055 = vmatprep.subr.bf16.mxu0 0
        %8056 = vmatpush1.bf16.msra.mxu0 %v7749
        %8057 = vmatprep.subr.bf16.mxu0 0
        %8058 = vmatpush1.bf16.msra.mxu0 %v7750
        %8059 = vmatprep.subr.bf16.mxu0 0
        %8060 = vmatpush1.bf16.msra.mxu0 %v7751
        %8061 = vmatprep.subr.bf16.mxu0 0
        %8062 = vmatpush1.bf16.msra.mxu0 %v7752
        %8063 = vmatprep.subr.bf16.mxu0 0
        %8064 = vmatpush1.bf16.msra.mxu0 %v7753
        %8065 = vmatprep.subr.bf16.mxu0 0
        %8066 = vmatpush1.bf16.msra.mxu0 %v7754
        %8067 = vmatprep.subr.bf16.mxu0 0
        %8068 = vmatpush1.bf16.msra.mxu0 %v7755
        %8069 = vmatprep.subr.bf16.mxu0 0
        %8070 = vmatpush1.bf16.msra.mxu0 %v7756
        %8071 = vmatprep.subr.bf16.mxu0 0
        %8072 = vmatpush1.bf16.msra.mxu0 %v7757
        %8073 = vmatprep.subr.bf16.mxu0 0
        %8074 = vmatpush1.bf16.msra.mxu0 %v7758
        %8075 = vmatprep.subr.bf16.mxu0 0
        %8076 = vmatpush1.bf16.msra.mxu0 %v7759
        %8077 = vmatprep.subr.bf16.mxu0 0
        %8078 = vmatpush1.bf16.msra.mxu0 %v7760
        %8079 = vmatprep.subr.bf16.mxu0 0
        %8080 = vmatpush1.bf16.msra.mxu0 %v7761
        %8081 = vmatprep.subr.bf16.mxu0 0
        %8082 = vmatpush1.bf16.msra.mxu0 %v7762
        %8083 = vmatprep.subr.bf16.mxu0 0
        %8084 = vmatpush1.bf16.msra.mxu0 %v7763
        %8085 = vmatprep.subr.bf16.mxu0 0
        %8086 = vmatpush1.bf16.msra.mxu0 %v7764
        %8087 = vmatprep.mubr.bf16.mxu0 %v7175
        %8088 = vmatmul.mubr.bf16.gmra.mrb[0].mxu0 %v1031
        %v8089 = vpop.f32.mrb[0].mxu0
        %v8090 = vadd.f32 %v7993, %v8089
        %v8091 = vpop.f32.mrb[0].mxu0
        %v8092 = vpop.f32.mrb[0].mxu0
        %v8093 = vadd.f32 %v7996, %v8092
        %v8094 = vpop.f32.mrb[0].mxu0
        %8095 = vmatprep.mubr.bf16.mxu0 %v7176
        %8096 = vmatmul.mubr.bf16.gmra.mrb[0].mxu0 %v1032
        %v8097 = vpop.f32.mrb[0].mxu0
        %v8098 = vadd.f32 %v8001, %v8097
        %v8099 = vpop.f32.mrb[0].mxu0
        %v8100 = vpop.f32.mrb[0].mxu0
        %v8101 = vadd.f32 %v8004, %v8100
        %v8102 = vpop.f32.mrb[0].mxu0
        %8103 = vmatprep.mubr.bf16.mxu0 %v7177
        %8104 = vmatmul.mubr.bf16.gmra.mrb[0].mxu0 %v1033
        %v8105 = vpop.f32.mrb[0].mxu0
        %v8106 = vadd.f32 %v8009, %v8105
        %v8107 = vpop.f32.mrb[0].mxu0
        %v8108 = vpop.f32.mrb[0].mxu0
        %v8109 = vadd.f32 %v8012, %v8108
        %v8110 = vpop.f32.mrb[0].mxu0
        %8111 = vmatprep.mubr.bf16.mxu0 %v7178
        %8112 = vmatmul.mubr.bf16.gmra.mrb[0].mxu0 %v1034
        %v8113 = vpop.f32.mrb[0].mxu0
        %v8114 = vadd.f32 %v8017, %v8113
        %v8115 = vpop.f32.mrb[0].mxu0
        %v8116 = vpop.f32.mrb[0].mxu0
        %v8117 = vadd.f32 %v8020, %v8116
        %v8118 = vpop.f32.mrb[0].mxu0
        %8119 = vmatprep.mubr.bf16.mxu0 %v7179
        %8120 = vmatmul.mubr.bf16.gmra.mrb[0].mxu0 %v1035
        %v8121 = vpop.f32.mrb[0].mxu0
        %v8122 = vadd.f32 %v8025, %v8121
        %v8123 = vpop.f32.mrb[0].mxu0
        %v8124 = vpop.f32.mrb[0].mxu0
        %v8125 = vadd.f32 %v8028, %v8124
        %v8126 = vpop.f32.mrb[0].mxu0
        %8127 = vmatprep.mubr.bf16.mxu0 %v7180
        %8128 = vmatmul.mubr.bf16.gmra.mrb[0].mxu0 %v1036
        %v8129 = vpop.f32.mrb[0].mxu0
        %v8130 = vadd.f32 %v8033, %v8129
        %v8131 = vpop.f32.mrb[0].mxu0
        %v8132 = vpop.f32.mrb[0].mxu0
        %v8133 = vadd.f32 %v8036, %v8132
        %v8134 = vpop.f32.mrb[0].mxu0
        %8135 = vmatprep.mubr.bf16.mxu0 %v7181
        %8136 = vmatmul.mubr.bf16.gmra.mrb[0].mxu0 %v1037
        %v8137 = vpop.f32.mrb[0].mxu0
        %v8138 = vadd.f32 %v8041, %v8137
        %v8139 = vpop.f32.mrb[0].mxu0
        %v8140 = vpop.f32.mrb[0].mxu0
        %v8141 = vadd.f32 %v8044, %v8140
        %v8142 = vpop.f32.mrb[0].mxu0
        %8143 = vmatprep.mubr.bf16.mxu0 %v7182
        %8144 = vmatmul.mubr.bf16.gmra.mrb[0].mxu0 %v1038
        %v8145 = vpop.f32.mrb[0].mxu0
        %v8146 = vadd.f32 %v8049, %v8145
        %v8147 = vpop.f32.mrb[0].mxu0
        %v8148 = vpop.f32.mrb[0].mxu0
        %v8149 = vadd.f32 %v8052, %v8148
        %v8150 = vpop.f32.mrb[0].mxu0
        %8151 = vdwg.mxu0
        %8152 = vmatprep.subr.bf16.mxu0 0
        %8153 = vmatpush1.bf16.msra.mxu0 %v7765
        %8154 = vmatprep.subr.bf16.mxu0 0
        %8155 = vmatpush1.bf16.msra.mxu0 %v7766
        %8156 = vmatprep.subr.bf16.mxu0 0
        %8157 = vmatpush1.bf16.msra.mxu0 %v7767
        %8158 = vmatprep.subr.bf16.mxu0 0
        %8159 = vmatpush1.bf16.msra.mxu0 %v7768
        %8160 = vmatprep.subr.bf16.mxu0 0
        %8161 = vmatpush1.bf16.msra.mxu0 %v7769
        %8162 = vmatprep.subr.bf16.mxu0 0
        %8163 = vmatpush1.bf16.msra.mxu0 %v7770
        %8164 = vmatprep.subr.bf16.mxu0 0
        %8165 = vmatpush1.bf16.msra.mxu0 %v7771
        %8166 = vmatprep.subr.bf16.mxu0 0
        %8167 = vmatpush1.bf16.msra.mxu0 %v7772
        %8168 = vmatprep.subr.bf16.mxu0 0
        %8169 = vmatpush1.bf16.msra.mxu0 %v7773
        %8170 = vmatprep.subr.bf16.mxu0 0
        %8171 = vmatpush1.bf16.msra.mxu0 %v7774
        %8172 = vmatprep.subr.bf16.mxu0 0
        %8173 = vmatpush1.bf16.msra.mxu0 %v7775
        %8174 = vmatprep.subr.bf16.mxu0 0
        %8175 = vmatpush1.bf16.msra.mxu0 %v7776
        %8176 = vmatprep.subr.bf16.mxu0 0
        %8177 = vmatpush1.bf16.msra.mxu0 %v7777
        %8178 = vmatprep.subr.bf16.mxu0 0
        %8179 = vmatpush1.bf16.msra.mxu0 %v7778
        %8180 = vmatprep.subr.bf16.mxu0 0
        %8181 = vmatpush1.bf16.msra.mxu0 %v7779
        %8182 = vmatprep.subr.bf16.mxu0 0
        %8183 = vmatpush1.bf16.msra.mxu0 %v7780
        %8184 = vmatprep.mubr.bf16.mxu0 %v2163
        %8185 = vmatmul.mubr.bf16.gmra.mrb[0].mxu0 %v7219
        %v8186 = vpop.f32.mrb[0].mxu0
        %v8187 = vadd.f32 %v8090, %v8186
        %v8188 = vpop.f32.mrb[0].mxu0
        %v8189 = vpop.f32.mrb[0].mxu0
        %v8190 = vadd.f32 %v8093, %v8189
        %v8191 = vpop.f32.mrb[0].mxu0
        %8192 = vmatprep.mubr.bf16.mxu0 %v7241
        %8193 = vmatmul.mubr.bf16.gmra.mrb[0].mxu0 %v7220
        %v8194 = vpop.f32.mrb[0].mxu0
        %v8195 = vadd.f32 %v8098, %v8194
        %v8196 = vpop.f32.mrb[0].mxu0
        %v8197 = vpop.f32.mrb[0].mxu0
        %v8198 = vadd.f32 %v8101, %v8197
        %v8199 = vpop.f32.mrb[0].mxu0
        %8200 = vmatprep.mubr.bf16.mxu0 %v7242
        %8201 = vmatmul.mubr.bf16.gmra.mrb[0].mxu0 %v7221
        %v8202 = vpop.f32.mrb[0].mxu0
        %v8203 = vadd.f32 %v8106, %v8202
        %v8204 = vpop.f32.mrb[0].mxu0
        %v8205 = vpop.f32.mrb[0].mxu0
        %v8206 = vadd.f32 %v8109, %v8205
        %v8207 = vpop.f32.mrb[0].mxu0
        %8208 = vmatprep.mubr.bf16.mxu0 %v7243
        %8209 = vmatmul.mubr.bf16.gmra.mrb[0].mxu0 %v7222
        %v8210 = vpop.f32.mrb[0].mxu0
        %v8211 = vadd.f32 %v8114, %v8210
        %v8212 = vpop.f32.mrb[0].mxu0
        %v8213 = vpop.f32.mrb[0].mxu0
        %v8214 = vadd.f32 %v8117, %v8213
        %v8215 = vpop.f32.mrb[0].mxu0
        %8216 = vmatprep.mubr.bf16.mxu0 %v2166
        %8217 = vmatmul.mubr.bf16.gmra.mrb[0].mxu0 %v7223
        %v8218 = vpop.f32.mrb[0].mxu0
        %v8219 = vadd.f32 %v8122, %v8218
        %v8220 = vpop.f32.mrb[0].mxu0
        %v8221 = vpop.f32.mrb[0].mxu0
        %v8222 = vadd.f32 %v8125, %v8221
        %v8223 = vpop.f32.mrb[0].mxu0
        %8224 = vmatprep.mubr.bf16.mxu0 %v7244
        %8225 = vmatmul.mubr.bf16.gmra.mrb[0].mxu0 %v7224
        %v8226 = vpop.f32.mrb[0].mxu0
        %v8227 = vadd.f32 %v8130, %v8226
        %v8228 = vpop.f32.mrb[0].mxu0
        %v8229 = vpop.f32.mrb[0].mxu0
        %v8230 = vadd.f32 %v8133, %v8229
        %v8231 = vpop.f32.mrb[0].mxu0
        %8232 = vmatprep.mubr.bf16.mxu0 %v7245
        %8233 = vmatmul.mubr.bf16.gmra.mrb[0].mxu0 %v7225
        %v8234 = vpop.f32.mrb[0].mxu0
        %v8235 = vadd.f32 %v8138, %v8234
        %v8236 = vpop.f32.mrb[0].mxu0
        %v8237 = vpop.f32.mrb[0].mxu0
        %v8238 = vadd.f32 %v8141, %v8237
        %v8239 = vpop.f32.mrb[0].mxu0
        %8240 = vmatprep.mubr.bf16.mxu0 %v7246
        %8241 = vmatmul.mubr.bf16.gmra.mrb[0].mxu0 %v7226
        %v8242 = vpop.f32.mrb[0].mxu0
        %v8243 = vadd.f32 %v8146, %v8242
        %v8244 = vpop.f32.mrb[0].mxu0
        %v8245 = vpop.f32.mrb[0].mxu0
        %v8246 = vadd.f32 %v8149, %v8245
        %v8247 = vpop.f32.mrb[0].mxu0
        %8248 = vdwg.mxu0
        %8249 = vmatprep.subr.bf16.mxu0 0
        %8250 = vmatpush1.bf16.msra.mxu0 %v7781
        %8251 = vmatprep.subr.bf16.mxu0 0
        %8252 = vmatpush1.bf16.msra.mxu0 %v7782
        %8253 = vmatprep.subr.bf16.mxu0 0
        %8254 = vmatpush1.bf16.msra.mxu0 %v7783
        %8255 = vmatprep.subr.bf16.mxu0 0
        %8256 = vmatpush1.bf16.msra.mxu0 %v7784
        %8257 = vmatprep.subr.bf16.mxu0 0
        %8258 = vmatpush1.bf16.msra.mxu0 %v7785
        %8259 = vmatprep.subr.bf16.mxu0 0
        %8260 = vmatpush1.bf16.msra.mxu0 %v7786
        %8261 = vmatprep.subr.bf16.mxu0 0
        %8262 = vmatpush1.bf16.msra.mxu0 %v7787
        %8263 = vmatprep.subr.bf16.mxu0 0
        %8264 = vmatpush1.bf16.msra.mxu0 %v7788
        %8265 = vmatprep.subr.bf16.mxu0 0
        %8266 = vmatpush1.bf16.msra.mxu0 0
        %8267 = vmatprep.subr.bf16.mxu0 0
        %8268 = vmatpush1.bf16.msra.mxu0 0
        %8269 = vmatprep.subr.bf16.mxu0 0
        %8270 = vmatpush1.bf16.msra.mxu0 0
        %8271 = vmatprep.subr.bf16.mxu0 0
        %8272 = vmatpush1.bf16.msra.mxu0 0
        %8273 = vmatprep.subr.bf16.mxu0 0
        %8274 = vmatpush1.bf16.msra.mxu0 0
        %8275 = vmatprep.subr.bf16.mxu0 0
        %8276 = vmatpush1.bf16.msra.mxu0 0
        %8277 = vmatprep.subr.bf16.mxu0 0
        %8278 = vmatpush1.bf16.msra.mxu0 0
        %8279 = vmatprep.subr.bf16.mxu0 0
        %8280 = vmatpush1.bf16.msra.mxu0 0
        %8281 = vmatprep.mubr.bf16.mxu0 0
        %8282 = vmatmul.mubr.bf16.gmra.mrb[0].mxu0 %v7269
        %v8283 = vpop.f32.mrb[0].mxu0
        %v8284 = vadd.f32 %v8187, %v8283
        %v8285 = vpop.f32.mrb[0].mxu0
        %v8286 = vpop.f32.mrb[0].mxu0
        %v8287 = vadd.f32 %v8190, %v8286
        %v8288 = vpop.f32.mrb[0].mxu0
        %8289 = vmatprep.mubr.bf16.mxu0 0
        %8290 = vmatmul.mubr.bf16.gmra.mrb[0].mxu0 %v7270
        %v8291 = vpop.f32.mrb[0].mxu0
        %v8292 = vadd.f32 %v8195, %v8291
        %v8293 = vpop.f32.mrb[0].mxu0
        %v8294 = vpop.f32.mrb[0].mxu0
        %v8295 = vadd.f32 %v8198, %v8294
        %v8296 = vpop.f32.mrb[0].mxu0
        %8297 = vmatprep.mubr.bf16.mxu0 0
        %8298 = vmatmul.mubr.bf16.gmra.mrb[0].mxu0 %v7271
        %v8299 = vpop.f32.mrb[0].mxu0
        %v8300 = vadd.f32 %v8203, %v8299
        %v8301 = vpop.f32.mrb[0].mxu0
        %v8302 = vpop.f32.mrb[0].mxu0
        %v8303 = vadd.f32 %v8206, %v8302
        %v8304 = vpop.f32.mrb[0].mxu0
        %8305 = vmatprep.mubr.bf16.mxu0 0
        %8306 = vmatmul.mubr.bf16.gmra.mrb[0].mxu0 %v7272
        %v8307 = vpop.f32.mrb[0].mxu0
        %v8308 = vadd.f32 %v8211, %v8307
        %v8309 = vpop.f32.mrb[0].mxu0
        %v8310 = vpop.f32.mrb[0].mxu0
        %v8311 = vadd.f32 %v8214, %v8310
        %v8312 = vpop.f32.mrb[0].mxu0
        %8313 = vmatprep.mubr.bf16.mxu0 0
        %8314 = vmatmul.mubr.bf16.gmra.mrb[0].mxu0 %v7273
        %v8315 = vpop.f32.mrb[0].mxu0
        %v8316 = vadd.f32 %v8219, %v8315
        %v8317 = vpop.f32.mrb[0].mxu0
        %v8318 = vpop.f32.mrb[0].mxu0
        %v8319 = vadd.f32 %v8222, %v8318
        %v8320 = vpop.f32.mrb[0].mxu0
        %8321 = vmatprep.mubr.bf16.mxu0 0
        %8322 = vmatmul.mubr.bf16.gmra.mrb[0].mxu0 %v7274
        %v8323 = vpop.f32.mrb[0].mxu0
        %v8324 = vadd.f32 %v8227, %v8323
        %v8325 = vpop.f32.mrb[0].mxu0
        %v8326 = vpop.f32.mrb[0].mxu0
        %v8327 = vadd.f32 %v8230, %v8326
        %v8328 = vpop.f32.mrb[0].mxu0
        %8329 = vmatprep.mubr.bf16.mxu0 0
        %8330 = vmatmul.mubr.bf16.gmra.mrb[0].mxu0 %v7275
        %v8331 = vpop.f32.mrb[0].mxu0
        %v8332 = vadd.f32 %v8235, %v8331
        %v8333 = vpop.f32.mrb[0].mxu0
        %v8334 = vpop.f32.mrb[0].mxu0
        %v8335 = vadd.f32 %v8238, %v8334
        %v8336 = vpop.f32.mrb[0].mxu0
        %8337 = vmatprep.mubr.bf16.mxu0 0
        %8338 = vmatmul.mubr.bf16.gmra.mrb[0].mxu0 %v7276
        %v8339 = vpop.f32.mrb[0].mxu0
        %v8340 = vadd.f32 %v8243, %v8339
        %v8341 = vpop.f32.mrb[0].mxu0
        %v8342 = vpop.f32.mrb[0].mxu0
        %v8343 = vadd.f32 %v8246, %v8342
        %v8344 = vpop.f32.mrb[0].mxu0
        %8345 = vdwg.mxu0
        %s8346 = scalar_lea.vmem [#allocation16], 3
        %v8347 = vld [vmem:[%s8346] sm:$0x1]
        %s8348 = scalar_lea.vmem [#allocation17], 3
        %v8349 = vld [vmem:[%s8348] sm:$0x1]
        %v8350 = vadd.f32 %v8284, %v8287
        %v8351 = vadd.f32 %v8350, %v8292
        %v8352 = vadd.f32 %v8351, %v8295
        %v8353 = vadd.f32 %v8352, %v8300
        %v8354 = vadd.f32 %v8353, %v8303
        %v8355 = vadd.f32 %v8354, %v8308
        %v8356 = vadd.f32 %v8355, %v8311
        %v8357 = vrot.slane %v8356, 4
        %v8358 = vadd.f32 %v8356, %v8357
        %v8359 = vrot.slane %v8358, 2
        %v8360 = vadd.f32 %v8358, %v8359
        %v8361 = vrot.slane %v8360, 1
        %v8362 = vadd.f32 %v8360, %v8361
        %v8363 = vadd.f32 %v8316, %v8319
        %v8364 = vadd.f32 %v8363, %v8324
        %v8365 = vadd.f32 %v8364, %v8327
        %v8366 = vadd.f32 %v8365, %v8332
        %v8367 = vadd.f32 %v8366, %v8335
        %v8368 = vadd.f32 %v8367, %v8340
        %v8369 = vadd.f32 %v8368, %v8343
        %v8370 = vrot.slane %v8369, 4
        %v8371 = vadd.f32 %v8369, %v8370
        %v8372 = vrot.slane %v8371, 2
        %v8373 = vadd.f32 %v8371, %v8372
        %v8374 = vrot.slane %v8373, 1
        %v8375 = vadd.f32 %v8373, %v8374
        %v8376 = vmul.f32 %v8362, %v1220
        %v8377 = vmul.f32 %v8375, %v1220
        %v8378 = vmul.f32 %v8284, %v8284
        %v8379 = vmul.f32 %v8287, %v8287
        %v8380 = vmul.f32 %v8292, %v8292
        %v8381 = vmul.f32 %v8295, %v8295
        %v8382 = vmul.f32 %v8300, %v8300
        %v8383 = vmul.f32 %v8303, %v8303
        %v8384 = vmul.f32 %v8308, %v8308
        %v8385 = vmul.f32 %v8311, %v8311
        %v8386 = vmul.f32 %v8316, %v8316
        %v8387 = vmul.f32 %v8319, %v8319
        %v8388 = vmul.f32 %v8324, %v8324
        %v8389 = vmul.f32 %v8327, %v8327
        %v8390 = vmul.f32 %v8332, %v8332
        %v8391 = vmul.f32 %v8335, %v8335
        %v8392 = vmul.f32 %v8340, %v8340
        %v8393 = vmul.f32 %v8343, %v8343
        %v8394 = vadd.f32 %v8378, %v8379
        %v8395 = vadd.f32 %v8394, %v8380
        %v8396 = vadd.f32 %v8395, %v8381
        %v8397 = vadd.f32 %v8396, %v8382
        %v8398 = vadd.f32 %v8397, %v8383
        %v8399 = vadd.f32 %v8398, %v8384
        %v8400 = vadd.f32 %v8399, %v8385
        %v8401 = vrot.slane %v8400, 4
        %v8402 = vadd.f32 %v8400, %v8401
        %v8403 = vrot.slane %v8402, 2
        %v8404 = vadd.f32 %v8402, %v8403
        %v8405 = vrot.slane %v8404, 1
        %v8406 = vadd.f32 %v8404, %v8405
        %v8407 = vadd.f32 %v8386, %v8387
        %v8408 = vadd.f32 %v8407, %v8388
        %v8409 = vadd.f32 %v8408, %v8389
        %v8410 = vadd.f32 %v8409, %v8390
        %v8411 = vadd.f32 %v8410, %v8391
        %v8412 = vadd.f32 %v8411, %v8392
        %v8413 = vadd.f32 %v8412, %v8393
        %v8414 = vrot.slane %v8413, 4
        %v8415 = vadd.f32 %v8413, %v8414
        %v8416 = vrot.slane %v8415, 2
        %v8417 = vadd.f32 %v8415, %v8416
        %v8418 = vrot.slane %v8417, 1
        %v8419 = vadd.f32 %v8417, %v8418
        %v8420 = vmul.f32 %v8406, %v1220
        %v8421 = vmul.f32 %v8419, %v1220
        %v8424 = vsel %vm1269, %v8377, %v8376
        %v8428 = vsel %vm1274, %v8421, %v8420
        %v8430 = vsel %vm1277, %v8424, %v8428
        %8431 = vmatprep.subr.mxu0 0.0
        %8432 = vmatpush1.msra.mxu0 %v552
        %8433 = vmatprep.subr.mxu0 0.0
        %8434 = vmatpush1.msra.mxu0 %v553
        %8435 = vmatprep.subr.mxu0 0.0
        %8436 = vmatpush1.msra.mxu0 %v554
        %8437 = vmatprep.subr.mxu0 0.0
        %8438 = vmatpush1.msra.mxu0 %v555
        %8439 = vmatprep.subr.mxu0 0.0
        %8440 = vmatpush1.msra.mxu0 %v556
        %8441 = vmatprep.subr.mxu0 0.0
        %8442 = vmatpush1.msra.mxu0 %v557
        %8443 = vmatprep.subr.mxu0 0.0
        %8444 = vmatpush1.msra.mxu0 %v558
        %8445 = vmatprep.subr.mxu0 0.0
        %8446 = vmatpush1.msra.mxu0 %v559
        %8447 = vmatprep.subr.mxu0 0.0
        %8448 = vmatpush1.msra.mxu0 %v560
        %8449 = vmatprep.subr.mxu0 0.0
        %8450 = vmatpush1.msra.mxu0 %v561
        %8451 = vmatprep.subr.mxu0 0.0
        %8452 = vmatpush1.msra.mxu0 %v562
        %8453 = vmatprep.subr.mxu0 0.0
        %8454 = vmatpush1.msra.mxu0 %v563
        %8455 = vmatprep.subr.mxu0 0.0
        %8456 = vmatpush1.msra.mxu0 %v564
        %8457 = vmatprep.subr.mxu0 0.0
        %8458 = vmatpush1.msra.mxu0 %v565
        %8459 = vmatprep.subr.mxu0 0.0
        %8460 = vmatpush1.msra.mxu0 %v566
        %8461 = vmatprep.subr.mxu0 0.0
        %8462 = vmatpush1.msra.mxu0 %v567
        %8463 = vmatprep.subr.mxu0 0.0
        %8464 = vmatpush1.msra.mxu0 0.0
        %8465 = vmatprep.subr.mxu0 0.0
        %8466 = vmatpush1.msra.mxu0 0.0
        %8467 = vmatprep.subr.mxu0 0.0
        %8468 = vmatpush1.msra.mxu0 0.0
        %8469 = vmatprep.subr.mxu0 0.0
        %8470 = vmatpush1.msra.mxu0 0.0
        %8471 = vmatprep.subr.mxu0 0.0
        %8472 = vmatpush1.msra.mxu0 0.0
        %8473 = vmatprep.subr.mxu0 0.0
        %8474 = vmatpush1.msra.mxu0 0.0
        %8475 = vmatprep.subr.mxu0 0.0
        %8476 = vmatpush1.msra.mxu0 0.0
        %8477 = vmatprep.subr.mxu0 0.0
        %8478 = vmatpush1.msra.mxu0 0.0
        %8479 = vmatprep.subr.mxu0 0.0
        %8480 = vmatpush1.msra.mxu0 0.0
        %8481 = vmatprep.subr.mxu0 0.0
        %8482 = vmatpush1.msra.mxu0 0.0
        %8483 = vmatprep.subr.mxu0 0.0
        %8484 = vmatpush1.msra.mxu0 0.0
        %8485 = vmatprep.subr.mxu0 0.0
        %8486 = vmatpush1.msra.mxu0 0.0
        %8487 = vmatprep.subr.mxu0 0.0
        %8488 = vmatpush1.msra.mxu0 0.0
        %8489 = vmatprep.subr.mxu0 0.0
        %8490 = vmatpush1.msra.mxu0 0.0
        %8491 = vmatprep.subr.mxu0 0.0
        %8492 = vmatpush1.msra.mxu0 0.0
        %8493 = vmatprep.subr.mxu0 0.0
        %8494 = vmatpush1.msra.mxu0 0.0
        %8495 = vmatprep.mubr.f32.mxu0 0.0
        %8496 = vmatmul.mubr.f32.gmra.mrb[0].mxu0 %v8430
        %v8497 = vpop.f32.mrb[0].mxu0
        %v8498 = vadd.f32 0.0, %v8497
        %v8499 = vpop.f32.mrb[0].mxu0
        %8500 = vdwg.mxu0
        %v8501 = vmul.f32 %v8498, %v8498
        %v8503 = vrot.slane %v8501, 6
        %v8505 = vsub.f32 %v8498, %v8503
        %v8506 = vadd.f32 %v8505, 1e-05
        %v8507 = vrsqrt.pop %v8506
        %v8509 = vlaneseq
        %v8510 = vshrl.u32 %v8509, 7
        %v8511 = vsub.s32 0, %v8510
        %v8512 = vrot.slane %v8347, %v8511
        %v8514 = vmul.f32 %v8507, %v8512
        %v8517 = vunpack.c.l.s4 1966171168
        %v8518 = vunpack.c.0.s8 %v8517
        %v8519 = vlaneseq
        %v8520 = vshrl.u32 %v8519, 7
        %v8521 = vsub.s32 %v8518, %v8520
        %v8522 = vrot.slane %v8498, %v8521
        %v8523 = vcombine.high %v8522, %v8522
        %v8525 = vunpack.c.l.s4 1966171168
        %v8526 = vunpack.c.0.s8 %v8525
        %v8527 = vlaneseq
        %v8528 = vshrl.u32 %v8527, 7
        %v8529 = vsub.s32 %v8526, %v8528
        %v8530 = vrot.slane %v8522, %v8529
        %v8532 = vunpack.c.l.s4 1966171168
        %v8533 = vunpack.c.0.s8 %v8532
        %v8534 = vlaneseq
        %v8535 = vshrl.u32 %v8534, 7
        %v8536 = vsub.s32 %v8533, %v8535
        %v8537 = vrot.slane %v8523, %v8536
        %v8538 = vlaneseq
        %v8539 = vshrl.u32 %v8538, 7
        %v8540 = vsub.s32 0, %v8539
        %v8541 = vrot.slane %v8530, %v8540
        %v8542 = vlaneseq
        %v8543 = vshrl.u32 %v8542, 7
        %v8544 = vsub.s32 0, %v8543
        %v8545 = vrot.slane %v8537, %v8544
        %v8548 = vsub.f32 %v8284, %v8541
        %v8549 = vsub.f32 %v8287, %v8541
        %v8550 = vsub.f32 %v8292, %v8541
        %v8551 = vsub.f32 %v8295, %v8541
        %v8552 = vsub.f32 %v8300, %v8541
        %v8553 = vsub.f32 %v8303, %v8541
        %v8554 = vsub.f32 %v8308, %v8541
        %v8555 = vsub.f32 %v8311, %v8541
        %v8556 = vsub.f32 %v8316, %v8545
        %v8557 = vsub.f32 %v8319, %v8545
        %v8558 = vsub.f32 %v8324, %v8545
        %v8559 = vsub.f32 %v8327, %v8545
        %v8560 = vsub.f32 %v8332, %v8545
        %v8561 = vsub.f32 %v8335, %v8545
        %v8562 = vsub.f32 %v8340, %v8545
        %v8563 = vsub.f32 %v8343, %v8545
        %v8566 = vunpack.c.l.s4 1966171168
        %v8567 = vunpack.c.0.s8 %v8566
        %v8568 = vlaneseq
        %v8569 = vshrl.u32 %v8568, 7
        %v8570 = vsub.s32 %v8567, %v8569
        %v8571 = vrot.slane %v8514, %v8570
        %v8572 = vcombine.high %v8571, %v8571
        %v8574 = vunpack.c.l.s4 1966171168
        %v8575 = vunpack.c.0.s8 %v8574
        %v8576 = vlaneseq
        %v8577 = vshrl.u32 %v8576, 7
        %v8578 = vsub.s32 %v8575, %v8577
        %v8579 = vrot.slane %v8571, %v8578
        %v8581 = vunpack.c.l.s4 1966171168
        %v8582 = vunpack.c.0.s8 %v8581
        %v8583 = vlaneseq
        %v8584 = vshrl.u32 %v8583, 7
        %v8585 = vsub.s32 %v8582, %v8584
        %v8586 = vrot.slane %v8572, %v8585
        %v8587 = vcombine.high %v8579, %v8579
        %v8588 = vcombine.high %v8586, %v8586
        %v8589 = vlaneseq
        %v8590 = vshrl.u32 %v8589, 7
        %v8591 = vsub.s32 0, %v8590
        %v8592 = vrot.slane %v8587, %v8591
        %v8593 = vlaneseq
        %v8594 = vshrl.u32 %v8593, 7
        %v8595 = vsub.s32 0, %v8594
        %v8596 = vrot.slane %v8588, %v8595
        %v8599 = vmul.f32 %v8548, %v8592
        %v8600 = vmul.f32 %v8549, %v8592
        %v8601 = vmul.f32 %v8550, %v8592
        %v8602 = vmul.f32 %v8551, %v8592
        %v8603 = vmul.f32 %v8552, %v8592
        %v8604 = vmul.f32 %v8553, %v8592
        %v8605 = vmul.f32 %v8554, %v8592
        %v8606 = vmul.f32 %v8555, %v8592
        %v8607 = vmul.f32 %v8556, %v8596
        %v8608 = vmul.f32 %v8557, %v8596
        %v8609 = vmul.f32 %v8558, %v8596
        %v8610 = vmul.f32 %v8559, %v8596
        %v8611 = vmul.f32 %v8560, %v8596
        %v8612 = vmul.f32 %v8561, %v8596
        %v8613 = vmul.f32 %v8562, %v8596
        %v8614 = vmul.f32 %v8563, %v8596
        %v8616 = vlaneseq
        %v8617 = vshrl.u32 %v8616, 7
        %v8618 = vsub.s32 0, %v8617
        %v8619 = vrot.slane %v8349, %v8618
        %v8621 = vadd.f32 %v8599, %v8619
        %v8622 = vadd.f32 %v8600, %v8619
        %v8623 = vadd.f32 %v8601, %v8619
        %v8624 = vadd.f32 %v8602, %v8619
        %v8625 = vadd.f32 %v8603, %v8619
        %v8626 = vadd.f32 %v8604, %v8619
        %v8627 = vadd.f32 %v8605, %v8619
        %v8628 = vadd.f32 %v8606, %v8619
        %v8629 = vadd.f32 %v8607, %v8619
        %v8630 = vadd.f32 %v8608, %v8619
        %v8631 = vadd.f32 %v8609, %v8619
        %v8632 = vadd.f32 %v8610, %v8619
        %v8633 = vadd.f32 %v8611, %v8619
        %v8634 = vadd.f32 %v8612, %v8619
        %v8635 = vadd.f32 %v8613, %v8619
        %v8636 = vadd.f32 %v8614, %v8619
        %v8637 = vmax.f32 %v8621, 0.0
        %v8638 = vmax.f32 %v8622, 0.0
        %v8639 = vmax.f32 %v8623, 0.0
        %v8640 = vmax.f32 %v8624, 0.0
        %v8641 = vmax.f32 %v8625, 0.0
        %v8642 = vmax.f32 %v8626, 0.0
        %v8643 = vmax.f32 %v8627, 0.0
        %v8644 = vmax.f32 %v8628, 0.0
        %v8645 = vmax.f32 %v8629, 0.0
        %v8646 = vmax.f32 %v8630, 0.0
        %v8647 = vmax.f32 %v8631, 0.0
        %v8648 = vmax.f32 %v8632, 0.0
        %v8649 = vmax.f32 %v8633, 0.0
        %v8650 = vmax.f32 %v8634, 0.0
        %v8651 = vmax.f32 %v8635, 0.0
        %v8652 = vmax.f32 %v8636, 0.0
        %v8653 = vpack.c.bf16 %v8638, %v8637
        %v8654 = vpack.c.bf16 %v8640, %v8639
        %v8655 = vpack.c.bf16 %v8642, %v8641
        %v8656 = vpack.c.bf16 %v8644, %v8643
        %v8657 = vpack.c.bf16 %v8646, %v8645
        %v8658 = vpack.c.bf16 %v8648, %v8647
        %v8659 = vpack.c.bf16 %v8650, %v8649
        %v8660 = vpack.c.bf16 %v8652, %v8651
        %s8661 = scalar_lea.vmem [#allocation14], 192
        %v8662 = vld [vmem:[%s8661] sm:$0xf]
        %v8663 = vld [vmem:[%s8661 + $0x4] sm:$0xf]
        %v8664 = vld [vmem:[%s8661 + $0x8] sm:$0xf]
        %v8665 = vld [vmem:[%s8661 + $0xc] sm:$0xf]
        %v8666 = vld [vmem:[%s8661 + $0x10] sm:$0xf]
        %v8667 = vld [vmem:[%s8661 + $0x14] sm:$0xf]
        %v8668 = vld [vmem:[%s8661 + $0x18] sm:$0xf]
        %v8669 = vld [vmem:[%s8661 + $0x1c] sm:$0xf]
        %v8670 = vld [vmem:[%s8661 + $0x20] sm:$0xf]
        %v8671 = vld [vmem:[%s8661 + $0x24] sm:$0xf]
        %v8672 = vld [vmem:[%s8661 + $0x28] sm:$0xf]
        %v8673 = vld [vmem:[%s8661 + $0x2c] sm:$0xf]
        %v8674 = vld [vmem:[%s8661 + $0x30] sm:$0xf]
        %v8675 = vld [vmem:[%s8661 + $0x34] sm:$0xf]
        %v8676 = vld [vmem:[%s8661 + $0x38] sm:$0xf]
        %v8677 = vld [vmem:[%s8661 + $0x3c] sm:$0xf]
        %v8694 = vunpack.c.l.b16 %v8662
        %v8695 = vunpack.c.l.b16 %v8663
        %v8696 = vunpack.c.l.b16 %v8664
        %v8697 = vunpack.c.l.b16 %v8665
        %v8698 = vunpack.c.l.b16 %v8666
        %v8699 = vunpack.c.l.b16 %v8667
        %v8700 = vunpack.c.l.b16 %v8668
        %v8701 = vunpack.c.l.b16 %v8669
        %v8702 = vunpack.c.l.b16 %v8670
        %v8703 = vunpack.c.l.b16 %v8671
        %v8704 = vunpack.c.l.b16 %v8672
        %v8705 = vunpack.c.l.b16 %v8673
        %v8706 = vunpack.c.l.b16 %v8674
        %v8707 = vunpack.c.l.b16 %v8675
        %v8708 = vunpack.c.l.b16 %v8676
        %v8709 = vunpack.c.l.b16 %v8677
        %v8710 = vpack.c.b16 %v8695, %v8694
        %v8711 = vpack.c.b16 %v8697, %v8696
        %v8712 = vpack.c.b16 %v8699, %v8698
        %v8713 = vpack.c.b16 %v8701, %v8700
        %v8714 = vpack.c.b16 %v8703, %v8702
        %v8715 = vpack.c.b16 %v8705, %v8704
        %v8716 = vpack.c.b16 %v8707, %v8706
        %v8717 = vpack.c.b16 %v8709, %v8708
        %8726 = vmatprep.subr.bf16.mxu0 0
        %8727 = vmatpush1.bf16.msra.mxu0 %v8710
        %8728 = vmatprep.subr.bf16.mxu0 0
        %8729 = vmatpush1.bf16.msra.mxu0 %v8711
        %8730 = vmatprep.subr.bf16.mxu0 0
        %8731 = vmatpush1.bf16.msra.mxu0 %v8712
        %8732 = vmatprep.subr.bf16.mxu0 0
        %8733 = vmatpush1.bf16.msra.mxu0 %v8713
        %8734 = vmatprep.subr.bf16.mxu0 0
        %8735 = vmatpush1.bf16.msra.mxu0 %v8714
        %8736 = vmatprep.subr.bf16.mxu0 0
        %8737 = vmatpush1.bf16.msra.mxu0 %v8715
        %8738 = vmatprep.subr.bf16.mxu0 0
        %8739 = vmatpush1.bf16.msra.mxu0 %v8716
        %8740 = vmatprep.subr.bf16.mxu0 0
        %8741 = vmatpush1.bf16.msra.mxu0 %v8717
        %8742 = vmatprep.subr.bf16.mxu0 0
        %8743 = vmatpush1.bf16.msra.mxu0 0
        %8744 = vmatprep.subr.bf16.mxu0 0
        %8745 = vmatpush1.bf16.msra.mxu0 0
        %8746 = vmatprep.subr.bf16.mxu0 0
        %8747 = vmatpush1.bf16.msra.mxu0 0
        %8748 = vmatprep.subr.bf16.mxu0 0
        %8749 = vmatpush1.bf16.msra.mxu0 0
        %8750 = vmatprep.subr.bf16.mxu0 0
        %8751 = vmatpush1.bf16.msra.mxu0 0
        %8752 = vmatprep.subr.bf16.mxu0 0
        %8753 = vmatpush1.bf16.msra.mxu0 0
        %8754 = vmatprep.subr.bf16.mxu0 0
        %8755 = vmatpush1.bf16.msra.mxu0 0
        %8756 = vmatprep.subr.bf16.mxu0 0
        %8757 = vmatpush1.bf16.msra.mxu0 0
        %8758 = vmatprep.mubr.bf16.mxu0 0
        %8759 = vmatmul.mubr.bf16.gmra.mrb[0].mxu0 %v8653
        %v8760 = vpop.f32.mrb[0].mxu0
        %v8761 = vadd.f32 0.0, %v8760
        %v8762 = vpop.f32.mrb[0].mxu0
        %v8763 = vpop.f32.mrb[0].mxu0
        %v8764 = vadd.f32 0.0, %v8763
        %v8765 = vpop.f32.mrb[0].mxu0
        %8766 = vmatprep.mubr.bf16.mxu0 0
        %8767 = vmatmul.mubr.bf16.gmra.mrb[0].mxu0 %v8654
        %v8768 = vpop.f32.mrb[0].mxu0
        %v8769 = vadd.f32 0.0, %v8768
        %v8770 = vpop.f32.mrb[0].mxu0
        %v8771 = vpop.f32.mrb[0].mxu0
        %v8772 = vadd.f32 0.0, %v8771
        %v8773 = vpop.f32.mrb[0].mxu0
        %8774 = vmatprep.mubr.bf16.mxu0 0
        %8775 = vmatmul.mubr.bf16.gmra.mrb[0].mxu0 %v8655
        %v8776 = vpop.f32.mrb[0].mxu0
        %v8777 = vadd.f32 0.0, %v8776
        %v8778 = vpop.f32.mrb[0].mxu0
        %v8779 = vpop.f32.mrb[0].mxu0
        %v8780 = vadd.f32 0.0, %v8779
        %v8781 = vpop.f32.mrb[0].mxu0
        %8782 = vmatprep.mubr.bf16.mxu0 0
        %8783 = vmatmul.mubr.bf16.gmra.mrb[0].mxu0 %v8656
        %v8784 = vpop.f32.mrb[0].mxu0
        %v8785 = vadd.f32 0.0, %v8784
        %v8786 = vpop.f32.mrb[0].mxu0
        %v8787 = vpop.f32.mrb[0].mxu0
        %v8788 = vadd.f32 0.0, %v8787
        %v8789 = vpop.f32.mrb[0].mxu0
        %8790 = vmatprep.mubr.bf16.mxu0 0
        %8791 = vmatmul.mubr.bf16.gmra.mrb[0].mxu0 %v8657
        %v8792 = vpop.f32.mrb[0].mxu0
        %v8793 = vadd.f32 0.0, %v8792
        %v8794 = vpop.f32.mrb[0].mxu0
        %v8795 = vpop.f32.mrb[0].mxu0
        %v8796 = vadd.f32 0.0, %v8795
        %v8797 = vpop.f32.mrb[0].mxu0
        %8798 = vmatprep.mubr.bf16.mxu0 0
        %8799 = vmatmul.mubr.bf16.gmra.mrb[0].mxu0 %v8658
        %v8800 = vpop.f32.mrb[0].mxu0
        %v8801 = vadd.f32 0.0, %v8800
        %v8802 = vpop.f32.mrb[0].mxu0
        %v8803 = vpop.f32.mrb[0].mxu0
        %v8804 = vadd.f32 0.0, %v8803
        %v8805 = vpop.f32.mrb[0].mxu0
        %8806 = vmatprep.mubr.bf16.mxu0 0
        %8807 = vmatmul.mubr.bf16.gmra.mrb[0].mxu0 %v8659
        %v8808 = vpop.f32.mrb[0].mxu0
        %v8809 = vadd.f32 0.0, %v8808
        %v8810 = vpop.f32.mrb[0].mxu0
        %v8811 = vpop.f32.mrb[0].mxu0
        %v8812 = vadd.f32 0.0, %v8811
        %v8813 = vpop.f32.mrb[0].mxu0
        %8814 = vmatprep.mubr.bf16.mxu0 0
        %8815 = vmatmul.mubr.bf16.gmra.mrb[0].mxu0 %v8660
        %v8816 = vpop.f32.mrb[0].mxu0
        %v8817 = vadd.f32 0.0, %v8816
        %v8818 = vpop.f32.mrb[0].mxu0
        %v8819 = vpop.f32.mrb[0].mxu0
        %v8820 = vadd.f32 0.0, %v8819
        %v8821 = vpop.f32.mrb[0].mxu0
        %8822 = vdwg.mxu0
        %v8823 = vadd.f32 %v6582, %v8761
        %v8824 = vadd.f32 %v6583, %v8764
        %v8825 = vadd.f32 %v6584, %v8769
        %v8826 = vadd.f32 %v6585, %v8772
        %v8827 = vadd.f32 %v6586, %v8777
        %v8828 = vadd.f32 %v6587, %v8780
        %v8829 = vadd.f32 %v6588, %v8785
        %v8830 = vadd.f32 %v6589, %v8788
        %v8831 = vadd.f32 %v6590, %v8793
        %v8832 = vadd.f32 %v6591, %v8796
        %v8833 = vadd.f32 %v6592, %v8801
        %v8834 = vadd.f32 %v6593, %v8804
        %v8835 = vadd.f32 %v6594, %v8809
        %v8836 = vadd.f32 %v6595, %v8812
        %v8837 = vadd.f32 %v6596, %v8817
        %v8838 = vadd.f32 %v6597, %v8820
        %v8839 = vld [vmem:[#allocation5] sm:$0x1]
        %8840 = vmatprep.subr.bf16.mxu0 0
        %8841 = vmatpush1.bf16.msra.mxu0 %v1031
        %8842 = vmatprep.subr.bf16.mxu0 0
        %8843 = vmatpush1.bf16.msra.mxu0 %v1032
        %8844 = vmatprep.subr.bf16.mxu0 0
        %8845 = vmatpush1.bf16.msra.mxu0 %v1033
        %8846 = vmatprep.subr.bf16.mxu0 0
        %8847 = vmatpush1.bf16.msra.mxu0 %v1034
        %8848 = vmatprep.subr.bf16.mxu0 0
        %8849 = vmatpush1.bf16.msra.mxu0 %v1035
        %8850 = vmatprep.subr.bf16.mxu0 0
        %8851 = vmatpush1.bf16.msra.mxu0 %v1036
        %8852 = vmatprep.subr.bf16.mxu0 0
        %8853 = vmatpush1.bf16.msra.mxu0 %v1037
        %8854 = vmatprep.subr.bf16.mxu0 0
        %8855 = vmatpush1.bf16.msra.mxu0 %v1038
        %8856 = vmatprep.subr.bf16.mxu0 0
        %8857 = vmatpush1.bf16.msra.mxu0 0
        %8858 = vmatprep.subr.bf16.mxu0 0
        %8859 = vmatpush1.bf16.msra.mxu0 0
        %8860 = vmatprep.subr.bf16.mxu0 0
        %8861 = vmatpush1.bf16.msra.mxu0 0
        %8862 = vmatprep.subr.bf16.mxu0 0
        %8863 = vmatpush1.bf16.msra.mxu0 0
        %8864 = vmatprep.subr.bf16.mxu0 0
        %8865 = vmatpush1.bf16.msra.mxu0 0
        %8866 = vmatprep.subr.bf16.mxu0 0
        %8867 = vmatpush1.bf16.msra.mxu0 0
        %8868 = vmatprep.subr.bf16.mxu0 0
        %8869 = vmatpush1.bf16.msra.mxu0 0
        %8870 = vmatprep.subr.bf16.mxu0 0
        %8871 = vmatpush1.bf16.msra.mxu0 0
        %8872 = vmatprep.mubr.bf16.mxu0 0
        %8873 = vmatmul.mubr.bf16.gmra.mrb[0].mxu0 %v8839
        %v8874 = vpop.f32.mrb[0].mxu0
        %v8875 = vadd.f32 0.0, %v8874
        %v8876 = vpop.f32.mrb[0].mxu0
        %v8877 = vpop.f32.mrb[0].mxu0
        %v8878 = vpop.f32.mrb[0].mxu0
        %8879 = vdwg.mxu0
        %v8880 = vmul.f32 %v8875, 0.015625
        %v8881 = vpack.c.bf16 %v8880, %v8880
        %v8882 = vld [vmem:[#allocation13] sm:$0xf]
        %v8883 = vld [vmem:[#allocation13 + $0x4] sm:$0xf]
        %v8884 = vld [vmem:[#allocation13 + $0x8] sm:$0xf]
        %v8885 = vld [vmem:[#allocation13 + $0xc] sm:$0xf]
        %v8886 = vld [vmem:[#allocation13 + $0x10] sm:$0xf]
        %v8887 = vld [vmem:[#allocation13 + $0x14] sm:$0xf]
        %v8888 = vld [vmem:[#allocation13 + $0x18] sm:$0xf]
        %v8889 = vld [vmem:[#allocation13 + $0x1c] sm:$0xf]
        %v8890 = vld [vmem:[#allocation13 + $0x20] sm:$0xf]
        %v8891 = vld [vmem:[#allocation13 + $0x24] sm:$0xf]
        %v8892 = vld [vmem:[#allocation13 + $0x28] sm:$0xf]
        %v8893 = vld [vmem:[#allocation13 + $0x2c] sm:$0xf]
        %v8894 = vld [vmem:[#allocation13 + $0x30] sm:$0xf]
        %v8895 = vld [vmem:[#allocation13 + $0x34] sm:$0xf]
        %v8896 = vld [vmem:[#allocation13 + $0x38] sm:$0xf]
        %v8897 = vld [vmem:[#allocation13 + $0x3c] sm:$0xf]
        %v8914 = vunpack.c.l.b16 %v8882
        %v8915 = vunpack.c.l.b16 %v8883
        %v8916 = vunpack.c.l.b16 %v8884
        %v8917 = vunpack.c.l.b16 %v8885
        %v8918 = vunpack.c.l.b16 %v8886
        %v8919 = vunpack.c.l.b16 %v8887
        %v8920 = vunpack.c.l.b16 %v8888
        %v8921 = vunpack.c.l.b16 %v8889
        %v8922 = vunpack.c.l.b16 %v8890
        %v8923 = vunpack.c.l.b16 %v8891
        %v8924 = vunpack.c.l.b16 %v8892
        %v8925 = vunpack.c.l.b16 %v8893
        %v8926 = vunpack.c.l.b16 %v8894
        %v8927 = vunpack.c.l.b16 %v8895
        %v8928 = vunpack.c.l.b16 %v8896
        %v8929 = vunpack.c.l.b16 %v8897
        %v8930 = vpack.c.b16 %v8915, %v8914
        %v8931 = vpack.c.b16 %v8917, %v8916
        %v8932 = vpack.c.b16 %v8919, %v8918
        %v8933 = vpack.c.b16 %v8921, %v8920
        %v8934 = vpack.c.b16 %v8923, %v8922
        %v8935 = vpack.c.b16 %v8925, %v8924
        %v8936 = vpack.c.b16 %v8927, %v8926
        %v8937 = vpack.c.b16 %v8929, %v8928
        %8946 = vmatprep.subr.bf16.mxu0 0
        %8947 = vmatpush1.bf16.msra.mxu0 %v8930
        %8948 = vmatprep.subr.bf16.mxu0 0
        %8949 = vmatpush1.bf16.msra.mxu0 %v8931
        %8950 = vmatprep.subr.bf16.mxu0 0
        %8951 = vmatpush1.bf16.msra.mxu0 %v8932
        %8952 = vmatprep.subr.bf16.mxu0 0
        %8953 = vmatpush1.bf16.msra.mxu0 %v8933
        %8954 = vmatprep.subr.bf16.mxu0 0
        %8955 = vmatpush1.bf16.msra.mxu0 %v8934
        %8956 = vmatprep.subr.bf16.mxu0 0
        %8957 = vmatpush1.bf16.msra.mxu0 %v8935
        %8958 = vmatprep.subr.bf16.mxu0 0
        %8959 = vmatpush1.bf16.msra.mxu0 %v8936
        %8960 = vmatprep.subr.bf16.mxu0 0
        %8961 = vmatpush1.bf16.msra.mxu0 %v8937
        %8962 = vmatprep.subr.bf16.mxu0 0
        %8963 = vmatpush1.bf16.msra.mxu0 0
        %8964 = vmatprep.subr.bf16.mxu0 0
        %8965 = vmatpush1.bf16.msra.mxu0 0
        %8966 = vmatprep.subr.bf16.mxu0 0
        %8967 = vmatpush1.bf16.msra.mxu0 0
        %8968 = vmatprep.subr.bf16.mxu0 0
        %8969 = vmatpush1.bf16.msra.mxu0 0
        %8970 = vmatprep.subr.bf16.mxu0 0
        %8971 = vmatpush1.bf16.msra.mxu0 0
        %8972 = vmatprep.subr.bf16.mxu0 0
        %8973 = vmatpush1.bf16.msra.mxu0 0
        %8974 = vmatprep.subr.bf16.mxu0 0
        %8975 = vmatpush1.bf16.msra.mxu0 0
        %8976 = vmatprep.subr.bf16.mxu0 0
        %8977 = vmatpush1.bf16.msra.mxu0 0
        %8978 = vmatprep.mubr.bf16.mxu0 0
        %8979 = vmatmul.mubr.bf16.gmra.mrb[0].mxu0 %v8881
        %v8980 = vpop.f32.mrb[0].mxu0
        %v8981 = vadd.f32 0.0, %v8980
        %v8982 = vpop.f32.mrb[0].mxu0
        %v8983 = vpop.f32.mrb[0].mxu0
        %v8984 = vpop.f32.mrb[0].mxu0
        %8985 = vdwg.mxu0
        %v8988 = vunpack.c.l.s4 1966171168
        %v8989 = vunpack.c.0.s8 %v8988
        %v8990 = vlaneseq
        %v8991 = vshrl.u32 %v8990, 7
        %v8992 = vsub.s32 %v8989, %v8991
        %v8993 = vrot.slane %v8981, %v8992
        %v8994 = vcombine.high %v8993, %v8993
        %v8996 = vunpack.c.l.s4 1966171168
        %v8997 = vunpack.c.0.s8 %v8996
        %v8998 = vlaneseq
        %v8999 = vshrl.u32 %v8998, 7
        %v9000 = vsub.s32 %v8997, %v8999
        %v9001 = vrot.slane %v8993, %v9000
        %v9003 = vunpack.c.l.s4 1966171168
        %v9004 = vunpack.c.0.s8 %v9003
        %v9005 = vlaneseq
        %v9006 = vshrl.u32 %v9005, 7
        %v9007 = vsub.s32 %v9004, %v9006
        %v9008 = vrot.slane %v8994, %v9007
        %s9011 = scalar_lea.vmem [#allocation16], 4
        %v9012 = vld [vmem:[%s9011] sm:$0x1]
        %s9013 = scalar_lea.vmem [#allocation17], 4
        %v9014 = vld [vmem:[%s9013] sm:$0x1]
        %v9015 = vadd.f32 %v8981, 0.0
        %v9016 = vmul.f32 %v9001, %v9001
        %v9017 = vmul.f32 %v9008, %v9008
        %v9018 = vadd.f32 %v9016, 0.0
        %v9019 = vadd.f32 %v9017, 0.0
        %v9022 = vcombine.low %v9018, %v9019
        %v9024 = vunpack.c.l.s4 1966171168
        %v9025 = vunpack.c.0.s8 %v9024
        %v9026 = vlaneseq
        %v9027 = vshrl.u32 %v9026, 7
        %v9028 = vsub.s32 %v9025, %v9027
        %v9029 = vrot.slane %v9022, %v9028
        %v9030 = vcombine.low %v9029, %v9029
        %v9032 = vunpack.c.l.s4 1966171168
        %v9033 = vunpack.c.0.s8 %v9032
        %v9034 = vlaneseq
        %v9035 = vshrl.u32 %v9034, 7
        %v9036 = vsub.s32 %v9033, %v9035
        %v9037 = vrot.slane %v9030, %v9036
        %v9039 = vsel %vm1277, %v9015, %v9037
        %9040 = vmatprep.subr.mxu0 0.0
        %9041 = vmatpush1.msra.mxu0 %v552
        %9042 = vmatprep.subr.mxu0 0.0
        %9043 = vmatpush1.msra.mxu0 %v553
        %9044 = vmatprep.subr.mxu0 0.0
        %9045 = vmatpush1.msra.mxu0 %v554
        %9046 = vmatprep.subr.mxu0 0.0
        %9047 = vmatpush1.msra.mxu0 %v555
        %9048 = vmatprep.subr.mxu0 0.0
        %9049 = vmatpush1.msra.mxu0 %v556
        %9050 = vmatprep.subr.mxu0 0.0
        %9051 = vmatpush1.msra.mxu0 %v557
        %9052 = vmatprep.subr.mxu0 0.0
        %9053 = vmatpush1.msra.mxu0 %v558
        %9054 = vmatprep.subr.mxu0 0.0
        %9055 = vmatpush1.msra.mxu0 %v559
        %9056 = vmatprep.subr.mxu0 0.0
        %9057 = vmatpush1.msra.mxu0 %v560
        %9058 = vmatprep.subr.mxu0 0.0
        %9059 = vmatpush1.msra.mxu0 %v561
        %9060 = vmatprep.subr.mxu0 0.0
        %9061 = vmatpush1.msra.mxu0 %v562
        %9062 = vmatprep.subr.mxu0 0.0
        %9063 = vmatpush1.msra.mxu0 %v563
        %9064 = vmatprep.subr.mxu0 0.0
        %9065 = vmatpush1.msra.mxu0 %v564
        %9066 = vmatprep.subr.mxu0 0.0
        %9067 = vmatpush1.msra.mxu0 %v565
        %9068 = vmatprep.subr.mxu0 0.0
        %9069 = vmatpush1.msra.mxu0 %v566
        %9070 = vmatprep.subr.mxu0 0.0
        %9071 = vmatpush1.msra.mxu0 %v567
        %9072 = vmatprep.subr.mxu0 0.0
        %9073 = vmatpush1.msra.mxu0 0.0
        %9074 = vmatprep.subr.mxu0 0.0
        %9075 = vmatpush1.msra.mxu0 0.0
        %9076 = vmatprep.subr.mxu0 0.0
        %9077 = vmatpush1.msra.mxu0 0.0
        %9078 = vmatprep.subr.mxu0 0.0
        %9079 = vmatpush1.msra.mxu0 0.0
        %9080 = vmatprep.subr.mxu0 0.0
        %9081 = vmatpush1.msra.mxu0 0.0
        %9082 = vmatprep.subr.mxu0 0.0
        %9083 = vmatpush1.msra.mxu0 0.0
        %9084 = vmatprep.subr.mxu0 0.0
        %9085 = vmatpush1.msra.mxu0 0.0
        %9086 = vmatprep.subr.mxu0 0.0
        %9087 = vmatpush1.msra.mxu0 0.0
        %9088 = vmatprep.subr.mxu0 0.0
        %9089 = vmatpush1.msra.mxu0 0.0
        %9090 = vmatprep.subr.mxu0 0.0
        %9091 = vmatpush1.msra.mxu0 0.0
        %9092 = vmatprep.subr.mxu0 0.0
        %9093 = vmatpush1.msra.mxu0 0.0
        %9094 = vmatprep.subr.mxu0 0.0
        %9095 = vmatpush1.msra.mxu0 0.0
        %9096 = vmatprep.subr.mxu0 0.0
        %9097 = vmatpush1.msra.mxu0 0.0
        %9098 = vmatprep.subr.mxu0 0.0
        %9099 = vmatpush1.msra.mxu0 0.0
        %9100 = vmatprep.subr.mxu0 0.0
        %9101 = vmatpush1.msra.mxu0 0.0
        %9102 = vmatprep.subr.mxu0 0.0
        %9103 = vmatpush1.msra.mxu0 0.0
        %9104 = vmatprep.mubr.f32.mxu0 0.0
        %9105 = vmatmul.mubr.f32.gmra.mrb[0].mxu0 %v9039
        %v9106 = vpop.f32.mrb[0].mxu0
        %v9107 = vadd.f32 0.0, %v9106
        %v9108 = vpop.f32.mrb[0].mxu0
        %9109 = vdwg.mxu0
        %v9110 = vmul.f32 %v9107, %v9107
        %v9112 = vrot.slane %v9110, 6
        %v9114 = vsub.f32 %v9107, %v9112
        %v9115 = vadd.f32 %v9114, 1e-05
        %v9116 = vrsqrt.pop %v9115
        %v9118 = vlaneseq
        %v9119 = vshrl.u32 %v9118, 7
        %v9120 = vsub.s32 0, %v9119
        %v9121 = vrot.slane %v9012, %v9120
        %v9123 = vmul.f32 %v9116, %v9121
        %v9126 = vunpack.c.l.s4 1966171168
        %v9127 = vunpack.c.0.s8 %v9126
        %v9128 = vlaneseq
        %v9129 = vshrl.u32 %v9128, 7
        %v9130 = vsub.s32 %v9127, %v9129
        %v9131 = vrot.slane %v9107, %v9130
        %v9132 = vcombine.high %v9131, %v9131
        %v9134 = vunpack.c.l.s4 1966171168
        %v9135 = vunpack.c.0.s8 %v9134
        %v9136 = vlaneseq
        %v9137 = vshrl.u32 %v9136, 7
        %v9138 = vsub.s32 %v9135, %v9137
        %v9139 = vrot.slane %v9131, %v9138
        %v9141 = vunpack.c.l.s4 1966171168
        %v9142 = vunpack.c.0.s8 %v9141
        %v9143 = vlaneseq
        %v9144 = vshrl.u32 %v9143, 7
        %v9145 = vsub.s32 %v9142, %v9144
        %v9146 = vrot.slane %v9132, %v9145
        %v9149 = vsub.f32 %v9001, %v9139
        %v9150 = vsub.f32 %v9008, %v9146
        %v9153 = vunpack.c.l.s4 1966171168
        %v9154 = vunpack.c.0.s8 %v9153
        %v9155 = vlaneseq
        %v9156 = vshrl.u32 %v9155, 7
        %v9157 = vsub.s32 %v9154, %v9156
        %v9158 = vrot.slane %v9123, %v9157
        %v9159 = vcombine.high %v9158, %v9158
        %v9161 = vunpack.c.l.s4 1966171168
        %v9162 = vunpack.c.0.s8 %v9161
        %v9163 = vlaneseq
        %v9164 = vshrl.u32 %v9163, 7
        %v9165 = vsub.s32 %v9162, %v9164
        %v9166 = vrot.slane %v9158, %v9165
        %v9168 = vunpack.c.l.s4 1966171168
        %v9169 = vunpack.c.0.s8 %v9168
        %v9170 = vlaneseq
        %v9171 = vshrl.u32 %v9170, 7
        %v9172 = vsub.s32 %v9169, %v9171
        %v9173 = vrot.slane %v9159, %v9172
        %v9174 = vcombine.high %v9166, %v9166
        %v9175 = vcombine.high %v9173, %v9173
        %v9178 = vmul.f32 %v9149, %v9174
        %v9179 = vmul.f32 %v9150, %v9175
        %v9180 = vadd.f32 %v9178, %v9014
        %v9181 = vadd.f32 %v9179, %v9014
        %v9182 = vmax.f32 %v9180, 0.0
        %v9183 = vmax.f32 %v9181, 0.0
        %v9184 = vpack.c.bf16 %v9182, %v9182
        %v9185 = vpack.c.bf16 %v9183, %v9183
        %s9186 = scalar_lea.vmem [#allocation14], 256
        %v9187 = vld [vmem:[%s9186] sm:$0xf]
        %v9188 = vld [vmem:[%s9186 + $0x4] sm:$0xf]
        %v9189 = vld [vmem:[%s9186 + $0x8] sm:$0xf]
        %v9190 = vld [vmem:[%s9186 + $0xc] sm:$0xf]
        %v9191 = vld [vmem:[%s9186 + $0x10] sm:$0xf]
        %v9192 = vld [vmem:[%s9186 + $0x14] sm:$0xf]
        %v9193 = vld [vmem:[%s9186 + $0x18] sm:$0xf]
        %v9194 = vld [vmem:[%s9186 + $0x1c] sm:$0xf]
        %v9195 = vld [vmem:[%s9186 + $0x20] sm:$0xf]
        %v9196 = vld [vmem:[%s9186 + $0x24] sm:$0xf]
        %v9197 = vld [vmem:[%s9186 + $0x28] sm:$0xf]
        %v9198 = vld [vmem:[%s9186 + $0x2c] sm:$0xf]
        %v9199 = vld [vmem:[%s9186 + $0x30] sm:$0xf]
        %v9200 = vld [vmem:[%s9186 + $0x34] sm:$0xf]
        %v9201 = vld [vmem:[%s9186 + $0x38] sm:$0xf]
        %v9202 = vld [vmem:[%s9186 + $0x3c] sm:$0xf]
        %v9205 = vunpack.c.l.b16 %v9184
        %v9206 = vunpack.c.l.b16 %v9185
        %v9207 = vrot.slane %v9206, 7
        %v9208 = vsel %vm1269, %v9207, %v9205
        %v9209 = vpack.c.b16 %v9208, %v9208
        %v9227 = vunpack.c.l.b16 %v9187
        %v9228 = vunpack.c.l.b16 %v9188
        %v9229 = vunpack.c.l.b16 %v9189
        %v9230 = vunpack.c.l.b16 %v9190
        %v9231 = vunpack.c.l.b16 %v9191
        %v9232 = vunpack.c.l.b16 %v9192
        %v9233 = vunpack.c.l.b16 %v9193
        %v9234 = vunpack.c.l.b16 %v9194
        %v9235 = vunpack.c.l.b16 %v9195
        %v9236 = vunpack.c.l.b16 %v9196
        %v9237 = vunpack.c.l.b16 %v9197
        %v9238 = vunpack.c.l.b16 %v9198
        %v9239 = vunpack.c.l.b16 %v9199
        %v9240 = vunpack.c.l.b16 %v9200
        %v9241 = vunpack.c.l.b16 %v9201
        %v9242 = vunpack.c.l.b16 %v9202
        %v9243 = vpack.c.b16 %v9228, %v9227
        %v9244 = vpack.c.b16 %v9230, %v9229
        %v9245 = vpack.c.b16 %v9232, %v9231
        %v9246 = vpack.c.b16 %v9234, %v9233
        %v9247 = vpack.c.b16 %v9236, %v9235
        %v9248 = vpack.c.b16 %v9238, %v9237
        %v9249 = vpack.c.b16 %v9240, %v9239
        %v9250 = vpack.c.b16 %v9242, %v9241
        %9259 = vmatprep.subr.bf16.mxu0 0
        %9260 = vmatpush1.bf16.msra.mxu0 %v9243
        %9261 = vmatprep.subr.bf16.mxu0 0
        %9262 = vmatpush1.bf16.msra.mxu0 %v9244
        %9263 = vmatprep.subr.bf16.mxu0 0
        %9264 = vmatpush1.bf16.msra.mxu0 %v9245
        %9265 = vmatprep.subr.bf16.mxu0 0
        %9266 = vmatpush1.bf16.msra.mxu0 %v9246
        %9267 = vmatprep.subr.bf16.mxu0 0
        %9268 = vmatpush1.bf16.msra.mxu0 %v9247
        %9269 = vmatprep.subr.bf16.mxu0 0
        %9270 = vmatpush1.bf16.msra.mxu0 %v9248
        %9271 = vmatprep.subr.bf16.mxu0 0
        %9272 = vmatpush1.bf16.msra.mxu0 %v9249
        %9273 = vmatprep.subr.bf16.mxu0 0
        %9274 = vmatpush1.bf16.msra.mxu0 %v9250
        %9275 = vmatprep.subr.bf16.mxu0 0
        %9276 = vmatpush1.bf16.msra.mxu0 0
        %9277 = vmatprep.subr.bf16.mxu0 0
        %9278 = vmatpush1.bf16.msra.mxu0 0
        %9279 = vmatprep.subr.bf16.mxu0 0
        %9280 = vmatpush1.bf16.msra.mxu0 0
        %9281 = vmatprep.subr.bf16.mxu0 0
        %9282 = vmatpush1.bf16.msra.mxu0 0
        %9283 = vmatprep.subr.bf16.mxu0 0
        %9284 = vmatpush1.bf16.msra.mxu0 0
        %9285 = vmatprep.subr.bf16.mxu0 0
        %9286 = vmatpush1.bf16.msra.mxu0 0
        %9287 = vmatprep.subr.bf16.mxu0 0
        %9288 = vmatpush1.bf16.msra.mxu0 0
        %9289 = vmatprep.subr.bf16.mxu0 0
        %9290 = vmatpush1.bf16.msra.mxu0 0
        %9291 = vmatprep.mubr.bf16.mxu0 0
        %9292 = vmatmul.mubr.bf16.gmra.mrb[0].mxu0 %v9209
        %v9293 = vpop.f32.mrb[0].mxu0
        %v9294 = vadd.f32 0.0, %v9293
        %v9295 = vpop.f32.mrb[0].mxu0
        %v9296 = vpop.f32.mrb[0].mxu0
        %v9297 = vpop.f32.mrb[0].mxu0
        %9298 = vdwg.mxu0
        %v9301 = vunpack.c.l.s4 1966171168
        %v9302 = vunpack.c.0.s8 %v9301
        %v9303 = vlaneseq
        %v9304 = vshrl.u32 %v9303, 7
        %v9305 = vsub.s32 %v9302, %v9304
        %v9306 = vrot.slane %v9294, %v9305
        %v9307 = vcombine.high %v9306, %v9306
        %v9309 = vunpack.c.l.s4 1966171168
        %v9310 = vunpack.c.0.s8 %v9309
        %v9311 = vlaneseq
        %v9312 = vshrl.u32 %v9311, 7
        %v9313 = vsub.s32 %v9310, %v9312
        %v9314 = vrot.slane %v9306, %v9313
        %v9316 = vunpack.c.l.s4 1966171168
        %v9317 = vunpack.c.0.s8 %v9316
        %v9318 = vlaneseq
        %v9319 = vshrl.u32 %v9318, 7
        %v9320 = vsub.s32 %v9317, %v9319
        %v9321 = vrot.slane %v9307, %v9320
        %v9322 = vlaneseq
        %v9323 = vshrl.u32 %v9322, 7
        %v9324 = vsub.s32 0, %v9323
        %v9325 = vrot.slane %v9314, %v9324
        %v9326 = vlaneseq
        %v9327 = vshrl.u32 %v9326, 7
        %v9328 = vsub.s32 0, %v9327
        %v9329 = vrot.slane %v9321, %v9328
        %v9332 = vadd.f32 %v8823, %v9325
        %v9333 = vadd.f32 %v8824, %v9325
        %v9334 = vadd.f32 %v8825, %v9325
        %v9335 = vadd.f32 %v8826, %v9325
        %v9336 = vadd.f32 %v8827, %v9325
        %v9337 = vadd.f32 %v8828, %v9325
        %v9338 = vadd.f32 %v8829, %v9325
        %v9339 = vadd.f32 %v8830, %v9325
        %v9340 = vadd.f32 %v8831, %v9329
        %v9341 = vadd.f32 %v8832, %v9329
        %v9342 = vadd.f32 %v8833, %v9329
        %v9343 = vadd.f32 %v8834, %v9329
        %v9344 = vadd.f32 %v8835, %v9329
        %v9345 = vadd.f32 %v8836, %v9329
        %v9346 = vadd.f32 %v8837, %v9329
        %v9347 = vadd.f32 %v8838, %v9329
        %s9348 = scalar_lea.vmem [#allocation16], 5
        %v9349 = vld [vmem:[%s9348] sm:$0x1]
        %s9350 = scalar_lea.vmem [#allocation17], 5
        %v9351 = vld [vmem:[%s9350] sm:$0x1]
        %v9352 = vadd.f32 %v9332, %v9333
        %v9353 = vadd.f32 %v9352, %v9334
        %v9354 = vadd.f32 %v9353, %v9335
        %v9355 = vadd.f32 %v9354, %v9336
        %v9356 = vadd.f32 %v9355, %v9337
        %v9357 = vadd.f32 %v9356, %v9338
        %v9358 = vadd.f32 %v9357, %v9339
        %v9359 = vrot.slane %v9358, 4
        %v9360 = vadd.f32 %v9358, %v9359
        %v9361 = vrot.slane %v9360, 2
        %v9362 = vadd.f32 %v9360, %v9361
        %v9363 = vrot.slane %v9362, 1
        %v9364 = vadd.f32 %v9362, %v9363
        %v9365 = vadd.f32 %v9340, %v9341
        %v9366 = vadd.f32 %v9365, %v9342
        %v9367 = vadd.f32 %v9366, %v9343
        %v9368 = vadd.f32 %v9367, %v9344
        %v9369 = vadd.f32 %v9368, %v9345
        %v9370 = vadd.f32 %v9369, %v9346
        %v9371 = vadd.f32 %v9370, %v9347
        %v9372 = vrot.slane %v9371, 4
        %v9373 = vadd.f32 %v9371, %v9372
        %v9374 = vrot.slane %v9373, 2
        %v9375 = vadd.f32 %v9373, %v9374
        %v9376 = vrot.slane %v9375, 1
        %v9377 = vadd.f32 %v9375, %v9376
        %v9378 = vmul.f32 %v9364, %v1220
        %v9379 = vmul.f32 %v9377, %v1220
        %v9380 = vmul.f32 %v9332, %v9332
        %v9381 = vmul.f32 %v9333, %v9333
        %v9382 = vmul.f32 %v9334, %v9334
        %v9383 = vmul.f32 %v9335, %v9335
        %v9384 = vmul.f32 %v9336, %v9336
        %v9385 = vmul.f32 %v9337, %v9337
        %v9386 = vmul.f32 %v9338, %v9338
        %v9387 = vmul.f32 %v9339, %v9339
        %v9388 = vmul.f32 %v9340, %v9340
        %v9389 = vmul.f32 %v9341, %v9341
        %v9390 = vmul.f32 %v9342, %v9342
        %v9391 = vmul.f32 %v9343, %v9343
        %v9392 = vmul.f32 %v9344, %v9344
        %v9393 = vmul.f32 %v9345, %v9345
        %v9394 = vmul.f32 %v9346, %v9346
        %v9395 = vmul.f32 %v9347, %v9347
        %v9396 = vadd.f32 %v9380, %v9381
        %v9397 = vadd.f32 %v9396, %v9382
        %v9398 = vadd.f32 %v9397, %v9383
        %v9399 = vadd.f32 %v9398, %v9384
        %v9400 = vadd.f32 %v9399, %v9385
        %v9401 = vadd.f32 %v9400, %v9386
        %v9402 = vadd.f32 %v9401, %v9387
        %v9403 = vrot.slane %v9402, 4
        %v9404 = vadd.f32 %v9402, %v9403
        %v9405 = vrot.slane %v9404, 2
        %v9406 = vadd.f32 %v9404, %v9405
        %v9407 = vrot.slane %v9406, 1
        %v9408 = vadd.f32 %v9406, %v9407
        %v9409 = vadd.f32 %v9388, %v9389
        %v9410 = vadd.f32 %v9409, %v9390
        %v9411 = vadd.f32 %v9410, %v9391
        %v9412 = vadd.f32 %v9411, %v9392
        %v9413 = vadd.f32 %v9412, %v9393
        %v9414 = vadd.f32 %v9413, %v9394
        %v9415 = vadd.f32 %v9414, %v9395
        %v9416 = vrot.slane %v9415, 4
        %v9417 = vadd.f32 %v9415, %v9416
        %v9418 = vrot.slane %v9417, 2
        %v9419 = vadd.f32 %v9417, %v9418
        %v9420 = vrot.slane %v9419, 1
        %v9421 = vadd.f32 %v9419, %v9420
        %v9422 = vmul.f32 %v9408, %v1220
        %v9423 = vmul.f32 %v9421, %v1220
        %v9426 = vsel %vm1269, %v9379, %v9378
        %v9430 = vsel %vm1274, %v9423, %v9422
        %v9432 = vsel %vm1277, %v9426, %v9430
        %9433 = vmatprep.subr.mxu0 0.0
        %9434 = vmatpush1.msra.mxu0 %v552
        %9435 = vmatprep.subr.mxu0 0.0
        %9436 = vmatpush1.msra.mxu0 %v553
        %9437 = vmatprep.subr.mxu0 0.0
        %9438 = vmatpush1.msra.mxu0 %v554
        %9439 = vmatprep.subr.mxu0 0.0
        %9440 = vmatpush1.msra.mxu0 %v555
        %9441 = vmatprep.subr.mxu0 0.0
        %9442 = vmatpush1.msra.mxu0 %v556
        %9443 = vmatprep.subr.mxu0 0.0
        %9444 = vmatpush1.msra.mxu0 %v557
        %9445 = vmatprep.subr.mxu0 0.0
        %9446 = vmatpush1.msra.mxu0 %v558
        %9447 = vmatprep.subr.mxu0 0.0
        %9448 = vmatpush1.msra.mxu0 %v559
        %9449 = vmatprep.subr.mxu0 0.0
        %9450 = vmatpush1.msra.mxu0 %v560
        %9451 = vmatprep.subr.mxu0 0.0
        %9452 = vmatpush1.msra.mxu0 %v561
        %9453 = vmatprep.subr.mxu0 0.0
        %9454 = vmatpush1.msra.mxu0 %v562
        %9455 = vmatprep.subr.mxu0 0.0
        %9456 = vmatpush1.msra.mxu0 %v563
        %9457 = vmatprep.subr.mxu0 0.0
        %9458 = vmatpush1.msra.mxu0 %v564
        %9459 = vmatprep.subr.mxu0 0.0
        %9460 = vmatpush1.msra.mxu0 %v565
        %9461 = vmatprep.subr.mxu0 0.0
        %9462 = vmatpush1.msra.mxu0 %v566
        %9463 = vmatprep.subr.mxu0 0.0
        %9464 = vmatpush1.msra.mxu0 %v567
        %9465 = vmatprep.subr.mxu0 0.0
        %9466 = vmatpush1.msra.mxu0 0.0
        %9467 = vmatprep.subr.mxu0 0.0
        %9468 = vmatpush1.msra.mxu0 0.0
        %9469 = vmatprep.subr.mxu0 0.0
        %9470 = vmatpush1.msra.mxu0 0.0
        %9471 = vmatprep.subr.mxu0 0.0
        %9472 = vmatpush1.msra.mxu0 0.0
        %9473 = vmatprep.subr.mxu0 0.0
        %9474 = vmatpush1.msra.mxu0 0.0
        %9475 = vmatprep.subr.mxu0 0.0
        %9476 = vmatpush1.msra.mxu0 0.0
        %9477 = vmatprep.subr.mxu0 0.0
        %9478 = vmatpush1.msra.mxu0 0.0
        %9479 = vmatprep.subr.mxu0 0.0
        %9480 = vmatpush1.msra.mxu0 0.0
        %9481 = vmatprep.subr.mxu0 0.0
        %9482 = vmatpush1.msra.mxu0 0.0
        %9483 = vmatprep.subr.mxu0 0.0
        %9484 = vmatpush1.msra.mxu0 0.0
        %9485 = vmatprep.subr.mxu0 0.0
        %9486 = vmatpush1.msra.mxu0 0.0
        %9487 = vmatprep.subr.mxu0 0.0
        %9488 = vmatpush1.msra.mxu0 0.0
        %9489 = vmatprep.subr.mxu0 0.0
        %9490 = vmatpush1.msra.mxu0 0.0
        %9491 = vmatprep.subr.mxu0 0.0
        %9492 = vmatpush1.msra.mxu0 0.0
        %9493 = vmatprep.subr.mxu0 0.0
        %9494 = vmatpush1.msra.mxu0 0.0
        %9495 = vmatprep.subr.mxu0 0.0
        %9496 = vmatpush1.msra.mxu0 0.0
        %9497 = vmatprep.mubr.f32.mxu0 0.0
        %9498 = vmatmul.mubr.f32.gmra.mrb[0].mxu0 %v9432
        %v9499 = vpop.f32.mrb[0].mxu0
        %v9500 = vadd.f32 0.0, %v9499
        %v9501 = vpop.f32.mrb[0].mxu0
        %9502 = vdwg.mxu0
        %v9503 = vmul.f32 %v9500, %v9500
        %v9505 = vrot.slane %v9503, 6
        %v9507 = vsub.f32 %v9500, %v9505
        %v9508 = vadd.f32 %v9507, 1e-05
        %v9509 = vrsqrt.pop %v9508
        %v9511 = vlaneseq
        %v9512 = vshrl.u32 %v9511, 7
        %v9513 = vsub.s32 0, %v9512
        %v9514 = vrot.slane %v9349, %v9513
        %v9516 = vmul.f32 %v9509, %v9514
        %v9519 = vunpack.c.l.s4 1966171168
        %v9520 = vunpack.c.0.s8 %v9519
        %v9521 = vlaneseq
        %v9522 = vshrl.u32 %v9521, 7
        %v9523 = vsub.s32 %v9520, %v9522
        %v9524 = vrot.slane %v9500, %v9523
        %v9525 = vcombine.high %v9524, %v9524
        %v9527 = vunpack.c.l.s4 1966171168
        %v9528 = vunpack.c.0.s8 %v9527
        %v9529 = vlaneseq
        %v9530 = vshrl.u32 %v9529, 7
        %v9531 = vsub.s32 %v9528, %v9530
        %v9532 = vrot.slane %v9524, %v9531
        %v9534 = vunpack.c.l.s4 1966171168
        %v9535 = vunpack.c.0.s8 %v9534
        %v9536 = vlaneseq
        %v9537 = vshrl.u32 %v9536, 7
        %v9538 = vsub.s32 %v9535, %v9537
        %v9539 = vrot.slane %v9525, %v9538
        %v9540 = vlaneseq
        %v9541 = vshrl.u32 %v9540, 7
        %v9542 = vsub.s32 0, %v9541
        %v9543 = vrot.slane %v9532, %v9542
        %v9544 = vlaneseq
        %v9545 = vshrl.u32 %v9544, 7
        %v9546 = vsub.s32 0, %v9545
        %v9547 = vrot.slane %v9539, %v9546
        %v9550 = vsub.f32 %v9332, %v9543
        %v9551 = vsub.f32 %v9333, %v9543
        %v9552 = vsub.f32 %v9334, %v9543
        %v9553 = vsub.f32 %v9335, %v9543
        %v9554 = vsub.f32 %v9336, %v9543
        %v9555 = vsub.f32 %v9337, %v9543
        %v9556 = vsub.f32 %v9338, %v9543
        %v9557 = vsub.f32 %v9339, %v9543
        %v9558 = vsub.f32 %v9340, %v9547
        %v9559 = vsub.f32 %v9341, %v9547
        %v9560 = vsub.f32 %v9342, %v9547
        %v9561 = vsub.f32 %v9343, %v9547
        %v9562 = vsub.f32 %v9344, %v9547
        %v9563 = vsub.f32 %v9345, %v9547
        %v9564 = vsub.f32 %v9346, %v9547
        %v9565 = vsub.f32 %v9347, %v9547
        %v9568 = vunpack.c.l.s4 1966171168
        %v9569 = vunpack.c.0.s8 %v9568
        %v9570 = vlaneseq
        %v9571 = vshrl.u32 %v9570, 7
        %v9572 = vsub.s32 %v9569, %v9571
        %v9573 = vrot.slane %v9516, %v9572
        %v9574 = vcombine.high %v9573, %v9573
        %v9576 = vunpack.c.l.s4 1966171168
        %v9577 = vunpack.c.0.s8 %v9576
        %v9578 = vlaneseq
        %v9579 = vshrl.u32 %v9578, 7
        %v9580 = vsub.s32 %v9577, %v9579
        %v9581 = vrot.slane %v9573, %v9580
        %v9583 = vunpack.c.l.s4 1966171168
        %v9584 = vunpack.c.0.s8 %v9583
        %v9585 = vlaneseq
        %v9586 = vshrl.u32 %v9585, 7
        %v9587 = vsub.s32 %v9584, %v9586
        %v9588 = vrot.slane %v9574, %v9587
        %v9589 = vcombine.high %v9581, %v9581
        %v9590 = vcombine.high %v9588, %v9588
        %v9591 = vlaneseq
        %v9592 = vshrl.u32 %v9591, 7
        %v9593 = vsub.s32 0, %v9592
        %v9594 = vrot.slane %v9589, %v9593
        %v9595 = vlaneseq
        %v9596 = vshrl.u32 %v9595, 7
        %v9597 = vsub.s32 0, %v9596
        %v9598 = vrot.slane %v9590, %v9597
        %v9601 = vmul.f32 %v9550, %v9594
        %v9602 = vmul.f32 %v9551, %v9594
        %v9603 = vmul.f32 %v9552, %v9594
        %v9604 = vmul.f32 %v9553, %v9594
        %v9605 = vmul.f32 %v9554, %v9594
        %v9606 = vmul.f32 %v9555, %v9594
        %v9607 = vmul.f32 %v9556, %v9594
        %v9608 = vmul.f32 %v9557, %v9594
        %v9609 = vmul.f32 %v9558, %v9598
        %v9610 = vmul.f32 %v9559, %v9598
        %v9611 = vmul.f32 %v9560, %v9598
        %v9612 = vmul.f32 %v9561, %v9598
        %v9613 = vmul.f32 %v9562, %v9598
        %v9614 = vmul.f32 %v9563, %v9598
        %v9615 = vmul.f32 %v9564, %v9598
        %v9616 = vmul.f32 %v9565, %v9598
        %v9618 = vlaneseq
        %v9619 = vshrl.u32 %v9618, 7
        %v9620 = vsub.s32 0, %v9619
        %v9621 = vrot.slane %v9351, %v9620
        %v9623 = vadd.f32 %v9601, %v9621
        %v9624 = vadd.f32 %v9602, %v9621
        %v9625 = vadd.f32 %v9603, %v9621
        %v9626 = vadd.f32 %v9604, %v9621
        %v9627 = vadd.f32 %v9605, %v9621
        %v9628 = vadd.f32 %v9606, %v9621
        %v9629 = vadd.f32 %v9607, %v9621
        %v9630 = vadd.f32 %v9608, %v9621
        %v9631 = vadd.f32 %v9609, %v9621
        %v9632 = vadd.f32 %v9610, %v9621
        %v9633 = vadd.f32 %v9611, %v9621
        %v9634 = vadd.f32 %v9612, %v9621
        %v9635 = vadd.f32 %v9613, %v9621
        %v9636 = vadd.f32 %v9614, %v9621
        %v9637 = vadd.f32 %v9615, %v9621
        %v9638 = vadd.f32 %v9616, %v9621
        %v9639 = vmax.f32 %v9623, 0.0
        %v9640 = vmax.f32 %v9624, 0.0
        %v9641 = vmax.f32 %v9625, 0.0
        %v9642 = vmax.f32 %v9626, 0.0
        %v9643 = vmax.f32 %v9627, 0.0
        %v9644 = vmax.f32 %v9628, 0.0
        %v9645 = vmax.f32 %v9629, 0.0
        %v9646 = vmax.f32 %v9630, 0.0
        %v9647 = vmax.f32 %v9631, 0.0
        %v9648 = vmax.f32 %v9632, 0.0
        %v9649 = vmax.f32 %v9633, 0.0
        %v9650 = vmax.f32 %v9634, 0.0
        %v9651 = vmax.f32 %v9635, 0.0
        %v9652 = vmax.f32 %v9636, 0.0
        %v9653 = vmax.f32 %v9637, 0.0
        %v9654 = vmax.f32 %v9638, 0.0
        %v9655 = vpack.c.bf16 %v9640, %v9639
        %v9656 = vpack.c.bf16 %v9642, %v9641
        %v9657 = vpack.c.bf16 %v9644, %v9643
        %v9658 = vpack.c.bf16 %v9646, %v9645
        %v9659 = vpack.c.bf16 %v9648, %v9647
        %v9660 = vpack.c.bf16 %v9650, %v9649
        %v9661 = vpack.c.bf16 %v9652, %v9651
        %v9662 = vpack.c.bf16 %v9654, %v9653
        %v9671 = vunpack.c.l.b16 %v9655
        %v9672 = vunpack.c.h.b16 %v9655
        %v9673 = vunpack.c.l.b16 %v9656
        %v9674 = vunpack.c.h.b16 %v9656
        %v9675 = vunpack.c.l.b16 %v9657
        %v9676 = vunpack.c.h.b16 %v9657
        %v9677 = vunpack.c.l.b16 %v9658
        %v9678 = vunpack.c.h.b16 %v9658
        %v9679 = vunpack.c.l.b16 %v9659
        %v9680 = vunpack.c.h.b16 %v9659
        %v9681 = vunpack.c.l.b16 %v9660
        %v9682 = vunpack.c.h.b16 %v9660
        %v9683 = vunpack.c.l.b16 %v9661
        %v9684 = vunpack.c.h.b16 %v9661
        %v9685 = vunpack.c.l.b16 %v9662
        %v9686 = vunpack.c.h.b16 %v9662
        %v9687 = vpack.c.b16 %v9671, %v9671
        %v9688 = vpack.c.b16 %v9672, %v9672
        %v9689 = vpack.c.b16 %v9673, %v9673
        %v9690 = vpack.c.b16 %v9674, %v9674
        %v9691 = vpack.c.b16 %v9675, %v9675
        %v9692 = vpack.c.b16 %v9676, %v9676
        %v9693 = vpack.c.b16 %v9677, %v9677
        %v9694 = vpack.c.b16 %v9678, %v9678
        %v9695 = vpack.c.b16 %v9679, %v9679
        %v9696 = vpack.c.b16 %v9680, %v9680
        %v9697 = vpack.c.b16 %v9681, %v9681
        %v9698 = vpack.c.b16 %v9682, %v9682
        %v9699 = vpack.c.b16 %v9683, %v9683
        %v9700 = vpack.c.b16 %v9684, %v9684
        %v9701 = vpack.c.b16 %v9685, %v9685
        %v9702 = vpack.c.b16 %v9686, %v9686
        %9719 = vst [vmem:[%s548] sm:$0xf] %v9687
        %9720 = vst [vmem:[%s548 + $0x4] sm:$0xf] %v9688
        %9721 = vst [vmem:[%s548 + $0x8] sm:$0xf] %v9689
        %9722 = vst [vmem:[%s548 + $0xc] sm:$0xf] %v9690
        %9723 = vst [vmem:[%s548 + $0x10] sm:$0xf] %v9691
        %9724 = vst [vmem:[%s548 + $0x14] sm:$0xf] %v9692
        %9725 = vst [vmem:[%s548 + $0x18] sm:$0xf] %v9693
        %9726 = vst [vmem:[%s548 + $0x1c] sm:$0xf] %v9694
        %9727 = vst [vmem:[%s548 + $0x20] sm:$0xf] %v9695
        %9728 = vst [vmem:[%s548 + $0x24] sm:$0xf] %v9696
        %9729 = vst [vmem:[%s548 + $0x28] sm:$0xf] %v9697
        %9730 = vst [vmem:[%s548 + $0x2c] sm:$0xf] %v9698
        %9731 = vst [vmem:[%s548 + $0x30] sm:$0xf] %v9699
        %9732 = vst [vmem:[%s548 + $0x34] sm:$0xf] %v9700
        %9733 = vst [vmem:[%s548 + $0x38] sm:$0xf] %v9701
        %9734 = vst [vmem:[%s548 + $0x3c] sm:$0xf] %v9702
        %s9735 = sand.u32 %s277, 1
        %s9736 = scalar_lea.sflag [#allocation4], %s9735
        %s9737 = sand.u32 %s277, 1
        %s9738 = smul.addr %s9737, 64
        %s9739 = scalar_lea.vmem [#allocation20], %s9738
        // Predicated region
        $region109: #{tpu_custom_call.1} parent=63 // pred_check
          %p9740 = pneg %p287
        $region110: #{tpu_custom_call.1} parent=63 // pred_check_branch
          %9742 = sbr.rel (%p9740) target = $region112
        $region111: #{tpu_custom_call.1} parent=63 // pred_region
          %s9743 = smul.u32 2, %s33
          %s9745 = ssub.s32 1024, 1024
          %9746 = vsyncadd %s9736, %s9745
          %s9747 = smul.addr %s9743, 8
          %s9748 = smul.addr %s9747, 64
          %s9749 = scalar_lea.hbm %s11, %s9748
          %s9750 = sshll.u32 %s9739, 4
          %s9751 = int_to_ptr.vmem [resolvable:$true] %s9750
          %9756 = dma.vmem_to_hbm [thread:$0]  %s9751, 1024, %s9749, %s9736, 64, 64, 4
        $region112: #{tpu_custom_call.1} parent=63 // pred_fallthru
          _
      $region64: #{tpu_custom_call.1} parent=5 // pred_fallthru
        _
      %p9757 = scmp.le.s32.totalorder 2, %s28
      // Predicated region
      $region113: #{tpu_custom_call.1} parent=5 // pred_check
        %p9758 = pneg %p9757
      $region114: #{tpu_custom_call.1} parent=5 // pred_check_branch
        %9760 = sbr.rel (%p9758) target = $region116
      $region115: #{tpu_custom_call.1} parent=5 // pred_region
        %s9761 = ssub.s32 %s28, 2
        // Predicated region
        $region117: #{tpu_custom_call.1} parent=115 // pred_check
          %p9762 = pneg %p293
        $region118: #{tpu_custom_call.1} parent=115 // pred_check_branch
          %9764 = sbr.rel (%p9762) target = $region120
        $region119: #{tpu_custom_call.1} parent=115 // pred_region
          %s9765 = sand.u32 %s278, 1
          %s9766 = scalar_lea.sflag [#allocation4], %s9765
          %s9767 = sand.u32 %s278, 1
          %s9768 = smul.addr %s9767, 64
          %s9769 = scalar_lea.vmem [#allocation20], %s9768
          %9770 = dma.done %s9766, 1024
        $region120: #{tpu_custom_call.1} parent=115 // pred_fallthru
          _
      $region116: #{tpu_custom_call.1} parent=5 // pred_fallthru
        _
    $region6: #{tpu_custom_call.1} parent=1 // loop_footer
      %s32 = sadd.s32 1, %s28
    $region7: #{tpu_custom_call.1} parent=1 // loop_footer_branch
      %27 = sbr.rel target = $region3
    $region8: #{tpu_custom_call.1} parent=1 // loop_exit
      _
    %9771 = vsyncpa [#allocation3], 1
    %s9772 = scalar_lea.sflag [#allocation3], 1
    %9773 = vsyncpa %s9772, 1
    %9774 = vsyncpa [#allocation6], 1
    %9775 = vsyncpa [#allocation9], 1
    %9776 = vsyncpa [#allocation12], 1
    %9777 = vsyncpa [#allocation15], 1
    %9778 = vsyncpa [#allocation18], 1
    %9779 = vsyncpa [#allocation4], 1
    %s9780 = scalar_lea.sflag [#allocation4], 1
    %9781 = vsyncpa %s9780, 1

</llo_original>
